<compile_context>
chip_gen: v6e
topology: v6e:2x2x1
jax: 0.10.0
libtpu: 0.0.40
codegen_flags: <defaults>
</compile_context>

<pallas_src>
import functools
import math

import numpy as np
import jax
import jax.numpy as jnp
from jax.experimental import pallas as pl
from jax.experimental.pallas import tpu as pltpu

LN_EPS = 1e-5          # torch.nn.LayerNorm default eps
LEAKY_SLOPE = 0.01     # torch.nn.LeakyReLU default
ACT = "relu"           # PhyTSMixerModel default activation
_SMALL_K = 8           # contractions with K <= this use a VPU broadcast-MAC, not the MXU

# Whole-array, VMEM-resident operand (no grid, no blocking, one DMA per operand).
_VMEM = pl.BlockSpec(memory_space=pltpu.MemorySpace.VMEM)


# ---------------------------------------------------------------------------
# Host-side parameter packing: everything into one (N, R, C) f32 slab.
# ---------------------------------------------------------------------------
class _Packer:
    """Packs every parameter into one zero-padded slab; handles are static (idx, rows, cols)."""

    def __init__(self):
        self._entries = []

    def _add(self, a):
        a = np.asarray(a, np.float32)
        idx = len(self._entries)
        self._entries.append(a)
        return (idx, a.shape[0], a.shape[1])

    def mat(self, w):            # 2-D weight, used as (K, M)
        return self._add(w)

    def row(self, v):            # 1-D -> (1, n) row (broadcasts over rows)
        return self._add(np.asarray(v).reshape(1, -1))

    def col(self, v):            # 1-D -> (n, 1) column (broadcasts over channels)
        return self._add(np.asarray(v).reshape(-1, 1))

    def finalize(self):
        r = max(e.shape[0] for e in self._entries)
        c = max(e.shape[1] for e in self._entries)
        buf = np.zeros((len(self._entries), r, c), np.float32)
        for i, e in enumerate(self._entries):
            buf[i, :e.shape[0], :e.shape[1]] = e
        return jnp.asarray(buf)


def pack_params(params):
    """Walks the param tree once (host side), returns (packed_slab, static_plan)."""
    pk = _Packer()

    def fm(p):
        d = {"ln_g": pk.row(p["ln"]["g"]), "ln_b": pk.row(p["ln"]["b"]),
             "fc1_w": pk.mat(p["fc1"]["w"]), "fc1_b": pk.row(p["fc1"]["b"]),
             "fc2_w": pk.mat(p["fc2"]["w"]), "fc2_b": pk.row(p["fc2"]["b"])}
        if "proj" in p:
            d["proj_w"] = pk.mat(p["proj"]["w"])
            d["proj_b"] = pk.row(p["proj"]["b"])
        return d

    def tm(p):
        return {"ln_g": pk.row(p["ln"]["g"]), "ln_b": pk.row(p["ln"]["b"]),
                "wt": pk.mat(np.asarray(p["fc"]["w"]).T),     # pre-transposed (T, T)
                "bt": pk.col(p["fc"]["b"])}                    # (T, 1) column bias

    def blocks(bs):
        return [{"tm": tm(b["tm"]), "fm": fm(b["fm"])} for b in bs]

    def head(p):
        return {"fc1_w": pk.mat(p["fc1"]["w"]), "fc1_b": pk.row(p["fc1"]["b"]),
                "ln_g": pk.row(p["ln"]["g"]), "ln_b": pk.row(p["ln"]["b"]),
                "fc2_w": pk.mat(p["fc2"]["w"]), "fc2_b": pk.row(p["fc2"]["b"])}

    t1 = params["ts1"]
    plan = {
        "ts1": {"tp_wt": pk.mat(np.asarray(t1["temporal_proj"]["w"]).T),
                "tp_b": pk.col(t1["temporal_proj"]["b"]),
                "fm_past": fm(t1["fm_past"]),
                "fm_future": fm(t1["fm_future"]),
                "blocks": blocks(t1["blocks"])},
        "fc1": head(params["fc1"]),
        "ts2": blocks(params["ts2"]["blocks"]),
        "fc2": head(params["fc2"]),
        "gpx": head(params["gpx"]),
        "ts3": blocks(params["ts3"]["blocks"]),
        "fc3": head(params["fc3"]),
    }
    return pk.finalize(), plan


# ---------------------------------------------------------------------------
# The single fused kernel (whole forward pass, whole batch, no grid)
# ---------------------------------------------------------------------------
def _phytsmixer_kernel(past_ref, fut_ref, p_ref, out_ref, cat1_ref, cat3_ref, *, plan):
    B, T, _ = out_ref.shape

    def L(h):                                     # static slice of the packed slab
        i, r, c = h
        return p_ref[i, 0:r, 0:c]

    def act(y, kind):
        if kind == "relu":
            return jnp.maximum(y, 0.0)
        if kind == "leaky_relu":
            return jnp.where(y >= 0.0, y, LEAKY_SLOPE * y)
        if kind == "gelu":
            return jax.nn.gelu(y)
        return y

    def mm(x, w, b=None):
        # (R, K) @ (K, M) [+ b].  Tiny-K contractions stay on the VPU (broadcast-MAC)
        # instead of paying MXU push / result-pop latency on an almost-empty systolic array.
        k = x.shape[-1]
        if k <= _SMALL_K:
            y = x[:, 0:1] * w[0:1, :]
            for i in range(1, k):
                y = y + x[:, i:i + 1] * w[i:i + 1, :]
        else:
            y = jnp.dot(x, w, preferred_element_type=jnp.float32)
        return y if b is None else y + b

    def ln(x, d):
        mu = jnp.mean(x, axis=-1, keepdims=True)
        var = jnp.mean(jnp.square(x - mu), axis=-1, keepdims=True)
        return (x - mu) * jax.lax.rsqrt(var + LN_EPS) * L(d["ln_g"]) + L(d["ln_b"])

    def feature_mix(x, d):
        res = mm(x, L(d["proj_w"]), L(d["proj_b"])) if "proj_w" in d else x
        h = act(mm(ln(x, d), L(d["fc1_w"]), L(d["fc1_b"])), ACT)
        return res + mm(h, L(d["fc2_w"]), L(d["fc2_b"]))

    def time_mix(x, d):
        # contraction over time with the pre-transposed weight -> no in-kernel transpose
        y = mm(L(d["wt"]), ln(x, d), L(d["bt"]))
        return x + act(y, ACT)

    def mixer_chain(x, block_plans):
        for bd in block_plans:
            x = feature_mix(time_mix(x, bd["tm"]), bd["fm"])
        return x

    def head(x, d, act1, act2):
        h = act(mm(x, L(d["fc1_w"]), L(d["fc1_b"])), act1)
        h = act(ln(h, d), act2)
        return mm(h, L(d["fc2_w"]), L(d["fc2_b"]))

    p1 = plan["ts1"]
    hdim = p1["fm_past"]["fc2_w"][2]

    for b in range(B):        # statically unrolled; independent slabs interleave in the scheduler
        past = past_ref[b].astype(jnp.float32)          # (ctxt, F)
        fut = fut_ref[b].astype(jnp.float32)            # (T, Ff)

        # --- ts1: temporal projection (ctxt -> T) fused with past/future feature mixing ----
        xp = feature_mix(mm(L(p1["tp_wt"]), past, L(p1["tp_b"])), p1["fm_past"])   # (T, h)
        xf = feature_mix(fut, p1["fm_future"])                                      # (T, h)

        # VMEM concat [xp | xf] -> (T, 2h) via scratch (never touches HBM)
        cat1_ref[b, :, 0:hdim] = xp
        cat1_ref[b, :, hdim:2 * hdim] = xf
        z = head(mixer_chain(cat1_ref[b], p1["blocks"]), plan["fc1"],
                 "leaky_relu", "none")                                              # (T, 3)
        out_ref[b, :, 0:3] = z

        # --- dz_dt = torch.gradient(z, dim=time): written straight into the output slab ----
        out_ref[b, 0:1, 3:6] = z[1:2, :] - z[0:1, :]
        if T > 2:
            out_ref[b, 1:T - 1, 3:6] = (z[2:T, :] - z[0:T - 2, :]) * 0.5
        out_ref[b, T - 1:T, 3:6] = z[T - 1:T, :] - z[T - 2:T - 1, :]

        # --- g branch -----------------------------------------------------------------------
        g = head(mixer_chain(z, plan["ts2"]), plan["fc2"], "leaky_relu", "none")    # (T, 1)
        out_ref[b, :, 6:7] = g

        # --- g_plus_x: Linear(2,.) on cat([g, future]) done as a split broadcast-MAC --------
        gd = plan["gpx"]
        w1 = L(gd["fc1_w"])                                                         # (2, hd2q)
        h = g * w1[0:1, :] + fut[:, 0:1] * w1[1:2, :] + L(gd["fc1_b"])
        h = act(ln(h, gd), "relu")
        out_ref[b, :, 7:8] = mm(h, L(gd["fc2_w"]), L(gd["fc2_b"]))                  # (T, 1)

        # --- dr branch: phi = [dz_dt[:,1] - dz_dt[0,1] | z[:,2]] ----------------------------
        dz1 = out_ref[b, :, 4:5]                         # dz_dt[..., 1] read back from VMEM
        cat3_ref[b, :, 0:1] = dz1 - dz1[0:1, :]          # delta_z_dot
        cat3_ref[b, :, 1:2] = z[:, 2:3]
        dr = head(mixer_chain(cat3_ref[b], plan["ts3"]), plan["fc3"],
                  "leaky_relu", "none")                                             # (T, 1)
        out_ref[b, :, 8:9] = dr


# ---------------------------------------------------------------------------
# Wrapper: one pallas_call for the whole forward
# ---------------------------------------------------------------------------
def phytsmixer_forward(packed, past_covariates, future_covariates, *, plan, output_len):
    B = past_covariates.shape[0]
    T, Ff = future_covariates.shape[1], future_covariates.shape[2]
    assert T == output_len and T >= 2
    assert Ff == 1  # g_plus_x's Linear(2, .) implies a single future covariate
    hdim = plan["ts1"]["fm_past"]["fc2_w"][2]

    out = pl.pallas_call(
        functools.partial(_phytsmixer_kernel, plan=plan),
        out_shape=jax.ShapeDtypeStruct((B, T, 9), jnp.float32),
        in_specs=[_VMEM, _VMEM, _VMEM],
        out_specs=_VMEM,
        scratch_shapes=[pltpu.VMEM((B, T, 2 * hdim), jnp.float32),   # [xp | xf] concat buffer
                        pltpu.VMEM((B, T, 2), jnp.float32)],         # phi concat buffer
    )(past_covariates, future_covariates, packed)

    return {"z": out[..., 0:3], "dz_dt": out[..., 3:6], "g": out[..., 6:7],
            "g_gamma_x": out[..., 7:8], "dr_dt": out[..., 8:9]}


# ---------------------------------------------------------------------------
# Deterministic parameter initialization (torch.nn.Linear-style uniform)
# ---------------------------------------------------------------------------
class ParamGen:
    def __init__(self, seed=0):
        self.key = jax.random.PRNGKey(seed)
        self.count = 0

    def _next(self):
        self.count += 1
        return jax.random.fold_in(self.key, self.count)

    def linear(self, fan_in, fan_out):
        bound = 1.0 / math.sqrt(fan_in)
        w = jax.random.uniform(self._next(), (fan_in, fan_out), jnp.float32, -bound, bound)
        b = jax.random.uniform(self._next(), (fan_out,), jnp.float32, -bound, bound)
        return {"w": w, "b": b}

    def ln(self, dim):
        return {"g": jnp.ones((dim,), jnp.float32), "b": jnp.zeros((dim,), jnp.float32)}


def init_feature_mixing(pg, c_in, c_out, fc_dim):
    p = {"ln": pg.ln(c_in), "fc1": pg.linear(c_in, fc_dim), "fc2": pg.linear(fc_dim, c_out)}
    if c_in != c_out:
        p["proj"] = pg.linear(c_in, c_out)
    return p


def init_time_mixing(pg, seq_len, c):
    return {"ln": pg.ln(c), "fc": pg.linear(seq_len, seq_len)}


def init_mixer_block(pg, seq_len, c_in, c_out, fc_dim):
    return {"tm": init_time_mixing(pg, seq_len, c_in),
            "fm": init_feature_mixing(pg, c_in, c_out, fc_dim)}


def init_basic_tsmixer(pg, num_features, seq_len, fc_dim, hidden_dim, num_blocks):
    blocks, c = [], num_features
    for _ in range(num_blocks):
        blocks.append(init_mixer_block(pg, seq_len, c, hidden_dim, fc_dim))
        c = hidden_dim
    return {"blocks": blocks}


def init_tsmixer(pg, num_feat, num_future_feat, ctxt_seq_len, tgt_seq_len,
                 fc_dim, hidden_dim, num_blocks):
    p = {
        "temporal_proj": pg.linear(ctxt_seq_len, tgt_seq_len),
        "fm_past": init_feature_mixing(pg, num_feat, hidden_dim, fc_dim),
        "fm_future": init_feature_mixing(pg, num_future_feat, hidden_dim, fc_dim),
    }
    blocks, c = [], 2 * hidden_dim
    for _ in range(num_blocks):
        blocks.append(init_mixer_block(pg, tgt_seq_len, c, hidden_dim, fc_dim))
        c = hidden_dim
    p["blocks"] = blocks
    return p


def init_fc_head(pg, d_in, d_mid, d_out):
    return {"fc1": pg.linear(d_in, d_mid), "ln": pg.ln(d_mid), "fc2": pg.linear(d_mid, d_out)}


def init_g_plus_x(pg, d_mid):
    return {"fc1": pg.linear(2, d_mid), "ln": pg.ln(d_mid), "fc2": pg.linear(d_mid, 1)}


def init_phytsmixer(pg, num_features, num_future_features, ctxt_seq_len, tgt_seq_len,
                    fc_dim, hidden_dim_2, num_blocks):
    hidden_dim = hidden_dim_2 or num_future_features
    params = {}
    params["ts1"] = init_tsmixer(pg, num_features, num_future_features, ctxt_seq_len,
                                 tgt_seq_len, fc_dim, hidden_dim, num_blocks)
    params["fc1"] = init_fc_head(pg, hidden_dim_2, fc_dim, 3)
    hd2q = hidden_dim_2 // 4
    params["ts2"] = init_basic_tsmixer(pg, 3, tgt_seq_len, fc_dim, hd2q, num_blocks)
    params["fc2"] = init_fc_head(pg, hd2q or num_features, hidden_dim, 1)
    params["gpx"] = init_g_plus_x(pg, hd2q)
    params["ts3"] = init_basic_tsmixer(pg, 2, tgt_seq_len, fc_dim, hd2q, num_blocks)
    params["fc3"] = init_fc_head(pg, hd2q or num_features, hidden_dim, 1)
    return params


if __name__ == "__main__":
    B = 2
    NUM_FEATURES = 4
    NUM_FUTURE_FEATURES = 1   # g_plus_x's Linear(2, .) implies a single future covariate
    CTXT_SEQ_LEN = 16
    TGT_SEQ_LEN = 8
    FC_DIM = 32
    HIDDEN_DIM_2 = 8
    NUM_BLOCKS = 2

    pg = ParamGen(seed=0)
    params = init_phytsmixer(pg, NUM_FEATURES, NUM_FUTURE_FEATURES, CTXT_SEQ_LEN,
                             TGT_SEQ_LEN, FC_DIM, HIDDEN_DIM_2, NUM_BLOCKS)
    packed, plan = pack_params(params)      # one-time host-side packing -> one param DMA

    k1, k2 = jax.random.split(jax.random.PRNGKey(0))
    past = jax.random.normal(k1, (B, CTXT_SEQ_LEN, NUM_FEATURES), jnp.float32)
    future = jax.random.normal(k2, (B, TGT_SEQ_LEN, NUM_FUTURE_FEATURES), jnp.float32)

    fwd = jax.jit(functools.partial(phytsmixer_forward, plan=plan, output_len=TGT_SEQ_LEN))
    out = fwd(packed, past, future)
    jax.block_until_ready(out)

    assert out["z"].shape == (B, TGT_SEQ_LEN, 3)
    assert out["dz_dt"].shape == (B, TGT_SEQ_LEN, 3)
    assert out["g"].shape == (B, TGT_SEQ_LEN, 1)
    assert out["g_gamma_x"].shape == (B, TGT_SEQ_LEN, 1)
    assert out["dr_dt"].shape == (B, TGT_SEQ_LEN, 1)
    for v in out.values():
        assert bool(jnp.all(jnp.isfinite(v)))
    print("KERNEL_OK")
</pallas_src>

<mosaic_0001>
module attributes {stable_mosaic.version = 11 : i64} {
  func.func @_phytsmixer_kernel(%arg0: memref<2x16x4xf32, #tpu.memory_space<vmem>>, %arg1: memref<2x8x1xf32, #tpu.memory_space<vmem>>, %arg2: memref<106x32x32xf32, #tpu.memory_space<vmem>>, %arg3: memref<2x8x9xf32, #tpu.memory_space<vmem>>, %arg4: memref<2x8x16xf32, #tpu.memory_space<vmem>>, %arg5: memref<2x8x2xf32, #tpu.memory_space<vmem>>) attributes {dimension_semantics = [], scalar_prefetch = 0 : i64, scratch_operands = 2 : i64, tpu.core_type = #tpu.core_type<tc>} {
    %c0 = arith.constant 0 : index
    %c0_0 = arith.constant 0 : index
    %c0_1 = arith.constant 0 : index
    %0 = vector.load %arg0[%c0, %c0_0, %c0_1] : memref<2x16x4xf32, #tpu.memory_space<vmem>>, vector<1x16x4xf32>
    %1 = vector.shape_cast %0 : vector<1x16x4xf32> to vector<16x4xf32>
    %c0_2 = arith.constant 0 : index
    %c0_3 = arith.constant 0 : index
    %c0_4 = arith.constant 0 : index
    %2 = vector.load %arg1[%c0_2, %c0_3, %c0_4] : memref<2x8x1xf32, #tpu.memory_space<vmem>>, vector<1x8x1xf32>
    %3 = vector.shape_cast %2 : vector<1x8x1xf32> to vector<8x1xf32>
    %c0_5 = arith.constant 0 : index
    %c0_6 = arith.constant 0 : index
    %c0_7 = arith.constant 0 : index
    %4 = vector.load %arg2[%c0_5, %c0_6, %c0_7] : memref<106x32x32xf32, #tpu.memory_space<vmem>>, vector<1x8x16xf32>
    %5 = vector.shape_cast %4 : vector<1x8x16xf32> to vector<8x16xf32>
    %c1 = arith.constant 1 : index
    %c0_8 = arith.constant 0 : index
    %c0_9 = arith.constant 0 : index
    %6 = vector.load %arg2[%c1, %c0_8, %c0_9] : memref<106x32x32xf32, #tpu.memory_space<vmem>>, vector<1x8x1xf32>
    %7 = vector.shape_cast %6 : vector<1x8x1xf32> to vector<8x1xf32>
    %cst = arith.constant dense<0.000000e+00> : vector<8x4xf32>
    %8 = tpu.matmul %5, %1, %cst {dimension_numbers = #tpu.dot_dimension_numbers<[1], [0], [0], [1], [0, 0, 1, 1], [], []>} : vector<8x16xf32>, vector<16x4xf32>, vector<8x4xf32> -> vector<8x4xf32>
    %9 = vector.broadcast %7 : vector<8x1xf32> to vector<8x4xf32>
    %10 = arith.addf %8, %9 : vector<8x4xf32>
    %c8 = arith.constant 8 : index
    %c0_10 = arith.constant 0 : index
    %c0_11 = arith.constant 0 : index
    %11 = vector.load %arg2[%c8, %c0_10, %c0_11] : memref<106x32x32xf32, #tpu.memory_space<vmem>>, vector<1x4x8xf32>
    %12 = vector.shape_cast %11 : vector<1x4x8xf32> to vector<4x8xf32>
    %c9 = arith.constant 9 : index
    %c0_12 = arith.constant 0 : index
    %c0_13 = arith.constant 0 : index
    %13 = vector.load %arg2[%c9, %c0_12, %c0_13] : memref<106x32x32xf32, #tpu.memory_space<vmem>>, vector<1x1x8xf32>
    %14 = vector.shape_cast %13 : vector<1x1x8xf32> to vector<1x8xf32>
    %15 = vector.extract_strided_slice %10 {offsets = [0, 0], sizes = [8, 1], strides = [1, 1]} : vector<8x4xf32> to vector<8x1xf32>
    %16 = vector.extract_strided_slice %12 {offsets = [0, 0], sizes = [1, 8], strides = [1, 1]} : vector<4x8xf32> to vector<1x8xf32>
    %17 = vector.broadcast %15 : vector<8x1xf32> to vector<8x8xf32>
    %18 = vector.broadcast %16 : vector<1x8xf32> to vector<8x8xf32>
    %19 = arith.mulf %17, %18 : vector<8x8xf32>
    %20 = vector.extract_strided_slice %10 {offsets = [0, 1], sizes = [8, 1], strides = [1, 1]} : vector<8x4xf32> to vector<8x1xf32>
    %21 = vector.extract_strided_slice %12 {offsets = [1, 0], sizes = [1, 8], strides = [1, 1]} : vector<4x8xf32> to vector<1x8xf32>
    %22 = vector.broadcast %20 : vector<8x1xf32> to vector<8x8xf32>
    %23 = vector.broadcast %21 : vector<1x8xf32> to vector<8x8xf32>
    %24 = arith.mulf %22, %23 : vector<8x8xf32>
    %25 = arith.addf %19, %24 : vector<8x8xf32>
    %26 = vector.extract_strided_slice %10 {offsets = [0, 2], sizes = [8, 1], strides = [1, 1]} : vector<8x4xf32> to vector<8x1xf32>
    %27 = vector.extract_strided_slice %12 {offsets = [2, 0], sizes = [1, 8], strides = [1, 1]} : vector<4x8xf32> to vector<1x8xf32>
    %28 = vector.broadcast %26 : vector<8x1xf32> to vector<8x8xf32>
    %29 = vector.broadcast %27 : vector<1x8xf32> to vector<8x8xf32>
    %30 = arith.mulf %28, %29 : vector<8x8xf32>
    %31 = arith.addf %25, %30 : vector<8x8xf32>
    %32 = vector.extract_strided_slice %10 {offsets = [0, 3], sizes = [8, 1], strides = [1, 1]} : vector<8x4xf32> to vector<8x1xf32>
    %33 = vector.extract_strided_slice %12 {offsets = [3, 0], sizes = [1, 8], strides = [1, 1]} : vector<4x8xf32> to vector<1x8xf32>
    %34 = vector.broadcast %32 : vector<8x1xf32> to vector<8x8xf32>
    %35 = vector.broadcast %33 : vector<1x8xf32> to vector<8x8xf32>
    %36 = arith.mulf %34, %35 : vector<8x8xf32>
    %37 = arith.addf %31, %36 : vector<8x8xf32>
    %38 = vector.broadcast %14 : vector<1x8xf32> to vector<8x8xf32>
    %39 = arith.addf %37, %38 : vector<8x8xf32>
    %cst_14 = arith.constant dense<0.000000e+00> : vector<8xf32>
    %40 = vector.multi_reduction <add>, %10, %cst_14 [1] : vector<8x4xf32> to vector<8xf32>
    %41 = vector.shape_cast %40 : vector<8xf32> to vector<8x1xf32>
    %cst_15 = arith.constant 4.000000e+00 : f32
    %42 = vector.broadcast %cst_15 : f32 to vector<8x1xf32>
    %43 = arith.divf %41, %42 : vector<8x1xf32>
    %44 = vector.broadcast %43 : vector<8x1xf32> to vector<8x4xf32>
    %45 = arith.subf %10, %44 : vector<8x4xf32>
    %46 = arith.mulf %45, %45 : vector<8x4xf32>
    %cst_16 = arith.constant dense<0.000000e+00> : vector<8xf32>
    %47 = vector.multi_reduction <add>, %46, %cst_16 [1] : vector<8x4xf32> to vector<8xf32>
    %48 = vector.shape_cast %47 : vector<8xf32> to vector<8x1xf32>
    %cst_17 = arith.constant 4.000000e+00 : f32
    %49 = vector.broadcast %cst_17 : f32 to vector<8x1xf32>
    %50 = arith.divf %48, %49 : vector<8x1xf32>
    %51 = vector.broadcast %43 : vector<8x1xf32> to vector<8x4xf32>
    %52 = arith.subf %10, %51 : vector<8x4xf32>
    %cst_18 = arith.constant 9.99999974E-6 : f32
    %53 = vector.broadcast %cst_18 : f32 to vector<8x1xf32>
    %54 = arith.addf %50, %53 : vector<8x1xf32>
    %55 = math.rsqrt %54 : vector<8x1xf32>
    %56 = vector.broadcast %55 : vector<8x1xf32> to vector<8x4xf32>
    %57 = arith.mulf %52, %56 : vector<8x4xf32>
    %c2 = arith.constant 2 : index
    %c0_19 = arith.constant 0 : index
    %c0_20 = arith.constant 0 : index
    %58 = vector.load %arg2[%c2, %c0_19, %c0_20] : memref<106x32x32xf32, #tpu.memory_space<vmem>>, vector<1x1x4xf32>
    %59 = vector.shape_cast %58 : vector<1x1x4xf32> to vector<1x4xf32>
    %60 = vector.broadcast %59 : vector<1x4xf32> to vector<8x4xf32>
    %61 = arith.mulf %57, %60 : vector<8x4xf32>
    %c3 = arith.constant 3 : index
    %c0_21 = arith.constant 0 : index
    %c0_22 = arith.constant 0 : index
    %62 = vector.load %arg2[%c3, %c0_21, %c0_22] : memref<106x32x32xf32, #tpu.memory_space<vmem>>, vector<1x1x4xf32>
    %63 = vector.shape_cast %62 : vector<1x1x4xf32> to vector<1x4xf32>
    %64 = vector.broadcast %63 : vector<1x4xf32> to vector<8x4xf32>
    %65 = arith.addf %61, %64 : vector<8x4xf32>
    %c4 = arith.constant 4 : index
    %c0_23 = arith.constant 0 : index
    %c0_24 = arith.constant 0 : index
    %66 = vector.load %arg2[%c4, %c0_23, %c0_24] : memref<106x32x32xf32, #tpu.memory_space<vmem>>, vector<1x4x32xf32>
    %67 = vector.shape_cast %66 : vector<1x4x32xf32> to vector<4x32xf32>
    %c5 = arith.constant 5 : index
    %c0_25 = arith.constant 0 : index
    %c0_26 = arith.constant 0 : index
    %68 = vector.load %arg2[%c5, %c0_25, %c0_26] : memref<106x32x32xf32, #tpu.memory_space<vmem>>, vector<1x1x32xf32>
    %69 = vector.shape_cast %68 : vector<1x1x32xf32> to vector<1x32xf32>
    %70 = vector.extract_strided_slice %65 {offsets = [0, 0], sizes = [8, 1], strides = [1, 1]} : vector<8x4xf32> to vector<8x1xf32>
    %71 = vector.extract_strided_slice %67 {offsets = [0, 0], sizes = [1, 32], strides = [1, 1]} : vector<4x32xf32> to vector<1x32xf32>
    %72 = vector.broadcast %70 : vector<8x1xf32> to vector<8x32xf32>
    %73 = vector.broadcast %71 : vector<1x32xf32> to vector<8x32xf32>
    %74 = arith.mulf %72, %73 : vector<8x32xf32>
    %75 = vector.extract_strided_slice %65 {offsets = [0, 1], sizes = [8, 1], strides = [1, 1]} : vector<8x4xf32> to vector<8x1xf32>
    %76 = vector.extract_strided_slice %67 {offsets = [1, 0], sizes = [1, 32], strides = [1, 1]} : vector<4x32xf32> to vector<1x32xf32>
    %77 = vector.broadcast %75 : vector<8x1xf32> to vector<8x32xf32>
    %78 = vector.broadcast %76 : vector<1x32xf32> to vector<8x32xf32>
    %79 = arith.mulf %77, %78 : vector<8x32xf32>
    %80 = arith.addf %74, %79 : vector<8x32xf32>
    %81 = vector.extract_strided_slice %65 {offsets = [0, 2], sizes = [8, 1], strides = [1, 1]} : vector<8x4xf32> to vector<8x1xf32>
    %82 = vector.extract_strided_slice %67 {offsets = [2, 0], sizes = [1, 32], strides = [1, 1]} : vector<4x32xf32> to vector<1x32xf32>
    %83 = vector.broadcast %81 : vector<8x1xf32> to vector<8x32xf32>
    %84 = vector.broadcast %82 : vector<1x32xf32> to vector<8x32xf32>
    %85 = arith.mulf %83, %84 : vector<8x32xf32>
    %86 = arith.addf %80, %85 : vector<8x32xf32>
    %87 = vector.extract_strided_slice %65 {offsets = [0, 3], sizes = [8, 1], strides = [1, 1]} : vector<8x4xf32> to vector<8x1xf32>
    %88 = vector.extract_strided_slice %67 {offsets = [3, 0], sizes = [1, 32], strides = [1, 1]} : vector<4x32xf32> to vector<1x32xf32>
    %89 = vector.broadcast %87 : vector<8x1xf32> to vector<8x32xf32>
    %90 = vector.broadcast %88 : vector<1x32xf32> to vector<8x32xf32>
    %91 = arith.mulf %89, %90 : vector<8x32xf32>
    %92 = arith.addf %86, %91 : vector<8x32xf32>
    %93 = vector.broadcast %69 : vector<1x32xf32> to vector<8x32xf32>
    %94 = arith.addf %92, %93 : vector<8x32xf32>
    %cst_27 = arith.constant 0.000000e+00 : f32
    %95 = vector.broadcast %cst_27 : f32 to vector<8x32xf32>
    %96 = arith.maximumf %94, %95 : vector<8x32xf32>
    %c6 = arith.constant 6 : index
    %c0_28 = arith.constant 0 : index
    %c0_29 = arith.constant 0 : index
    %97 = vector.load %arg2[%c6, %c0_28, %c0_29] : memref<106x32x32xf32, #tpu.memory_space<vmem>>, vector<1x32x8xf32>
    %98 = vector.shape_cast %97 : vector<1x32x8xf32> to vector<32x8xf32>
    %c7 = arith.constant 7 : index
    %c0_30 = arith.constant 0 : index
    %c0_31 = arith.constant 0 : index
    %99 = vector.load %arg2[%c7, %c0_30, %c0_31] : memref<106x32x32xf32, #tpu.memory_space<vmem>>, vector<1x1x8xf32>
    %100 = vector.shape_cast %99 : vector<1x1x8xf32> to vector<1x8xf32>
    %cst_32 = arith.constant dense<0.000000e+00> : vector<8x8xf32>
    %101 = tpu.matmul %96, %98, %cst_32 {dimension_numbers = #tpu.dot_dimension_numbers<[1], [0], [0], [1], [0, 0, 1, 1], [], []>} : vector<8x32xf32>, vector<32x8xf32>, vector<8x8xf32> -> vector<8x8xf32>
    %102 = vector.broadcast %100 : vector<1x8xf32> to vector<8x8xf32>
    %103 = arith.addf %101, %102 : vector<8x8xf32>
    %104 = arith.addf %39, %103 : vector<8x8xf32>
    %c16 = arith.constant 16 : index
    %c0_33 = arith.constant 0 : index
    %c0_34 = arith.constant 0 : index
    %105 = vector.load %arg2[%c16, %c0_33, %c0_34] : memref<106x32x32xf32, #tpu.memory_space<vmem>>, vector<1x1x8xf32>
    %106 = vector.shape_cast %105 : vector<1x1x8xf32> to vector<1x8xf32>
    %c17 = arith.constant 17 : index
    %c0_35 = arith.constant 0 : index
    %c0_36 = arith.constant 0 : index
    %107 = vector.load %arg2[%c17, %c0_35, %c0_36] : memref<106x32x32xf32, #tpu.memory_space<vmem>>, vector<1x1x8xf32>
    %108 = vector.shape_cast %107 : vector<1x1x8xf32> to vector<1x8xf32>
    %109 = vector.broadcast %3 : vector<8x1xf32> to vector<8x8xf32>
    %110 = vector.broadcast %106 : vector<1x8xf32> to vector<8x8xf32>
    %111 = arith.mulf %109, %110 : vector<8x8xf32>
    %112 = vector.broadcast %108 : vector<1x8xf32> to vector<8x8xf32>
    %113 = arith.addf %111, %112 : vector<8x8xf32>
    %cst_37 = arith.constant dense<0.000000e+00> : vector<8xf32>
    %114 = vector.multi_reduction <add>, %3, %cst_37 [1] : vector<8x1xf32> to vector<8xf32>
    %115 = vector.shape_cast %114 : vector<8xf32> to vector<8x1xf32>
    %cst_38 = arith.constant 1.000000e+00 : f32
    %116 = vector.broadcast %cst_38 : f32 to vector<8x1xf32>
    %117 = arith.divf %115, %116 : vector<8x1xf32>
    %118 = arith.subf %3, %117 : vector<8x1xf32>
    %119 = arith.mulf %118, %118 : vector<8x1xf32>
    %cst_39 = arith.constant dense<0.000000e+00> : vector<8xf32>
    %120 = vector.multi_reduction <add>, %119, %cst_39 [1] : vector<8x1xf32> to vector<8xf32>
    %121 = vector.shape_cast %120 : vector<8xf32> to vector<8x1xf32>
    %cst_40 = arith.constant 1.000000e+00 : f32
    %122 = vector.broadcast %cst_40 : f32 to vector<8x1xf32>
    %123 = arith.divf %121, %122 : vector<8x1xf32>
    %124 = arith.subf %3, %117 : vector<8x1xf32>
    %cst_41 = arith.constant 9.99999974E-6 : f32
    %125 = vector.broadcast %cst_41 : f32 to vector<8x1xf32>
    %126 = arith.addf %123, %125 : vector<8x1xf32>
    %127 = math.rsqrt %126 : vector<8x1xf32>
    %128 = arith.mulf %124, %127 : vector<8x1xf32>
    %c10 = arith.constant 10 : index
    %c0_42 = arith.constant 0 : index
    %c0_43 = arith.constant 0 : index
    %129 = vector.load %arg2[%c10, %c0_42, %c0_43] : memref<106x32x32xf32, #tpu.memory_space<vmem>>, vector<1x1x1xf32>
    %130 = vector.shape_cast %129 : vector<1x1x1xf32> to vector<1x1xf32>
    %131 = vector.broadcast %130 : vector<1x1xf32> to vector<8x1xf32>
    %132 = arith.mulf %128, %131 : vector<8x1xf32>
    %c11 = arith.constant 11 : index
    %c0_44 = arith.constant 0 : index
    %c0_45 = arith.constant 0 : index
    %133 = vector.load %arg2[%c11, %c0_44, %c0_45] : memref<106x32x32xf32, #tpu.memory_space<vmem>>, vector<1x1x1xf32>
    %134 = vector.shape_cast %133 : vector<1x1x1xf32> to vector<1x1xf32>
    %135 = vector.broadcast %134 : vector<1x1xf32> to vector<8x1xf32>
    %136 = arith.addf %132, %135 : vector<8x1xf32>
    %c12 = arith.constant 12 : index
    %c0_46 = arith.constant 0 : index
    %c0_47 = arith.constant 0 : index
    %137 = vector.load %arg2[%c12, %c0_46, %c0_47] : memref<106x32x32xf32, #tpu.memory_space<vmem>>, vector<1x1x32xf32>
    %138 = vector.shape_cast %137 : vector<1x1x32xf32> to vector<1x32xf32>
    %c13 = arith.constant 13 : index
    %c0_48 = arith.constant 0 : index
    %c0_49 = arith.constant 0 : index
    %139 = vector.load %arg2[%c13, %c0_48, %c0_49] : memref<106x32x32xf32, #tpu.memory_space<vmem>>, vector<1x1x32xf32>
    %140 = vector.shape_cast %139 : vector<1x1x32xf32> to vector<1x32xf32>
    %141 = vector.broadcast %136 : vector<8x1xf32> to vector<8x32xf32>
    %142 = vector.broadcast %138 : vector<1x32xf32> to vector<8x32xf32>
    %143 = arith.mulf %141, %142 : vector<8x32xf32>
    %144 = vector.broadcast %140 : vector<1x32xf32> to vector<8x32xf32>
    %145 = arith.addf %143, %144 : vector<8x32xf32>
    %cst_50 = arith.constant 0.000000e+00 : f32
    %146 = vector.broadcast %cst_50 : f32 to vector<8x32xf32>
    %147 = arith.maximumf %145, %146 : vector<8x32xf32>
    %c14 = arith.constant 14 : index
    %c0_51 = arith.constant 0 : index
    %c0_52 = arith.constant 0 : index
    %148 = vector.load %arg2[%c14, %c0_51, %c0_52] : memref<106x32x32xf32, #tpu.memory_space<vmem>>, vector<1x32x8xf32>
    %149 = vector.shape_cast %148 : vector<1x32x8xf32> to vector<32x8xf32>
    %c15 = arith.constant 15 : index
    %c0_53 = arith.constant 0 : index
    %c0_54 = arith.constant 0 : index
    %150 = vector.load %arg2[%c15, %c0_53, %c0_54] : memref<106x32x32xf32, #tpu.memory_space<vmem>>, vector<1x1x8xf32>
    %151 = vector.shape_cast %150 : vector<1x1x8xf32> to vector<1x8xf32>
    %cst_55 = arith.constant dense<0.000000e+00> : vector<8x8xf32>
    %152 = tpu.matmul %147, %149, %cst_55 {dimension_numbers = #tpu.dot_dimension_numbers<[1], [0], [0], [1], [0, 0, 1, 1], [], []>} : vector<8x32xf32>, vector<32x8xf32>, vector<8x8xf32> -> vector<8x8xf32>
    %153 = vector.broadcast %151 : vector<1x8xf32> to vector<8x8xf32>
    %154 = arith.addf %152, %153 : vector<8x8xf32>
    %155 = arith.addf %113, %154 : vector<8x8xf32>
    %c0_56 = arith.constant 0 : index
    %c0_57 = arith.constant 0 : index
    %c0_58 = arith.constant 0 : index
    %156 = vector.load %arg4[%c0_56, %c0_57, %c0_58] : memref<2x8x16xf32, #tpu.memory_space<vmem>>, vector<1x8x8xf32>
    %157 = vector.shape_cast %156 : vector<1x8x8xf32> to vector<8x8xf32>
    %158 = vector.shape_cast %104 : vector<8x8xf32> to vector<1x8x8xf32>
    tpu.vector_store %arg4[%c0_56, %c0_57, %c0_58], %158 {strides = array<i32>} : memref<2x8x16xf32, #tpu.memory_space<vmem>>, vector<1x8x8xf32>,
    %c0_59 = arith.constant 0 : index
    %c0_60 = arith.constant 0 : index
    %c8_61 = arith.constant 8 : index
    %159 = vector.load %arg4[%c0_59, %c0_60, %c8_61] : memref<2x8x16xf32, #tpu.memory_space<vmem>>, vector<1x8x8xf32>
    %160 = vector.shape_cast %159 : vector<1x8x8xf32> to vector<8x8xf32>
    %161 = vector.shape_cast %155 : vector<8x8xf32> to vector<1x8x8xf32>
    tpu.vector_store %arg4[%c0_59, %c0_60, %c8_61], %161 {strides = array<i32>} : memref<2x8x16xf32, #tpu.memory_space<vmem>>, vector<1x8x8xf32>,
    %c0_62 = arith.constant 0 : index
    %c0_63 = arith.constant 0 : index
    %c0_64 = arith.constant 0 : index
    %162 = vector.load %arg4[%c0_62, %c0_63, %c0_64] : memref<2x8x16xf32, #tpu.memory_space<vmem>>, vector<1x8x16xf32>
    %163 = vector.shape_cast %162 : vector<1x8x16xf32> to vector<8x16xf32>
    %c20 = arith.constant 20 : index
    %c0_65 = arith.constant 0 : index
    %c0_66 = arith.constant 0 : index
    %164 = vector.load %arg2[%c20, %c0_65, %c0_66] : memref<106x32x32xf32, #tpu.memory_space<vmem>>, vector<1x8x8xf32>
    %165 = vector.shape_cast %164 : vector<1x8x8xf32> to vector<8x8xf32>
    %cst_67 = arith.constant dense<0.000000e+00> : vector<8xf32>
    %166 = vector.multi_reduction <add>, %163, %cst_67 [1] : vector<8x16xf32> to vector<8xf32>
    %167 = vector.shape_cast %166 : vector<8xf32> to vector<8x1xf32>
    %cst_68 = arith.constant 1.600000e+01 : f32
    %168 = vector.broadcast %cst_68 : f32 to vector<8x1xf32>
    %169 = arith.divf %167, %168 : vector<8x1xf32>
    %170 = vector.broadcast %169 : vector<8x1xf32> to vector<8x16xf32>
    %171 = arith.subf %163, %170 : vector<8x16xf32>
    %172 = arith.mulf %171, %171 : vector<8x16xf32>
    %cst_69 = arith.constant dense<0.000000e+00> : vector<8xf32>
    %173 = vector.multi_reduction <add>, %172, %cst_69 [1] : vector<8x16xf32> to vector<8xf32>
    %174 = vector.shape_cast %173 : vector<8xf32> to vector<8x1xf32>
    %cst_70 = arith.constant 1.600000e+01 : f32
    %175 = vector.broadcast %cst_70 : f32 to vector<8x1xf32>
    %176 = arith.divf %174, %175 : vector<8x1xf32>
    %177 = vector.broadcast %169 : vector<8x1xf32> to vector<8x16xf32>
    %178 = arith.subf %163, %177 : vector<8x16xf32>
    %cst_71 = arith.constant 9.99999974E-6 : f32
    %179 = vector.broadcast %cst_71 : f32 to vector<8x1xf32>
    %180 = arith.addf %176, %179 : vector<8x1xf32>
    %181 = math.rsqrt %180 : vector<8x1xf32>
    %182 = vector.broadcast %181 : vector<8x1xf32> to vector<8x16xf32>
    %183 = arith.mulf %178, %182 : vector<8x16xf32>
    %c18 = arith.constant 18 : index
    %c0_72 = arith.constant 0 : index
    %c0_73 = arith.constant 0 : index
    %184 = vector.load %arg2[%c18, %c0_72, %c0_73] : memref<106x32x32xf32, #tpu.memory_space<vmem>>, vector<1x1x16xf32>
    %185 = vector.shape_cast %184 : vector<1x1x16xf32> to vector<1x16xf32>
    %186 = vector.broadcast %185 : vector<1x16xf32> to vector<8x16xf32>
    %187 = arith.mulf %183, %186 : vector<8x16xf32>
    %c19 = arith.constant 19 : index
    %c0_74 = arith.constant 0 : index
    %c0_75 = arith.constant 0 : index
    %188 = vector.load %arg2[%c19, %c0_74, %c0_75] : memref<106x32x32xf32, #tpu.memory_space<vmem>>, vector<1x1x16xf32>
    %189 = vector.shape_cast %188 : vector<1x1x16xf32> to vector<1x16xf32>
    %190 = vector.broadcast %189 : vector<1x16xf32> to vector<8x16xf32>
    %191 = arith.addf %187, %190 : vector<8x16xf32>
    %c21 = arith.constant 21 : index
    %c0_76 = arith.constant 0 : index
    %c0_77 = arith.constant 0 : index
    %192 = vector.load %arg2[%c21, %c0_76, %c0_77] : memref<106x32x32xf32, #tpu.memory_space<vmem>>, vector<1x8x1xf32>
    %193 = vector.shape_cast %192 : vector<1x8x1xf32> to vector<8x1xf32>
    %194 = vector.extract_strided_slice %165 {offsets = [0, 0], sizes = [8, 1], strides = [1, 1]} : vector<8x8xf32> to vector<8x1xf32>
    %195 = vector.extract_strided_slice %191 {offsets = [0, 0], sizes = [1, 16], strides = [1, 1]} : vector<8x16xf32> to vector<1x16xf32>
    %196 = vector.broadcast %194 : vector<8x1xf32> to vector<8x16xf32>
    %197 = vector.broadcast %195 : vector<1x16xf32> to vector<8x16xf32>
    %198 = arith.mulf %196, %197 : vector<8x16xf32>
    %199 = vector.extract_strided_slice %165 {offsets = [0, 1], sizes = [8, 1], strides = [1, 1]} : vector<8x8xf32> to vector<8x1xf32>
    %200 = vector.extract_strided_slice %191 {offsets = [1, 0], sizes = [1, 16], strides = [1, 1]} : vector<8x16xf32> to vector<1x16xf32>
    %201 = vector.broadcast %199 : vector<8x1xf32> to vector<8x16xf32>
    %202 = vector.broadcast %200 : vector<1x16xf32> to vector<8x16xf32>
    %203 = arith.mulf %201, %202 : vector<8x16xf32>
    %204 = arith.addf %198, %203 : vector<8x16xf32>
    %205 = vector.extract_strided_slice %165 {offsets = [0, 2], sizes = [8, 1], strides = [1, 1]} : vector<8x8xf32> to vector<8x1xf32>
    %206 = vector.extract_strided_slice %191 {offsets = [2, 0], sizes = [1, 16], strides = [1, 1]} : vector<8x16xf32> to vector<1x16xf32>
    %207 = vector.broadcast %205 : vector<8x1xf32> to vector<8x16xf32>
    %208 = vector.broadcast %206 : vector<1x16xf32> to vector<8x16xf32>
    %209 = arith.mulf %207, %208 : vector<8x16xf32>
    %210 = arith.addf %204, %209 : vector<8x16xf32>
    %211 = vector.extract_strided_slice %165 {offsets = [0, 3], sizes = [8, 1], strides = [1, 1]} : vector<8x8xf32> to vector<8x1xf32>
    %212 = vector.extract_strided_slice %191 {offsets = [3, 0], sizes = [1, 16], strides = [1, 1]} : vector<8x16xf32> to vector<1x16xf32>
    %213 = vector.broadcast %211 : vector<8x1xf32> to vector<8x16xf32>
    %214 = vector.broadcast %212 : vector<1x16xf32> to vector<8x16xf32>
    %215 = arith.mulf %213, %214 : vector<8x16xf32>
    %216 = arith.addf %210, %215 : vector<8x16xf32>
    %217 = vector.extract_strided_slice %165 {offsets = [0, 4], sizes = [8, 1], strides = [1, 1]} : vector<8x8xf32> to vector<8x1xf32>
    %218 = vector.extract_strided_slice %191 {offsets = [4, 0], sizes = [1, 16], strides = [1, 1]} : vector<8x16xf32> to vector<1x16xf32>
    %219 = vector.broadcast %217 : vector<8x1xf32> to vector<8x16xf32>
    %220 = vector.broadcast %218 : vector<1x16xf32> to vector<8x16xf32>
    %221 = arith.mulf %219, %220 : vector<8x16xf32>
    %222 = arith.addf %216, %221 : vector<8x16xf32>
    %223 = vector.extract_strided_slice %165 {offsets = [0, 5], sizes = [8, 1], strides = [1, 1]} : vector<8x8xf32> to vector<8x1xf32>
    %224 = vector.extract_strided_slice %191 {offsets = [5, 0], sizes = [1, 16], strides = [1, 1]} : vector<8x16xf32> to vector<1x16xf32>
    %225 = vector.broadcast %223 : vector<8x1xf32> to vector<8x16xf32>
    %226 = vector.broadcast %224 : vector<1x16xf32> to vector<8x16xf32>
    %227 = arith.mulf %225, %226 : vector<8x16xf32>
    %228 = arith.addf %222, %227 : vector<8x16xf32>
    %229 = vector.extract_strided_slice %165 {offsets = [0, 6], sizes = [8, 1], strides = [1, 1]} : vector<8x8xf32> to vector<8x1xf32>
    %230 = vector.extract_strided_slice %191 {offsets = [6, 0], sizes = [1, 16], strides = [1, 1]} : vector<8x16xf32> to vector<1x16xf32>
    %231 = vector.broadcast %229 : vector<8x1xf32> to vector<8x16xf32>
    %232 = vector.broadcast %230 : vector<1x16xf32> to vector<8x16xf32>
    %233 = arith.mulf %231, %232 : vector<8x16xf32>
    %234 = arith.addf %228, %233 : vector<8x16xf32>
    %235 = vector.extract_strided_slice %165 {offsets = [0, 7], sizes = [8, 1], strides = [1, 1]} : vector<8x8xf32> to vector<8x1xf32>
    %236 = vector.extract_strided_slice %191 {offsets = [7, 0], sizes = [1, 16], strides = [1, 1]} : vector<8x16xf32> to vector<1x16xf32>
    %237 = vector.broadcast %235 : vector<8x1xf32> to vector<8x16xf32>
    %238 = vector.broadcast %236 : vector<1x16xf32> to vector<8x16xf32>
    %239 = arith.mulf %237, %238 : vector<8x16xf32>
    %240 = arith.addf %234, %239 : vector<8x16xf32>
    %241 = vector.broadcast %193 : vector<8x1xf32> to vector<8x16xf32>
    %242 = arith.addf %240, %241 : vector<8x16xf32>
    %cst_78 = arith.constant 0.000000e+00 : f32
    %243 = vector.broadcast %cst_78 : f32 to vector<8x16xf32>
    %244 = arith.maximumf %242, %243 : vector<8x16xf32>
    %245 = arith.addf %163, %244 : vector<8x16xf32>
    %c28 = arith.constant 28 : index
    %c0_79 = arith.constant 0 : index
    %c0_80 = arith.constant 0 : index
    %246 = vector.load %arg2[%c28, %c0_79, %c0_80] : memref<106x32x32xf32, #tpu.memory_space<vmem>>, vector<1x16x8xf32>
    %247 = vector.shape_cast %246 : vector<1x16x8xf32> to vector<16x8xf32>
    %c29 = arith.constant 29 : index
    %c0_81 = arith.constant 0 : index
    %c0_82 = arith.constant 0 : index
    %248 = vector.load %arg2[%c29, %c0_81, %c0_82] : memref<106x32x32xf32, #tpu.memory_space<vmem>>, vector<1x1x8xf32>
    %249 = vector.shape_cast %248 : vector<1x1x8xf32> to vector<1x8xf32>
    %cst_83 = arith.constant dense<0.000000e+00> : vector<8x8xf32>
    %250 = tpu.matmul %245, %247, %cst_83 {dimension_numbers = #tpu.dot_dimension_numbers<[1], [0], [0], [1], [0, 0, 1, 1], [], []>} : vector<8x16xf32>, vector<16x8xf32>, vector<8x8xf32> -> vector<8x8xf32>
    %251 = vector.broadcast %249 : vector<1x8xf32> to vector<8x8xf32>
    %252 = arith.addf %250, %251 : vector<8x8xf32>
    %cst_84 = arith.constant dense<0.000000e+00> : vector<8xf32>
    %253 = vector.multi_reduction <add>, %245, %cst_84 [1] : vector<8x16xf32> to vector<8xf32>
    %254 = vector.shape_cast %253 : vector<8xf32> to vector<8x1xf32>
    %cst_85 = arith.constant 1.600000e+01 : f32
    %255 = vector.broadcast %cst_85 : f32 to vector<8x1xf32>
    %256 = arith.divf %254, %255 : vector<8x1xf32>
    %257 = vector.broadcast %256 : vector<8x1xf32> to vector<8x16xf32>
    %258 = arith.subf %245, %257 : vector<8x16xf32>
    %259 = arith.mulf %258, %258 : vector<8x16xf32>
    %cst_86 = arith.constant dense<0.000000e+00> : vector<8xf32>
    %260 = vector.multi_reduction <add>, %259, %cst_86 [1] : vector<8x16xf32> to vector<8xf32>
    %261 = vector.shape_cast %260 : vector<8xf32> to vector<8x1xf32>
    %cst_87 = arith.constant 1.600000e+01 : f32
    %262 = vector.broadcast %cst_87 : f32 to vector<8x1xf32>
    %263 = arith.divf %261, %262 : vector<8x1xf32>
    %264 = vector.broadcast %256 : vector<8x1xf32> to vector<8x16xf32>
    %265 = arith.subf %245, %264 : vector<8x16xf32>
    %cst_88 = arith.constant 9.99999974E-6 : f32
    %266 = vector.broadcast %cst_88 : f32 to vector<8x1xf32>
    %267 = arith.addf %263, %266 : vector<8x1xf32>
    %268 = math.rsqrt %267 : vector<8x1xf32>
    %269 = vector.broadcast %268 : vector<8x1xf32> to vector<8x16xf32>
    %270 = arith.mulf %265, %269 : vector<8x16xf32>
    %c22 = arith.constant 22 : index
    %c0_89 = arith.constant 0 : index
    %c0_90 = arith.constant 0 : index
    %271 = vector.load %arg2[%c22, %c0_89, %c0_90] : memref<106x32x32xf32, #tpu.memory_space<vmem>>, vector<1x1x16xf32>
    %272 = vector.shape_cast %271 : vector<1x1x16xf32> to vector<1x16xf32>
    %273 = vector.broadcast %272 : vector<1x16xf32> to vector<8x16xf32>
    %274 = arith.mulf %270, %273 : vector<8x16xf32>
    %c23 = arith.constant 23 : index
    %c0_91 = arith.constant 0 : index
    %c0_92 = arith.constant 0 : index
    %275 = vector.load %arg2[%c23, %c0_91, %c0_92] : memref<106x32x32xf32, #tpu.memory_space<vmem>>, vector<1x1x16xf32>
    %276 = vector.shape_cast %275 : vector<1x1x16xf32> to vector<1x16xf32>
    %277 = vector.broadcast %276 : vector<1x16xf32> to vector<8x16xf32>
    %278 = arith.addf %274, %277 : vector<8x16xf32>
    %c24 = arith.constant 24 : index
    %c0_93 = arith.constant 0 : index
    %c0_94 = arith.constant 0 : index
    %279 = vector.load %arg2[%c24, %c0_93, %c0_94] : memref<106x32x32xf32, #tpu.memory_space<vmem>>, vector<1x16x32xf32>
    %280 = vector.shape_cast %279 : vector<1x16x32xf32> to vector<16x32xf32>
    %c25 = arith.constant 25 : index
    %c0_95 = arith.constant 0 : index
    %c0_96 = arith.constant 0 : index
    %281 = vector.load %arg2[%c25, %c0_95, %c0_96] : memref<106x32x32xf32, #tpu.memory_space<vmem>>, vector<1x1x32xf32>
    %282 = vector.shape_cast %281 : vector<1x1x32xf32> to vector<1x32xf32>
    %cst_97 = arith.constant dense<0.000000e+00> : vector<8x32xf32>
    %283 = tpu.matmul %278, %280, %cst_97 {dimension_numbers = #tpu.dot_dimension_numbers<[1], [0], [0], [1], [0, 0, 1, 1], [], []>} : vector<8x16xf32>, vector<16x32xf32>, vector<8x32xf32> -> vector<8x32xf32>
    %284 = vector.broadcast %282 : vector<1x32xf32> to vector<8x32xf32>
    %285 = arith.addf %283, %284 : vector<8x32xf32>
    %cst_98 = arith.constant 0.000000e+00 : f32
    %286 = vector.broadcast %cst_98 : f32 to vector<8x32xf32>
    %287 = arith.maximumf %285, %286 : vector<8x32xf32>
    %c26 = arith.constant 26 : index
    %c0_99 = arith.constant 0 : index
    %c0_100 = arith.constant 0 : index
    %288 = vector.load %arg2[%c26, %c0_99, %c0_100] : memref<106x32x32xf32, #tpu.memory_space<vmem>>, vector<1x32x8xf32>
    %289 = vector.shape_cast %288 : vector<1x32x8xf32> to vector<32x8xf32>
    %c27 = arith.constant 27 : index
    %c0_101 = arith.constant 0 : index
    %c0_102 = arith.constant 0 : index
    %290 = vector.load %arg2[%c27, %c0_101, %c0_102] : memref<106x32x32xf32, #tpu.memory_space<vmem>>, vector<1x1x8xf32>
    %291 = vector.shape_cast %290 : vector<1x1x8xf32> to vector<1x8xf32>
    %cst_103 = arith.constant dense<0.000000e+00> : vector<8x8xf32>
    %292 = tpu.matmul %287, %289, %cst_103 {dimension_numbers = #tpu.dot_dimension_numbers<[1], [0], [0], [1], [0, 0, 1, 1], [], []>} : vector<8x32xf32>, vector<32x8xf32>, vector<8x8xf32> -> vector<8x8xf32>
    %293 = vector.broadcast %291 : vector<1x8xf32> to vector<8x8xf32>
    %294 = arith.addf %292, %293 : vector<8x8xf32>
    %295 = arith.addf %252, %294 : vector<8x8xf32>
    %c32 = arith.constant 32 : index
    %c0_104 = arith.constant 0 : index
    %c0_105 = arith.constant 0 : index
    %296 = vector.load %arg2[%c32, %c0_104, %c0_105] : memref<106x32x32xf32, #tpu.memory_space<vmem>>, vector<1x8x8xf32>
    %297 = vector.shape_cast %296 : vector<1x8x8xf32> to vector<8x8xf32>
    %cst_106 = arith.constant dense<0.000000e+00> : vector<8xf32>
    %298 = vector.multi_reduction <add>, %295, %cst_106 [1] : vector<8x8xf32> to vector<8xf32>
    %299 = vector.shape_cast %298 : vector<8xf32> to vector<8x1xf32>
    %cst_107 = arith.constant 8.000000e+00 : f32
    %300 = vector.broadcast %cst_107 : f32 to vector<8x1xf32>
    %301 = arith.divf %299, %300 : vector<8x1xf32>
    %302 = vector.broadcast %301 : vector<8x1xf32> to vector<8x8xf32>
    %303 = arith.subf %295, %302 : vector<8x8xf32>
    %304 = arith.mulf %303, %303 : vector<8x8xf32>
    %cst_108 = arith.constant dense<0.000000e+00> : vector<8xf32>
    %305 = vector.multi_reduction <add>, %304, %cst_108 [1] : vector<8x8xf32> to vector<8xf32>
    %306 = vector.shape_cast %305 : vector<8xf32> to vector<8x1xf32>
    %cst_109 = arith.constant 8.000000e+00 : f32
    %307 = vector.broadcast %cst_109 : f32 to vector<8x1xf32>
    %308 = arith.divf %306, %307 : vector<8x1xf32>
    %309 = vector.broadcast %301 : vector<8x1xf32> to vector<8x8xf32>
    %310 = arith.subf %295, %309 : vector<8x8xf32>
    %cst_110 = arith.constant 9.99999974E-6 : f32
    %311 = vector.broadcast %cst_110 : f32 to vector<8x1xf32>
    %312 = arith.addf %308, %311 : vector<8x1xf32>
    %313 = math.rsqrt %312 : vector<8x1xf32>
    %314 = vector.broadcast %313 : vector<8x1xf32> to vector<8x8xf32>
    %315 = arith.mulf %310, %314 : vector<8x8xf32>
    %c30 = arith.constant 30 : index
    %c0_111 = arith.constant 0 : index
    %c0_112 = arith.constant 0 : index
    %316 = vector.load %arg2[%c30, %c0_111, %c0_112] : memref<106x32x32xf32, #tpu.memory_space<vmem>>, vector<1x1x8xf32>
    %317 = vector.shape_cast %316 : vector<1x1x8xf32> to vector<1x8xf32>
    %318 = vector.broadcast %317 : vector<1x8xf32> to vector<8x8xf32>
    %319 = arith.mulf %315, %318 : vector<8x8xf32>
    %c31 = arith.constant 31 : index
    %c0_113 = arith.constant 0 : index
    %c0_114 = arith.constant 0 : index
    %320 = vector.load %arg2[%c31, %c0_113, %c0_114] : memref<106x32x32xf32, #tpu.memory_space<vmem>>, vector<1x1x8xf32>
    %321 = vector.shape_cast %320 : vector<1x1x8xf32> to vector<1x8xf32>
    %322 = vector.broadcast %321 : vector<1x8xf32> to vector<8x8xf32>
    %323 = arith.addf %319, %322 : vector<8x8xf32>
    %c33 = arith.constant 33 : index
    %c0_115 = arith.constant 0 : index
    %c0_116 = arith.constant 0 : index
    %324 = vector.load %arg2[%c33, %c0_115, %c0_116] : memref<106x32x32xf32, #tpu.memory_space<vmem>>, vector<1x8x1xf32>
    %325 = vector.shape_cast %324 : vector<1x8x1xf32> to vector<8x1xf32>
    %326 = vector.extract_strided_slice %297 {offsets = [0, 0], sizes = [8, 1], strides = [1, 1]} : vector<8x8xf32> to vector<8x1xf32>
    %327 = vector.extract_strided_slice %323 {offsets = [0, 0], sizes = [1, 8], strides = [1, 1]} : vector<8x8xf32> to vector<1x8xf32>
    %328 = vector.broadcast %326 : vector<8x1xf32> to vector<8x8xf32>
    %329 = vector.broadcast %327 : vector<1x8xf32> to vector<8x8xf32>
    %330 = arith.mulf %328, %329 : vector<8x8xf32>
    %331 = vector.extract_strided_slice %297 {offsets = [0, 1], sizes = [8, 1], strides = [1, 1]} : vector<8x8xf32> to vector<8x1xf32>
    %332 = vector.extract_strided_slice %323 {offsets = [1, 0], sizes = [1, 8], strides = [1, 1]} : vector<8x8xf32> to vector<1x8xf32>
    %333 = vector.broadcast %331 : vector<8x1xf32> to vector<8x8xf32>
    %334 = vector.broadcast %332 : vector<1x8xf32> to vector<8x8xf32>
    %335 = arith.mulf %333, %334 : vector<8x8xf32>
    %336 = arith.addf %330, %335 : vector<8x8xf32>
    %337 = vector.extract_strided_slice %297 {offsets = [0, 2], sizes = [8, 1], strides = [1, 1]} : vector<8x8xf32> to vector<8x1xf32>
    %338 = vector.extract_strided_slice %323 {offsets = [2, 0], sizes = [1, 8], strides = [1, 1]} : vector<8x8xf32> to vector<1x8xf32>
    %339 = vector.broadcast %337 : vector<8x1xf32> to vector<8x8xf32>
    %340 = vector.broadcast %338 : vector<1x8xf32> to vector<8x8xf32>
    %341 = arith.mulf %339, %340 : vector<8x8xf32>
    %342 = arith.addf %336, %341 : vector<8x8xf32>
    %343 = vector.extract_strided_slice %297 {offsets = [0, 3], sizes = [8, 1], strides = [1, 1]} : vector<8x8xf32> to vector<8x1xf32>
    %344 = vector.extract_strided_slice %323 {offsets = [3, 0], sizes = [1, 8], strides = [1, 1]} : vector<8x8xf32> to vector<1x8xf32>
    %345 = vector.broadcast %343 : vector<8x1xf32> to vector<8x8xf32>
    %346 = vector.broadcast %344 : vector<1x8xf32> to vector<8x8xf32>
    %347 = arith.mulf %345, %346 : vector<8x8xf32>
    %348 = arith.addf %342, %347 : vector<8x8xf32>
    %349 = vector.extract_strided_slice %297 {offsets = [0, 4], sizes = [8, 1], strides = [1, 1]} : vector<8x8xf32> to vector<8x1xf32>
    %350 = vector.extract_strided_slice %323 {offsets = [4, 0], sizes = [1, 8], strides = [1, 1]} : vector<8x8xf32> to vector<1x8xf32>
    %351 = vector.broadcast %349 : vector<8x1xf32> to vector<8x8xf32>
    %352 = vector.broadcast %350 : vector<1x8xf32> to vector<8x8xf32>
    %353 = arith.mulf %351, %352 : vector<8x8xf32>
    %354 = arith.addf %348, %353 : vector<8x8xf32>
    %355 = vector.extract_strided_slice %297 {offsets = [0, 5], sizes = [8, 1], strides = [1, 1]} : vector<8x8xf32> to vector<8x1xf32>
    %356 = vector.extract_strided_slice %323 {offsets = [5, 0], sizes = [1, 8], strides = [1, 1]} : vector<8x8xf32> to vector<1x8xf32>
    %357 = vector.broadcast %355 : vector<8x1xf32> to vector<8x8xf32>
    %358 = vector.broadcast %356 : vector<1x8xf32> to vector<8x8xf32>
    %359 = arith.mulf %357, %358 : vector<8x8xf32>
    %360 = arith.addf %354, %359 : vector<8x8xf32>
    %361 = vector.extract_strided_slice %297 {offsets = [0, 6], sizes = [8, 1], strides = [1, 1]} : vector<8x8xf32> to vector<8x1xf32>
    %362 = vector.extract_strided_slice %323 {offsets = [6, 0], sizes = [1, 8], strides = [1, 1]} : vector<8x8xf32> to vector<1x8xf32>
    %363 = vector.broadcast %361 : vector<8x1xf32> to vector<8x8xf32>
    %364 = vector.broadcast %362 : vector<1x8xf32> to vector<8x8xf32>
    %365 = arith.mulf %363, %364 : vector<8x8xf32>
    %366 = arith.addf %360, %365 : vector<8x8xf32>
    %367 = vector.extract_strided_slice %297 {offsets = [0, 7], sizes = [8, 1], strides = [1, 1]} : vector<8x8xf32> to vector<8x1xf32>
    %368 = vector.extract_strided_slice %323 {offsets = [7, 0], sizes = [1, 8], strides = [1, 1]} : vector<8x8xf32> to vector<1x8xf32>
    %369 = vector.broadcast %367 : vector<8x1xf32> to vector<8x8xf32>
    %370 = vector.broadcast %368 : vector<1x8xf32> to vector<8x8xf32>
    %371 = arith.mulf %369, %370 : vector<8x8xf32>
    %372 = arith.addf %366, %371 : vector<8x8xf32>
    %373 = vector.broadcast %325 : vector<8x1xf32> to vector<8x8xf32>
    %374 = arith.addf %372, %373 : vector<8x8xf32>
    %cst_117 = arith.constant 0.000000e+00 : f32
    %375 = vector.broadcast %cst_117 : f32 to vector<8x8xf32>
    %376 = arith.maximumf %374, %375 : vector<8x8xf32>
    %377 = arith.addf %295, %376 : vector<8x8xf32>
    %cst_118 = arith.constant dense<0.000000e+00> : vector<8xf32>
    %378 = vector.multi_reduction <add>, %377, %cst_118 [1] : vector<8x8xf32> to vector<8xf32>
    %379 = vector.shape_cast %378 : vector<8xf32> to vector<8x1xf32>
    %cst_119 = arith.constant 8.000000e+00 : f32
    %380 = vector.broadcast %cst_119 : f32 to vector<8x1xf32>
    %381 = arith.divf %379, %380 : vector<8x1xf32>
    %382 = vector.broadcast %381 : vector<8x1xf32> to vector<8x8xf32>
    %383 = arith.subf %377, %382 : vector<8x8xf32>
    %384 = arith.mulf %383, %383 : vector<8x8xf32>
    %cst_120 = arith.constant dense<0.000000e+00> : vector<8xf32>
    %385 = vector.multi_reduction <add>, %384, %cst_120 [1] : vector<8x8xf32> to vector<8xf32>
    %386 = vector.shape_cast %385 : vector<8xf32> to vector<8x1xf32>
    %cst_121 = arith.constant 8.000000e+00 : f32
    %387 = vector.broadcast %cst_121 : f32 to vector<8x1xf32>
    %388 = arith.divf %386, %387 : vector<8x1xf32>
    %389 = vector.broadcast %381 : vector<8x1xf32> to vector<8x8xf32>
    %390 = arith.subf %377, %389 : vector<8x8xf32>
    %cst_122 = arith.constant 9.99999974E-6 : f32
    %391 = vector.broadcast %cst_122 : f32 to vector<8x1xf32>
    %392 = arith.addf %388, %391 : vector<8x1xf32>
    %393 = math.rsqrt %392 : vector<8x1xf32>
    %394 = vector.broadcast %393 : vector<8x1xf32> to vector<8x8xf32>
    %395 = arith.mulf %390, %394 : vector<8x8xf32>
    %c34 = arith.constant 34 : index
    %c0_123 = arith.constant 0 : index
    %c0_124 = arith.constant 0 : index
    %396 = vector.load %arg2[%c34, %c0_123, %c0_124] : memref<106x32x32xf32, #tpu.memory_space<vmem>>, vector<1x1x8xf32>
    %397 = vector.shape_cast %396 : vector<1x1x8xf32> to vector<1x8xf32>
    %398 = vector.broadcast %397 : vector<1x8xf32> to vector<8x8xf32>
    %399 = arith.mulf %395, %398 : vector<8x8xf32>
    %c35 = arith.constant 35 : index
    %c0_125 = arith.constant 0 : index
    %c0_126 = arith.constant 0 : index
    %400 = vector.load %arg2[%c35, %c0_125, %c0_126] : memref<106x32x32xf32, #tpu.memory_space<vmem>>, vector<1x1x8xf32>
    %401 = vector.shape_cast %400 : vector<1x1x8xf32> to vector<1x8xf32>
    %402 = vector.broadcast %401 : vector<1x8xf32> to vector<8x8xf32>
    %403 = arith.addf %399, %402 : vector<8x8xf32>
    %c36 = arith.constant 36 : index
    %c0_127 = arith.constant 0 : index
    %c0_128 = arith.constant 0 : index
    %404 = vector.load %arg2[%c36, %c0_127, %c0_128] : memref<106x32x32xf32, #tpu.memory_space<vmem>>, vector<1x8x32xf32>
    %405 = vector.shape_cast %404 : vector<1x8x32xf32> to vector<8x32xf32>
    %c37 = arith.constant 37 : index
    %c0_129 = arith.constant 0 : index
    %c0_130 = arith.constant 0 : index
    %406 = vector.load %arg2[%c37, %c0_129, %c0_130] : memref<106x32x32xf32, #tpu.memory_space<vmem>>, vector<1x1x32xf32>
    %407 = vector.shape_cast %406 : vector<1x1x32xf32> to vector<1x32xf32>
    %408 = vector.extract_strided_slice %403 {offsets = [0, 0], sizes = [8, 1], strides = [1, 1]} : vector<8x8xf32> to vector<8x1xf32>
    %409 = vector.extract_strided_slice %405 {offsets = [0, 0], sizes = [1, 32], strides = [1, 1]} : vector<8x32xf32> to vector<1x32xf32>
    %410 = vector.broadcast %408 : vector<8x1xf32> to vector<8x32xf32>
    %411 = vector.broadcast %409 : vector<1x32xf32> to vector<8x32xf32>
    %412 = arith.mulf %410, %411 : vector<8x32xf32>
    %413 = vector.extract_strided_slice %403 {offsets = [0, 1], sizes = [8, 1], strides = [1, 1]} : vector<8x8xf32> to vector<8x1xf32>
    %414 = vector.extract_strided_slice %405 {offsets = [1, 0], sizes = [1, 32], strides = [1, 1]} : vector<8x32xf32> to vector<1x32xf32>
    %415 = vector.broadcast %413 : vector<8x1xf32> to vector<8x32xf32>
    %416 = vector.broadcast %414 : vector<1x32xf32> to vector<8x32xf32>
    %417 = arith.mulf %415, %416 : vector<8x32xf32>
    %418 = arith.addf %412, %417 : vector<8x32xf32>
    %419 = vector.extract_strided_slice %403 {offsets = [0, 2], sizes = [8, 1], strides = [1, 1]} : vector<8x8xf32> to vector<8x1xf32>
    %420 = vector.extract_strided_slice %405 {offsets = [2, 0], sizes = [1, 32], strides = [1, 1]} : vector<8x32xf32> to vector<1x32xf32>
    %421 = vector.broadcast %419 : vector<8x1xf32> to vector<8x32xf32>
    %422 = vector.broadcast %420 : vector<1x32xf32> to vector<8x32xf32>
    %423 = arith.mulf %421, %422 : vector<8x32xf32>
    %424 = arith.addf %418, %423 : vector<8x32xf32>
    %425 = vector.extract_strided_slice %403 {offsets = [0, 3], sizes = [8, 1], strides = [1, 1]} : vector<8x8xf32> to vector<8x1xf32>
    %426 = vector.extract_strided_slice %405 {offsets = [3, 0], sizes = [1, 32], strides = [1, 1]} : vector<8x32xf32> to vector<1x32xf32>
    %427 = vector.broadcast %425 : vector<8x1xf32> to vector<8x32xf32>
    %428 = vector.broadcast %426 : vector<1x32xf32> to vector<8x32xf32>
    %429 = arith.mulf %427, %428 : vector<8x32xf32>
    %430 = arith.addf %424, %429 : vector<8x32xf32>
    %431 = vector.extract_strided_slice %403 {offsets = [0, 4], sizes = [8, 1], strides = [1, 1]} : vector<8x8xf32> to vector<8x1xf32>
    %432 = vector.extract_strided_slice %405 {offsets = [4, 0], sizes = [1, 32], strides = [1, 1]} : vector<8x32xf32> to vector<1x32xf32>
    %433 = vector.broadcast %431 : vector<8x1xf32> to vector<8x32xf32>
    %434 = vector.broadcast %432 : vector<1x32xf32> to vector<8x32xf32>
    %435 = arith.mulf %433, %434 : vector<8x32xf32>
    %436 = arith.addf %430, %435 : vector<8x32xf32>
    %437 = vector.extract_strided_slice %403 {offsets = [0, 5], sizes = [8, 1], strides = [1, 1]} : vector<8x8xf32> to vector<8x1xf32>
    %438 = vector.extract_strided_slice %405 {offsets = [5, 0], sizes = [1, 32], strides = [1, 1]} : vector<8x32xf32> to vector<1x32xf32>
    %439 = vector.broadcast %437 : vector<8x1xf32> to vector<8x32xf32>
    %440 = vector.broadcast %438 : vector<1x32xf32> to vector<8x32xf32>
    %441 = arith.mulf %439, %440 : vector<8x32xf32>
    %442 = arith.addf %436, %441 : vector<8x32xf32>
    %443 = vector.extract_strided_slice %403 {offsets = [0, 6], sizes = [8, 1], strides = [1, 1]} : vector<8x8xf32> to vector<8x1xf32>
    %444 = vector.extract_strided_slice %405 {offsets = [6, 0], sizes = [1, 32], strides = [1, 1]} : vector<8x32xf32> to vector<1x32xf32>
    %445 = vector.broadcast %443 : vector<8x1xf32> to vector<8x32xf32>
    %446 = vector.broadcast %444 : vector<1x32xf32> to vector<8x32xf32>
    %447 = arith.mulf %445, %446 : vector<8x32xf32>
    %448 = arith.addf %442, %447 : vector<8x32xf32>
    %449 = vector.extract_strided_slice %403 {offsets = [0, 7], sizes = [8, 1], strides = [1, 1]} : vector<8x8xf32> to vector<8x1xf32>
    %450 = vector.extract_strided_slice %405 {offsets = [7, 0], sizes = [1, 32], strides = [1, 1]} : vector<8x32xf32> to vector<1x32xf32>
    %451 = vector.broadcast %449 : vector<8x1xf32> to vector<8x32xf32>
    %452 = vector.broadcast %450 : vector<1x32xf32> to vector<8x32xf32>
    %453 = arith.mulf %451, %452 : vector<8x32xf32>
    %454 = arith.addf %448, %453 : vector<8x32xf32>
    %455 = vector.broadcast %407 : vector<1x32xf32> to vector<8x32xf32>
    %456 = arith.addf %454, %455 : vector<8x32xf32>
    %cst_131 = arith.constant 0.000000e+00 : f32
    %457 = vector.broadcast %cst_131 : f32 to vector<8x32xf32>
    %458 = arith.maximumf %456, %457 : vector<8x32xf32>
    %c38 = arith.constant 38 : index
    %c0_132 = arith.constant 0 : index
    %c0_133 = arith.constant 0 : index
    %459 = vector.load %arg2[%c38, %c0_132, %c0_133] : memref<106x32x32xf32, #tpu.memory_space<vmem>>, vector<1x32x8xf32>
    %460 = vector.shape_cast %459 : vector<1x32x8xf32> to vector<32x8xf32>
    %c39 = arith.constant 39 : index
    %c0_134 = arith.constant 0 : index
    %c0_135 = arith.constant 0 : index
    %461 = vector.load %arg2[%c39, %c0_134, %c0_135] : memref<106x32x32xf32, #tpu.memory_space<vmem>>, vector<1x1x8xf32>
    %462 = vector.shape_cast %461 : vector<1x1x8xf32> to vector<1x8xf32>
    %cst_136 = arith.constant dense<0.000000e+00> : vector<8x8xf32>
    %463 = tpu.matmul %458, %460, %cst_136 {dimension_numbers = #tpu.dot_dimension_numbers<[1], [0], [0], [1], [0, 0, 1, 1], [], []>} : vector<8x32xf32>, vector<32x8xf32>, vector<8x8xf32> -> vector<8x8xf32>
    %464 = vector.broadcast %462 : vector<1x8xf32> to vector<8x8xf32>
    %465 = arith.addf %463, %464 : vector<8x8xf32>
    %466 = arith.addf %377, %465 : vector<8x8xf32>
    %c40 = arith.constant 40 : index
    %c0_137 = arith.constant 0 : index
    %c0_138 = arith.constant 0 : index
    %467 = vector.load %arg2[%c40, %c0_137, %c0_138] : memref<106x32x32xf32, #tpu.memory_space<vmem>>, vector<1x8x32xf32>
    %468 = vector.shape_cast %467 : vector<1x8x32xf32> to vector<8x32xf32>
    %c41 = arith.constant 41 : index
    %c0_139 = arith.constant 0 : index
    %c0_140 = arith.constant 0 : index
    %469 = vector.load %arg2[%c41, %c0_139, %c0_140] : memref<106x32x32xf32, #tpu.memory_space<vmem>>, vector<1x1x32xf32>
    %470 = vector.shape_cast %469 : vector<1x1x32xf32> to vector<1x32xf32>
    %471 = vector.extract_strided_slice %466 {offsets = [0, 0], sizes = [8, 1], strides = [1, 1]} : vector<8x8xf32> to vector<8x1xf32>
    %472 = vector.extract_strided_slice %468 {offsets = [0, 0], sizes = [1, 32], strides = [1, 1]} : vector<8x32xf32> to vector<1x32xf32>
    %473 = vector.broadcast %471 : vector<8x1xf32> to vector<8x32xf32>
    %474 = vector.broadcast %472 : vector<1x32xf32> to vector<8x32xf32>
    %475 = arith.mulf %473, %474 : vector<8x32xf32>
    %476 = vector.extract_strided_slice %466 {offsets = [0, 1], sizes = [8, 1], strides = [1, 1]} : vector<8x8xf32> to vector<8x1xf32>
    %477 = vector.extract_strided_slice %468 {offsets = [1, 0], sizes = [1, 32], strides = [1, 1]} : vector<8x32xf32> to vector<1x32xf32>
    %478 = vector.broadcast %476 : vector<8x1xf32> to vector<8x32xf32>
    %479 = vector.broadcast %477 : vector<1x32xf32> to vector<8x32xf32>
    %480 = arith.mulf %478, %479 : vector<8x32xf32>
    %481 = arith.addf %475, %480 : vector<8x32xf32>
    %482 = vector.extract_strided_slice %466 {offsets = [0, 2], sizes = [8, 1], strides = [1, 1]} : vector<8x8xf32> to vector<8x1xf32>
    %483 = vector.extract_strided_slice %468 {offsets = [2, 0], sizes = [1, 32], strides = [1, 1]} : vector<8x32xf32> to vector<1x32xf32>
    %484 = vector.broadcast %482 : vector<8x1xf32> to vector<8x32xf32>
    %485 = vector.broadcast %483 : vector<1x32xf32> to vector<8x32xf32>
    %486 = arith.mulf %484, %485 : vector<8x32xf32>
    %487 = arith.addf %481, %486 : vector<8x32xf32>
    %488 = vector.extract_strided_slice %466 {offsets = [0, 3], sizes = [8, 1], strides = [1, 1]} : vector<8x8xf32> to vector<8x1xf32>
    %489 = vector.extract_strided_slice %468 {offsets = [3, 0], sizes = [1, 32], strides = [1, 1]} : vector<8x32xf32> to vector<1x32xf32>
    %490 = vector.broadcast %488 : vector<8x1xf32> to vector<8x32xf32>
    %491 = vector.broadcast %489 : vector<1x32xf32> to vector<8x32xf32>
    %492 = arith.mulf %490, %491 : vector<8x32xf32>
    %493 = arith.addf %487, %492 : vector<8x32xf32>
    %494 = vector.extract_strided_slice %466 {offsets = [0, 4], sizes = [8, 1], strides = [1, 1]} : vector<8x8xf32> to vector<8x1xf32>
    %495 = vector.extract_strided_slice %468 {offsets = [4, 0], sizes = [1, 32], strides = [1, 1]} : vector<8x32xf32> to vector<1x32xf32>
    %496 = vector.broadcast %494 : vector<8x1xf32> to vector<8x32xf32>
    %497 = vector.broadcast %495 : vector<1x32xf32> to vector<8x32xf32>
    %498 = arith.mulf %496, %497 : vector<8x32xf32>
    %499 = arith.addf %493, %498 : vector<8x32xf32>
    %500 = vector.extract_strided_slice %466 {offsets = [0, 5], sizes = [8, 1], strides = [1, 1]} : vector<8x8xf32> to vector<8x1xf32>
    %501 = vector.extract_strided_slice %468 {offsets = [5, 0], sizes = [1, 32], strides = [1, 1]} : vector<8x32xf32> to vector<1x32xf32>
    %502 = vector.broadcast %500 : vector<8x1xf32> to vector<8x32xf32>
    %503 = vector.broadcast %501 : vector<1x32xf32> to vector<8x32xf32>
    %504 = arith.mulf %502, %503 : vector<8x32xf32>
    %505 = arith.addf %499, %504 : vector<8x32xf32>
    %506 = vector.extract_strided_slice %466 {offsets = [0, 6], sizes = [8, 1], strides = [1, 1]} : vector<8x8xf32> to vector<8x1xf32>
    %507 = vector.extract_strided_slice %468 {offsets = [6, 0], sizes = [1, 32], strides = [1, 1]} : vector<8x32xf32> to vector<1x32xf32>
    %508 = vector.broadcast %506 : vector<8x1xf32> to vector<8x32xf32>
    %509 = vector.broadcast %507 : vector<1x32xf32> to vector<8x32xf32>
    %510 = arith.mulf %508, %509 : vector<8x32xf32>
    %511 = arith.addf %505, %510 : vector<8x32xf32>
    %512 = vector.extract_strided_slice %466 {offsets = [0, 7], sizes = [8, 1], strides = [1, 1]} : vector<8x8xf32> to vector<8x1xf32>
    %513 = vector.extract_strided_slice %468 {offsets = [7, 0], sizes = [1, 32], strides = [1, 1]} : vector<8x32xf32> to vector<1x32xf32>
    %514 = vector.broadcast %512 : vector<8x1xf32> to vector<8x32xf32>
    %515 = vector.broadcast %513 : vector<1x32xf32> to vector<8x32xf32>
    %516 = arith.mulf %514, %515 : vector<8x32xf32>
    %517 = arith.addf %511, %516 : vector<8x32xf32>
    %518 = vector.broadcast %470 : vector<1x32xf32> to vector<8x32xf32>
    %519 = arith.addf %517, %518 : vector<8x32xf32>
    %cst_141 = arith.constant 0.000000e+00 : f32
    %520 = vector.broadcast %cst_141 : f32 to vector<8x32xf32>
    %521 = arith.cmpf oge, %519, %520 : vector<8x32xf32>
    %cst_142 = arith.constant 0.00999999977 : f32
    %522 = vector.broadcast %cst_142 : f32 to vector<8x32xf32>
    %523 = arith.mulf %522, %519 : vector<8x32xf32>
    %524 = arith.select %521, %519, %523 : vector<8x32xi1>, vector<8x32xf32>
    %cst_143 = arith.constant dense<0.000000e+00> : vector<8xf32>
    %525 = vector.multi_reduction <add>, %524, %cst_143 [1] : vector<8x32xf32> to vector<8xf32>
    %526 = vector.shape_cast %525 : vector<8xf32> to vector<8x1xf32>
    %cst_144 = arith.constant 3.200000e+01 : f32
    %527 = vector.broadcast %cst_144 : f32 to vector<8x1xf32>
    %528 = arith.divf %526, %527 : vector<8x1xf32>
    %529 = vector.broadcast %528 : vector<8x1xf32> to vector<8x32xf32>
    %530 = arith.subf %524, %529 : vector<8x32xf32>
    %531 = arith.mulf %530, %530 : vector<8x32xf32>
    %cst_145 = arith.constant dense<0.000000e+00> : vector<8xf32>
    %532 = vector.multi_reduction <add>, %531, %cst_145 [1] : vector<8x32xf32> to vector<8xf32>
    %533 = vector.shape_cast %532 : vector<8xf32> to vector<8x1xf32>
    %cst_146 = arith.constant 3.200000e+01 : f32
    %534 = vector.broadcast %cst_146 : f32 to vector<8x1xf32>
    %535 = arith.divf %533, %534 : vector<8x1xf32>
    %536 = vector.broadcast %528 : vector<8x1xf32> to vector<8x32xf32>
    %537 = arith.subf %524, %536 : vector<8x32xf32>
    %cst_147 = arith.constant 9.99999974E-6 : f32
    %538 = vector.broadcast %cst_147 : f32 to vector<8x1xf32>
    %539 = arith.addf %535, %538 : vector<8x1xf32>
    %540 = math.rsqrt %539 : vector<8x1xf32>
    %541 = vector.broadcast %540 : vector<8x1xf32> to vector<8x32xf32>
    %542 = arith.mulf %537, %541 : vector<8x32xf32>
    %c42 = arith.constant 42 : index
    %c0_148 = arith.constant 0 : index
    %c0_149 = arith.constant 0 : index
    %543 = vector.load %arg2[%c42, %c0_148, %c0_149] : memref<106x32x32xf32, #tpu.memory_space<vmem>>, vector<1x1x32xf32>
    %544 = vector.shape_cast %543 : vector<1x1x32xf32> to vector<1x32xf32>
    %545 = vector.broadcast %544 : vector<1x32xf32> to vector<8x32xf32>
    %546 = arith.mulf %542, %545 : vector<8x32xf32>
    %c43 = arith.constant 43 : index
    %c0_150 = arith.constant 0 : index
    %c0_151 = arith.constant 0 : index
    %547 = vector.load %arg2[%c43, %c0_150, %c0_151] : memref<106x32x32xf32, #tpu.memory_space<vmem>>, vector<1x1x32xf32>
    %548 = vector.shape_cast %547 : vector<1x1x32xf32> to vector<1x32xf32>
    %549 = vector.broadcast %548 : vector<1x32xf32> to vector<8x32xf32>
    %550 = arith.addf %546, %549 : vector<8x32xf32>
    %c44 = arith.constant 44 : index
    %c0_152 = arith.constant 0 : index
    %c0_153 = arith.constant 0 : index
    %551 = vector.load %arg2[%c44, %c0_152, %c0_153] : memref<106x32x32xf32, #tpu.memory_space<vmem>>, vector<1x32x3xf32>
    %552 = vector.shape_cast %551 : vector<1x32x3xf32> to vector<32x3xf32>
    %c45 = arith.constant 45 : index
    %c0_154 = arith.constant 0 : index
    %c0_155 = arith.constant 0 : index
    %553 = vector.load %arg2[%c45, %c0_154, %c0_155] : memref<106x32x32xf32, #tpu.memory_space<vmem>>, vector<1x1x3xf32>
    %554 = vector.shape_cast %553 : vector<1x1x3xf32> to vector<1x3xf32>
    %cst_156 = arith.constant dense<0.000000e+00> : vector<8x3xf32>
    %555 = tpu.matmul %550, %552, %cst_156 {dimension_numbers = #tpu.dot_dimension_numbers<[1], [0], [0], [1], [0, 0, 1, 1], [], []>} : vector<8x32xf32>, vector<32x3xf32>, vector<8x3xf32> -> vector<8x3xf32>
    %556 = vector.broadcast %554 : vector<1x3xf32> to vector<8x3xf32>
    %557 = arith.addf %555, %556 : vector<8x3xf32>
    %c0_157 = arith.constant 0 : index
    %c0_158 = arith.constant 0 : index
    %c0_159 = arith.constant 0 : index
    %558 = vector.load %arg3[%c0_157, %c0_158, %c0_159] : memref<2x8x9xf32, #tpu.memory_space<vmem>>, vector<1x8x3xf32>
    %559 = vector.shape_cast %558 : vector<1x8x3xf32> to vector<8x3xf32>
    %560 = vector.shape_cast %557 : vector<8x3xf32> to vector<1x8x3xf32>
    tpu.vector_store %arg3[%c0_157, %c0_158, %c0_159], %560 {strides = array<i32>} : memref<2x8x9xf32, #tpu.memory_space<vmem>>, vector<1x8x3xf32>,
    %561 = vector.extract_strided_slice %557 {offsets = [1, 0], sizes = [1, 3], strides = [1, 1]} : vector<8x3xf32> to vector<1x3xf32>
    %562 = vector.extract_strided_slice %557 {offsets = [0, 0], sizes = [1, 3], strides = [1, 1]} : vector<8x3xf32> to vector<1x3xf32>
    %563 = arith.subf %561, %562 : vector<1x3xf32>
    %c0_160 = arith.constant 0 : index
    %c0_161 = arith.constant 0 : index
    %c3_162 = arith.constant 3 : index
    %564 = vector.load %arg3[%c0_160, %c0_161, %c3_162] : memref<2x8x9xf32, #tpu.memory_space<vmem>>, vector<1x1x3xf32>
    %565 = vector.shape_cast %564 : vector<1x1x3xf32> to vector<1x3xf32>
    %566 = vector.shape_cast %563 : vector<1x3xf32> to vector<1x1x3xf32>
    tpu.vector_store %arg3[%c0_160, %c0_161, %c3_162], %566 {strides = array<i32>} : memref<2x8x9xf32, #tpu.memory_space<vmem>>, vector<1x1x3xf32>,
    %567 = vector.extract_strided_slice %557 {offsets = [2, 0], sizes = [6, 3], strides = [1, 1]} : vector<8x3xf32> to vector<6x3xf32>
    %568 = vector.extract_strided_slice %557 {offsets = [0, 0], sizes = [6, 3], strides = [1, 1]} : vector<8x3xf32> to vector<6x3xf32>
    %569 = arith.subf %567, %568 : vector<6x3xf32>
    %cst_163 = arith.constant 5.000000e-01 : f32
    %570 = vector.broadcast %cst_163 : f32 to vector<6x3xf32>
    %571 = arith.mulf %569, %570 : vector<6x3xf32>
    %c0_164 = arith.constant 0 : index
    %c1_165 = arith.constant 1 : index
    %c3_166 = arith.constant 3 : index
    %572 = vector.load %arg3[%c0_164, %c1_165, %c3_166] : memref<2x8x9xf32, #tpu.memory_space<vmem>>, vector<1x6x3xf32>
    %573 = vector.shape_cast %572 : vector<1x6x3xf32> to vector<6x3xf32>
    %574 = vector.shape_cast %571 : vector<6x3xf32> to vector<1x6x3xf32>
    tpu.vector_store %arg3[%c0_164, %c1_165, %c3_166], %574 {strides = array<i32>} : memref<2x8x9xf32, #tpu.memory_space<vmem>>, vector<1x6x3xf32>,
    %575 = vector.extract_strided_slice %557 {offsets = [7, 0], sizes = [1, 3], strides = [1, 1]} : vector<8x3xf32> to vector<1x3xf32>
    %576 = vector.extract_strided_slice %557 {offsets = [6, 0], sizes = [1, 3], strides = [1, 1]} : vector<8x3xf32> to vector<1x3xf32>
    %577 = arith.subf %575, %576 : vector<1x3xf32>
    %c0_167 = arith.constant 0 : index
    %c7_168 = arith.constant 7 : index
    %c3_169 = arith.constant 3 : index
    %578 = vector.load %arg3[%c0_167, %c7_168, %c3_169] : memref<2x8x9xf32, #tpu.memory_space<vmem>>, vector<1x1x3xf32>
    %579 = vector.shape_cast %578 : vector<1x1x3xf32> to vector<1x3xf32>
    %580 = vector.shape_cast %577 : vector<1x3xf32> to vector<1x1x3xf32>
    tpu.vector_store %arg3[%c0_167, %c7_168, %c3_169], %580 {strides = array<i32>} : memref<2x8x9xf32, #tpu.memory_space<vmem>>, vector<1x1x3xf32>,
    %c48 = arith.constant 48 : index
    %c0_170 = arith.constant 0 : index
    %c0_171 = arith.constant 0 : index
    %581 = vector.load %arg2[%c48, %c0_170, %c0_171] : memref<106x32x32xf32, #tpu.memory_space<vmem>>, vector<1x8x8xf32>
    %582 = vector.shape_cast %581 : vector<1x8x8xf32> to vector<8x8xf32>
    %cst_172 = arith.constant dense<0.000000e+00> : vector<8xf32>
    %583 = vector.multi_reduction <add>, %557, %cst_172 [1] : vector<8x3xf32> to vector<8xf32>
    %584 = vector.shape_cast %583 : vector<8xf32> to vector<8x1xf32>
    %cst_173 = arith.constant 3.000000e+00 : f32
    %585 = vector.broadcast %cst_173 : f32 to vector<8x1xf32>
    %586 = arith.divf %584, %585 : vector<8x1xf32>
    %587 = vector.broadcast %586 : vector<8x1xf32> to vector<8x3xf32>
    %588 = arith.subf %557, %587 : vector<8x3xf32>
    %589 = arith.mulf %588, %588 : vector<8x3xf32>
    %cst_174 = arith.constant dense<0.000000e+00> : vector<8xf32>
    %590 = vector.multi_reduction <add>, %589, %cst_174 [1] : vector<8x3xf32> to vector<8xf32>
    %591 = vector.shape_cast %590 : vector<8xf32> to vector<8x1xf32>
    %cst_175 = arith.constant 3.000000e+00 : f32
    %592 = vector.broadcast %cst_175 : f32 to vector<8x1xf32>
    %593 = arith.divf %591, %592 : vector<8x1xf32>
    %594 = vector.broadcast %586 : vector<8x1xf32> to vector<8x3xf32>
    %595 = arith.subf %557, %594 : vector<8x3xf32>
    %cst_176 = arith.constant 9.99999974E-6 : f32
    %596 = vector.broadcast %cst_176 : f32 to vector<8x1xf32>
    %597 = arith.addf %593, %596 : vector<8x1xf32>
    %598 = math.rsqrt %597 : vector<8x1xf32>
    %599 = vector.broadcast %598 : vector<8x1xf32> to vector<8x3xf32>
    %600 = arith.mulf %595, %599 : vector<8x3xf32>
    %c46 = arith.constant 46 : index
    %c0_177 = arith.constant 0 : index
    %c0_178 = arith.constant 0 : index
    %601 = vector.load %arg2[%c46, %c0_177, %c0_178] : memref<106x32x32xf32, #tpu.memory_space<vmem>>, vector<1x1x3xf32>
    %602 = vector.shape_cast %601 : vector<1x1x3xf32> to vector<1x3xf32>
    %603 = vector.broadcast %602 : vector<1x3xf32> to vector<8x3xf32>
    %604 = arith.mulf %600, %603 : vector<8x3xf32>
    %c47 = arith.constant 47 : index
    %c0_179 = arith.constant 0 : index
    %c0_180 = arith.constant 0 : index
    %605 = vector.load %arg2[%c47, %c0_179, %c0_180] : memref<106x32x32xf32, #tpu.memory_space<vmem>>, vector<1x1x3xf32>
    %606 = vector.shape_cast %605 : vector<1x1x3xf32> to vector<1x3xf32>
    %607 = vector.broadcast %606 : vector<1x3xf32> to vector<8x3xf32>
    %608 = arith.addf %604, %607 : vector<8x3xf32>
    %c49 = arith.constant 49 : index
    %c0_181 = arith.constant 0 : index
    %c0_182 = arith.constant 0 : index
    %609 = vector.load %arg2[%c49, %c0_181, %c0_182] : memref<106x32x32xf32, #tpu.memory_space<vmem>>, vector<1x8x1xf32>
    %610 = vector.shape_cast %609 : vector<1x8x1xf32> to vector<8x1xf32>
    %611 = vector.extract_strided_slice %582 {offsets = [0, 0], sizes = [8, 1], strides = [1, 1]} : vector<8x8xf32> to vector<8x1xf32>
    %612 = vector.extract_strided_slice %608 {offsets = [0, 0], sizes = [1, 3], strides = [1, 1]} : vector<8x3xf32> to vector<1x3xf32>
    %613 = vector.broadcast %611 : vector<8x1xf32> to vector<8x3xf32>
    %614 = vector.broadcast %612 : vector<1x3xf32> to vector<8x3xf32>
    %615 = arith.mulf %613, %614 : vector<8x3xf32>
    %616 = vector.extract_strided_slice %582 {offsets = [0, 1], sizes = [8, 1], strides = [1, 1]} : vector<8x8xf32> to vector<8x1xf32>
    %617 = vector.extract_strided_slice %608 {offsets = [1, 0], sizes = [1, 3], strides = [1, 1]} : vector<8x3xf32> to vector<1x3xf32>
    %618 = vector.broadcast %616 : vector<8x1xf32> to vector<8x3xf32>
    %619 = vector.broadcast %617 : vector<1x3xf32> to vector<8x3xf32>
    %620 = arith.mulf %618, %619 : vector<8x3xf32>
    %621 = arith.addf %615, %620 : vector<8x3xf32>
    %622 = vector.extract_strided_slice %582 {offsets = [0, 2], sizes = [8, 1], strides = [1, 1]} : vector<8x8xf32> to vector<8x1xf32>
    %623 = vector.extract_strided_slice %608 {offsets = [2, 0], sizes = [1, 3], strides = [1, 1]} : vector<8x3xf32> to vector<1x3xf32>
    %624 = vector.broadcast %622 : vector<8x1xf32> to vector<8x3xf32>
    %625 = vector.broadcast %623 : vector<1x3xf32> to vector<8x3xf32>
    %626 = arith.mulf %624, %625 : vector<8x3xf32>
    %627 = arith.addf %621, %626 : vector<8x3xf32>
    %628 = vector.extract_strided_slice %582 {offsets = [0, 3], sizes = [8, 1], strides = [1, 1]} : vector<8x8xf32> to vector<8x1xf32>
    %629 = vector.extract_strided_slice %608 {offsets = [3, 0], sizes = [1, 3], strides = [1, 1]} : vector<8x3xf32> to vector<1x3xf32>
    %630 = vector.broadcast %628 : vector<8x1xf32> to vector<8x3xf32>
    %631 = vector.broadcast %629 : vector<1x3xf32> to vector<8x3xf32>
    %632 = arith.mulf %630, %631 : vector<8x3xf32>
    %633 = arith.addf %627, %632 : vector<8x3xf32>
    %634 = vector.extract_strided_slice %582 {offsets = [0, 4], sizes = [8, 1], strides = [1, 1]} : vector<8x8xf32> to vector<8x1xf32>
    %635 = vector.extract_strided_slice %608 {offsets = [4, 0], sizes = [1, 3], strides = [1, 1]} : vector<8x3xf32> to vector<1x3xf32>
    %636 = vector.broadcast %634 : vector<8x1xf32> to vector<8x3xf32>
    %637 = vector.broadcast %635 : vector<1x3xf32> to vector<8x3xf32>
    %638 = arith.mulf %636, %637 : vector<8x3xf32>
    %639 = arith.addf %633, %638 : vector<8x3xf32>
    %640 = vector.extract_strided_slice %582 {offsets = [0, 5], sizes = [8, 1], strides = [1, 1]} : vector<8x8xf32> to vector<8x1xf32>
    %641 = vector.extract_strided_slice %608 {offsets = [5, 0], sizes = [1, 3], strides = [1, 1]} : vector<8x3xf32> to vector<1x3xf32>
    %642 = vector.broadcast %640 : vector<8x1xf32> to vector<8x3xf32>
    %643 = vector.broadcast %641 : vector<1x3xf32> to vector<8x3xf32>
    %644 = arith.mulf %642, %643 : vector<8x3xf32>
    %645 = arith.addf %639, %644 : vector<8x3xf32>
    %646 = vector.extract_strided_slice %582 {offsets = [0, 6], sizes = [8, 1], strides = [1, 1]} : vector<8x8xf32> to vector<8x1xf32>
    %647 = vector.extract_strided_slice %608 {offsets = [6, 0], sizes = [1, 3], strides = [1, 1]} : vector<8x3xf32> to vector<1x3xf32>
    %648 = vector.broadcast %646 : vector<8x1xf32> to vector<8x3xf32>
    %649 = vector.broadcast %647 : vector<1x3xf32> to vector<8x3xf32>
    %650 = arith.mulf %648, %649 : vector<8x3xf32>
    %651 = arith.addf %645, %650 : vector<8x3xf32>
    %652 = vector.extract_strided_slice %582 {offsets = [0, 7], sizes = [8, 1], strides = [1, 1]} : vector<8x8xf32> to vector<8x1xf32>
    %653 = vector.extract_strided_slice %608 {offsets = [7, 0], sizes = [1, 3], strides = [1, 1]} : vector<8x3xf32> to vector<1x3xf32>
    %654 = vector.broadcast %652 : vector<8x1xf32> to vector<8x3xf32>
    %655 = vector.broadcast %653 : vector<1x3xf32> to vector<8x3xf32>
    %656 = arith.mulf %654, %655 : vector<8x3xf32>
    %657 = arith.addf %651, %656 : vector<8x3xf32>
    %658 = vector.broadcast %610 : vector<8x1xf32> to vector<8x3xf32>
    %659 = arith.addf %657, %658 : vector<8x3xf32>
    %cst_183 = arith.constant 0.000000e+00 : f32
    %660 = vector.broadcast %cst_183 : f32 to vector<8x3xf32>
    %661 = arith.maximumf %659, %660 : vector<8x3xf32>
    %662 = arith.addf %557, %661 : vector<8x3xf32>
    %c56 = arith.constant 56 : index
    %c0_184 = arith.constant 0 : index
    %c0_185 = arith.constant 0 : index
    %663 = vector.load %arg2[%c56, %c0_184, %c0_185] : memref<106x32x32xf32, #tpu.memory_space<vmem>>, vector<1x3x2xf32>
    %664 = vector.shape_cast %663 : vector<1x3x2xf32> to vector<3x2xf32>
    %c57 = arith.constant 57 : index
    %c0_186 = arith.constant 0 : index
    %c0_187 = arith.constant 0 : index
    %665 = vector.load %arg2[%c57, %c0_186, %c0_187] : memref<106x32x32xf32, #tpu.memory_space<vmem>>, vector<1x1x2xf32>
    %666 = vector.shape_cast %665 : vector<1x1x2xf32> to vector<1x2xf32>
    %667 = vector.extract_strided_slice %662 {offsets = [0, 0], sizes = [8, 1], strides = [1, 1]} : vector<8x3xf32> to vector<8x1xf32>
    %668 = vector.extract_strided_slice %664 {offsets = [0, 0], sizes = [1, 2], strides = [1, 1]} : vector<3x2xf32> to vector<1x2xf32>
    %669 = vector.broadcast %667 : vector<8x1xf32> to vector<8x2xf32>
    %670 = vector.broadcast %668 : vector<1x2xf32> to vector<8x2xf32>
    %671 = arith.mulf %669, %670 : vector<8x2xf32>
    %672 = vector.extract_strided_slice %662 {offsets = [0, 1], sizes = [8, 1], strides = [1, 1]} : vector<8x3xf32> to vector<8x1xf32>
    %673 = vector.extract_strided_slice %664 {offsets = [1, 0], sizes = [1, 2], strides = [1, 1]} : vector<3x2xf32> to vector<1x2xf32>
    %674 = vector.broadcast %672 : vector<8x1xf32> to vector<8x2xf32>
    %675 = vector.broadcast %673 : vector<1x2xf32> to vector<8x2xf32>
    %676 = arith.mulf %674, %675 : vector<8x2xf32>
    %677 = arith.addf %671, %676 : vector<8x2xf32>
    %678 = vector.extract_strided_slice %662 {offsets = [0, 2], sizes = [8, 1], strides = [1, 1]} : vector<8x3xf32> to vector<8x1xf32>
    %679 = vector.extract_strided_slice %664 {offsets = [2, 0], sizes = [1, 2], strides = [1, 1]} : vector<3x2xf32> to vector<1x2xf32>
    %680 = vector.broadcast %678 : vector<8x1xf32> to vector<8x2xf32>
    %681 = vector.broadcast %679 : vector<1x2xf32> to vector<8x2xf32>
    %682 = arith.mulf %680, %681 : vector<8x2xf32>
    %683 = arith.addf %677, %682 : vector<8x2xf32>
    %684 = vector.broadcast %666 : vector<1x2xf32> to vector<8x2xf32>
    %685 = arith.addf %683, %684 : vector<8x2xf32>
    %cst_188 = arith.constant dense<0.000000e+00> : vector<8xf32>
    %686 = vector.multi_reduction <add>, %662, %cst_188 [1] : vector<8x3xf32> to vector<8xf32>
    %687 = vector.shape_cast %686 : vector<8xf32> to vector<8x1xf32>
    %cst_189 = arith.constant 3.000000e+00 : f32
    %688 = vector.broadcast %cst_189 : f32 to vector<8x1xf32>
    %689 = arith.divf %687, %688 : vector<8x1xf32>
    %690 = vector.broadcast %689 : vector<8x1xf32> to vector<8x3xf32>
    %691 = arith.subf %662, %690 : vector<8x3xf32>
    %692 = arith.mulf %691, %691 : vector<8x3xf32>
    %cst_190 = arith.constant dense<0.000000e+00> : vector<8xf32>
    %693 = vector.multi_reduction <add>, %692, %cst_190 [1] : vector<8x3xf32> to vector<8xf32>
    %694 = vector.shape_cast %693 : vector<8xf32> to vector<8x1xf32>
    %cst_191 = arith.constant 3.000000e+00 : f32
    %695 = vector.broadcast %cst_191 : f32 to vector<8x1xf32>
    %696 = arith.divf %694, %695 : vector<8x1xf32>
    %697 = vector.broadcast %689 : vector<8x1xf32> to vector<8x3xf32>
    %698 = arith.subf %662, %697 : vector<8x3xf32>
    %cst_192 = arith.constant 9.99999974E-6 : f32
    %699 = vector.broadcast %cst_192 : f32 to vector<8x1xf32>
    %700 = arith.addf %696, %699 : vector<8x1xf32>
    %701 = math.rsqrt %700 : vector<8x1xf32>
    %702 = vector.broadcast %701 : vector<8x1xf32> to vector<8x3xf32>
    %703 = arith.mulf %698, %702 : vector<8x3xf32>
    %c50 = arith.constant 50 : index
    %c0_193 = arith.constant 0 : index
    %c0_194 = arith.constant 0 : index
    %704 = vector.load %arg2[%c50, %c0_193, %c0_194] : memref<106x32x32xf32, #tpu.memory_space<vmem>>, vector<1x1x3xf32>
    %705 = vector.shape_cast %704 : vector<1x1x3xf32> to vector<1x3xf32>
    %706 = vector.broadcast %705 : vector<1x3xf32> to vector<8x3xf32>
    %707 = arith.mulf %703, %706 : vector<8x3xf32>
    %c51 = arith.constant 51 : index
    %c0_195 = arith.constant 0 : index
    %c0_196 = arith.constant 0 : index
    %708 = vector.load %arg2[%c51, %c0_195, %c0_196] : memref<106x32x32xf32, #tpu.memory_space<vmem>>, vector<1x1x3xf32>
    %709 = vector.shape_cast %708 : vector<1x1x3xf32> to vector<1x3xf32>
    %710 = vector.broadcast %709 : vector<1x3xf32> to vector<8x3xf32>
    %711 = arith.addf %707, %710 : vector<8x3xf32>
    %c52 = arith.constant 52 : index
    %c0_197 = arith.constant 0 : index
    %c0_198 = arith.constant 0 : index
    %712 = vector.load %arg2[%c52, %c0_197, %c0_198] : memref<106x32x32xf32, #tpu.memory_space<vmem>>, vector<1x3x32xf32>
    %713 = vector.shape_cast %712 : vector<1x3x32xf32> to vector<3x32xf32>
    %c53 = arith.constant 53 : index
    %c0_199 = arith.constant 0 : index
    %c0_200 = arith.constant 0 : index
    %714 = vector.load %arg2[%c53, %c0_199, %c0_200] : memref<106x32x32xf32, #tpu.memory_space<vmem>>, vector<1x1x32xf32>
    %715 = vector.shape_cast %714 : vector<1x1x32xf32> to vector<1x32xf32>
    %716 = vector.extract_strided_slice %711 {offsets = [0, 0], sizes = [8, 1], strides = [1, 1]} : vector<8x3xf32> to vector<8x1xf32>
    %717 = vector.extract_strided_slice %713 {offsets = [0, 0], sizes = [1, 32], strides = [1, 1]} : vector<3x32xf32> to vector<1x32xf32>
    %718 = vector.broadcast %716 : vector<8x1xf32> to vector<8x32xf32>
    %719 = vector.broadcast %717 : vector<1x32xf32> to vector<8x32xf32>
    %720 = arith.mulf %718, %719 : vector<8x32xf32>
    %721 = vector.extract_strided_slice %711 {offsets = [0, 1], sizes = [8, 1], strides = [1, 1]} : vector<8x3xf32> to vector<8x1xf32>
    %722 = vector.extract_strided_slice %713 {offsets = [1, 0], sizes = [1, 32], strides = [1, 1]} : vector<3x32xf32> to vector<1x32xf32>
    %723 = vector.broadcast %721 : vector<8x1xf32> to vector<8x32xf32>
    %724 = vector.broadcast %722 : vector<1x32xf32> to vector<8x32xf32>
    %725 = arith.mulf %723, %724 : vector<8x32xf32>
    %726 = arith.addf %720, %725 : vector<8x32xf32>
    %727 = vector.extract_strided_slice %711 {offsets = [0, 2], sizes = [8, 1], strides = [1, 1]} : vector<8x3xf32> to vector<8x1xf32>
    %728 = vector.extract_strided_slice %713 {offsets = [2, 0], sizes = [1, 32], strides = [1, 1]} : vector<3x32xf32> to vector<1x32xf32>
    %729 = vector.broadcast %727 : vector<8x1xf32> to vector<8x32xf32>
    %730 = vector.broadcast %728 : vector<1x32xf32> to vector<8x32xf32>
    %731 = arith.mulf %729, %730 : vector<8x32xf32>
    %732 = arith.addf %726, %731 : vector<8x32xf32>
    %733 = vector.broadcast %715 : vector<1x32xf32> to vector<8x32xf32>
    %734 = arith.addf %732, %733 : vector<8x32xf32>
    %cst_201 = arith.constant 0.000000e+00 : f32
    %735 = vector.broadcast %cst_201 : f32 to vector<8x32xf32>
    %736 = arith.maximumf %734, %735 : vector<8x32xf32>
    %c54 = arith.constant 54 : index
    %c0_202 = arith.constant 0 : index
    %c0_203 = arith.constant 0 : index
    %737 = vector.load %arg2[%c54, %c0_202, %c0_203] : memref<106x32x32xf32, #tpu.memory_space<vmem>>, vector<1x32x2xf32>
    %738 = vector.shape_cast %737 : vector<1x32x2xf32> to vector<32x2xf32>
    %c55 = arith.constant 55 : index
    %c0_204 = arith.constant 0 : index
    %c0_205 = arith.constant 0 : index
    %739 = vector.load %arg2[%c55, %c0_204, %c0_205] : memref<106x32x32xf32, #tpu.memory_space<vmem>>, vector<1x1x2xf32>
    %740 = vector.shape_cast %739 : vector<1x1x2xf32> to vector<1x2xf32>
    %cst_206 = arith.constant dense<0.000000e+00> : vector<8x2xf32>
    %741 = tpu.matmul %736, %738, %cst_206 {dimension_numbers = #tpu.dot_dimension_numbers<[1], [0], [0], [1], [0, 0, 1, 1], [], []>} : vector<8x32xf32>, vector<32x2xf32>, vector<8x2xf32> -> vector<8x2xf32>
    %742 = vector.broadcast %740 : vector<1x2xf32> to vector<8x2xf32>
    %743 = arith.addf %741, %742 : vector<8x2xf32>
    %744 = arith.addf %685, %743 : vector<8x2xf32>
    %c60 = arith.constant 60 : index
    %c0_207 = arith.constant 0 : index
    %c0_208 = arith.constant 0 : index
    %745 = vector.load %arg2[%c60, %c0_207, %c0_208] : memref<106x32x32xf32, #tpu.memory_space<vmem>>, vector<1x8x8xf32>
    %746 = vector.shape_cast %745 : vector<1x8x8xf32> to vector<8x8xf32>
    %cst_209 = arith.constant dense<0.000000e+00> : vector<8xf32>
    %747 = vector.multi_reduction <add>, %744, %cst_209 [1] : vector<8x2xf32> to vector<8xf32>
    %748 = vector.shape_cast %747 : vector<8xf32> to vector<8x1xf32>
    %cst_210 = arith.constant 2.000000e+00 : f32
    %749 = vector.broadcast %cst_210 : f32 to vector<8x1xf32>
    %750 = arith.divf %748, %749 : vector<8x1xf32>
    %751 = vector.broadcast %750 : vector<8x1xf32> to vector<8x2xf32>
    %752 = arith.subf %744, %751 : vector<8x2xf32>
    %753 = arith.mulf %752, %752 : vector<8x2xf32>
    %cst_211 = arith.constant dense<0.000000e+00> : vector<8xf32>
    %754 = vector.multi_reduction <add>, %753, %cst_211 [1] : vector<8x2xf32> to vector<8xf32>
    %755 = vector.shape_cast %754 : vector<8xf32> to vector<8x1xf32>
    %cst_212 = arith.constant 2.000000e+00 : f32
    %756 = vector.broadcast %cst_212 : f32 to vector<8x1xf32>
    %757 = arith.divf %755, %756 : vector<8x1xf32>
    %758 = vector.broadcast %750 : vector<8x1xf32> to vector<8x2xf32>
    %759 = arith.subf %744, %758 : vector<8x2xf32>
    %cst_213 = arith.constant 9.99999974E-6 : f32
    %760 = vector.broadcast %cst_213 : f32 to vector<8x1xf32>
    %761 = arith.addf %757, %760 : vector<8x1xf32>
    %762 = math.rsqrt %761 : vector<8x1xf32>
    %763 = vector.broadcast %762 : vector<8x1xf32> to vector<8x2xf32>
    %764 = arith.mulf %759, %763 : vector<8x2xf32>
    %c58 = arith.constant 58 : index
    %c0_214 = arith.constant 0 : index
    %c0_215 = arith.constant 0 : index
    %765 = vector.load %arg2[%c58, %c0_214, %c0_215] : memref<106x32x32xf32, #tpu.memory_space<vmem>>, vector<1x1x2xf32>
    %766 = vector.shape_cast %765 : vector<1x1x2xf32> to vector<1x2xf32>
    %767 = vector.broadcast %766 : vector<1x2xf32> to vector<8x2xf32>
    %768 = arith.mulf %764, %767 : vector<8x2xf32>
    %c59 = arith.constant 59 : index
    %c0_216 = arith.constant 0 : index
    %c0_217 = arith.constant 0 : index
    %769 = vector.load %arg2[%c59, %c0_216, %c0_217] : memref<106x32x32xf32, #tpu.memory_space<vmem>>, vector<1x1x2xf32>
    %770 = vector.shape_cast %769 : vector<1x1x2xf32> to vector<1x2xf32>
    %771 = vector.broadcast %770 : vector<1x2xf32> to vector<8x2xf32>
    %772 = arith.addf %768, %771 : vector<8x2xf32>
    %c61 = arith.constant 61 : index
    %c0_218 = arith.constant 0 : index
    %c0_219 = arith.constant 0 : index
    %773 = vector.load %arg2[%c61, %c0_218, %c0_219] : memref<106x32x32xf32, #tpu.memory_space<vmem>>, vector<1x8x1xf32>
    %774 = vector.shape_cast %773 : vector<1x8x1xf32> to vector<8x1xf32>
    %775 = vector.extract_strided_slice %746 {offsets = [0, 0], sizes = [8, 1], strides = [1, 1]} : vector<8x8xf32> to vector<8x1xf32>
    %776 = vector.extract_strided_slice %772 {offsets = [0, 0], sizes = [1, 2], strides = [1, 1]} : vector<8x2xf32> to vector<1x2xf32>
    %777 = vector.broadcast %775 : vector<8x1xf32> to vector<8x2xf32>
    %778 = vector.broadcast %776 : vector<1x2xf32> to vector<8x2xf32>
    %779 = arith.mulf %777, %778 : vector<8x2xf32>
    %780 = vector.extract_strided_slice %746 {offsets = [0, 1], sizes = [8, 1], strides = [1, 1]} : vector<8x8xf32> to vector<8x1xf32>
    %781 = vector.extract_strided_slice %772 {offsets = [1, 0], sizes = [1, 2], strides = [1, 1]} : vector<8x2xf32> to vector<1x2xf32>
    %782 = vector.broadcast %780 : vector<8x1xf32> to vector<8x2xf32>
    %783 = vector.broadcast %781 : vector<1x2xf32> to vector<8x2xf32>
    %784 = arith.mulf %782, %783 : vector<8x2xf32>
    %785 = arith.addf %779, %784 : vector<8x2xf32>
    %786 = vector.extract_strided_slice %746 {offsets = [0, 2], sizes = [8, 1], strides = [1, 1]} : vector<8x8xf32> to vector<8x1xf32>
    %787 = vector.extract_strided_slice %772 {offsets = [2, 0], sizes = [1, 2], strides = [1, 1]} : vector<8x2xf32> to vector<1x2xf32>
    %788 = vector.broadcast %786 : vector<8x1xf32> to vector<8x2xf32>
    %789 = vector.broadcast %787 : vector<1x2xf32> to vector<8x2xf32>
    %790 = arith.mulf %788, %789 : vector<8x2xf32>
    %791 = arith.addf %785, %790 : vector<8x2xf32>
    %792 = vector.extract_strided_slice %746 {offsets = [0, 3], sizes = [8, 1], strides = [1, 1]} : vector<8x8xf32> to vector<8x1xf32>
    %793 = vector.extract_strided_slice %772 {offsets = [3, 0], sizes = [1, 2], strides = [1, 1]} : vector<8x2xf32> to vector<1x2xf32>
    %794 = vector.broadcast %792 : vector<8x1xf32> to vector<8x2xf32>
    %795 = vector.broadcast %793 : vector<1x2xf32> to vector<8x2xf32>
    %796 = arith.mulf %794, %795 : vector<8x2xf32>
    %797 = arith.addf %791, %796 : vector<8x2xf32>
    %798 = vector.extract_strided_slice %746 {offsets = [0, 4], sizes = [8, 1], strides = [1, 1]} : vector<8x8xf32> to vector<8x1xf32>
    %799 = vector.extract_strided_slice %772 {offsets = [4, 0], sizes = [1, 2], strides = [1, 1]} : vector<8x2xf32> to vector<1x2xf32>
    %800 = vector.broadcast %798 : vector<8x1xf32> to vector<8x2xf32>
    %801 = vector.broadcast %799 : vector<1x2xf32> to vector<8x2xf32>
    %802 = arith.mulf %800, %801 : vector<8x2xf32>
    %803 = arith.addf %797, %802 : vector<8x2xf32>
    %804 = vector.extract_strided_slice %746 {offsets = [0, 5], sizes = [8, 1], strides = [1, 1]} : vector<8x8xf32> to vector<8x1xf32>
    %805 = vector.extract_strided_slice %772 {offsets = [5, 0], sizes = [1, 2], strides = [1, 1]} : vector<8x2xf32> to vector<1x2xf32>
    %806 = vector.broadcast %804 : vector<8x1xf32> to vector<8x2xf32>
    %807 = vector.broadcast %805 : vector<1x2xf32> to vector<8x2xf32>
    %808 = arith.mulf %806, %807 : vector<8x2xf32>
    %809 = arith.addf %803, %808 : vector<8x2xf32>
    %810 = vector.extract_strided_slice %746 {offsets = [0, 6], sizes = [8, 1], strides = [1, 1]} : vector<8x8xf32> to vector<8x1xf32>
    %811 = vector.extract_strided_slice %772 {offsets = [6, 0], sizes = [1, 2], strides = [1, 1]} : vector<8x2xf32> to vector<1x2xf32>
    %812 = vector.broadcast %810 : vector<8x1xf32> to vector<8x2xf32>
    %813 = vector.broadcast %811 : vector<1x2xf32> to vector<8x2xf32>
    %814 = arith.mulf %812, %813 : vector<8x2xf32>
    %815 = arith.addf %809, %814 : vector<8x2xf32>
    %816 = vector.extract_strided_slice %746 {offsets = [0, 7], sizes = [8, 1], strides = [1, 1]} : vector<8x8xf32> to vector<8x1xf32>
    %817 = vector.extract_strided_slice %772 {offsets = [7, 0], sizes = [1, 2], strides = [1, 1]} : vector<8x2xf32> to vector<1x2xf32>
    %818 = vector.broadcast %816 : vector<8x1xf32> to vector<8x2xf32>
    %819 = vector.broadcast %817 : vector<1x2xf32> to vector<8x2xf32>
    %820 = arith.mulf %818, %819 : vector<8x2xf32>
    %821 = arith.addf %815, %820 : vector<8x2xf32>
    %822 = vector.broadcast %774 : vector<8x1xf32> to vector<8x2xf32>
    %823 = arith.addf %821, %822 : vector<8x2xf32>
    %cst_220 = arith.constant 0.000000e+00 : f32
    %824 = vector.broadcast %cst_220 : f32 to vector<8x2xf32>
    %825 = arith.maximumf %823, %824 : vector<8x2xf32>
    %826 = arith.addf %744, %825 : vector<8x2xf32>
    %cst_221 = arith.constant dense<0.000000e+00> : vector<8xf32>
    %827 = vector.multi_reduction <add>, %826, %cst_221 [1] : vector<8x2xf32> to vector<8xf32>
    %828 = vector.shape_cast %827 : vector<8xf32> to vector<8x1xf32>
    %cst_222 = arith.constant 2.000000e+00 : f32
    %829 = vector.broadcast %cst_222 : f32 to vector<8x1xf32>
    %830 = arith.divf %828, %829 : vector<8x1xf32>
    %831 = vector.broadcast %830 : vector<8x1xf32> to vector<8x2xf32>
    %832 = arith.subf %826, %831 : vector<8x2xf32>
    %833 = arith.mulf %832, %832 : vector<8x2xf32>
    %cst_223 = arith.constant dense<0.000000e+00> : vector<8xf32>
    %834 = vector.multi_reduction <add>, %833, %cst_223 [1] : vector<8x2xf32> to vector<8xf32>
    %835 = vector.shape_cast %834 : vector<8xf32> to vector<8x1xf32>
    %cst_224 = arith.constant 2.000000e+00 : f32
    %836 = vector.broadcast %cst_224 : f32 to vector<8x1xf32>
    %837 = arith.divf %835, %836 : vector<8x1xf32>
    %838 = vector.broadcast %830 : vector<8x1xf32> to vector<8x2xf32>
    %839 = arith.subf %826, %838 : vector<8x2xf32>
    %cst_225 = arith.constant 9.99999974E-6 : f32
    %840 = vector.broadcast %cst_225 : f32 to vector<8x1xf32>
    %841 = arith.addf %837, %840 : vector<8x1xf32>
    %842 = math.rsqrt %841 : vector<8x1xf32>
    %843 = vector.broadcast %842 : vector<8x1xf32> to vector<8x2xf32>
    %844 = arith.mulf %839, %843 : vector<8x2xf32>
    %c62 = arith.constant 62 : index
    %c0_226 = arith.constant 0 : index
    %c0_227 = arith.constant 0 : index
    %845 = vector.load %arg2[%c62, %c0_226, %c0_227] : memref<106x32x32xf32, #tpu.memory_space<vmem>>, vector<1x1x2xf32>
    %846 = vector.shape_cast %845 : vector<1x1x2xf32> to vector<1x2xf32>
    %847 = vector.broadcast %846 : vector<1x2xf32> to vector<8x2xf32>
    %848 = arith.mulf %844, %847 : vector<8x2xf32>
    %c63 = arith.constant 63 : index
    %c0_228 = arith.constant 0 : index
    %c0_229 = arith.constant 0 : index
    %849 = vector.load %arg2[%c63, %c0_228, %c0_229] : memref<106x32x32xf32, #tpu.memory_space<vmem>>, vector<1x1x2xf32>
    %850 = vector.shape_cast %849 : vector<1x1x2xf32> to vector<1x2xf32>
    %851 = vector.broadcast %850 : vector<1x2xf32> to vector<8x2xf32>
    %852 = arith.addf %848, %851 : vector<8x2xf32>
    %c64 = arith.constant 64 : index
    %c0_230 = arith.constant 0 : index
    %c0_231 = arith.constant 0 : index
    %853 = vector.load %arg2[%c64, %c0_230, %c0_231] : memref<106x32x32xf32, #tpu.memory_space<vmem>>, vector<1x2x32xf32>
    %854 = vector.shape_cast %853 : vector<1x2x32xf32> to vector<2x32xf32>
    %c65 = arith.constant 65 : index
    %c0_232 = arith.constant 0 : index
    %c0_233 = arith.constant 0 : index
    %855 = vector.load %arg2[%c65, %c0_232, %c0_233] : memref<106x32x32xf32, #tpu.memory_space<vmem>>, vector<1x1x32xf32>
    %856 = vector.shape_cast %855 : vector<1x1x32xf32> to vector<1x32xf32>
    %857 = vector.extract_strided_slice %852 {offsets = [0, 0], sizes = [8, 1], strides = [1, 1]} : vector<8x2xf32> to vector<8x1xf32>
    %858 = vector.extract_strided_slice %854 {offsets = [0, 0], sizes = [1, 32], strides = [1, 1]} : vector<2x32xf32> to vector<1x32xf32>
    %859 = vector.broadcast %857 : vector<8x1xf32> to vector<8x32xf32>
    %860 = vector.broadcast %858 : vector<1x32xf32> to vector<8x32xf32>
    %861 = arith.mulf %859, %860 : vector<8x32xf32>
    %862 = vector.extract_strided_slice %852 {offsets = [0, 1], sizes = [8, 1], strides = [1, 1]} : vector<8x2xf32> to vector<8x1xf32>
    %863 = vector.extract_strided_slice %854 {offsets = [1, 0], sizes = [1, 32], strides = [1, 1]} : vector<2x32xf32> to vector<1x32xf32>
    %864 = vector.broadcast %862 : vector<8x1xf32> to vector<8x32xf32>
    %865 = vector.broadcast %863 : vector<1x32xf32> to vector<8x32xf32>
    %866 = arith.mulf %864, %865 : vector<8x32xf32>
    %867 = arith.addf %861, %866 : vector<8x32xf32>
    %868 = vector.broadcast %856 : vector<1x32xf32> to vector<8x32xf32>
    %869 = arith.addf %867, %868 : vector<8x32xf32>
    %cst_234 = arith.constant 0.000000e+00 : f32
    %870 = vector.broadcast %cst_234 : f32 to vector<8x32xf32>
    %871 = arith.maximumf %869, %870 : vector<8x32xf32>
    %c66 = arith.constant 66 : index
    %c0_235 = arith.constant 0 : index
    %c0_236 = arith.constant 0 : index
    %872 = vector.load %arg2[%c66, %c0_235, %c0_236] : memref<106x32x32xf32, #tpu.memory_space<vmem>>, vector<1x32x2xf32>
    %873 = vector.shape_cast %872 : vector<1x32x2xf32> to vector<32x2xf32>
    %c67 = arith.constant 67 : index
    %c0_237 = arith.constant 0 : index
    %c0_238 = arith.constant 0 : index
    %874 = vector.load %arg2[%c67, %c0_237, %c0_238] : memref<106x32x32xf32, #tpu.memory_space<vmem>>, vector<1x1x2xf32>
    %875 = vector.shape_cast %874 : vector<1x1x2xf32> to vector<1x2xf32>
    %cst_239 = arith.constant dense<0.000000e+00> : vector<8x2xf32>
    %876 = tpu.matmul %871, %873, %cst_239 {dimension_numbers = #tpu.dot_dimension_numbers<[1], [0], [0], [1], [0, 0, 1, 1], [], []>} : vector<8x32xf32>, vector<32x2xf32>, vector<8x2xf32> -> vector<8x2xf32>
    %877 = vector.broadcast %875 : vector<1x2xf32> to vector<8x2xf32>
    %878 = arith.addf %876, %877 : vector<8x2xf32>
    %879 = arith.addf %826, %878 : vector<8x2xf32>
    %c68 = arith.constant 68 : index
    %c0_240 = arith.constant 0 : index
    %c0_241 = arith.constant 0 : index
    %880 = vector.load %arg2[%c68, %c0_240, %c0_241] : memref<106x32x32xf32, #tpu.memory_space<vmem>>, vector<1x2x8xf32>
    %881 = vector.shape_cast %880 : vector<1x2x8xf32> to vector<2x8xf32>
    %c69 = arith.constant 69 : index
    %c0_242 = arith.constant 0 : index
    %c0_243 = arith.constant 0 : index
    %882 = vector.load %arg2[%c69, %c0_242, %c0_243] : memref<106x32x32xf32, #tpu.memory_space<vmem>>, vector<1x1x8xf32>
    %883 = vector.shape_cast %882 : vector<1x1x8xf32> to vector<1x8xf32>
    %884 = vector.extract_strided_slice %879 {offsets = [0, 0], sizes = [8, 1], strides = [1, 1]} : vector<8x2xf32> to vector<8x1xf32>
    %885 = vector.extract_strided_slice %881 {offsets = [0, 0], sizes = [1, 8], strides = [1, 1]} : vector<2x8xf32> to vector<1x8xf32>
    %886 = vector.broadcast %884 : vector<8x1xf32> to vector<8x8xf32>
    %887 = vector.broadcast %885 : vector<1x8xf32> to vector<8x8xf32>
    %888 = arith.mulf %886, %887 : vector<8x8xf32>
    %889 = vector.extract_strided_slice %879 {offsets = [0, 1], sizes = [8, 1], strides = [1, 1]} : vector<8x2xf32> to vector<8x1xf32>
    %890 = vector.extract_strided_slice %881 {offsets = [1, 0], sizes = [1, 8], strides = [1, 1]} : vector<2x8xf32> to vector<1x8xf32>
    %891 = vector.broadcast %889 : vector<8x1xf32> to vector<8x8xf32>
    %892 = vector.broadcast %890 : vector<1x8xf32> to vector<8x8xf32>
    %893 = arith.mulf %891, %892 : vector<8x8xf32>
    %894 = arith.addf %888, %893 : vector<8x8xf32>
    %895 = vector.broadcast %883 : vector<1x8xf32> to vector<8x8xf32>
    %896 = arith.addf %894, %895 : vector<8x8xf32>
    %cst_244 = arith.constant 0.000000e+00 : f32
    %897 = vector.broadcast %cst_244 : f32 to vector<8x8xf32>
    %898 = arith.cmpf oge, %896, %897 : vector<8x8xf32>
    %cst_245 = arith.constant 0.00999999977 : f32
    %899 = vector.broadcast %cst_245 : f32 to vector<8x8xf32>
    %900 = arith.mulf %899, %896 : vector<8x8xf32>
    %901 = arith.select %898, %896, %900 : vector<8x8xi1>, vector<8x8xf32>
    %cst_246 = arith.constant dense<0.000000e+00> : vector<8xf32>
    %902 = vector.multi_reduction <add>, %901, %cst_246 [1] : vector<8x8xf32> to vector<8xf32>
    %903 = vector.shape_cast %902 : vector<8xf32> to vector<8x1xf32>
    %cst_247 = arith.constant 8.000000e+00 : f32
    %904 = vector.broadcast %cst_247 : f32 to vector<8x1xf32>
    %905 = arith.divf %903, %904 : vector<8x1xf32>
    %906 = vector.broadcast %905 : vector<8x1xf32> to vector<8x8xf32>
    %907 = arith.subf %901, %906 : vector<8x8xf32>
    %908 = arith.mulf %907, %907 : vector<8x8xf32>
    %cst_248 = arith.constant dense<0.000000e+00> : vector<8xf32>
    %909 = vector.multi_reduction <add>, %908, %cst_248 [1] : vector<8x8xf32> to vector<8xf32>
    %910 = vector.shape_cast %909 : vector<8xf32> to vector<8x1xf32>
    %cst_249 = arith.constant 8.000000e+00 : f32
    %911 = vector.broadcast %cst_249 : f32 to vector<8x1xf32>
    %912 = arith.divf %910, %911 : vector<8x1xf32>
    %913 = vector.broadcast %905 : vector<8x1xf32> to vector<8x8xf32>
    %914 = arith.subf %901, %913 : vector<8x8xf32>
    %cst_250 = arith.constant 9.99999974E-6 : f32
    %915 = vector.broadcast %cst_250 : f32 to vector<8x1xf32>
    %916 = arith.addf %912, %915 : vector<8x1xf32>
    %917 = math.rsqrt %916 : vector<8x1xf32>
    %918 = vector.broadcast %917 : vector<8x1xf32> to vector<8x8xf32>
    %919 = arith.mulf %914, %918 : vector<8x8xf32>
    %c70 = arith.constant 70 : index
    %c0_251 = arith.constant 0 : index
    %c0_252 = arith.constant 0 : index
    %920 = vector.load %arg2[%c70, %c0_251, %c0_252] : memref<106x32x32xf32, #tpu.memory_space<vmem>>, vector<1x1x8xf32>
    %921 = vector.shape_cast %920 : vector<1x1x8xf32> to vector<1x8xf32>
    %922 = vector.broadcast %921 : vector<1x8xf32> to vector<8x8xf32>
    %923 = arith.mulf %919, %922 : vector<8x8xf32>
    %c71 = arith.constant 71 : index
    %c0_253 = arith.constant 0 : index
    %c0_254 = arith.constant 0 : index
    %924 = vector.load %arg2[%c71, %c0_253, %c0_254] : memref<106x32x32xf32, #tpu.memory_space<vmem>>, vector<1x1x8xf32>
    %925 = vector.shape_cast %924 : vector<1x1x8xf32> to vector<1x8xf32>
    %926 = vector.broadcast %925 : vector<1x8xf32> to vector<8x8xf32>
    %927 = arith.addf %923, %926 : vector<8x8xf32>
    %c72 = arith.constant 72 : index
    %c0_255 = arith.constant 0 : index
    %c0_256 = arith.constant 0 : index
    %928 = vector.load %arg2[%c72, %c0_255, %c0_256] : memref<106x32x32xf32, #tpu.memory_space<vmem>>, vector<1x8x1xf32>
    %929 = vector.shape_cast %928 : vector<1x8x1xf32> to vector<8x1xf32>
    %c73 = arith.constant 73 : index
    %c0_257 = arith.constant 0 : index
    %c0_258 = arith.constant 0 : index
    %930 = vector.load %arg2[%c73, %c0_257, %c0_258] : memref<106x32x32xf32, #tpu.memory_space<vmem>>, vector<1x1x1xf32>
    %931 = vector.shape_cast %930 : vector<1x1x1xf32> to vector<1x1xf32>
    %932 = vector.extract_strided_slice %927 {offsets = [0, 0], sizes = [8, 1], strides = [1, 1]} : vector<8x8xf32> to vector<8x1xf32>
    %933 = vector.extract_strided_slice %929 {offsets = [0, 0], sizes = [1, 1], strides = [1, 1]} : vector<8x1xf32> to vector<1x1xf32>
    %934 = vector.broadcast %933 : vector<1x1xf32> to vector<8x1xf32>
    %935 = arith.mulf %932, %934 : vector<8x1xf32>
    %936 = vector.extract_strided_slice %927 {offsets = [0, 1], sizes = [8, 1], strides = [1, 1]} : vector<8x8xf32> to vector<8x1xf32>
    %937 = vector.extract_strided_slice %929 {offsets = [1, 0], sizes = [1, 1], strides = [1, 1]} : vector<8x1xf32> to vector<1x1xf32>
    %938 = vector.broadcast %937 : vector<1x1xf32> to vector<8x1xf32>
    %939 = arith.mulf %936, %938 : vector<8x1xf32>
    %940 = arith.addf %935, %939 : vector<8x1xf32>
    %941 = vector.extract_strided_slice %927 {offsets = [0, 2], sizes = [8, 1], strides = [1, 1]} : vector<8x8xf32> to vector<8x1xf32>
    %942 = vector.extract_strided_slice %929 {offsets = [2, 0], sizes = [1, 1], strides = [1, 1]} : vector<8x1xf32> to vector<1x1xf32>
    %943 = vector.broadcast %942 : vector<1x1xf32> to vector<8x1xf32>
    %944 = arith.mulf %941, %943 : vector<8x1xf32>
    %945 = arith.addf %940, %944 : vector<8x1xf32>
    %946 = vector.extract_strided_slice %927 {offsets = [0, 3], sizes = [8, 1], strides = [1, 1]} : vector<8x8xf32> to vector<8x1xf32>
    %947 = vector.extract_strided_slice %929 {offsets = [3, 0], sizes = [1, 1], strides = [1, 1]} : vector<8x1xf32> to vector<1x1xf32>
    %948 = vector.broadcast %947 : vector<1x1xf32> to vector<8x1xf32>
    %949 = arith.mulf %946, %948 : vector<8x1xf32>
    %950 = arith.addf %945, %949 : vector<8x1xf32>
    %951 = vector.extract_strided_slice %927 {offsets = [0, 4], sizes = [8, 1], strides = [1, 1]} : vector<8x8xf32> to vector<8x1xf32>
    %952 = vector.extract_strided_slice %929 {offsets = [4, 0], sizes = [1, 1], strides = [1, 1]} : vector<8x1xf32> to vector<1x1xf32>
    %953 = vector.broadcast %952 : vector<1x1xf32> to vector<8x1xf32>
    %954 = arith.mulf %951, %953 : vector<8x1xf32>
    %955 = arith.addf %950, %954 : vector<8x1xf32>
    %956 = vector.extract_strided_slice %927 {offsets = [0, 5], sizes = [8, 1], strides = [1, 1]} : vector<8x8xf32> to vector<8x1xf32>
    %957 = vector.extract_strided_slice %929 {offsets = [5, 0], sizes = [1, 1], strides = [1, 1]} : vector<8x1xf32> to vector<1x1xf32>
    %958 = vector.broadcast %957 : vector<1x1xf32> to vector<8x1xf32>
    %959 = arith.mulf %956, %958 : vector<8x1xf32>
    %960 = arith.addf %955, %959 : vector<8x1xf32>
    %961 = vector.extract_strided_slice %927 {offsets = [0, 6], sizes = [8, 1], strides = [1, 1]} : vector<8x8xf32> to vector<8x1xf32>
    %962 = vector.extract_strided_slice %929 {offsets = [6, 0], sizes = [1, 1], strides = [1, 1]} : vector<8x1xf32> to vector<1x1xf32>
    %963 = vector.broadcast %962 : vector<1x1xf32> to vector<8x1xf32>
    %964 = arith.mulf %961, %963 : vector<8x1xf32>
    %965 = arith.addf %960, %964 : vector<8x1xf32>
    %966 = vector.extract_strided_slice %927 {offsets = [0, 7], sizes = [8, 1], strides = [1, 1]} : vector<8x8xf32> to vector<8x1xf32>
    %967 = vector.extract_strided_slice %929 {offsets = [7, 0], sizes = [1, 1], strides = [1, 1]} : vector<8x1xf32> to vector<1x1xf32>
    %968 = vector.broadcast %967 : vector<1x1xf32> to vector<8x1xf32>
    %969 = arith.mulf %966, %968 : vector<8x1xf32>
    %970 = arith.addf %965, %969 : vector<8x1xf32>
    %971 = vector.broadcast %931 : vector<1x1xf32> to vector<8x1xf32>
    %972 = arith.addf %970, %971 : vector<8x1xf32>
    %c0_259 = arith.constant 0 : index
    %c0_260 = arith.constant 0 : index
    %c6_261 = arith.constant 6 : index
    %973 = vector.load %arg3[%c0_259, %c0_260, %c6_261] : memref<2x8x9xf32, #tpu.memory_space<vmem>>, vector<1x8x1xf32>
    %974 = vector.shape_cast %973 : vector<1x8x1xf32> to vector<8x1xf32>
    %975 = vector.shape_cast %972 : vector<8x1xf32> to vector<1x8x1xf32>
    tpu.vector_store %arg3[%c0_259, %c0_260, %c6_261], %975 {strides = array<i32>} : memref<2x8x9xf32, #tpu.memory_space<vmem>>, vector<1x8x1xf32>,
    %c74 = arith.constant 74 : index
    %c0_262 = arith.constant 0 : index
    %c0_263 = arith.constant 0 : index
    %976 = vector.load %arg2[%c74, %c0_262, %c0_263] : memref<106x32x32xf32, #tpu.memory_space<vmem>>, vector<1x2x2xf32>
    %977 = vector.shape_cast %976 : vector<1x2x2xf32> to vector<2x2xf32>
    %978 = vector.extract_strided_slice %977 {offsets = [0, 0], sizes = [1, 2], strides = [1, 1]} : vector<2x2xf32> to vector<1x2xf32>
    %979 = vector.broadcast %972 : vector<8x1xf32> to vector<8x2xf32>
    %980 = vector.broadcast %978 : vector<1x2xf32> to vector<8x2xf32>
    %981 = arith.mulf %979, %980 : vector<8x2xf32>
    %982 = vector.extract_strided_slice %977 {offsets = [1, 0], sizes = [1, 2], strides = [1, 1]} : vector<2x2xf32> to vector<1x2xf32>
    %983 = vector.broadcast %3 : vector<8x1xf32> to vector<8x2xf32>
    %984 = vector.broadcast %982 : vector<1x2xf32> to vector<8x2xf32>
    %985 = arith.mulf %983, %984 : vector<8x2xf32>
    %986 = arith.addf %981, %985 : vector<8x2xf32>
    %c75 = arith.constant 75 : index
    %c0_264 = arith.constant 0 : index
    %c0_265 = arith.constant 0 : index
    %987 = vector.load %arg2[%c75, %c0_264, %c0_265] : memref<106x32x32xf32, #tpu.memory_space<vmem>>, vector<1x1x2xf32>
    %988 = vector.shape_cast %987 : vector<1x1x2xf32> to vector<1x2xf32>
    %989 = vector.broadcast %988 : vector<1x2xf32> to vector<8x2xf32>
    %990 = arith.addf %986, %989 : vector<8x2xf32>
    %cst_266 = arith.constant dense<0.000000e+00> : vector<8xf32>
    %991 = vector.multi_reduction <add>, %990, %cst_266 [1] : vector<8x2xf32> to vector<8xf32>
    %992 = vector.shape_cast %991 : vector<8xf32> to vector<8x1xf32>
    %cst_267 = arith.constant 2.000000e+00 : f32
    %993 = vector.broadcast %cst_267 : f32 to vector<8x1xf32>
    %994 = arith.divf %992, %993 : vector<8x1xf32>
    %995 = vector.broadcast %994 : vector<8x1xf32> to vector<8x2xf32>
    %996 = arith.subf %990, %995 : vector<8x2xf32>
    %997 = arith.mulf %996, %996 : vector<8x2xf32>
    %cst_268 = arith.constant dense<0.000000e+00> : vector<8xf32>
    %998 = vector.multi_reduction <add>, %997, %cst_268 [1] : vector<8x2xf32> to vector<8xf32>
    %999 = vector.shape_cast %998 : vector<8xf32> to vector<8x1xf32>
    %cst_269 = arith.constant 2.000000e+00 : f32
    %1000 = vector.broadcast %cst_269 : f32 to vector<8x1xf32>
    %1001 = arith.divf %999, %1000 : vector<8x1xf32>
    %1002 = vector.broadcast %994 : vector<8x1xf32> to vector<8x2xf32>
    %1003 = arith.subf %990, %1002 : vector<8x2xf32>
    %cst_270 = arith.constant 9.99999974E-6 : f32
    %1004 = vector.broadcast %cst_270 : f32 to vector<8x1xf32>
    %1005 = arith.addf %1001, %1004 : vector<8x1xf32>
    %1006 = math.rsqrt %1005 : vector<8x1xf32>
    %1007 = vector.broadcast %1006 : vector<8x1xf32> to vector<8x2xf32>
    %1008 = arith.mulf %1003, %1007 : vector<8x2xf32>
    %c76 = arith.constant 76 : index
    %c0_271 = arith.constant 0 : index
    %c0_272 = arith.constant 0 : index
    %1009 = vector.load %arg2[%c76, %c0_271, %c0_272] : memref<106x32x32xf32, #tpu.memory_space<vmem>>, vector<1x1x2xf32>
    %1010 = vector.shape_cast %1009 : vector<1x1x2xf32> to vector<1x2xf32>
    %1011 = vector.broadcast %1010 : vector<1x2xf32> to vector<8x2xf32>
    %1012 = arith.mulf %1008, %1011 : vector<8x2xf32>
    %c77 = arith.constant 77 : index
    %c0_273 = arith.constant 0 : index
    %c0_274 = arith.constant 0 : index
    %1013 = vector.load %arg2[%c77, %c0_273, %c0_274] : memref<106x32x32xf32, #tpu.memory_space<vmem>>, vector<1x1x2xf32>
    %1014 = vector.shape_cast %1013 : vector<1x1x2xf32> to vector<1x2xf32>
    %1015 = vector.broadcast %1014 : vector<1x2xf32> to vector<8x2xf32>
    %1016 = arith.addf %1012, %1015 : vector<8x2xf32>
    %cst_275 = arith.constant 0.000000e+00 : f32
    %1017 = vector.broadcast %cst_275 : f32 to vector<8x2xf32>
    %1018 = arith.maximumf %1016, %1017 : vector<8x2xf32>
    %c78 = arith.constant 78 : index
    %c0_276 = arith.constant 0 : index
    %c0_277 = arith.constant 0 : index
    %1019 = vector.load %arg2[%c78, %c0_276, %c0_277] : memref<106x32x32xf32, #tpu.memory_space<vmem>>, vector<1x2x1xf32>
    %1020 = vector.shape_cast %1019 : vector<1x2x1xf32> to vector<2x1xf32>
    %c79 = arith.constant 79 : index
    %c0_278 = arith.constant 0 : index
    %c0_279 = arith.constant 0 : index
    %1021 = vector.load %arg2[%c79, %c0_278, %c0_279] : memref<106x32x32xf32, #tpu.memory_space<vmem>>, vector<1x1x1xf32>
    %1022 = vector.shape_cast %1021 : vector<1x1x1xf32> to vector<1x1xf32>
    %1023 = vector.extract_strided_slice %1018 {offsets = [0, 0], sizes = [8, 1], strides = [1, 1]} : vector<8x2xf32> to vector<8x1xf32>
    %1024 = vector.extract_strided_slice %1020 {offsets = [0, 0], sizes = [1, 1], strides = [1, 1]} : vector<2x1xf32> to vector<1x1xf32>
    %1025 = vector.broadcast %1024 : vector<1x1xf32> to vector<8x1xf32>
    %1026 = arith.mulf %1023, %1025 : vector<8x1xf32>
    %1027 = vector.extract_strided_slice %1018 {offsets = [0, 1], sizes = [8, 1], strides = [1, 1]} : vector<8x2xf32> to vector<8x1xf32>
    %1028 = vector.extract_strided_slice %1020 {offsets = [1, 0], sizes = [1, 1], strides = [1, 1]} : vector<2x1xf32> to vector<1x1xf32>
    %1029 = vector.broadcast %1028 : vector<1x1xf32> to vector<8x1xf32>
    %1030 = arith.mulf %1027, %1029 : vector<8x1xf32>
    %1031 = arith.addf %1026, %1030 : vector<8x1xf32>
    %1032 = vector.broadcast %1022 : vector<1x1xf32> to vector<8x1xf32>
    %1033 = arith.addf %1031, %1032 : vector<8x1xf32>
    %c0_280 = arith.constant 0 : index
    %c0_281 = arith.constant 0 : index
    %c7_282 = arith.constant 7 : index
    %1034 = vector.load %arg3[%c0_280, %c0_281, %c7_282] : memref<2x8x9xf32, #tpu.memory_space<vmem>>, vector<1x8x1xf32>
    %1035 = vector.shape_cast %1034 : vector<1x8x1xf32> to vector<8x1xf32>
    %1036 = vector.shape_cast %1033 : vector<8x1xf32> to vector<1x8x1xf32>
    tpu.vector_store %arg3[%c0_280, %c0_281, %c7_282], %1036 {strides = array<i32>} : memref<2x8x9xf32, #tpu.memory_space<vmem>>, vector<1x8x1xf32>,
    %c0_283 = arith.constant 0 : index
    %c0_284 = arith.constant 0 : index
    %c4_285 = arith.constant 4 : index
    %1037 = vector.load %arg3[%c0_283, %c0_284, %c4_285] : memref<2x8x9xf32, #tpu.memory_space<vmem>>, vector<1x8x1xf32>
    %1038 = vector.shape_cast %1037 : vector<1x8x1xf32> to vector<8x1xf32>
    %1039 = vector.extract_strided_slice %1038 {offsets = [0, 0], sizes = [1, 1], strides = [1, 1]} : vector<8x1xf32> to vector<1x1xf32>
    %1040 = vector.broadcast %1039 : vector<1x1xf32> to vector<8x1xf32>
    %1041 = arith.subf %1038, %1040 : vector<8x1xf32>
    %c0_286 = arith.constant 0 : index
    %c0_287 = arith.constant 0 : index
    %c0_288 = arith.constant 0 : index
    %1042 = vector.load %arg5[%c0_286, %c0_287, %c0_288] : memref<2x8x2xf32, #tpu.memory_space<vmem>>, vector<1x8x1xf32>
    %1043 = vector.shape_cast %1042 : vector<1x8x1xf32> to vector<8x1xf32>
    %1044 = vector.shape_cast %1041 : vector<8x1xf32> to vector<1x8x1xf32>
    tpu.vector_store %arg5[%c0_286, %c0_287, %c0_288], %1044 {strides = array<i32>} : memref<2x8x2xf32, #tpu.memory_space<vmem>>, vector<1x8x1xf32>,
    %1045 = vector.extract_strided_slice %557 {offsets = [0, 2], sizes = [8, 1], strides = [1, 1]} : vector<8x3xf32> to vector<8x1xf32>
    %c0_289 = arith.constant 0 : index
    %c0_290 = arith.constant 0 : index
    %c1_291 = arith.constant 1 : index
    %1046 = vector.load %arg5[%c0_289, %c0_290, %c1_291] : memref<2x8x2xf32, #tpu.memory_space<vmem>>, vector<1x8x1xf32>
    %1047 = vector.shape_cast %1046 : vector<1x8x1xf32> to vector<8x1xf32>
    %1048 = vector.shape_cast %1045 : vector<8x1xf32> to vector<1x8x1xf32>
    tpu.vector_store %arg5[%c0_289, %c0_290, %c1_291], %1048 {strides = array<i32>} : memref<2x8x2xf32, #tpu.memory_space<vmem>>, vector<1x8x1xf32>,
    %c0_292 = arith.constant 0 : index
    %c0_293 = arith.constant 0 : index
    %c0_294 = arith.constant 0 : index
    %1049 = vector.load %arg5[%c0_292, %c0_293, %c0_294] : memref<2x8x2xf32, #tpu.memory_space<vmem>>, vector<1x8x2xf32>
    %1050 = vector.shape_cast %1049 : vector<1x8x2xf32> to vector<8x2xf32>
    %c82 = arith.constant 82 : index
    %c0_295 = arith.constant 0 : index
    %c0_296 = arith.constant 0 : index
    %1051 = vector.load %arg2[%c82, %c0_295, %c0_296] : memref<106x32x32xf32, #tpu.memory_space<vmem>>, vector<1x8x8xf32>
    %1052 = vector.shape_cast %1051 : vector<1x8x8xf32> to vector<8x8xf32>
    %cst_297 = arith.constant dense<0.000000e+00> : vector<8xf32>
    %1053 = vector.multi_reduction <add>, %1050, %cst_297 [1] : vector<8x2xf32> to vector<8xf32>
    %1054 = vector.shape_cast %1053 : vector<8xf32> to vector<8x1xf32>
    %cst_298 = arith.constant 2.000000e+00 : f32
    %1055 = vector.broadcast %cst_298 : f32 to vector<8x1xf32>
    %1056 = arith.divf %1054, %1055 : vector<8x1xf32>
    %1057 = vector.broadcast %1056 : vector<8x1xf32> to vector<8x2xf32>
    %1058 = arith.subf %1050, %1057 : vector<8x2xf32>
    %1059 = arith.mulf %1058, %1058 : vector<8x2xf32>
    %cst_299 = arith.constant dense<0.000000e+00> : vector<8xf32>
    %1060 = vector.multi_reduction <add>, %1059, %cst_299 [1] : vector<8x2xf32> to vector<8xf32>
    %1061 = vector.shape_cast %1060 : vector<8xf32> to vector<8x1xf32>
    %cst_300 = arith.constant 2.000000e+00 : f32
    %1062 = vector.broadcast %cst_300 : f32 to vector<8x1xf32>
    %1063 = arith.divf %1061, %1062 : vector<8x1xf32>
    %1064 = vector.broadcast %1056 : vector<8x1xf32> to vector<8x2xf32>
    %1065 = arith.subf %1050, %1064 : vector<8x2xf32>
    %cst_301 = arith.constant 9.99999974E-6 : f32
    %1066 = vector.broadcast %cst_301 : f32 to vector<8x1xf32>
    %1067 = arith.addf %1063, %1066 : vector<8x1xf32>
    %1068 = math.rsqrt %1067 : vector<8x1xf32>
    %1069 = vector.broadcast %1068 : vector<8x1xf32> to vector<8x2xf32>
    %1070 = arith.mulf %1065, %1069 : vector<8x2xf32>
    %c80 = arith.constant 80 : index
    %c0_302 = arith.constant 0 : index
    %c0_303 = arith.constant 0 : index
    %1071 = vector.load %arg2[%c80, %c0_302, %c0_303] : memref<106x32x32xf32, #tpu.memory_space<vmem>>, vector<1x1x2xf32>
    %1072 = vector.shape_cast %1071 : vector<1x1x2xf32> to vector<1x2xf32>
    %1073 = vector.broadcast %1072 : vector<1x2xf32> to vector<8x2xf32>
    %1074 = arith.mulf %1070, %1073 : vector<8x2xf32>
    %c81 = arith.constant 81 : index
    %c0_304 = arith.constant 0 : index
    %c0_305 = arith.constant 0 : index
    %1075 = vector.load %arg2[%c81, %c0_304, %c0_305] : memref<106x32x32xf32, #tpu.memory_space<vmem>>, vector<1x1x2xf32>
    %1076 = vector.shape_cast %1075 : vector<1x1x2xf32> to vector<1x2xf32>
    %1077 = vector.broadcast %1076 : vector<1x2xf32> to vector<8x2xf32>
    %1078 = arith.addf %1074, %1077 : vector<8x2xf32>
    %c83 = arith.constant 83 : index
    %c0_306 = arith.constant 0 : index
    %c0_307 = arith.constant 0 : index
    %1079 = vector.load %arg2[%c83, %c0_306, %c0_307] : memref<106x32x32xf32, #tpu.memory_space<vmem>>, vector<1x8x1xf32>
    %1080 = vector.shape_cast %1079 : vector<1x8x1xf32> to vector<8x1xf32>
    %1081 = vector.extract_strided_slice %1052 {offsets = [0, 0], sizes = [8, 1], strides = [1, 1]} : vector<8x8xf32> to vector<8x1xf32>
    %1082 = vector.extract_strided_slice %1078 {offsets = [0, 0], sizes = [1, 2], strides = [1, 1]} : vector<8x2xf32> to vector<1x2xf32>
    %1083 = vector.broadcast %1081 : vector<8x1xf32> to vector<8x2xf32>
    %1084 = vector.broadcast %1082 : vector<1x2xf32> to vector<8x2xf32>
    %1085 = arith.mulf %1083, %1084 : vector<8x2xf32>
    %1086 = vector.extract_strided_slice %1052 {offsets = [0, 1], sizes = [8, 1], strides = [1, 1]} : vector<8x8xf32> to vector<8x1xf32>
    %1087 = vector.extract_strided_slice %1078 {offsets = [1, 0], sizes = [1, 2], strides = [1, 1]} : vector<8x2xf32> to vector<1x2xf32>
    %1088 = vector.broadcast %1086 : vector<8x1xf32> to vector<8x2xf32>
    %1089 = vector.broadcast %1087 : vector<1x2xf32> to vector<8x2xf32>
    %1090 = arith.mulf %1088, %1089 : vector<8x2xf32>
    %1091 = arith.addf %1085, %1090 : vector<8x2xf32>
    %1092 = vector.extract_strided_slice %1052 {offsets = [0, 2], sizes = [8, 1], strides = [1, 1]} : vector<8x8xf32> to vector<8x1xf32>
    %1093 = vector.extract_strided_slice %1078 {offsets = [2, 0], sizes = [1, 2], strides = [1, 1]} : vector<8x2xf32> to vector<1x2xf32>
    %1094 = vector.broadcast %1092 : vector<8x1xf32> to vector<8x2xf32>
    %1095 = vector.broadcast %1093 : vector<1x2xf32> to vector<8x2xf32>
    %1096 = arith.mulf %1094, %1095 : vector<8x2xf32>
    %1097 = arith.addf %1091, %1096 : vector<8x2xf32>
    %1098 = vector.extract_strided_slice %1052 {offsets = [0, 3], sizes = [8, 1], strides = [1, 1]} : vector<8x8xf32> to vector<8x1xf32>
    %1099 = vector.extract_strided_slice %1078 {offsets = [3, 0], sizes = [1, 2], strides = [1, 1]} : vector<8x2xf32> to vector<1x2xf32>
    %1100 = vector.broadcast %1098 : vector<8x1xf32> to vector<8x2xf32>
    %1101 = vector.broadcast %1099 : vector<1x2xf32> to vector<8x2xf32>
    %1102 = arith.mulf %1100, %1101 : vector<8x2xf32>
    %1103 = arith.addf %1097, %1102 : vector<8x2xf32>
    %1104 = vector.extract_strided_slice %1052 {offsets = [0, 4], sizes = [8, 1], strides = [1, 1]} : vector<8x8xf32> to vector<8x1xf32>
    %1105 = vector.extract_strided_slice %1078 {offsets = [4, 0], sizes = [1, 2], strides = [1, 1]} : vector<8x2xf32> to vector<1x2xf32>
    %1106 = vector.broadcast %1104 : vector<8x1xf32> to vector<8x2xf32>
    %1107 = vector.broadcast %1105 : vector<1x2xf32> to vector<8x2xf32>
    %1108 = arith.mulf %1106, %1107 : vector<8x2xf32>
    %1109 = arith.addf %1103, %1108 : vector<8x2xf32>
    %1110 = vector.extract_strided_slice %1052 {offsets = [0, 5], sizes = [8, 1], strides = [1, 1]} : vector<8x8xf32> to vector<8x1xf32>
    %1111 = vector.extract_strided_slice %1078 {offsets = [5, 0], sizes = [1, 2], strides = [1, 1]} : vector<8x2xf32> to vector<1x2xf32>
    %1112 = vector.broadcast %1110 : vector<8x1xf32> to vector<8x2xf32>
    %1113 = vector.broadcast %1111 : vector<1x2xf32> to vector<8x2xf32>
    %1114 = arith.mulf %1112, %1113 : vector<8x2xf32>
    %1115 = arith.addf %1109, %1114 : vector<8x2xf32>
    %1116 = vector.extract_strided_slice %1052 {offsets = [0, 6], sizes = [8, 1], strides = [1, 1]} : vector<8x8xf32> to vector<8x1xf32>
    %1117 = vector.extract_strided_slice %1078 {offsets = [6, 0], sizes = [1, 2], strides = [1, 1]} : vector<8x2xf32> to vector<1x2xf32>
    %1118 = vector.broadcast %1116 : vector<8x1xf32> to vector<8x2xf32>
    %1119 = vector.broadcast %1117 : vector<1x2xf32> to vector<8x2xf32>
    %1120 = arith.mulf %1118, %1119 : vector<8x2xf32>
    %1121 = arith.addf %1115, %1120 : vector<8x2xf32>
    %1122 = vector.extract_strided_slice %1052 {offsets = [0, 7], sizes = [8, 1], strides = [1, 1]} : vector<8x8xf32> to vector<8x1xf32>
    %1123 = vector.extract_strided_slice %1078 {offsets = [7, 0], sizes = [1, 2], strides = [1, 1]} : vector<8x2xf32> to vector<1x2xf32>
    %1124 = vector.broadcast %1122 : vector<8x1xf32> to vector<8x2xf32>
    %1125 = vector.broadcast %1123 : vector<1x2xf32> to vector<8x2xf32>
    %1126 = arith.mulf %1124, %1125 : vector<8x2xf32>
    %1127 = arith.addf %1121, %1126 : vector<8x2xf32>
    %1128 = vector.broadcast %1080 : vector<8x1xf32> to vector<8x2xf32>
    %1129 = arith.addf %1127, %1128 : vector<8x2xf32>
    %cst_308 = arith.constant 0.000000e+00 : f32
    %1130 = vector.broadcast %cst_308 : f32 to vector<8x2xf32>
    %1131 = arith.maximumf %1129, %1130 : vector<8x2xf32>
    %1132 = arith.addf %1050, %1131 : vector<8x2xf32>
    %cst_309 = arith.constant dense<0.000000e+00> : vector<8xf32>
    %1133 = vector.multi_reduction <add>, %1132, %cst_309 [1] : vector<8x2xf32> to vector<8xf32>
    %1134 = vector.shape_cast %1133 : vector<8xf32> to vector<8x1xf32>
    %cst_310 = arith.constant 2.000000e+00 : f32
    %1135 = vector.broadcast %cst_310 : f32 to vector<8x1xf32>
    %1136 = arith.divf %1134, %1135 : vector<8x1xf32>
    %1137 = vector.broadcast %1136 : vector<8x1xf32> to vector<8x2xf32>
    %1138 = arith.subf %1132, %1137 : vector<8x2xf32>
    %1139 = arith.mulf %1138, %1138 : vector<8x2xf32>
    %cst_311 = arith.constant dense<0.000000e+00> : vector<8xf32>
    %1140 = vector.multi_reduction <add>, %1139, %cst_311 [1] : vector<8x2xf32> to vector<8xf32>
    %1141 = vector.shape_cast %1140 : vector<8xf32> to vector<8x1xf32>
    %cst_312 = arith.constant 2.000000e+00 : f32
    %1142 = vector.broadcast %cst_312 : f32 to vector<8x1xf32>
    %1143 = arith.divf %1141, %1142 : vector<8x1xf32>
    %1144 = vector.broadcast %1136 : vector<8x1xf32> to vector<8x2xf32>
    %1145 = arith.subf %1132, %1144 : vector<8x2xf32>
    %cst_313 = arith.constant 9.99999974E-6 : f32
    %1146 = vector.broadcast %cst_313 : f32 to vector<8x1xf32>
    %1147 = arith.addf %1143, %1146 : vector<8x1xf32>
    %1148 = math.rsqrt %1147 : vector<8x1xf32>
    %1149 = vector.broadcast %1148 : vector<8x1xf32> to vector<8x2xf32>
    %1150 = arith.mulf %1145, %1149 : vector<8x2xf32>
    %c84 = arith.constant 84 : index
    %c0_314 = arith.constant 0 : index
    %c0_315 = arith.constant 0 : index
    %1151 = vector.load %arg2[%c84, %c0_314, %c0_315] : memref<106x32x32xf32, #tpu.memory_space<vmem>>, vector<1x1x2xf32>
    %1152 = vector.shape_cast %1151 : vector<1x1x2xf32> to vector<1x2xf32>
    %1153 = vector.broadcast %1152 : vector<1x2xf32> to vector<8x2xf32>
    %1154 = arith.mulf %1150, %1153 : vector<8x2xf32>
    %c85 = arith.constant 85 : index
    %c0_316 = arith.constant 0 : index
    %c0_317 = arith.constant 0 : index
    %1155 = vector.load %arg2[%c85, %c0_316, %c0_317] : memref<106x32x32xf32, #tpu.memory_space<vmem>>, vector<1x1x2xf32>
    %1156 = vector.shape_cast %1155 : vector<1x1x2xf32> to vector<1x2xf32>
    %1157 = vector.broadcast %1156 : vector<1x2xf32> to vector<8x2xf32>
    %1158 = arith.addf %1154, %1157 : vector<8x2xf32>
    %c86 = arith.constant 86 : index
    %c0_318 = arith.constant 0 : index
    %c0_319 = arith.constant 0 : index
    %1159 = vector.load %arg2[%c86, %c0_318, %c0_319] : memref<106x32x32xf32, #tpu.memory_space<vmem>>, vector<1x2x32xf32>
    %1160 = vector.shape_cast %1159 : vector<1x2x32xf32> to vector<2x32xf32>
    %c87 = arith.constant 87 : index
    %c0_320 = arith.constant 0 : index
    %c0_321 = arith.constant 0 : index
    %1161 = vector.load %arg2[%c87, %c0_320, %c0_321] : memref<106x32x32xf32, #tpu.memory_space<vmem>>, vector<1x1x32xf32>
    %1162 = vector.shape_cast %1161 : vector<1x1x32xf32> to vector<1x32xf32>
    %1163 = vector.extract_strided_slice %1158 {offsets = [0, 0], sizes = [8, 1], strides = [1, 1]} : vector<8x2xf32> to vector<8x1xf32>
    %1164 = vector.extract_strided_slice %1160 {offsets = [0, 0], sizes = [1, 32], strides = [1, 1]} : vector<2x32xf32> to vector<1x32xf32>
    %1165 = vector.broadcast %1163 : vector<8x1xf32> to vector<8x32xf32>
    %1166 = vector.broadcast %1164 : vector<1x32xf32> to vector<8x32xf32>
    %1167 = arith.mulf %1165, %1166 : vector<8x32xf32>
    %1168 = vector.extract_strided_slice %1158 {offsets = [0, 1], sizes = [8, 1], strides = [1, 1]} : vector<8x2xf32> to vector<8x1xf32>
    %1169 = vector.extract_strided_slice %1160 {offsets = [1, 0], sizes = [1, 32], strides = [1, 1]} : vector<2x32xf32> to vector<1x32xf32>
    %1170 = vector.broadcast %1168 : vector<8x1xf32> to vector<8x32xf32>
    %1171 = vector.broadcast %1169 : vector<1x32xf32> to vector<8x32xf32>
    %1172 = arith.mulf %1170, %1171 : vector<8x32xf32>
    %1173 = arith.addf %1167, %1172 : vector<8x32xf32>
    %1174 = vector.broadcast %1162 : vector<1x32xf32> to vector<8x32xf32>
    %1175 = arith.addf %1173, %1174 : vector<8x32xf32>
    %cst_322 = arith.constant 0.000000e+00 : f32
    %1176 = vector.broadcast %cst_322 : f32 to vector<8x32xf32>
    %1177 = arith.maximumf %1175, %1176 : vector<8x32xf32>
    %c88 = arith.constant 88 : index
    %c0_323 = arith.constant 0 : index
    %c0_324 = arith.constant 0 : index
    %1178 = vector.load %arg2[%c88, %c0_323, %c0_324] : memref<106x32x32xf32, #tpu.memory_space<vmem>>, vector<1x32x2xf32>
    %1179 = vector.shape_cast %1178 : vector<1x32x2xf32> to vector<32x2xf32>
    %c89 = arith.constant 89 : index
    %c0_325 = arith.constant 0 : index
    %c0_326 = arith.constant 0 : index
    %1180 = vector.load %arg2[%c89, %c0_325, %c0_326] : memref<106x32x32xf32, #tpu.memory_space<vmem>>, vector<1x1x2xf32>
    %1181 = vector.shape_cast %1180 : vector<1x1x2xf32> to vector<1x2xf32>
    %cst_327 = arith.constant dense<0.000000e+00> : vector<8x2xf32>
    %1182 = tpu.matmul %1177, %1179, %cst_327 {dimension_numbers = #tpu.dot_dimension_numbers<[1], [0], [0], [1], [0, 0, 1, 1], [], []>} : vector<8x32xf32>, vector<32x2xf32>, vector<8x2xf32> -> vector<8x2xf32>
    %1183 = vector.broadcast %1181 : vector<1x2xf32> to vector<8x2xf32>
    %1184 = arith.addf %1182, %1183 : vector<8x2xf32>
    %1185 = arith.addf %1132, %1184 : vector<8x2xf32>
    %c92 = arith.constant 92 : index
    %c0_328 = arith.constant 0 : index
    %c0_329 = arith.constant 0 : index
    %1186 = vector.load %arg2[%c92, %c0_328, %c0_329] : memref<106x32x32xf32, #tpu.memory_space<vmem>>, vector<1x8x8xf32>
    %1187 = vector.shape_cast %1186 : vector<1x8x8xf32> to vector<8x8xf32>
    %cst_330 = arith.constant dense<0.000000e+00> : vector<8xf32>
    %1188 = vector.multi_reduction <add>, %1185, %cst_330 [1] : vector<8x2xf32> to vector<8xf32>
    %1189 = vector.shape_cast %1188 : vector<8xf32> to vector<8x1xf32>
    %cst_331 = arith.constant 2.000000e+00 : f32
    %1190 = vector.broadcast %cst_331 : f32 to vector<8x1xf32>
    %1191 = arith.divf %1189, %1190 : vector<8x1xf32>
    %1192 = vector.broadcast %1191 : vector<8x1xf32> to vector<8x2xf32>
    %1193 = arith.subf %1185, %1192 : vector<8x2xf32>
    %1194 = arith.mulf %1193, %1193 : vector<8x2xf32>
    %cst_332 = arith.constant dense<0.000000e+00> : vector<8xf32>
    %1195 = vector.multi_reduction <add>, %1194, %cst_332 [1] : vector<8x2xf32> to vector<8xf32>
    %1196 = vector.shape_cast %1195 : vector<8xf32> to vector<8x1xf32>
    %cst_333 = arith.constant 2.000000e+00 : f32
    %1197 = vector.broadcast %cst_333 : f32 to vector<8x1xf32>
    %1198 = arith.divf %1196, %1197 : vector<8x1xf32>
    %1199 = vector.broadcast %1191 : vector<8x1xf32> to vector<8x2xf32>
    %1200 = arith.subf %1185, %1199 : vector<8x2xf32>
    %cst_334 = arith.constant 9.99999974E-6 : f32
    %1201 = vector.broadcast %cst_334 : f32 to vector<8x1xf32>
    %1202 = arith.addf %1198, %1201 : vector<8x1xf32>
    %1203 = math.rsqrt %1202 : vector<8x1xf32>
    %1204 = vector.broadcast %1203 : vector<8x1xf32> to vector<8x2xf32>
    %1205 = arith.mulf %1200, %1204 : vector<8x2xf32>
    %c90 = arith.constant 90 : index
    %c0_335 = arith.constant 0 : index
    %c0_336 = arith.constant 0 : index
    %1206 = vector.load %arg2[%c90, %c0_335, %c0_336] : memref<106x32x32xf32, #tpu.memory_space<vmem>>, vector<1x1x2xf32>
    %1207 = vector.shape_cast %1206 : vector<1x1x2xf32> to vector<1x2xf32>
    %1208 = vector.broadcast %1207 : vector<1x2xf32> to vector<8x2xf32>
    %1209 = arith.mulf %1205, %1208 : vector<8x2xf32>
    %c91 = arith.constant 91 : index
    %c0_337 = arith.constant 0 : index
    %c0_338 = arith.constant 0 : index
    %1210 = vector.load %arg2[%c91, %c0_337, %c0_338] : memref<106x32x32xf32, #tpu.memory_space<vmem>>, vector<1x1x2xf32>
    %1211 = vector.shape_cast %1210 : vector<1x1x2xf32> to vector<1x2xf32>
    %1212 = vector.broadcast %1211 : vector<1x2xf32> to vector<8x2xf32>
    %1213 = arith.addf %1209, %1212 : vector<8x2xf32>
    %c93 = arith.constant 93 : index
    %c0_339 = arith.constant 0 : index
    %c0_340 = arith.constant 0 : index
    %1214 = vector.load %arg2[%c93, %c0_339, %c0_340] : memref<106x32x32xf32, #tpu.memory_space<vmem>>, vector<1x8x1xf32>
    %1215 = vector.shape_cast %1214 : vector<1x8x1xf32> to vector<8x1xf32>
    %1216 = vector.extract_strided_slice %1187 {offsets = [0, 0], sizes = [8, 1], strides = [1, 1]} : vector<8x8xf32> to vector<8x1xf32>
    %1217 = vector.extract_strided_slice %1213 {offsets = [0, 0], sizes = [1, 2], strides = [1, 1]} : vector<8x2xf32> to vector<1x2xf32>
    %1218 = vector.broadcast %1216 : vector<8x1xf32> to vector<8x2xf32>
    %1219 = vector.broadcast %1217 : vector<1x2xf32> to vector<8x2xf32>
    %1220 = arith.mulf %1218, %1219 : vector<8x2xf32>
    %1221 = vector.extract_strided_slice %1187 {offsets = [0, 1], sizes = [8, 1], strides = [1, 1]} : vector<8x8xf32> to vector<8x1xf32>
    %1222 = vector.extract_strided_slice %1213 {offsets = [1, 0], sizes = [1, 2], strides = [1, 1]} : vector<8x2xf32> to vector<1x2xf32>
    %1223 = vector.broadcast %1221 : vector<8x1xf32> to vector<8x2xf32>
    %1224 = vector.broadcast %1222 : vector<1x2xf32> to vector<8x2xf32>
    %1225 = arith.mulf %1223, %1224 : vector<8x2xf32>
    %1226 = arith.addf %1220, %1225 : vector<8x2xf32>
    %1227 = vector.extract_strided_slice %1187 {offsets = [0, 2], sizes = [8, 1], strides = [1, 1]} : vector<8x8xf32> to vector<8x1xf32>
    %1228 = vector.extract_strided_slice %1213 {offsets = [2, 0], sizes = [1, 2], strides = [1, 1]} : vector<8x2xf32> to vector<1x2xf32>
    %1229 = vector.broadcast %1227 : vector<8x1xf32> to vector<8x2xf32>
    %1230 = vector.broadcast %1228 : vector<1x2xf32> to vector<8x2xf32>
    %1231 = arith.mulf %1229, %1230 : vector<8x2xf32>
    %1232 = arith.addf %1226, %1231 : vector<8x2xf32>
    %1233 = vector.extract_strided_slice %1187 {offsets = [0, 3], sizes = [8, 1], strides = [1, 1]} : vector<8x8xf32> to vector<8x1xf32>
    %1234 = vector.extract_strided_slice %1213 {offsets = [3, 0], sizes = [1, 2], strides = [1, 1]} : vector<8x2xf32> to vector<1x2xf32>
    %1235 = vector.broadcast %1233 : vector<8x1xf32> to vector<8x2xf32>
    %1236 = vector.broadcast %1234 : vector<1x2xf32> to vector<8x2xf32>
    %1237 = arith.mulf %1235, %1236 : vector<8x2xf32>
    %1238 = arith.addf %1232, %1237 : vector<8x2xf32>
    %1239 = vector.extract_strided_slice %1187 {offsets = [0, 4], sizes = [8, 1], strides = [1, 1]} : vector<8x8xf32> to vector<8x1xf32>
    %1240 = vector.extract_strided_slice %1213 {offsets = [4, 0], sizes = [1, 2], strides = [1, 1]} : vector<8x2xf32> to vector<1x2xf32>
    %1241 = vector.broadcast %1239 : vector<8x1xf32> to vector<8x2xf32>
    %1242 = vector.broadcast %1240 : vector<1x2xf32> to vector<8x2xf32>
    %1243 = arith.mulf %1241, %1242 : vector<8x2xf32>
    %1244 = arith.addf %1238, %1243 : vector<8x2xf32>
    %1245 = vector.extract_strided_slice %1187 {offsets = [0, 5], sizes = [8, 1], strides = [1, 1]} : vector<8x8xf32> to vector<8x1xf32>
    %1246 = vector.extract_strided_slice %1213 {offsets = [5, 0], sizes = [1, 2], strides = [1, 1]} : vector<8x2xf32> to vector<1x2xf32>
    %1247 = vector.broadcast %1245 : vector<8x1xf32> to vector<8x2xf32>
    %1248 = vector.broadcast %1246 : vector<1x2xf32> to vector<8x2xf32>
    %1249 = arith.mulf %1247, %1248 : vector<8x2xf32>
    %1250 = arith.addf %1244, %1249 : vector<8x2xf32>
    %1251 = vector.extract_strided_slice %1187 {offsets = [0, 6], sizes = [8, 1], strides = [1, 1]} : vector<8x8xf32> to vector<8x1xf32>
    %1252 = vector.extract_strided_slice %1213 {offsets = [6, 0], sizes = [1, 2], strides = [1, 1]} : vector<8x2xf32> to vector<1x2xf32>
    %1253 = vector.broadcast %1251 : vector<8x1xf32> to vector<8x2xf32>
    %1254 = vector.broadcast %1252 : vector<1x2xf32> to vector<8x2xf32>
    %1255 = arith.mulf %1253, %1254 : vector<8x2xf32>
    %1256 = arith.addf %1250, %1255 : vector<8x2xf32>
    %1257 = vector.extract_strided_slice %1187 {offsets = [0, 7], sizes = [8, 1], strides = [1, 1]} : vector<8x8xf32> to vector<8x1xf32>
    %1258 = vector.extract_strided_slice %1213 {offsets = [7, 0], sizes = [1, 2], strides = [1, 1]} : vector<8x2xf32> to vector<1x2xf32>
    %1259 = vector.broadcast %1257 : vector<8x1xf32> to vector<8x2xf32>
    %1260 = vector.broadcast %1258 : vector<1x2xf32> to vector<8x2xf32>
    %1261 = arith.mulf %1259, %1260 : vector<8x2xf32>
    %1262 = arith.addf %1256, %1261 : vector<8x2xf32>
    %1263 = vector.broadcast %1215 : vector<8x1xf32> to vector<8x2xf32>
    %1264 = arith.addf %1262, %1263 : vector<8x2xf32>
    %cst_341 = arith.constant 0.000000e+00 : f32
    %1265 = vector.broadcast %cst_341 : f32 to vector<8x2xf32>
    %1266 = arith.maximumf %1264, %1265 : vector<8x2xf32>
    %1267 = arith.addf %1185, %1266 : vector<8x2xf32>
    %cst_342 = arith.constant dense<0.000000e+00> : vector<8xf32>
    %1268 = vector.multi_reduction <add>, %1267, %cst_342 [1] : vector<8x2xf32> to vector<8xf32>
    %1269 = vector.shape_cast %1268 : vector<8xf32> to vector<8x1xf32>
    %cst_343 = arith.constant 2.000000e+00 : f32
    %1270 = vector.broadcast %cst_343 : f32 to vector<8x1xf32>
    %1271 = arith.divf %1269, %1270 : vector<8x1xf32>
    %1272 = vector.broadcast %1271 : vector<8x1xf32> to vector<8x2xf32>
    %1273 = arith.subf %1267, %1272 : vector<8x2xf32>
    %1274 = arith.mulf %1273, %1273 : vector<8x2xf32>
    %cst_344 = arith.constant dense<0.000000e+00> : vector<8xf32>
    %1275 = vector.multi_reduction <add>, %1274, %cst_344 [1] : vector<8x2xf32> to vector<8xf32>
    %1276 = vector.shape_cast %1275 : vector<8xf32> to vector<8x1xf32>
    %cst_345 = arith.constant 2.000000e+00 : f32
    %1277 = vector.broadcast %cst_345 : f32 to vector<8x1xf32>
    %1278 = arith.divf %1276, %1277 : vector<8x1xf32>
    %1279 = vector.broadcast %1271 : vector<8x1xf32> to vector<8x2xf32>
    %1280 = arith.subf %1267, %1279 : vector<8x2xf32>
    %cst_346 = arith.constant 9.99999974E-6 : f32
    %1281 = vector.broadcast %cst_346 : f32 to vector<8x1xf32>
    %1282 = arith.addf %1278, %1281 : vector<8x1xf32>
    %1283 = math.rsqrt %1282 : vector<8x1xf32>
    %1284 = vector.broadcast %1283 : vector<8x1xf32> to vector<8x2xf32>
    %1285 = arith.mulf %1280, %1284 : vector<8x2xf32>
    %c94 = arith.constant 94 : index
    %c0_347 = arith.constant 0 : index
    %c0_348 = arith.constant 0 : index
    %1286 = vector.load %arg2[%c94, %c0_347, %c0_348] : memref<106x32x32xf32, #tpu.memory_space<vmem>>, vector<1x1x2xf32>
    %1287 = vector.shape_cast %1286 : vector<1x1x2xf32> to vector<1x2xf32>
    %1288 = vector.broadcast %1287 : vector<1x2xf32> to vector<8x2xf32>
    %1289 = arith.mulf %1285, %1288 : vector<8x2xf32>
    %c95 = arith.constant 95 : index
    %c0_349 = arith.constant 0 : index
    %c0_350 = arith.constant 0 : index
    %1290 = vector.load %arg2[%c95, %c0_349, %c0_350] : memref<106x32x32xf32, #tpu.memory_space<vmem>>, vector<1x1x2xf32>
    %1291 = vector.shape_cast %1290 : vector<1x1x2xf32> to vector<1x2xf32>
    %1292 = vector.broadcast %1291 : vector<1x2xf32> to vector<8x2xf32>
    %1293 = arith.addf %1289, %1292 : vector<8x2xf32>
    %c96 = arith.constant 96 : index
    %c0_351 = arith.constant 0 : index
    %c0_352 = arith.constant 0 : index
    %1294 = vector.load %arg2[%c96, %c0_351, %c0_352] : memref<106x32x32xf32, #tpu.memory_space<vmem>>, vector<1x2x32xf32>
    %1295 = vector.shape_cast %1294 : vector<1x2x32xf32> to vector<2x32xf32>
    %c97 = arith.constant 97 : index
    %c0_353 = arith.constant 0 : index
    %c0_354 = arith.constant 0 : index
    %1296 = vector.load %arg2[%c97, %c0_353, %c0_354] : memref<106x32x32xf32, #tpu.memory_space<vmem>>, vector<1x1x32xf32>
    %1297 = vector.shape_cast %1296 : vector<1x1x32xf32> to vector<1x32xf32>
    %1298 = vector.extract_strided_slice %1293 {offsets = [0, 0], sizes = [8, 1], strides = [1, 1]} : vector<8x2xf32> to vector<8x1xf32>
    %1299 = vector.extract_strided_slice %1295 {offsets = [0, 0], sizes = [1, 32], strides = [1, 1]} : vector<2x32xf32> to vector<1x32xf32>
    %1300 = vector.broadcast %1298 : vector<8x1xf32> to vector<8x32xf32>
    %1301 = vector.broadcast %1299 : vector<1x32xf32> to vector<8x32xf32>
    %1302 = arith.mulf %1300, %1301 : vector<8x32xf32>
    %1303 = vector.extract_strided_slice %1293 {offsets = [0, 1], sizes = [8, 1], strides = [1, 1]} : vector<8x2xf32> to vector<8x1xf32>
    %1304 = vector.extract_strided_slice %1295 {offsets = [1, 0], sizes = [1, 32], strides = [1, 1]} : vector<2x32xf32> to vector<1x32xf32>
    %1305 = vector.broadcast %1303 : vector<8x1xf32> to vector<8x32xf32>
    %1306 = vector.broadcast %1304 : vector<1x32xf32> to vector<8x32xf32>
    %1307 = arith.mulf %1305, %1306 : vector<8x32xf32>
    %1308 = arith.addf %1302, %1307 : vector<8x32xf32>
    %1309 = vector.broadcast %1297 : vector<1x32xf32> to vector<8x32xf32>
    %1310 = arith.addf %1308, %1309 : vector<8x32xf32>
    %cst_355 = arith.constant 0.000000e+00 : f32
    %1311 = vector.broadcast %cst_355 : f32 to vector<8x32xf32>
    %1312 = arith.maximumf %1310, %1311 : vector<8x32xf32>
    %c98 = arith.constant 98 : index
    %c0_356 = arith.constant 0 : index
    %c0_357 = arith.constant 0 : index
    %1313 = vector.load %arg2[%c98, %c0_356, %c0_357] : memref<106x32x32xf32, #tpu.memory_space<vmem>>, vector<1x32x2xf32>
    %1314 = vector.shape_cast %1313 : vector<1x32x2xf32> to vector<32x2xf32>
    %c99 = arith.constant 99 : index
    %c0_358 = arith.constant 0 : index
    %c0_359 = arith.constant 0 : index
    %1315 = vector.load %arg2[%c99, %c0_358, %c0_359] : memref<106x32x32xf32, #tpu.memory_space<vmem>>, vector<1x1x2xf32>
    %1316 = vector.shape_cast %1315 : vector<1x1x2xf32> to vector<1x2xf32>
    %cst_360 = arith.constant dense<0.000000e+00> : vector<8x2xf32>
    %1317 = tpu.matmul %1312, %1314, %cst_360 {dimension_numbers = #tpu.dot_dimension_numbers<[1], [0], [0], [1], [0, 0, 1, 1], [], []>} : vector<8x32xf32>, vector<32x2xf32>, vector<8x2xf32> -> vector<8x2xf32>
    %1318 = vector.broadcast %1316 : vector<1x2xf32> to vector<8x2xf32>
    %1319 = arith.addf %1317, %1318 : vector<8x2xf32>
    %1320 = arith.addf %1267, %1319 : vector<8x2xf32>
    %c100 = arith.constant 100 : index
    %c0_361 = arith.constant 0 : index
    %c0_362 = arith.constant 0 : index
    %1321 = vector.load %arg2[%c100, %c0_361, %c0_362] : memref<106x32x32xf32, #tpu.memory_space<vmem>>, vector<1x2x8xf32>
    %1322 = vector.shape_cast %1321 : vector<1x2x8xf32> to vector<2x8xf32>
    %c101 = arith.constant 101 : index
    %c0_363 = arith.constant 0 : index
    %c0_364 = arith.constant 0 : index
    %1323 = vector.load %arg2[%c101, %c0_363, %c0_364] : memref<106x32x32xf32, #tpu.memory_space<vmem>>, vector<1x1x8xf32>
    %1324 = vector.shape_cast %1323 : vector<1x1x8xf32> to vector<1x8xf32>
    %1325 = vector.extract_strided_slice %1320 {offsets = [0, 0], sizes = [8, 1], strides = [1, 1]} : vector<8x2xf32> to vector<8x1xf32>
    %1326 = vector.extract_strided_slice %1322 {offsets = [0, 0], sizes = [1, 8], strides = [1, 1]} : vector<2x8xf32> to vector<1x8xf32>
    %1327 = vector.broadcast %1325 : vector<8x1xf32> to vector<8x8xf32>
    %1328 = vector.broadcast %1326 : vector<1x8xf32> to vector<8x8xf32>
    %1329 = arith.mulf %1327, %1328 : vector<8x8xf32>
    %1330 = vector.extract_strided_slice %1320 {offsets = [0, 1], sizes = [8, 1], strides = [1, 1]} : vector<8x2xf32> to vector<8x1xf32>
    %1331 = vector.extract_strided_slice %1322 {offsets = [1, 0], sizes = [1, 8], strides = [1, 1]} : vector<2x8xf32> to vector<1x8xf32>
    %1332 = vector.broadcast %1330 : vector<8x1xf32> to vector<8x8xf32>
    %1333 = vector.broadcast %1331 : vector<1x8xf32> to vector<8x8xf32>
    %1334 = arith.mulf %1332, %1333 : vector<8x8xf32>
    %1335 = arith.addf %1329, %1334 : vector<8x8xf32>
    %1336 = vector.broadcast %1324 : vector<1x8xf32> to vector<8x8xf32>
    %1337 = arith.addf %1335, %1336 : vector<8x8xf32>
    %cst_365 = arith.constant 0.000000e+00 : f32
    %1338 = vector.broadcast %cst_365 : f32 to vector<8x8xf32>
    %1339 = arith.cmpf oge, %1337, %1338 : vector<8x8xf32>
    %cst_366 = arith.constant 0.00999999977 : f32
    %1340 = vector.broadcast %cst_366 : f32 to vector<8x8xf32>
    %1341 = arith.mulf %1340, %1337 : vector<8x8xf32>
    %1342 = arith.select %1339, %1337, %1341 : vector<8x8xi1>, vector<8x8xf32>
    %cst_367 = arith.constant dense<0.000000e+00> : vector<8xf32>
    %1343 = vector.multi_reduction <add>, %1342, %cst_367 [1] : vector<8x8xf32> to vector<8xf32>
    %1344 = vector.shape_cast %1343 : vector<8xf32> to vector<8x1xf32>
    %cst_368 = arith.constant 8.000000e+00 : f32
    %1345 = vector.broadcast %cst_368 : f32 to vector<8x1xf32>
    %1346 = arith.divf %1344, %1345 : vector<8x1xf32>
    %1347 = vector.broadcast %1346 : vector<8x1xf32> to vector<8x8xf32>
    %1348 = arith.subf %1342, %1347 : vector<8x8xf32>
    %1349 = arith.mulf %1348, %1348 : vector<8x8xf32>
    %cst_369 = arith.constant dense<0.000000e+00> : vector<8xf32>
    %1350 = vector.multi_reduction <add>, %1349, %cst_369 [1] : vector<8x8xf32> to vector<8xf32>
    %1351 = vector.shape_cast %1350 : vector<8xf32> to vector<8x1xf32>
    %cst_370 = arith.constant 8.000000e+00 : f32
    %1352 = vector.broadcast %cst_370 : f32 to vector<8x1xf32>
    %1353 = arith.divf %1351, %1352 : vector<8x1xf32>
    %1354 = vector.broadcast %1346 : vector<8x1xf32> to vector<8x8xf32>
    %1355 = arith.subf %1342, %1354 : vector<8x8xf32>
    %cst_371 = arith.constant 9.99999974E-6 : f32
    %1356 = vector.broadcast %cst_371 : f32 to vector<8x1xf32>
    %1357 = arith.addf %1353, %1356 : vector<8x1xf32>
    %1358 = math.rsqrt %1357 : vector<8x1xf32>
    %1359 = vector.broadcast %1358 : vector<8x1xf32> to vector<8x8xf32>
    %1360 = arith.mulf %1355, %1359 : vector<8x8xf32>
    %c102 = arith.constant 102 : index
    %c0_372 = arith.constant 0 : index
    %c0_373 = arith.constant 0 : index
    %1361 = vector.load %arg2[%c102, %c0_372, %c0_373] : memref<106x32x32xf32, #tpu.memory_space<vmem>>, vector<1x1x8xf32>
    %1362 = vector.shape_cast %1361 : vector<1x1x8xf32> to vector<1x8xf32>
    %1363 = vector.broadcast %1362 : vector<1x8xf32> to vector<8x8xf32>
    %1364 = arith.mulf %1360, %1363 : vector<8x8xf32>
    %c103 = arith.constant 103 : index
    %c0_374 = arith.constant 0 : index
    %c0_375 = arith.constant 0 : index
    %1365 = vector.load %arg2[%c103, %c0_374, %c0_375] : memref<106x32x32xf32, #tpu.memory_space<vmem>>, vector<1x1x8xf32>
    %1366 = vector.shape_cast %1365 : vector<1x1x8xf32> to vector<1x8xf32>
    %1367 = vector.broadcast %1366 : vector<1x8xf32> to vector<8x8xf32>
    %1368 = arith.addf %1364, %1367 : vector<8x8xf32>
    %c104 = arith.constant 104 : index
    %c0_376 = arith.constant 0 : index
    %c0_377 = arith.constant 0 : index
    %1369 = vector.load %arg2[%c104, %c0_376, %c0_377] : memref<106x32x32xf32, #tpu.memory_space<vmem>>, vector<1x8x1xf32>
    %1370 = vector.shape_cast %1369 : vector<1x8x1xf32> to vector<8x1xf32>
    %c105 = arith.constant 105 : index
    %c0_378 = arith.constant 0 : index
    %c0_379 = arith.constant 0 : index
    %1371 = vector.load %arg2[%c105, %c0_378, %c0_379] : memref<106x32x32xf32, #tpu.memory_space<vmem>>, vector<1x1x1xf32>
    %1372 = vector.shape_cast %1371 : vector<1x1x1xf32> to vector<1x1xf32>
    %1373 = vector.extract_strided_slice %1368 {offsets = [0, 0], sizes = [8, 1], strides = [1, 1]} : vector<8x8xf32> to vector<8x1xf32>
    %1374 = vector.extract_strided_slice %1370 {offsets = [0, 0], sizes = [1, 1], strides = [1, 1]} : vector<8x1xf32> to vector<1x1xf32>
    %1375 = vector.broadcast %1374 : vector<1x1xf32> to vector<8x1xf32>
    %1376 = arith.mulf %1373, %1375 : vector<8x1xf32>
    %1377 = vector.extract_strided_slice %1368 {offsets = [0, 1], sizes = [8, 1], strides = [1, 1]} : vector<8x8xf32> to vector<8x1xf32>
    %1378 = vector.extract_strided_slice %1370 {offsets = [1, 0], sizes = [1, 1], strides = [1, 1]} : vector<8x1xf32> to vector<1x1xf32>
    %1379 = vector.broadcast %1378 : vector<1x1xf32> to vector<8x1xf32>
    %1380 = arith.mulf %1377, %1379 : vector<8x1xf32>
    %1381 = arith.addf %1376, %1380 : vector<8x1xf32>
    %1382 = vector.extract_strided_slice %1368 {offsets = [0, 2], sizes = [8, 1], strides = [1, 1]} : vector<8x8xf32> to vector<8x1xf32>
    %1383 = vector.extract_strided_slice %1370 {offsets = [2, 0], sizes = [1, 1], strides = [1, 1]} : vector<8x1xf32> to vector<1x1xf32>
    %1384 = vector.broadcast %1383 : vector<1x1xf32> to vector<8x1xf32>
    %1385 = arith.mulf %1382, %1384 : vector<8x1xf32>
    %1386 = arith.addf %1381, %1385 : vector<8x1xf32>
    %1387 = vector.extract_strided_slice %1368 {offsets = [0, 3], sizes = [8, 1], strides = [1, 1]} : vector<8x8xf32> to vector<8x1xf32>
    %1388 = vector.extract_strided_slice %1370 {offsets = [3, 0], sizes = [1, 1], strides = [1, 1]} : vector<8x1xf32> to vector<1x1xf32>
    %1389 = vector.broadcast %1388 : vector<1x1xf32> to vector<8x1xf32>
    %1390 = arith.mulf %1387, %1389 : vector<8x1xf32>
    %1391 = arith.addf %1386, %1390 : vector<8x1xf32>
    %1392 = vector.extract_strided_slice %1368 {offsets = [0, 4], sizes = [8, 1], strides = [1, 1]} : vector<8x8xf32> to vector<8x1xf32>
    %1393 = vector.extract_strided_slice %1370 {offsets = [4, 0], sizes = [1, 1], strides = [1, 1]} : vector<8x1xf32> to vector<1x1xf32>
    %1394 = vector.broadcast %1393 : vector<1x1xf32> to vector<8x1xf32>
    %1395 = arith.mulf %1392, %1394 : vector<8x1xf32>
    %1396 = arith.addf %1391, %1395 : vector<8x1xf32>
    %1397 = vector.extract_strided_slice %1368 {offsets = [0, 5], sizes = [8, 1], strides = [1, 1]} : vector<8x8xf32> to vector<8x1xf32>
    %1398 = vector.extract_strided_slice %1370 {offsets = [5, 0], sizes = [1, 1], strides = [1, 1]} : vector<8x1xf32> to vector<1x1xf32>
    %1399 = vector.broadcast %1398 : vector<1x1xf32> to vector<8x1xf32>
    %1400 = arith.mulf %1397, %1399 : vector<8x1xf32>
    %1401 = arith.addf %1396, %1400 : vector<8x1xf32>
    %1402 = vector.extract_strided_slice %1368 {offsets = [0, 6], sizes = [8, 1], strides = [1, 1]} : vector<8x8xf32> to vector<8x1xf32>
    %1403 = vector.extract_strided_slice %1370 {offsets = [6, 0], sizes = [1, 1], strides = [1, 1]} : vector<8x1xf32> to vector<1x1xf32>
    %1404 = vector.broadcast %1403 : vector<1x1xf32> to vector<8x1xf32>
    %1405 = arith.mulf %1402, %1404 : vector<8x1xf32>
    %1406 = arith.addf %1401, %1405 : vector<8x1xf32>
    %1407 = vector.extract_strided_slice %1368 {offsets = [0, 7], sizes = [8, 1], strides = [1, 1]} : vector<8x8xf32> to vector<8x1xf32>
    %1408 = vector.extract_strided_slice %1370 {offsets = [7, 0], sizes = [1, 1], strides = [1, 1]} : vector<8x1xf32> to vector<1x1xf32>
    %1409 = vector.broadcast %1408 : vector<1x1xf32> to vector<8x1xf32>
    %1410 = arith.mulf %1407, %1409 : vector<8x1xf32>
    %1411 = arith.addf %1406, %1410 : vector<8x1xf32>
    %1412 = vector.broadcast %1372 : vector<1x1xf32> to vector<8x1xf32>
    %1413 = arith.addf %1411, %1412 : vector<8x1xf32>
    %c0_380 = arith.constant 0 : index
    %c0_381 = arith.constant 0 : index
    %c8_382 = arith.constant 8 : index
    %1414 = vector.load %arg3[%c0_380, %c0_381, %c8_382] : memref<2x8x9xf32, #tpu.memory_space<vmem>>, vector<1x8x1xf32>
    %1415 = vector.shape_cast %1414 : vector<1x8x1xf32> to vector<8x1xf32>
    %1416 = vector.shape_cast %1413 : vector<8x1xf32> to vector<1x8x1xf32>
    tpu.vector_store %arg3[%c0_380, %c0_381, %c8_382], %1416 {strides = array<i32>} : memref<2x8x9xf32, #tpu.memory_space<vmem>>, vector<1x8x1xf32>,
    %c1_383 = arith.constant 1 : index
    %c0_384 = arith.constant 0 : index
    %c0_385 = arith.constant 0 : index
    %1417 = vector.load %arg0[%c1_383, %c0_384, %c0_385] : memref<2x16x4xf32, #tpu.memory_space<vmem>>, vector<1x16x4xf32>
    %1418 = vector.shape_cast %1417 : vector<1x16x4xf32> to vector<16x4xf32>
    %c1_386 = arith.constant 1 : index
    %c0_387 = arith.constant 0 : index
    %c0_388 = arith.constant 0 : index
    %1419 = vector.load %arg1[%c1_386, %c0_387, %c0_388] : memref<2x8x1xf32, #tpu.memory_space<vmem>>, vector<1x8x1xf32>
    %1420 = vector.shape_cast %1419 : vector<1x8x1xf32> to vector<8x1xf32>
    %c0_389 = arith.constant 0 : index
    %c0_390 = arith.constant 0 : index
    %c0_391 = arith.constant 0 : index
    %1421 = vector.load %arg2[%c0_389, %c0_390, %c0_391] : memref<106x32x32xf32, #tpu.memory_space<vmem>>, vector<1x8x16xf32>
    %1422 = vector.shape_cast %1421 : vector<1x8x16xf32> to vector<8x16xf32>
    %c1_392 = arith.constant 1 : index
    %c0_393 = arith.constant 0 : index
    %c0_394 = arith.constant 0 : index
    %1423 = vector.load %arg2[%c1_392, %c0_393, %c0_394] : memref<106x32x32xf32, #tpu.memory_space<vmem>>, vector<1x8x1xf32>
    %1424 = vector.shape_cast %1423 : vector<1x8x1xf32> to vector<8x1xf32>
    %cst_395 = arith.constant dense<0.000000e+00> : vector<8x4xf32>
    %1425 = tpu.matmul %1422, %1418, %cst_395 {dimension_numbers = #tpu.dot_dimension_numbers<[1], [0], [0], [1], [0, 0, 1, 1], [], []>} : vector<8x16xf32>, vector<16x4xf32>, vector<8x4xf32> -> vector<8x4xf32>
    %1426 = vector.broadcast %1424 : vector<8x1xf32> to vector<8x4xf32>
    %1427 = arith.addf %1425, %1426 : vector<8x4xf32>
    %c8_396 = arith.constant 8 : index
    %c0_397 = arith.constant 0 : index
    %c0_398 = arith.constant 0 : index
    %1428 = vector.load %arg2[%c8_396, %c0_397, %c0_398] : memref<106x32x32xf32, #tpu.memory_space<vmem>>, vector<1x4x8xf32>
    %1429 = vector.shape_cast %1428 : vector<1x4x8xf32> to vector<4x8xf32>
    %c9_399 = arith.constant 9 : index
    %c0_400 = arith.constant 0 : index
    %c0_401 = arith.constant 0 : index
    %1430 = vector.load %arg2[%c9_399, %c0_400, %c0_401] : memref<106x32x32xf32, #tpu.memory_space<vmem>>, vector<1x1x8xf32>
    %1431 = vector.shape_cast %1430 : vector<1x1x8xf32> to vector<1x8xf32>
    %1432 = vector.extract_strided_slice %1427 {offsets = [0, 0], sizes = [8, 1], strides = [1, 1]} : vector<8x4xf32> to vector<8x1xf32>
    %1433 = vector.extract_strided_slice %1429 {offsets = [0, 0], sizes = [1, 8], strides = [1, 1]} : vector<4x8xf32> to vector<1x8xf32>
    %1434 = vector.broadcast %1432 : vector<8x1xf32> to vector<8x8xf32>
    %1435 = vector.broadcast %1433 : vector<1x8xf32> to vector<8x8xf32>
    %1436 = arith.mulf %1434, %1435 : vector<8x8xf32>
    %1437 = vector.extract_strided_slice %1427 {offsets = [0, 1], sizes = [8, 1], strides = [1, 1]} : vector<8x4xf32> to vector<8x1xf32>
    %1438 = vector.extract_strided_slice %1429 {offsets = [1, 0], sizes = [1, 8], strides = [1, 1]} : vector<4x8xf32> to vector<1x8xf32>
    %1439 = vector.broadcast %1437 : vector<8x1xf32> to vector<8x8xf32>
    %1440 = vector.broadcast %1438 : vector<1x8xf32> to vector<8x8xf32>
    %1441 = arith.mulf %1439, %1440 : vector<8x8xf32>
    %1442 = arith.addf %1436, %1441 : vector<8x8xf32>
    %1443 = vector.extract_strided_slice %1427 {offsets = [0, 2], sizes = [8, 1], strides = [1, 1]} : vector<8x4xf32> to vector<8x1xf32>
    %1444 = vector.extract_strided_slice %1429 {offsets = [2, 0], sizes = [1, 8], strides = [1, 1]} : vector<4x8xf32> to vector<1x8xf32>
    %1445 = vector.broadcast %1443 : vector<8x1xf32> to vector<8x8xf32>
    %1446 = vector.broadcast %1444 : vector<1x8xf32> to vector<8x8xf32>
    %1447 = arith.mulf %1445, %1446 : vector<8x8xf32>
    %1448 = arith.addf %1442, %1447 : vector<8x8xf32>
    %1449 = vector.extract_strided_slice %1427 {offsets = [0, 3], sizes = [8, 1], strides = [1, 1]} : vector<8x4xf32> to vector<8x1xf32>
    %1450 = vector.extract_strided_slice %1429 {offsets = [3, 0], sizes = [1, 8], strides = [1, 1]} : vector<4x8xf32> to vector<1x8xf32>
    %1451 = vector.broadcast %1449 : vector<8x1xf32> to vector<8x8xf32>
    %1452 = vector.broadcast %1450 : vector<1x8xf32> to vector<8x8xf32>
    %1453 = arith.mulf %1451, %1452 : vector<8x8xf32>
    %1454 = arith.addf %1448, %1453 : vector<8x8xf32>
    %1455 = vector.broadcast %1431 : vector<1x8xf32> to vector<8x8xf32>
    %1456 = arith.addf %1454, %1455 : vector<8x8xf32>
    %cst_402 = arith.constant dense<0.000000e+00> : vector<8xf32>
    %1457 = vector.multi_reduction <add>, %1427, %cst_402 [1] : vector<8x4xf32> to vector<8xf32>
    %1458 = vector.shape_cast %1457 : vector<8xf32> to vector<8x1xf32>
    %cst_403 = arith.constant 4.000000e+00 : f32
    %1459 = vector.broadcast %cst_403 : f32 to vector<8x1xf32>
    %1460 = arith.divf %1458, %1459 : vector<8x1xf32>
    %1461 = vector.broadcast %1460 : vector<8x1xf32> to vector<8x4xf32>
    %1462 = arith.subf %1427, %1461 : vector<8x4xf32>
    %1463 = arith.mulf %1462, %1462 : vector<8x4xf32>
    %cst_404 = arith.constant dense<0.000000e+00> : vector<8xf32>
    %1464 = vector.multi_reduction <add>, %1463, %cst_404 [1] : vector<8x4xf32> to vector<8xf32>
    %1465 = vector.shape_cast %1464 : vector<8xf32> to vector<8x1xf32>
    %cst_405 = arith.constant 4.000000e+00 : f32
    %1466 = vector.broadcast %cst_405 : f32 to vector<8x1xf32>
    %1467 = arith.divf %1465, %1466 : vector<8x1xf32>
    %1468 = vector.broadcast %1460 : vector<8x1xf32> to vector<8x4xf32>
    %1469 = arith.subf %1427, %1468 : vector<8x4xf32>
    %cst_406 = arith.constant 9.99999974E-6 : f32
    %1470 = vector.broadcast %cst_406 : f32 to vector<8x1xf32>
    %1471 = arith.addf %1467, %1470 : vector<8x1xf32>
    %1472 = math.rsqrt %1471 : vector<8x1xf32>
    %1473 = vector.broadcast %1472 : vector<8x1xf32> to vector<8x4xf32>
    %1474 = arith.mulf %1469, %1473 : vector<8x4xf32>
    %c2_407 = arith.constant 2 : index
    %c0_408 = arith.constant 0 : index
    %c0_409 = arith.constant 0 : index
    %1475 = vector.load %arg2[%c2_407, %c0_408, %c0_409] : memref<106x32x32xf32, #tpu.memory_space<vmem>>, vector<1x1x4xf32>
    %1476 = vector.shape_cast %1475 : vector<1x1x4xf32> to vector<1x4xf32>
    %1477 = vector.broadcast %1476 : vector<1x4xf32> to vector<8x4xf32>
    %1478 = arith.mulf %1474, %1477 : vector<8x4xf32>
    %c3_410 = arith.constant 3 : index
    %c0_411 = arith.constant 0 : index
    %c0_412 = arith.constant 0 : index
    %1479 = vector.load %arg2[%c3_410, %c0_411, %c0_412] : memref<106x32x32xf32, #tpu.memory_space<vmem>>, vector<1x1x4xf32>
    %1480 = vector.shape_cast %1479 : vector<1x1x4xf32> to vector<1x4xf32>
    %1481 = vector.broadcast %1480 : vector<1x4xf32> to vector<8x4xf32>
    %1482 = arith.addf %1478, %1481 : vector<8x4xf32>
    %c4_413 = arith.constant 4 : index
    %c0_414 = arith.constant 0 : index
    %c0_415 = arith.constant 0 : index
    %1483 = vector.load %arg2[%c4_413, %c0_414, %c0_415] : memref<106x32x32xf32, #tpu.memory_space<vmem>>, vector<1x4x32xf32>
    %1484 = vector.shape_cast %1483 : vector<1x4x32xf32> to vector<4x32xf32>
    %c5_416 = arith.constant 5 : index
    %c0_417 = arith.constant 0 : index
    %c0_418 = arith.constant 0 : index
    %1485 = vector.load %arg2[%c5_416, %c0_417, %c0_418] : memref<106x32x32xf32, #tpu.memory_space<vmem>>, vector<1x1x32xf32>
    %1486 = vector.shape_cast %1485 : vector<1x1x32xf32> to vector<1x32xf32>
    %1487 = vector.extract_strided_slice %1482 {offsets = [0, 0], sizes = [8, 1], strides = [1, 1]} : vector<8x4xf32> to vector<8x1xf32>
    %1488 = vector.extract_strided_slice %1484 {offsets = [0, 0], sizes = [1, 32], strides = [1, 1]} : vector<4x32xf32> to vector<1x32xf32>
    %1489 = vector.broadcast %1487 : vector<8x1xf32> to vector<8x32xf32>
    %1490 = vector.broadcast %1488 : vector<1x32xf32> to vector<8x32xf32>
    %1491 = arith.mulf %1489, %1490 : vector<8x32xf32>
    %1492 = vector.extract_strided_slice %1482 {offsets = [0, 1], sizes = [8, 1], strides = [1, 1]} : vector<8x4xf32> to vector<8x1xf32>
    %1493 = vector.extract_strided_slice %1484 {offsets = [1, 0], sizes = [1, 32], strides = [1, 1]} : vector<4x32xf32> to vector<1x32xf32>
    %1494 = vector.broadcast %1492 : vector<8x1xf32> to vector<8x32xf32>
    %1495 = vector.broadcast %1493 : vector<1x32xf32> to vector<8x32xf32>
    %1496 = arith.mulf %1494, %1495 : vector<8x32xf32>
    %1497 = arith.addf %1491, %1496 : vector<8x32xf32>
    %1498 = vector.extract_strided_slice %1482 {offsets = [0, 2], sizes = [8, 1], strides = [1, 1]} : vector<8x4xf32> to vector<8x1xf32>
    %1499 = vector.extract_strided_slice %1484 {offsets = [2, 0], sizes = [1, 32], strides = [1, 1]} : vector<4x32xf32> to vector<1x32xf32>
    %1500 = vector.broadcast %1498 : vector<8x1xf32> to vector<8x32xf32>
    %1501 = vector.broadcast %1499 : vector<1x32xf32> to vector<8x32xf32>
    %1502 = arith.mulf %1500, %1501 : vector<8x32xf32>
    %1503 = arith.addf %1497, %1502 : vector<8x32xf32>
    %1504 = vector.extract_strided_slice %1482 {offsets = [0, 3], sizes = [8, 1], strides = [1, 1]} : vector<8x4xf32> to vector<8x1xf32>
    %1505 = vector.extract_strided_slice %1484 {offsets = [3, 0], sizes = [1, 32], strides = [1, 1]} : vector<4x32xf32> to vector<1x32xf32>
    %1506 = vector.broadcast %1504 : vector<8x1xf32> to vector<8x32xf32>
    %1507 = vector.broadcast %1505 : vector<1x32xf32> to vector<8x32xf32>
    %1508 = arith.mulf %1506, %1507 : vector<8x32xf32>
    %1509 = arith.addf %1503, %1508 : vector<8x32xf32>
    %1510 = vector.broadcast %1486 : vector<1x32xf32> to vector<8x32xf32>
    %1511 = arith.addf %1509, %1510 : vector<8x32xf32>
    %cst_419 = arith.constant 0.000000e+00 : f32
    %1512 = vector.broadcast %cst_419 : f32 to vector<8x32xf32>
    %1513 = arith.maximumf %1511, %1512 : vector<8x32xf32>
    %c6_420 = arith.constant 6 : index
    %c0_421 = arith.constant 0 : index
    %c0_422 = arith.constant 0 : index
    %1514 = vector.load %arg2[%c6_420, %c0_421, %c0_422] : memref<106x32x32xf32, #tpu.memory_space<vmem>>, vector<1x32x8xf32>
    %1515 = vector.shape_cast %1514 : vector<1x32x8xf32> to vector<32x8xf32>
    %c7_423 = arith.constant 7 : index
    %c0_424 = arith.constant 0 : index
    %c0_425 = arith.constant 0 : index
    %1516 = vector.load %arg2[%c7_423, %c0_424, %c0_425] : memref<106x32x32xf32, #tpu.memory_space<vmem>>, vector<1x1x8xf32>
    %1517 = vector.shape_cast %1516 : vector<1x1x8xf32> to vector<1x8xf32>
    %cst_426 = arith.constant dense<0.000000e+00> : vector<8x8xf32>
    %1518 = tpu.matmul %1513, %1515, %cst_426 {dimension_numbers = #tpu.dot_dimension_numbers<[1], [0], [0], [1], [0, 0, 1, 1], [], []>} : vector<8x32xf32>, vector<32x8xf32>, vector<8x8xf32> -> vector<8x8xf32>
    %1519 = vector.broadcast %1517 : vector<1x8xf32> to vector<8x8xf32>
    %1520 = arith.addf %1518, %1519 : vector<8x8xf32>
    %1521 = arith.addf %1456, %1520 : vector<8x8xf32>
    %c16_427 = arith.constant 16 : index
    %c0_428 = arith.constant 0 : index
    %c0_429 = arith.constant 0 : index
    %1522 = vector.load %arg2[%c16_427, %c0_428, %c0_429] : memref<106x32x32xf32, #tpu.memory_space<vmem>>, vector<1x1x8xf32>
    %1523 = vector.shape_cast %1522 : vector<1x1x8xf32> to vector<1x8xf32>
    %c17_430 = arith.constant 17 : index
    %c0_431 = arith.constant 0 : index
    %c0_432 = arith.constant 0 : index
    %1524 = vector.load %arg2[%c17_430, %c0_431, %c0_432] : memref<106x32x32xf32, #tpu.memory_space<vmem>>, vector<1x1x8xf32>
    %1525 = vector.shape_cast %1524 : vector<1x1x8xf32> to vector<1x8xf32>
    %1526 = vector.broadcast %1420 : vector<8x1xf32> to vector<8x8xf32>
    %1527 = vector.broadcast %1523 : vector<1x8xf32> to vector<8x8xf32>
    %1528 = arith.mulf %1526, %1527 : vector<8x8xf32>
    %1529 = vector.broadcast %1525 : vector<1x8xf32> to vector<8x8xf32>
    %1530 = arith.addf %1528, %1529 : vector<8x8xf32>
    %cst_433 = arith.constant dense<0.000000e+00> : vector<8xf32>
    %1531 = vector.multi_reduction <add>, %1420, %cst_433 [1] : vector<8x1xf32> to vector<8xf32>
    %1532 = vector.shape_cast %1531 : vector<8xf32> to vector<8x1xf32>
    %cst_434 = arith.constant 1.000000e+00 : f32
    %1533 = vector.broadcast %cst_434 : f32 to vector<8x1xf32>
    %1534 = arith.divf %1532, %1533 : vector<8x1xf32>
    %1535 = arith.subf %1420, %1534 : vector<8x1xf32>
    %1536 = arith.mulf %1535, %1535 : vector<8x1xf32>
    %cst_435 = arith.constant dense<0.000000e+00> : vector<8xf32>
    %1537 = vector.multi_reduction <add>, %1536, %cst_435 [1] : vector<8x1xf32> to vector<8xf32>
    %1538 = vector.shape_cast %1537 : vector<8xf32> to vector<8x1xf32>
    %cst_436 = arith.constant 1.000000e+00 : f32
    %1539 = vector.broadcast %cst_436 : f32 to vector<8x1xf32>
    %1540 = arith.divf %1538, %1539 : vector<8x1xf32>
    %1541 = arith.subf %1420, %1534 : vector<8x1xf32>
    %cst_437 = arith.constant 9.99999974E-6 : f32
    %1542 = vector.broadcast %cst_437 : f32 to vector<8x1xf32>
    %1543 = arith.addf %1540, %1542 : vector<8x1xf32>
    %1544 = math.rsqrt %1543 : vector<8x1xf32>
    %1545 = arith.mulf %1541, %1544 : vector<8x1xf32>
    %c10_438 = arith.constant 10 : index
    %c0_439 = arith.constant 0 : index
    %c0_440 = arith.constant 0 : index
    %1546 = vector.load %arg2[%c10_438, %c0_439, %c0_440] : memref<106x32x32xf32, #tpu.memory_space<vmem>>, vector<1x1x1xf32>
    %1547 = vector.shape_cast %1546 : vector<1x1x1xf32> to vector<1x1xf32>
    %1548 = vector.broadcast %1547 : vector<1x1xf32> to vector<8x1xf32>
    %1549 = arith.mulf %1545, %1548 : vector<8x1xf32>
    %c11_441 = arith.constant 11 : index
    %c0_442 = arith.constant 0 : index
    %c0_443 = arith.constant 0 : index
    %1550 = vector.load %arg2[%c11_441, %c0_442, %c0_443] : memref<106x32x32xf32, #tpu.memory_space<vmem>>, vector<1x1x1xf32>
    %1551 = vector.shape_cast %1550 : vector<1x1x1xf32> to vector<1x1xf32>
    %1552 = vector.broadcast %1551 : vector<1x1xf32> to vector<8x1xf32>
    %1553 = arith.addf %1549, %1552 : vector<8x1xf32>
    %c12_444 = arith.constant 12 : index
    %c0_445 = arith.constant 0 : index
    %c0_446 = arith.constant 0 : index
    %1554 = vector.load %arg2[%c12_444, %c0_445, %c0_446] : memref<106x32x32xf32, #tpu.memory_space<vmem>>, vector<1x1x32xf32>
    %1555 = vector.shape_cast %1554 : vector<1x1x32xf32> to vector<1x32xf32>
    %c13_447 = arith.constant 13 : index
    %c0_448 = arith.constant 0 : index
    %c0_449 = arith.constant 0 : index
    %1556 = vector.load %arg2[%c13_447, %c0_448, %c0_449] : memref<106x32x32xf32, #tpu.memory_space<vmem>>, vector<1x1x32xf32>
    %1557 = vector.shape_cast %1556 : vector<1x1x32xf32> to vector<1x32xf32>
    %1558 = vector.broadcast %1553 : vector<8x1xf32> to vector<8x32xf32>
    %1559 = vector.broadcast %1555 : vector<1x32xf32> to vector<8x32xf32>
    %1560 = arith.mulf %1558, %1559 : vector<8x32xf32>
    %1561 = vector.broadcast %1557 : vector<1x32xf32> to vector<8x32xf32>
    %1562 = arith.addf %1560, %1561 : vector<8x32xf32>
    %cst_450 = arith.constant 0.000000e+00 : f32
    %1563 = vector.broadcast %cst_450 : f32 to vector<8x32xf32>
    %1564 = arith.maximumf %1562, %1563 : vector<8x32xf32>
    %c14_451 = arith.constant 14 : index
    %c0_452 = arith.constant 0 : index
    %c0_453 = arith.constant 0 : index
    %1565 = vector.load %arg2[%c14_451, %c0_452, %c0_453] : memref<106x32x32xf32, #tpu.memory_space<vmem>>, vector<1x32x8xf32>
    %1566 = vector.shape_cast %1565 : vector<1x32x8xf32> to vector<32x8xf32>
    %c15_454 = arith.constant 15 : index
    %c0_455 = arith.constant 0 : index
    %c0_456 = arith.constant 0 : index
    %1567 = vector.load %arg2[%c15_454, %c0_455, %c0_456] : memref<106x32x32xf32, #tpu.memory_space<vmem>>, vector<1x1x8xf32>
    %1568 = vector.shape_cast %1567 : vector<1x1x8xf32> to vector<1x8xf32>
    %cst_457 = arith.constant dense<0.000000e+00> : vector<8x8xf32>
    %1569 = tpu.matmul %1564, %1566, %cst_457 {dimension_numbers = #tpu.dot_dimension_numbers<[1], [0], [0], [1], [0, 0, 1, 1], [], []>} : vector<8x32xf32>, vector<32x8xf32>, vector<8x8xf32> -> vector<8x8xf32>
    %1570 = vector.broadcast %1568 : vector<1x8xf32> to vector<8x8xf32>
    %1571 = arith.addf %1569, %1570 : vector<8x8xf32>
    %1572 = arith.addf %1530, %1571 : vector<8x8xf32>
    %c1_458 = arith.constant 1 : index
    %c0_459 = arith.constant 0 : index
    %c0_460 = arith.constant 0 : index
    %1573 = vector.load %arg4[%c1_458, %c0_459, %c0_460] : memref<2x8x16xf32, #tpu.memory_space<vmem>>, vector<1x8x8xf32>
    %1574 = vector.shape_cast %1573 : vector<1x8x8xf32> to vector<8x8xf32>
    %1575 = vector.shape_cast %1521 : vector<8x8xf32> to vector<1x8x8xf32>
    tpu.vector_store %arg4[%c1_458, %c0_459, %c0_460], %1575 {strides = array<i32>} : memref<2x8x16xf32, #tpu.memory_space<vmem>>, vector<1x8x8xf32>,
    %c1_461 = arith.constant 1 : index
    %c0_462 = arith.constant 0 : index
    %c8_463 = arith.constant 8 : index
    %1576 = vector.load %arg4[%c1_461, %c0_462, %c8_463] : memref<2x8x16xf32, #tpu.memory_space<vmem>>, vector<1x8x8xf32>
    %1577 = vector.shape_cast %1576 : vector<1x8x8xf32> to vector<8x8xf32>
    %1578 = vector.shape_cast %1572 : vector<8x8xf32> to vector<1x8x8xf32>
    tpu.vector_store %arg4[%c1_461, %c0_462, %c8_463], %1578 {strides = array<i32>} : memref<2x8x16xf32, #tpu.memory_space<vmem>>, vector<1x8x8xf32>,
    %c1_464 = arith.constant 1 : index
    %c0_465 = arith.constant 0 : index
    %c0_466 = arith.constant 0 : index
    %1579 = vector.load %arg4[%c1_464, %c0_465, %c0_466] : memref<2x8x16xf32, #tpu.memory_space<vmem>>, vector<1x8x16xf32>
    %1580 = vector.shape_cast %1579 : vector<1x8x16xf32> to vector<8x16xf32>
    %c20_467 = arith.constant 20 : index
    %c0_468 = arith.constant 0 : index
    %c0_469 = arith.constant 0 : index
    %1581 = vector.load %arg2[%c20_467, %c0_468, %c0_469] : memref<106x32x32xf32, #tpu.memory_space<vmem>>, vector<1x8x8xf32>
    %1582 = vector.shape_cast %1581 : vector<1x8x8xf32> to vector<8x8xf32>
    %cst_470 = arith.constant dense<0.000000e+00> : vector<8xf32>
    %1583 = vector.multi_reduction <add>, %1580, %cst_470 [1] : vector<8x16xf32> to vector<8xf32>
    %1584 = vector.shape_cast %1583 : vector<8xf32> to vector<8x1xf32>
    %cst_471 = arith.constant 1.600000e+01 : f32
    %1585 = vector.broadcast %cst_471 : f32 to vector<8x1xf32>
    %1586 = arith.divf %1584, %1585 : vector<8x1xf32>
    %1587 = vector.broadcast %1586 : vector<8x1xf32> to vector<8x16xf32>
    %1588 = arith.subf %1580, %1587 : vector<8x16xf32>
    %1589 = arith.mulf %1588, %1588 : vector<8x16xf32>
    %cst_472 = arith.constant dense<0.000000e+00> : vector<8xf32>
    %1590 = vector.multi_reduction <add>, %1589, %cst_472 [1] : vector<8x16xf32> to vector<8xf32>
    %1591 = vector.shape_cast %1590 : vector<8xf32> to vector<8x1xf32>
    %cst_473 = arith.constant 1.600000e+01 : f32
    %1592 = vector.broadcast %cst_473 : f32 to vector<8x1xf32>
    %1593 = arith.divf %1591, %1592 : vector<8x1xf32>
    %1594 = vector.broadcast %1586 : vector<8x1xf32> to vector<8x16xf32>
    %1595 = arith.subf %1580, %1594 : vector<8x16xf32>
    %cst_474 = arith.constant 9.99999974E-6 : f32
    %1596 = vector.broadcast %cst_474 : f32 to vector<8x1xf32>
    %1597 = arith.addf %1593, %1596 : vector<8x1xf32>
    %1598 = math.rsqrt %1597 : vector<8x1xf32>
    %1599 = vector.broadcast %1598 : vector<8x1xf32> to vector<8x16xf32>
    %1600 = arith.mulf %1595, %1599 : vector<8x16xf32>
    %c18_475 = arith.constant 18 : index
    %c0_476 = arith.constant 0 : index
    %c0_477 = arith.constant 0 : index
    %1601 = vector.load %arg2[%c18_475, %c0_476, %c0_477] : memref<106x32x32xf32, #tpu.memory_space<vmem>>, vector<1x1x16xf32>
    %1602 = vector.shape_cast %1601 : vector<1x1x16xf32> to vector<1x16xf32>
    %1603 = vector.broadcast %1602 : vector<1x16xf32> to vector<8x16xf32>
    %1604 = arith.mulf %1600, %1603 : vector<8x16xf32>
    %c19_478 = arith.constant 19 : index
    %c0_479 = arith.constant 0 : index
    %c0_480 = arith.constant 0 : index
    %1605 = vector.load %arg2[%c19_478, %c0_479, %c0_480] : memref<106x32x32xf32, #tpu.memory_space<vmem>>, vector<1x1x16xf32>
    %1606 = vector.shape_cast %1605 : vector<1x1x16xf32> to vector<1x16xf32>
    %1607 = vector.broadcast %1606 : vector<1x16xf32> to vector<8x16xf32>
    %1608 = arith.addf %1604, %1607 : vector<8x16xf32>
    %c21_481 = arith.constant 21 : index
    %c0_482 = arith.constant 0 : index
    %c0_483 = arith.constant 0 : index
    %1609 = vector.load %arg2[%c21_481, %c0_482, %c0_483] : memref<106x32x32xf32, #tpu.memory_space<vmem>>, vector<1x8x1xf32>
    %1610 = vector.shape_cast %1609 : vector<1x8x1xf32> to vector<8x1xf32>
    %1611 = vector.extract_strided_slice %1582 {offsets = [0, 0], sizes = [8, 1], strides = [1, 1]} : vector<8x8xf32> to vector<8x1xf32>
    %1612 = vector.extract_strided_slice %1608 {offsets = [0, 0], sizes = [1, 16], strides = [1, 1]} : vector<8x16xf32> to vector<1x16xf32>
    %1613 = vector.broadcast %1611 : vector<8x1xf32> to vector<8x16xf32>
    %1614 = vector.broadcast %1612 : vector<1x16xf32> to vector<8x16xf32>
    %1615 = arith.mulf %1613, %1614 : vector<8x16xf32>
    %1616 = vector.extract_strided_slice %1582 {offsets = [0, 1], sizes = [8, 1], strides = [1, 1]} : vector<8x8xf32> to vector<8x1xf32>
    %1617 = vector.extract_strided_slice %1608 {offsets = [1, 0], sizes = [1, 16], strides = [1, 1]} : vector<8x16xf32> to vector<1x16xf32>
    %1618 = vector.broadcast %1616 : vector<8x1xf32> to vector<8x16xf32>
    %1619 = vector.broadcast %1617 : vector<1x16xf32> to vector<8x16xf32>
    %1620 = arith.mulf %1618, %1619 : vector<8x16xf32>
    %1621 = arith.addf %1615, %1620 : vector<8x16xf32>
    %1622 = vector.extract_strided_slice %1582 {offsets = [0, 2], sizes = [8, 1], strides = [1, 1]} : vector<8x8xf32> to vector<8x1xf32>
    %1623 = vector.extract_strided_slice %1608 {offsets = [2, 0], sizes = [1, 16], strides = [1, 1]} : vector<8x16xf32> to vector<1x16xf32>
    %1624 = vector.broadcast %1622 : vector<8x1xf32> to vector<8x16xf32>
    %1625 = vector.broadcast %1623 : vector<1x16xf32> to vector<8x16xf32>
    %1626 = arith.mulf %1624, %1625 : vector<8x16xf32>
    %1627 = arith.addf %1621, %1626 : vector<8x16xf32>
    %1628 = vector.extract_strided_slice %1582 {offsets = [0, 3], sizes = [8, 1], strides = [1, 1]} : vector<8x8xf32> to vector<8x1xf32>
    %1629 = vector.extract_strided_slice %1608 {offsets = [3, 0], sizes = [1, 16], strides = [1, 1]} : vector<8x16xf32> to vector<1x16xf32>
    %1630 = vector.broadcast %1628 : vector<8x1xf32> to vector<8x16xf32>
    %1631 = vector.broadcast %1629 : vector<1x16xf32> to vector<8x16xf32>
    %1632 = arith.mulf %1630, %1631 : vector<8x16xf32>
    %1633 = arith.addf %1627, %1632 : vector<8x16xf32>
    %1634 = vector.extract_strided_slice %1582 {offsets = [0, 4], sizes = [8, 1], strides = [1, 1]} : vector<8x8xf32> to vector<8x1xf32>
    %1635 = vector.extract_strided_slice %1608 {offsets = [4, 0], sizes = [1, 16], strides = [1, 1]} : vector<8x16xf32> to vector<1x16xf32>
    %1636 = vector.broadcast %1634 : vector<8x1xf32> to vector<8x16xf32>
    %1637 = vector.broadcast %1635 : vector<1x16xf32> to vector<8x16xf32>
    %1638 = arith.mulf %1636, %1637 : vector<8x16xf32>
    %1639 = arith.addf %1633, %1638 : vector<8x16xf32>
    %1640 = vector.extract_strided_slice %1582 {offsets = [0, 5], sizes = [8, 1], strides = [1, 1]} : vector<8x8xf32> to vector<8x1xf32>
    %1641 = vector.extract_strided_slice %1608 {offsets = [5, 0], sizes = [1, 16], strides = [1, 1]} : vector<8x16xf32> to vector<1x16xf32>
    %1642 = vector.broadcast %1640 : vector<8x1xf32> to vector<8x16xf32>
    %1643 = vector.broadcast %1641 : vector<1x16xf32> to vector<8x16xf32>
    %1644 = arith.mulf %1642, %1643 : vector<8x16xf32>
    %1645 = arith.addf %1639, %1644 : vector<8x16xf32>
    %1646 = vector.extract_strided_slice %1582 {offsets = [0, 6], sizes = [8, 1], strides = [1, 1]} : vector<8x8xf32> to vector<8x1xf32>
    %1647 = vector.extract_strided_slice %1608 {offsets = [6, 0], sizes = [1, 16], strides = [1, 1]} : vector<8x16xf32> to vector<1x16xf32>
    %1648 = vector.broadcast %1646 : vector<8x1xf32> to vector<8x16xf32>
    %1649 = vector.broadcast %1647 : vector<1x16xf32> to vector<8x16xf32>
    %1650 = arith.mulf %1648, %1649 : vector<8x16xf32>
    %1651 = arith.addf %1645, %1650 : vector<8x16xf32>
    %1652 = vector.extract_strided_slice %1582 {offsets = [0, 7], sizes = [8, 1], strides = [1, 1]} : vector<8x8xf32> to vector<8x1xf32>
    %1653 = vector.extract_strided_slice %1608 {offsets = [7, 0], sizes = [1, 16], strides = [1, 1]} : vector<8x16xf32> to vector<1x16xf32>
    %1654 = vector.broadcast %1652 : vector<8x1xf32> to vector<8x16xf32>
    %1655 = vector.broadcast %1653 : vector<1x16xf32> to vector<8x16xf32>
    %1656 = arith.mulf %1654, %1655 : vector<8x16xf32>
    %1657 = arith.addf %1651, %1656 : vector<8x16xf32>
    %1658 = vector.broadcast %1610 : vector<8x1xf32> to vector<8x16xf32>
    %1659 = arith.addf %1657, %1658 : vector<8x16xf32>
    %cst_484 = arith.constant 0.000000e+00 : f32
    %1660 = vector.broadcast %cst_484 : f32 to vector<8x16xf32>
    %1661 = arith.maximumf %1659, %1660 : vector<8x16xf32>
    %1662 = arith.addf %1580, %1661 : vector<8x16xf32>
    %c28_485 = arith.constant 28 : index
    %c0_486 = arith.constant 0 : index
    %c0_487 = arith.constant 0 : index
    %1663 = vector.load %arg2[%c28_485, %c0_486, %c0_487] : memref<106x32x32xf32, #tpu.memory_space<vmem>>, vector<1x16x8xf32>
    %1664 = vector.shape_cast %1663 : vector<1x16x8xf32> to vector<16x8xf32>
    %c29_488 = arith.constant 29 : index
    %c0_489 = arith.constant 0 : index
    %c0_490 = arith.constant 0 : index
    %1665 = vector.load %arg2[%c29_488, %c0_489, %c0_490] : memref<106x32x32xf32, #tpu.memory_space<vmem>>, vector<1x1x8xf32>
    %1666 = vector.shape_cast %1665 : vector<1x1x8xf32> to vector<1x8xf32>
    %cst_491 = arith.constant dense<0.000000e+00> : vector<8x8xf32>
    %1667 = tpu.matmul %1662, %1664, %cst_491 {dimension_numbers = #tpu.dot_dimension_numbers<[1], [0], [0], [1], [0, 0, 1, 1], [], []>} : vector<8x16xf32>, vector<16x8xf32>, vector<8x8xf32> -> vector<8x8xf32>
    %1668 = vector.broadcast %1666 : vector<1x8xf32> to vector<8x8xf32>
    %1669 = arith.addf %1667, %1668 : vector<8x8xf32>
    %cst_492 = arith.constant dense<0.000000e+00> : vector<8xf32>
    %1670 = vector.multi_reduction <add>, %1662, %cst_492 [1] : vector<8x16xf32> to vector<8xf32>
    %1671 = vector.shape_cast %1670 : vector<8xf32> to vector<8x1xf32>
    %cst_493 = arith.constant 1.600000e+01 : f32
    %1672 = vector.broadcast %cst_493 : f32 to vector<8x1xf32>
    %1673 = arith.divf %1671, %1672 : vector<8x1xf32>
    %1674 = vector.broadcast %1673 : vector<8x1xf32> to vector<8x16xf32>
    %1675 = arith.subf %1662, %1674 : vector<8x16xf32>
    %1676 = arith.mulf %1675, %1675 : vector<8x16xf32>
    %cst_494 = arith.constant dense<0.000000e+00> : vector<8xf32>
    %1677 = vector.multi_reduction <add>, %1676, %cst_494 [1] : vector<8x16xf32> to vector<8xf32>
    %1678 = vector.shape_cast %1677 : vector<8xf32> to vector<8x1xf32>
    %cst_495 = arith.constant 1.600000e+01 : f32
    %1679 = vector.broadcast %cst_495 : f32 to vector<8x1xf32>
    %1680 = arith.divf %1678, %1679 : vector<8x1xf32>
    %1681 = vector.broadcast %1673 : vector<8x1xf32> to vector<8x16xf32>
    %1682 = arith.subf %1662, %1681 : vector<8x16xf32>
    %cst_496 = arith.constant 9.99999974E-6 : f32
    %1683 = vector.broadcast %cst_496 : f32 to vector<8x1xf32>
    %1684 = arith.addf %1680, %1683 : vector<8x1xf32>
    %1685 = math.rsqrt %1684 : vector<8x1xf32>
    %1686 = vector.broadcast %1685 : vector<8x1xf32> to vector<8x16xf32>
    %1687 = arith.mulf %1682, %1686 : vector<8x16xf32>
    %c22_497 = arith.constant 22 : index
    %c0_498 = arith.constant 0 : index
    %c0_499 = arith.constant 0 : index
    %1688 = vector.load %arg2[%c22_497, %c0_498, %c0_499] : memref<106x32x32xf32, #tpu.memory_space<vmem>>, vector<1x1x16xf32>
    %1689 = vector.shape_cast %1688 : vector<1x1x16xf32> to vector<1x16xf32>
    %1690 = vector.broadcast %1689 : vector<1x16xf32> to vector<8x16xf32>
    %1691 = arith.mulf %1687, %1690 : vector<8x16xf32>
    %c23_500 = arith.constant 23 : index
    %c0_501 = arith.constant 0 : index
    %c0_502 = arith.constant 0 : index
    %1692 = vector.load %arg2[%c23_500, %c0_501, %c0_502] : memref<106x32x32xf32, #tpu.memory_space<vmem>>, vector<1x1x16xf32>
    %1693 = vector.shape_cast %1692 : vector<1x1x16xf32> to vector<1x16xf32>
    %1694 = vector.broadcast %1693 : vector<1x16xf32> to vector<8x16xf32>
    %1695 = arith.addf %1691, %1694 : vector<8x16xf32>
    %c24_503 = arith.constant 24 : index
    %c0_504 = arith.constant 0 : index
    %c0_505 = arith.constant 0 : index
    %1696 = vector.load %arg2[%c24_503, %c0_504, %c0_505] : memref<106x32x32xf32, #tpu.memory_space<vmem>>, vector<1x16x32xf32>
    %1697 = vector.shape_cast %1696 : vector<1x16x32xf32> to vector<16x32xf32>
    %c25_506 = arith.constant 25 : index
    %c0_507 = arith.constant 0 : index
    %c0_508 = arith.constant 0 : index
    %1698 = vector.load %arg2[%c25_506, %c0_507, %c0_508] : memref<106x32x32xf32, #tpu.memory_space<vmem>>, vector<1x1x32xf32>
    %1699 = vector.shape_cast %1698 : vector<1x1x32xf32> to vector<1x32xf32>
    %cst_509 = arith.constant dense<0.000000e+00> : vector<8x32xf32>
    %1700 = tpu.matmul %1695, %1697, %cst_509 {dimension_numbers = #tpu.dot_dimension_numbers<[1], [0], [0], [1], [0, 0, 1, 1], [], []>} : vector<8x16xf32>, vector<16x32xf32>, vector<8x32xf32> -> vector<8x32xf32>
    %1701 = vector.broadcast %1699 : vector<1x32xf32> to vector<8x32xf32>
    %1702 = arith.addf %1700, %1701 : vector<8x32xf32>
    %cst_510 = arith.constant 0.000000e+00 : f32
    %1703 = vector.broadcast %cst_510 : f32 to vector<8x32xf32>
    %1704 = arith.maximumf %1702, %1703 : vector<8x32xf32>
    %c26_511 = arith.constant 26 : index
    %c0_512 = arith.constant 0 : index
    %c0_513 = arith.constant 0 : index
    %1705 = vector.load %arg2[%c26_511, %c0_512, %c0_513] : memref<106x32x32xf32, #tpu.memory_space<vmem>>, vector<1x32x8xf32>
    %1706 = vector.shape_cast %1705 : vector<1x32x8xf32> to vector<32x8xf32>
    %c27_514 = arith.constant 27 : index
    %c0_515 = arith.constant 0 : index
    %c0_516 = arith.constant 0 : index
    %1707 = vector.load %arg2[%c27_514, %c0_515, %c0_516] : memref<106x32x32xf32, #tpu.memory_space<vmem>>, vector<1x1x8xf32>
    %1708 = vector.shape_cast %1707 : vector<1x1x8xf32> to vector<1x8xf32>
    %cst_517 = arith.constant dense<0.000000e+00> : vector<8x8xf32>
    %1709 = tpu.matmul %1704, %1706, %cst_517 {dimension_numbers = #tpu.dot_dimension_numbers<[1], [0], [0], [1], [0, 0, 1, 1], [], []>} : vector<8x32xf32>, vector<32x8xf32>, vector<8x8xf32> -> vector<8x8xf32>
    %1710 = vector.broadcast %1708 : vector<1x8xf32> to vector<8x8xf32>
    %1711 = arith.addf %1709, %1710 : vector<8x8xf32>
    %1712 = arith.addf %1669, %1711 : vector<8x8xf32>
    %c32_518 = arith.constant 32 : index
    %c0_519 = arith.constant 0 : index
    %c0_520 = arith.constant 0 : index
    %1713 = vector.load %arg2[%c32_518, %c0_519, %c0_520] : memref<106x32x32xf32, #tpu.memory_space<vmem>>, vector<1x8x8xf32>
    %1714 = vector.shape_cast %1713 : vector<1x8x8xf32> to vector<8x8xf32>
    %cst_521 = arith.constant dense<0.000000e+00> : vector<8xf32>
    %1715 = vector.multi_reduction <add>, %1712, %cst_521 [1] : vector<8x8xf32> to vector<8xf32>
    %1716 = vector.shape_cast %1715 : vector<8xf32> to vector<8x1xf32>
    %cst_522 = arith.constant 8.000000e+00 : f32
    %1717 = vector.broadcast %cst_522 : f32 to vector<8x1xf32>
    %1718 = arith.divf %1716, %1717 : vector<8x1xf32>
    %1719 = vector.broadcast %1718 : vector<8x1xf32> to vector<8x8xf32>
    %1720 = arith.subf %1712, %1719 : vector<8x8xf32>
    %1721 = arith.mulf %1720, %1720 : vector<8x8xf32>
    %cst_523 = arith.constant dense<0.000000e+00> : vector<8xf32>
    %1722 = vector.multi_reduction <add>, %1721, %cst_523 [1] : vector<8x8xf32> to vector<8xf32>
    %1723 = vector.shape_cast %1722 : vector<8xf32> to vector<8x1xf32>
    %cst_524 = arith.constant 8.000000e+00 : f32
    %1724 = vector.broadcast %cst_524 : f32 to vector<8x1xf32>
    %1725 = arith.divf %1723, %1724 : vector<8x1xf32>
    %1726 = vector.broadcast %1718 : vector<8x1xf32> to vector<8x8xf32>
    %1727 = arith.subf %1712, %1726 : vector<8x8xf32>
    %cst_525 = arith.constant 9.99999974E-6 : f32
    %1728 = vector.broadcast %cst_525 : f32 to vector<8x1xf32>
    %1729 = arith.addf %1725, %1728 : vector<8x1xf32>
    %1730 = math.rsqrt %1729 : vector<8x1xf32>
    %1731 = vector.broadcast %1730 : vector<8x1xf32> to vector<8x8xf32>
    %1732 = arith.mulf %1727, %1731 : vector<8x8xf32>
    %c30_526 = arith.constant 30 : index
    %c0_527 = arith.constant 0 : index
    %c0_528 = arith.constant 0 : index
    %1733 = vector.load %arg2[%c30_526, %c0_527, %c0_528] : memref<106x32x32xf32, #tpu.memory_space<vmem>>, vector<1x1x8xf32>
    %1734 = vector.shape_cast %1733 : vector<1x1x8xf32> to vector<1x8xf32>
    %1735 = vector.broadcast %1734 : vector<1x8xf32> to vector<8x8xf32>
    %1736 = arith.mulf %1732, %1735 : vector<8x8xf32>
    %c31_529 = arith.constant 31 : index
    %c0_530 = arith.constant 0 : index
    %c0_531 = arith.constant 0 : index
    %1737 = vector.load %arg2[%c31_529, %c0_530, %c0_531] : memref<106x32x32xf32, #tpu.memory_space<vmem>>, vector<1x1x8xf32>
    %1738 = vector.shape_cast %1737 : vector<1x1x8xf32> to vector<1x8xf32>
    %1739 = vector.broadcast %1738 : vector<1x8xf32> to vector<8x8xf32>
    %1740 = arith.addf %1736, %1739 : vector<8x8xf32>
    %c33_532 = arith.constant 33 : index
    %c0_533 = arith.constant 0 : index
    %c0_534 = arith.constant 0 : index
    %1741 = vector.load %arg2[%c33_532, %c0_533, %c0_534] : memref<106x32x32xf32, #tpu.memory_space<vmem>>, vector<1x8x1xf32>
    %1742 = vector.shape_cast %1741 : vector<1x8x1xf32> to vector<8x1xf32>
    %1743 = vector.extract_strided_slice %1714 {offsets = [0, 0], sizes = [8, 1], strides = [1, 1]} : vector<8x8xf32> to vector<8x1xf32>
    %1744 = vector.extract_strided_slice %1740 {offsets = [0, 0], sizes = [1, 8], strides = [1, 1]} : vector<8x8xf32> to vector<1x8xf32>
    %1745 = vector.broadcast %1743 : vector<8x1xf32> to vector<8x8xf32>
    %1746 = vector.broadcast %1744 : vector<1x8xf32> to vector<8x8xf32>
    %1747 = arith.mulf %1745, %1746 : vector<8x8xf32>
    %1748 = vector.extract_strided_slice %1714 {offsets = [0, 1], sizes = [8, 1], strides = [1, 1]} : vector<8x8xf32> to vector<8x1xf32>
    %1749 = vector.extract_strided_slice %1740 {offsets = [1, 0], sizes = [1, 8], strides = [1, 1]} : vector<8x8xf32> to vector<1x8xf32>
    %1750 = vector.broadcast %1748 : vector<8x1xf32> to vector<8x8xf32>
    %1751 = vector.broadcast %1749 : vector<1x8xf32> to vector<8x8xf32>
    %1752 = arith.mulf %1750, %1751 : vector<8x8xf32>
    %1753 = arith.addf %1747, %1752 : vector<8x8xf32>
    %1754 = vector.extract_strided_slice %1714 {offsets = [0, 2], sizes = [8, 1], strides = [1, 1]} : vector<8x8xf32> to vector<8x1xf32>
    %1755 = vector.extract_strided_slice %1740 {offsets = [2, 0], sizes = [1, 8], strides = [1, 1]} : vector<8x8xf32> to vector<1x8xf32>
    %1756 = vector.broadcast %1754 : vector<8x1xf32> to vector<8x8xf32>
    %1757 = vector.broadcast %1755 : vector<1x8xf32> to vector<8x8xf32>
    %1758 = arith.mulf %1756, %1757 : vector<8x8xf32>
    %1759 = arith.addf %1753, %1758 : vector<8x8xf32>
    %1760 = vector.extract_strided_slice %1714 {offsets = [0, 3], sizes = [8, 1], strides = [1, 1]} : vector<8x8xf32> to vector<8x1xf32>
    %1761 = vector.extract_strided_slice %1740 {offsets = [3, 0], sizes = [1, 8], strides = [1, 1]} : vector<8x8xf32> to vector<1x8xf32>
    %1762 = vector.broadcast %1760 : vector<8x1xf32> to vector<8x8xf32>
    %1763 = vector.broadcast %1761 : vector<1x8xf32> to vector<8x8xf32>
    %1764 = arith.mulf %1762, %1763 : vector<8x8xf32>
    %1765 = arith.addf %1759, %1764 : vector<8x8xf32>
    %1766 = vector.extract_strided_slice %1714 {offsets = [0, 4], sizes = [8, 1], strides = [1, 1]} : vector<8x8xf32> to vector<8x1xf32>
    %1767 = vector.extract_strided_slice %1740 {offsets = [4, 0], sizes = [1, 8], strides = [1, 1]} : vector<8x8xf32> to vector<1x8xf32>
    %1768 = vector.broadcast %1766 : vector<8x1xf32> to vector<8x8xf32>
    %1769 = vector.broadcast %1767 : vector<1x8xf32> to vector<8x8xf32>
    %1770 = arith.mulf %1768, %1769 : vector<8x8xf32>
    %1771 = arith.addf %1765, %1770 : vector<8x8xf32>
    %1772 = vector.extract_strided_slice %1714 {offsets = [0, 5], sizes = [8, 1], strides = [1, 1]} : vector<8x8xf32> to vector<8x1xf32>
    %1773 = vector.extract_strided_slice %1740 {offsets = [5, 0], sizes = [1, 8], strides = [1, 1]} : vector<8x8xf32> to vector<1x8xf32>
    %1774 = vector.broadcast %1772 : vector<8x1xf32> to vector<8x8xf32>
    %1775 = vector.broadcast %1773 : vector<1x8xf32> to vector<8x8xf32>
    %1776 = arith.mulf %1774, %1775 : vector<8x8xf32>
    %1777 = arith.addf %1771, %1776 : vector<8x8xf32>
    %1778 = vector.extract_strided_slice %1714 {offsets = [0, 6], sizes = [8, 1], strides = [1, 1]} : vector<8x8xf32> to vector<8x1xf32>
    %1779 = vector.extract_strided_slice %1740 {offsets = [6, 0], sizes = [1, 8], strides = [1, 1]} : vector<8x8xf32> to vector<1x8xf32>
    %1780 = vector.broadcast %1778 : vector<8x1xf32> to vector<8x8xf32>
    %1781 = vector.broadcast %1779 : vector<1x8xf32> to vector<8x8xf32>
    %1782 = arith.mulf %1780, %1781 : vector<8x8xf32>
    %1783 = arith.addf %1777, %1782 : vector<8x8xf32>
    %1784 = vector.extract_strided_slice %1714 {offsets = [0, 7], sizes = [8, 1], strides = [1, 1]} : vector<8x8xf32> to vector<8x1xf32>
    %1785 = vector.extract_strided_slice %1740 {offsets = [7, 0], sizes = [1, 8], strides = [1, 1]} : vector<8x8xf32> to vector<1x8xf32>
    %1786 = vector.broadcast %1784 : vector<8x1xf32> to vector<8x8xf32>
    %1787 = vector.broadcast %1785 : vector<1x8xf32> to vector<8x8xf32>
    %1788 = arith.mulf %1786, %1787 : vector<8x8xf32>
    %1789 = arith.addf %1783, %1788 : vector<8x8xf32>
    %1790 = vector.broadcast %1742 : vector<8x1xf32> to vector<8x8xf32>
    %1791 = arith.addf %1789, %1790 : vector<8x8xf32>
    %cst_535 = arith.constant 0.000000e+00 : f32
    %1792 = vector.broadcast %cst_535 : f32 to vector<8x8xf32>
    %1793 = arith.maximumf %1791, %1792 : vector<8x8xf32>
    %1794 = arith.addf %1712, %1793 : vector<8x8xf32>
    %cst_536 = arith.constant dense<0.000000e+00> : vector<8xf32>
    %1795 = vector.multi_reduction <add>, %1794, %cst_536 [1] : vector<8x8xf32> to vector<8xf32>
    %1796 = vector.shape_cast %1795 : vector<8xf32> to vector<8x1xf32>
    %cst_537 = arith.constant 8.000000e+00 : f32
    %1797 = vector.broadcast %cst_537 : f32 to vector<8x1xf32>
    %1798 = arith.divf %1796, %1797 : vector<8x1xf32>
    %1799 = vector.broadcast %1798 : vector<8x1xf32> to vector<8x8xf32>
    %1800 = arith.subf %1794, %1799 : vector<8x8xf32>
    %1801 = arith.mulf %1800, %1800 : vector<8x8xf32>
    %cst_538 = arith.constant dense<0.000000e+00> : vector<8xf32>
    %1802 = vector.multi_reduction <add>, %1801, %cst_538 [1] : vector<8x8xf32> to vector<8xf32>
    %1803 = vector.shape_cast %1802 : vector<8xf32> to vector<8x1xf32>
    %cst_539 = arith.constant 8.000000e+00 : f32
    %1804 = vector.broadcast %cst_539 : f32 to vector<8x1xf32>
    %1805 = arith.divf %1803, %1804 : vector<8x1xf32>
    %1806 = vector.broadcast %1798 : vector<8x1xf32> to vector<8x8xf32>
    %1807 = arith.subf %1794, %1806 : vector<8x8xf32>
    %cst_540 = arith.constant 9.99999974E-6 : f32
    %1808 = vector.broadcast %cst_540 : f32 to vector<8x1xf32>
    %1809 = arith.addf %1805, %1808 : vector<8x1xf32>
    %1810 = math.rsqrt %1809 : vector<8x1xf32>
    %1811 = vector.broadcast %1810 : vector<8x1xf32> to vector<8x8xf32>
    %1812 = arith.mulf %1807, %1811 : vector<8x8xf32>
    %c34_541 = arith.constant 34 : index
    %c0_542 = arith.constant 0 : index
    %c0_543 = arith.constant 0 : index
    %1813 = vector.load %arg2[%c34_541, %c0_542, %c0_543] : memref<106x32x32xf32, #tpu.memory_space<vmem>>, vector<1x1x8xf32>
    %1814 = vector.shape_cast %1813 : vector<1x1x8xf32> to vector<1x8xf32>
    %1815 = vector.broadcast %1814 : vector<1x8xf32> to vector<8x8xf32>
    %1816 = arith.mulf %1812, %1815 : vector<8x8xf32>
    %c35_544 = arith.constant 35 : index
    %c0_545 = arith.constant 0 : index
    %c0_546 = arith.constant 0 : index
    %1817 = vector.load %arg2[%c35_544, %c0_545, %c0_546] : memref<106x32x32xf32, #tpu.memory_space<vmem>>, vector<1x1x8xf32>
    %1818 = vector.shape_cast %1817 : vector<1x1x8xf32> to vector<1x8xf32>
    %1819 = vector.broadcast %1818 : vector<1x8xf32> to vector<8x8xf32>
    %1820 = arith.addf %1816, %1819 : vector<8x8xf32>
    %c36_547 = arith.constant 36 : index
    %c0_548 = arith.constant 0 : index
    %c0_549 = arith.constant 0 : index
    %1821 = vector.load %arg2[%c36_547, %c0_548, %c0_549] : memref<106x32x32xf32, #tpu.memory_space<vmem>>, vector<1x8x32xf32>
    %1822 = vector.shape_cast %1821 : vector<1x8x32xf32> to vector<8x32xf32>
    %c37_550 = arith.constant 37 : index
    %c0_551 = arith.constant 0 : index
    %c0_552 = arith.constant 0 : index
    %1823 = vector.load %arg2[%c37_550, %c0_551, %c0_552] : memref<106x32x32xf32, #tpu.memory_space<vmem>>, vector<1x1x32xf32>
    %1824 = vector.shape_cast %1823 : vector<1x1x32xf32> to vector<1x32xf32>
    %1825 = vector.extract_strided_slice %1820 {offsets = [0, 0], sizes = [8, 1], strides = [1, 1]} : vector<8x8xf32> to vector<8x1xf32>
    %1826 = vector.extract_strided_slice %1822 {offsets = [0, 0], sizes = [1, 32], strides = [1, 1]} : vector<8x32xf32> to vector<1x32xf32>
    %1827 = vector.broadcast %1825 : vector<8x1xf32> to vector<8x32xf32>
    %1828 = vector.broadcast %1826 : vector<1x32xf32> to vector<8x32xf32>
    %1829 = arith.mulf %1827, %1828 : vector<8x32xf32>
    %1830 = vector.extract_strided_slice %1820 {offsets = [0, 1], sizes = [8, 1], strides = [1, 1]} : vector<8x8xf32> to vector<8x1xf32>
    %1831 = vector.extract_strided_slice %1822 {offsets = [1, 0], sizes = [1, 32], strides = [1, 1]} : vector<8x32xf32> to vector<1x32xf32>
    %1832 = vector.broadcast %1830 : vector<8x1xf32> to vector<8x32xf32>
    %1833 = vector.broadcast %1831 : vector<1x32xf32> to vector<8x32xf32>
    %1834 = arith.mulf %1832, %1833 : vector<8x32xf32>
    %1835 = arith.addf %1829, %1834 : vector<8x32xf32>
    %1836 = vector.extract_strided_slice %1820 {offsets = [0, 2], sizes = [8, 1], strides = [1, 1]} : vector<8x8xf32> to vector<8x1xf32>
    %1837 = vector.extract_strided_slice %1822 {offsets = [2, 0], sizes = [1, 32], strides = [1, 1]} : vector<8x32xf32> to vector<1x32xf32>
    %1838 = vector.broadcast %1836 : vector<8x1xf32> to vector<8x32xf32>
    %1839 = vector.broadcast %1837 : vector<1x32xf32> to vector<8x32xf32>
    %1840 = arith.mulf %1838, %1839 : vector<8x32xf32>
    %1841 = arith.addf %1835, %1840 : vector<8x32xf32>
    %1842 = vector.extract_strided_slice %1820 {offsets = [0, 3], sizes = [8, 1], strides = [1, 1]} : vector<8x8xf32> to vector<8x1xf32>
    %1843 = vector.extract_strided_slice %1822 {offsets = [3, 0], sizes = [1, 32], strides = [1, 1]} : vector<8x32xf32> to vector<1x32xf32>
    %1844 = vector.broadcast %1842 : vector<8x1xf32> to vector<8x32xf32>
    %1845 = vector.broadcast %1843 : vector<1x32xf32> to vector<8x32xf32>
    %1846 = arith.mulf %1844, %1845 : vector<8x32xf32>
    %1847 = arith.addf %1841, %1846 : vector<8x32xf32>
    %1848 = vector.extract_strided_slice %1820 {offsets = [0, 4], sizes = [8, 1], strides = [1, 1]} : vector<8x8xf32> to vector<8x1xf32>
    %1849 = vector.extract_strided_slice %1822 {offsets = [4, 0], sizes = [1, 32], strides = [1, 1]} : vector<8x32xf32> to vector<1x32xf32>
    %1850 = vector.broadcast %1848 : vector<8x1xf32> to vector<8x32xf32>
    %1851 = vector.broadcast %1849 : vector<1x32xf32> to vector<8x32xf32>
    %1852 = arith.mulf %1850, %1851 : vector<8x32xf32>
    %1853 = arith.addf %1847, %1852 : vector<8x32xf32>
    %1854 = vector.extract_strided_slice %1820 {offsets = [0, 5], sizes = [8, 1], strides = [1, 1]} : vector<8x8xf32> to vector<8x1xf32>
    %1855 = vector.extract_strided_slice %1822 {offsets = [5, 0], sizes = [1, 32], strides = [1, 1]} : vector<8x32xf32> to vector<1x32xf32>
    %1856 = vector.broadcast %1854 : vector<8x1xf32> to vector<8x32xf32>
    %1857 = vector.broadcast %1855 : vector<1x32xf32> to vector<8x32xf32>
    %1858 = arith.mulf %1856, %1857 : vector<8x32xf32>
    %1859 = arith.addf %1853, %1858 : vector<8x32xf32>
    %1860 = vector.extract_strided_slice %1820 {offsets = [0, 6], sizes = [8, 1], strides = [1, 1]} : vector<8x8xf32> to vector<8x1xf32>
    %1861 = vector.extract_strided_slice %1822 {offsets = [6, 0], sizes = [1, 32], strides = [1, 1]} : vector<8x32xf32> to vector<1x32xf32>
    %1862 = vector.broadcast %1860 : vector<8x1xf32> to vector<8x32xf32>
    %1863 = vector.broadcast %1861 : vector<1x32xf32> to vector<8x32xf32>
    %1864 = arith.mulf %1862, %1863 : vector<8x32xf32>
    %1865 = arith.addf %1859, %1864 : vector<8x32xf32>
    %1866 = vector.extract_strided_slice %1820 {offsets = [0, 7], sizes = [8, 1], strides = [1, 1]} : vector<8x8xf32> to vector<8x1xf32>
    %1867 = vector.extract_strided_slice %1822 {offsets = [7, 0], sizes = [1, 32], strides = [1, 1]} : vector<8x32xf32> to vector<1x32xf32>
    %1868 = vector.broadcast %1866 : vector<8x1xf32> to vector<8x32xf32>
    %1869 = vector.broadcast %1867 : vector<1x32xf32> to vector<8x32xf32>
    %1870 = arith.mulf %1868, %1869 : vector<8x32xf32>
    %1871 = arith.addf %1865, %1870 : vector<8x32xf32>
    %1872 = vector.broadcast %1824 : vector<1x32xf32> to vector<8x32xf32>
    %1873 = arith.addf %1871, %1872 : vector<8x32xf32>
    %cst_553 = arith.constant 0.000000e+00 : f32
    %1874 = vector.broadcast %cst_553 : f32 to vector<8x32xf32>
    %1875 = arith.maximumf %1873, %1874 : vector<8x32xf32>
    %c38_554 = arith.constant 38 : index
    %c0_555 = arith.constant 0 : index
    %c0_556 = arith.constant 0 : index
    %1876 = vector.load %arg2[%c38_554, %c0_555, %c0_556] : memref<106x32x32xf32, #tpu.memory_space<vmem>>, vector<1x32x8xf32>
    %1877 = vector.shape_cast %1876 : vector<1x32x8xf32> to vector<32x8xf32>
    %c39_557 = arith.constant 39 : index
    %c0_558 = arith.constant 0 : index
    %c0_559 = arith.constant 0 : index
    %1878 = vector.load %arg2[%c39_557, %c0_558, %c0_559] : memref<106x32x32xf32, #tpu.memory_space<vmem>>, vector<1x1x8xf32>
    %1879 = vector.shape_cast %1878 : vector<1x1x8xf32> to vector<1x8xf32>
    %cst_560 = arith.constant dense<0.000000e+00> : vector<8x8xf32>
    %1880 = tpu.matmul %1875, %1877, %cst_560 {dimension_numbers = #tpu.dot_dimension_numbers<[1], [0], [0], [1], [0, 0, 1, 1], [], []>} : vector<8x32xf32>, vector<32x8xf32>, vector<8x8xf32> -> vector<8x8xf32>
    %1881 = vector.broadcast %1879 : vector<1x8xf32> to vector<8x8xf32>
    %1882 = arith.addf %1880, %1881 : vector<8x8xf32>
    %1883 = arith.addf %1794, %1882 : vector<8x8xf32>
    %c40_561 = arith.constant 40 : index
    %c0_562 = arith.constant 0 : index
    %c0_563 = arith.constant 0 : index
    %1884 = vector.load %arg2[%c40_561, %c0_562, %c0_563] : memref<106x32x32xf32, #tpu.memory_space<vmem>>, vector<1x8x32xf32>
    %1885 = vector.shape_cast %1884 : vector<1x8x32xf32> to vector<8x32xf32>
    %c41_564 = arith.constant 41 : index
    %c0_565 = arith.constant 0 : index
    %c0_566 = arith.constant 0 : index
    %1886 = vector.load %arg2[%c41_564, %c0_565, %c0_566] : memref<106x32x32xf32, #tpu.memory_space<vmem>>, vector<1x1x32xf32>
    %1887 = vector.shape_cast %1886 : vector<1x1x32xf32> to vector<1x32xf32>
    %1888 = vector.extract_strided_slice %1883 {offsets = [0, 0], sizes = [8, 1], strides = [1, 1]} : vector<8x8xf32> to vector<8x1xf32>
    %1889 = vector.extract_strided_slice %1885 {offsets = [0, 0], sizes = [1, 32], strides = [1, 1]} : vector<8x32xf32> to vector<1x32xf32>
    %1890 = vector.broadcast %1888 : vector<8x1xf32> to vector<8x32xf32>
    %1891 = vector.broadcast %1889 : vector<1x32xf32> to vector<8x32xf32>
    %1892 = arith.mulf %1890, %1891 : vector<8x32xf32>
    %1893 = vector.extract_strided_slice %1883 {offsets = [0, 1], sizes = [8, 1], strides = [1, 1]} : vector<8x8xf32> to vector<8x1xf32>
    %1894 = vector.extract_strided_slice %1885 {offsets = [1, 0], sizes = [1, 32], strides = [1, 1]} : vector<8x32xf32> to vector<1x32xf32>
    %1895 = vector.broadcast %1893 : vector<8x1xf32> to vector<8x32xf32>
    %1896 = vector.broadcast %1894 : vector<1x32xf32> to vector<8x32xf32>
    %1897 = arith.mulf %1895, %1896 : vector<8x32xf32>
    %1898 = arith.addf %1892, %1897 : vector<8x32xf32>
    %1899 = vector.extract_strided_slice %1883 {offsets = [0, 2], sizes = [8, 1], strides = [1, 1]} : vector<8x8xf32> to vector<8x1xf32>
    %1900 = vector.extract_strided_slice %1885 {offsets = [2, 0], sizes = [1, 32], strides = [1, 1]} : vector<8x32xf32> to vector<1x32xf32>
    %1901 = vector.broadcast %1899 : vector<8x1xf32> to vector<8x32xf32>
    %1902 = vector.broadcast %1900 : vector<1x32xf32> to vector<8x32xf32>
    %1903 = arith.mulf %1901, %1902 : vector<8x32xf32>
    %1904 = arith.addf %1898, %1903 : vector<8x32xf32>
    %1905 = vector.extract_strided_slice %1883 {offsets = [0, 3], sizes = [8, 1], strides = [1, 1]} : vector<8x8xf32> to vector<8x1xf32>
    %1906 = vector.extract_strided_slice %1885 {offsets = [3, 0], sizes = [1, 32], strides = [1, 1]} : vector<8x32xf32> to vector<1x32xf32>
    %1907 = vector.broadcast %1905 : vector<8x1xf32> to vector<8x32xf32>
    %1908 = vector.broadcast %1906 : vector<1x32xf32> to vector<8x32xf32>
    %1909 = arith.mulf %1907, %1908 : vector<8x32xf32>
    %1910 = arith.addf %1904, %1909 : vector<8x32xf32>
    %1911 = vector.extract_strided_slice %1883 {offsets = [0, 4], sizes = [8, 1], strides = [1, 1]} : vector<8x8xf32> to vector<8x1xf32>
    %1912 = vector.extract_strided_slice %1885 {offsets = [4, 0], sizes = [1, 32], strides = [1, 1]} : vector<8x32xf32> to vector<1x32xf32>
    %1913 = vector.broadcast %1911 : vector<8x1xf32> to vector<8x32xf32>
    %1914 = vector.broadcast %1912 : vector<1x32xf32> to vector<8x32xf32>
    %1915 = arith.mulf %1913, %1914 : vector<8x32xf32>
    %1916 = arith.addf %1910, %1915 : vector<8x32xf32>
    %1917 = vector.extract_strided_slice %1883 {offsets = [0, 5], sizes = [8, 1], strides = [1, 1]} : vector<8x8xf32> to vector<8x1xf32>
    %1918 = vector.extract_strided_slice %1885 {offsets = [5, 0], sizes = [1, 32], strides = [1, 1]} : vector<8x32xf32> to vector<1x32xf32>
    %1919 = vector.broadcast %1917 : vector<8x1xf32> to vector<8x32xf32>
    %1920 = vector.broadcast %1918 : vector<1x32xf32> to vector<8x32xf32>
    %1921 = arith.mulf %1919, %1920 : vector<8x32xf32>
    %1922 = arith.addf %1916, %1921 : vector<8x32xf32>
    %1923 = vector.extract_strided_slice %1883 {offsets = [0, 6], sizes = [8, 1], strides = [1, 1]} : vector<8x8xf32> to vector<8x1xf32>
    %1924 = vector.extract_strided_slice %1885 {offsets = [6, 0], sizes = [1, 32], strides = [1, 1]} : vector<8x32xf32> to vector<1x32xf32>
    %1925 = vector.broadcast %1923 : vector<8x1xf32> to vector<8x32xf32>
    %1926 = vector.broadcast %1924 : vector<1x32xf32> to vector<8x32xf32>
    %1927 = arith.mulf %1925, %1926 : vector<8x32xf32>
    %1928 = arith.addf %1922, %1927 : vector<8x32xf32>
    %1929 = vector.extract_strided_slice %1883 {offsets = [0, 7], sizes = [8, 1], strides = [1, 1]} : vector<8x8xf32> to vector<8x1xf32>
    %1930 = vector.extract_strided_slice %1885 {offsets = [7, 0], sizes = [1, 32], strides = [1, 1]} : vector<8x32xf32> to vector<1x32xf32>
    %1931 = vector.broadcast %1929 : vector<8x1xf32> to vector<8x32xf32>
    %1932 = vector.broadcast %1930 : vector<1x32xf32> to vector<8x32xf32>
    %1933 = arith.mulf %1931, %1932 : vector<8x32xf32>
    %1934 = arith.addf %1928, %1933 : vector<8x32xf32>
    %1935 = vector.broadcast %1887 : vector<1x32xf32> to vector<8x32xf32>
    %1936 = arith.addf %1934, %1935 : vector<8x32xf32>
    %cst_567 = arith.constant 0.000000e+00 : f32
    %1937 = vector.broadcast %cst_567 : f32 to vector<8x32xf32>
    %1938 = arith.cmpf oge, %1936, %1937 : vector<8x32xf32>
    %cst_568 = arith.constant 0.00999999977 : f32
    %1939 = vector.broadcast %cst_568 : f32 to vector<8x32xf32>
    %1940 = arith.mulf %1939, %1936 : vector<8x32xf32>
    %1941 = arith.select %1938, %1936, %1940 : vector<8x32xi1>, vector<8x32xf32>
    %cst_569 = arith.constant dense<0.000000e+00> : vector<8xf32>
    %1942 = vector.multi_reduction <add>, %1941, %cst_569 [1] : vector<8x32xf32> to vector<8xf32>
    %1943 = vector.shape_cast %1942 : vector<8xf32> to vector<8x1xf32>
    %cst_570 = arith.constant 3.200000e+01 : f32
    %1944 = vector.broadcast %cst_570 : f32 to vector<8x1xf32>
    %1945 = arith.divf %1943, %1944 : vector<8x1xf32>
    %1946 = vector.broadcast %1945 : vector<8x1xf32> to vector<8x32xf32>
    %1947 = arith.subf %1941, %1946 : vector<8x32xf32>
    %1948 = arith.mulf %1947, %1947 : vector<8x32xf32>
    %cst_571 = arith.constant dense<0.000000e+00> : vector<8xf32>
    %1949 = vector.multi_reduction <add>, %1948, %cst_571 [1] : vector<8x32xf32> to vector<8xf32>
    %1950 = vector.shape_cast %1949 : vector<8xf32> to vector<8x1xf32>
    %cst_572 = arith.constant 3.200000e+01 : f32
    %1951 = vector.broadcast %cst_572 : f32 to vector<8x1xf32>
    %1952 = arith.divf %1950, %1951 : vector<8x1xf32>
    %1953 = vector.broadcast %1945 : vector<8x1xf32> to vector<8x32xf32>
    %1954 = arith.subf %1941, %1953 : vector<8x32xf32>
    %cst_573 = arith.constant 9.99999974E-6 : f32
    %1955 = vector.broadcast %cst_573 : f32 to vector<8x1xf32>
    %1956 = arith.addf %1952, %1955 : vector<8x1xf32>
    %1957 = math.rsqrt %1956 : vector<8x1xf32>
    %1958 = vector.broadcast %1957 : vector<8x1xf32> to vector<8x32xf32>
    %1959 = arith.mulf %1954, %1958 : vector<8x32xf32>
    %c42_574 = arith.constant 42 : index
    %c0_575 = arith.constant 0 : index
    %c0_576 = arith.constant 0 : index
    %1960 = vector.load %arg2[%c42_574, %c0_575, %c0_576] : memref<106x32x32xf32, #tpu.memory_space<vmem>>, vector<1x1x32xf32>
    %1961 = vector.shape_cast %1960 : vector<1x1x32xf32> to vector<1x32xf32>
    %1962 = vector.broadcast %1961 : vector<1x32xf32> to vector<8x32xf32>
    %1963 = arith.mulf %1959, %1962 : vector<8x32xf32>
    %c43_577 = arith.constant 43 : index
    %c0_578 = arith.constant 0 : index
    %c0_579 = arith.constant 0 : index
    %1964 = vector.load %arg2[%c43_577, %c0_578, %c0_579] : memref<106x32x32xf32, #tpu.memory_space<vmem>>, vector<1x1x32xf32>
    %1965 = vector.shape_cast %1964 : vector<1x1x32xf32> to vector<1x32xf32>
    %1966 = vector.broadcast %1965 : vector<1x32xf32> to vector<8x32xf32>
    %1967 = arith.addf %1963, %1966 : vector<8x32xf32>
    %c44_580 = arith.constant 44 : index
    %c0_581 = arith.constant 0 : index
    %c0_582 = arith.constant 0 : index
    %1968 = vector.load %arg2[%c44_580, %c0_581, %c0_582] : memref<106x32x32xf32, #tpu.memory_space<vmem>>, vector<1x32x3xf32>
    %1969 = vector.shape_cast %1968 : vector<1x32x3xf32> to vector<32x3xf32>
    %c45_583 = arith.constant 45 : index
    %c0_584 = arith.constant 0 : index
    %c0_585 = arith.constant 0 : index
    %1970 = vector.load %arg2[%c45_583, %c0_584, %c0_585] : memref<106x32x32xf32, #tpu.memory_space<vmem>>, vector<1x1x3xf32>
    %1971 = vector.shape_cast %1970 : vector<1x1x3xf32> to vector<1x3xf32>
    %cst_586 = arith.constant dense<0.000000e+00> : vector<8x3xf32>
    %1972 = tpu.matmul %1967, %1969, %cst_586 {dimension_numbers = #tpu.dot_dimension_numbers<[1], [0], [0], [1], [0, 0, 1, 1], [], []>} : vector<8x32xf32>, vector<32x3xf32>, vector<8x3xf32> -> vector<8x3xf32>
    %1973 = vector.broadcast %1971 : vector<1x3xf32> to vector<8x3xf32>
    %1974 = arith.addf %1972, %1973 : vector<8x3xf32>
    %c1_587 = arith.constant 1 : index
    %c0_588 = arith.constant 0 : index
    %c0_589 = arith.constant 0 : index
    %1975 = vector.load %arg3[%c1_587, %c0_588, %c0_589] : memref<2x8x9xf32, #tpu.memory_space<vmem>>, vector<1x8x3xf32>
    %1976 = vector.shape_cast %1975 : vector<1x8x3xf32> to vector<8x3xf32>
    %1977 = vector.shape_cast %1974 : vector<8x3xf32> to vector<1x8x3xf32>
    tpu.vector_store %arg3[%c1_587, %c0_588, %c0_589], %1977 {strides = array<i32>} : memref<2x8x9xf32, #tpu.memory_space<vmem>>, vector<1x8x3xf32>,
    %1978 = vector.extract_strided_slice %1974 {offsets = [1, 0], sizes = [1, 3], strides = [1, 1]} : vector<8x3xf32> to vector<1x3xf32>
    %1979 = vector.extract_strided_slice %1974 {offsets = [0, 0], sizes = [1, 3], strides = [1, 1]} : vector<8x3xf32> to vector<1x3xf32>
    %1980 = arith.subf %1978, %1979 : vector<1x3xf32>
    %c1_590 = arith.constant 1 : index
    %c0_591 = arith.constant 0 : index
    %c3_592 = arith.constant 3 : index
    %1981 = vector.load %arg3[%c1_590, %c0_591, %c3_592] : memref<2x8x9xf32, #tpu.memory_space<vmem>>, vector<1x1x3xf32>
    %1982 = vector.shape_cast %1981 : vector<1x1x3xf32> to vector<1x3xf32>
    %1983 = vector.shape_cast %1980 : vector<1x3xf32> to vector<1x1x3xf32>
    tpu.vector_store %arg3[%c1_590, %c0_591, %c3_592], %1983 {strides = array<i32>} : memref<2x8x9xf32, #tpu.memory_space<vmem>>, vector<1x1x3xf32>,
    %1984 = vector.extract_strided_slice %1974 {offsets = [2, 0], sizes = [6, 3], strides = [1, 1]} : vector<8x3xf32> to vector<6x3xf32>
    %1985 = vector.extract_strided_slice %1974 {offsets = [0, 0], sizes = [6, 3], strides = [1, 1]} : vector<8x3xf32> to vector<6x3xf32>
    %1986 = arith.subf %1984, %1985 : vector<6x3xf32>
    %cst_593 = arith.constant 5.000000e-01 : f32
    %1987 = vector.broadcast %cst_593 : f32 to vector<6x3xf32>
    %1988 = arith.mulf %1986, %1987 : vector<6x3xf32>
    %c1_594 = arith.constant 1 : index
    %c1_595 = arith.constant 1 : index
    %c3_596 = arith.constant 3 : index
    %1989 = vector.load %arg3[%c1_594, %c1_595, %c3_596] : memref<2x8x9xf32, #tpu.memory_space<vmem>>, vector<1x6x3xf32>
    %1990 = vector.shape_cast %1989 : vector<1x6x3xf32> to vector<6x3xf32>
    %1991 = vector.shape_cast %1988 : vector<6x3xf32> to vector<1x6x3xf32>
    tpu.vector_store %arg3[%c1_594, %c1_595, %c3_596], %1991 {strides = array<i32>} : memref<2x8x9xf32, #tpu.memory_space<vmem>>, vector<1x6x3xf32>,
    %1992 = vector.extract_strided_slice %1974 {offsets = [7, 0], sizes = [1, 3], strides = [1, 1]} : vector<8x3xf32> to vector<1x3xf32>
    %1993 = vector.extract_strided_slice %1974 {offsets = [6, 0], sizes = [1, 3], strides = [1, 1]} : vector<8x3xf32> to vector<1x3xf32>
    %1994 = arith.subf %1992, %1993 : vector<1x3xf32>
    %c1_597 = arith.constant 1 : index
    %c7_598 = arith.constant 7 : index
    %c3_599 = arith.constant 3 : index
    %1995 = vector.load %arg3[%c1_597, %c7_598, %c3_599] : memref<2x8x9xf32, #tpu.memory_space<vmem>>, vector<1x1x3xf32>
    %1996 = vector.shape_cast %1995 : vector<1x1x3xf32> to vector<1x3xf32>
    %1997 = vector.shape_cast %1994 : vector<1x3xf32> to vector<1x1x3xf32>
    tpu.vector_store %arg3[%c1_597, %c7_598, %c3_599], %1997 {strides = array<i32>} : memref<2x8x9xf32, #tpu.memory_space<vmem>>, vector<1x1x3xf32>,
    %c48_600 = arith.constant 48 : index
    %c0_601 = arith.constant 0 : index
    %c0_602 = arith.constant 0 : index
    %1998 = vector.load %arg2[%c48_600, %c0_601, %c0_602] : memref<106x32x32xf32, #tpu.memory_space<vmem>>, vector<1x8x8xf32>
    %1999 = vector.shape_cast %1998 : vector<1x8x8xf32> to vector<8x8xf32>
    %cst_603 = arith.constant dense<0.000000e+00> : vector<8xf32>
    %2000 = vector.multi_reduction <add>, %1974, %cst_603 [1] : vector<8x3xf32> to vector<8xf32>
    %2001 = vector.shape_cast %2000 : vector<8xf32> to vector<8x1xf32>
    %cst_604 = arith.constant 3.000000e+00 : f32
    %2002 = vector.broadcast %cst_604 : f32 to vector<8x1xf32>
    %2003 = arith.divf %2001, %2002 : vector<8x1xf32>
    %2004 = vector.broadcast %2003 : vector<8x1xf32> to vector<8x3xf32>
    %2005 = arith.subf %1974, %2004 : vector<8x3xf32>
    %2006 = arith.mulf %2005, %2005 : vector<8x3xf32>
    %cst_605 = arith.constant dense<0.000000e+00> : vector<8xf32>
    %2007 = vector.multi_reduction <add>, %2006, %cst_605 [1] : vector<8x3xf32> to vector<8xf32>
    %2008 = vector.shape_cast %2007 : vector<8xf32> to vector<8x1xf32>
    %cst_606 = arith.constant 3.000000e+00 : f32
    %2009 = vector.broadcast %cst_606 : f32 to vector<8x1xf32>
    %2010 = arith.divf %2008, %2009 : vector<8x1xf32>
    %2011 = vector.broadcast %2003 : vector<8x1xf32> to vector<8x3xf32>
    %2012 = arith.subf %1974, %2011 : vector<8x3xf32>
    %cst_607 = arith.constant 9.99999974E-6 : f32
    %2013 = vector.broadcast %cst_607 : f32 to vector<8x1xf32>
    %2014 = arith.addf %2010, %2013 : vector<8x1xf32>
    %2015 = math.rsqrt %2014 : vector<8x1xf32>
    %2016 = vector.broadcast %2015 : vector<8x1xf32> to vector<8x3xf32>
    %2017 = arith.mulf %2012, %2016 : vector<8x3xf32>
    %c46_608 = arith.constant 46 : index
    %c0_609 = arith.constant 0 : index
    %c0_610 = arith.constant 0 : index
    %2018 = vector.load %arg2[%c46_608, %c0_609, %c0_610] : memref<106x32x32xf32, #tpu.memory_space<vmem>>, vector<1x1x3xf32>
    %2019 = vector.shape_cast %2018 : vector<1x1x3xf32> to vector<1x3xf32>
    %2020 = vector.broadcast %2019 : vector<1x3xf32> to vector<8x3xf32>
    %2021 = arith.mulf %2017, %2020 : vector<8x3xf32>
    %c47_611 = arith.constant 47 : index
    %c0_612 = arith.constant 0 : index
    %c0_613 = arith.constant 0 : index
    %2022 = vector.load %arg2[%c47_611, %c0_612, %c0_613] : memref<106x32x32xf32, #tpu.memory_space<vmem>>, vector<1x1x3xf32>
    %2023 = vector.shape_cast %2022 : vector<1x1x3xf32> to vector<1x3xf32>
    %2024 = vector.broadcast %2023 : vector<1x3xf32> to vector<8x3xf32>
    %2025 = arith.addf %2021, %2024 : vector<8x3xf32>
    %c49_614 = arith.constant 49 : index
    %c0_615 = arith.constant 0 : index
    %c0_616 = arith.constant 0 : index
    %2026 = vector.load %arg2[%c49_614, %c0_615, %c0_616] : memref<106x32x32xf32, #tpu.memory_space<vmem>>, vector<1x8x1xf32>
    %2027 = vector.shape_cast %2026 : vector<1x8x1xf32> to vector<8x1xf32>
    %2028 = vector.extract_strided_slice %1999 {offsets = [0, 0], sizes = [8, 1], strides = [1, 1]} : vector<8x8xf32> to vector<8x1xf32>
    %2029 = vector.extract_strided_slice %2025 {offsets = [0, 0], sizes = [1, 3], strides = [1, 1]} : vector<8x3xf32> to vector<1x3xf32>
    %2030 = vector.broadcast %2028 : vector<8x1xf32> to vector<8x3xf32>
    %2031 = vector.broadcast %2029 : vector<1x3xf32> to vector<8x3xf32>
    %2032 = arith.mulf %2030, %2031 : vector<8x3xf32>
    %2033 = vector.extract_strided_slice %1999 {offsets = [0, 1], sizes = [8, 1], strides = [1, 1]} : vector<8x8xf32> to vector<8x1xf32>
    %2034 = vector.extract_strided_slice %2025 {offsets = [1, 0], sizes = [1, 3], strides = [1, 1]} : vector<8x3xf32> to vector<1x3xf32>
    %2035 = vector.broadcast %2033 : vector<8x1xf32> to vector<8x3xf32>
    %2036 = vector.broadcast %2034 : vector<1x3xf32> to vector<8x3xf32>
    %2037 = arith.mulf %2035, %2036 : vector<8x3xf32>
    %2038 = arith.addf %2032, %2037 : vector<8x3xf32>
    %2039 = vector.extract_strided_slice %1999 {offsets = [0, 2], sizes = [8, 1], strides = [1, 1]} : vector<8x8xf32> to vector<8x1xf32>
    %2040 = vector.extract_strided_slice %2025 {offsets = [2, 0], sizes = [1, 3], strides = [1, 1]} : vector<8x3xf32> to vector<1x3xf32>
    %2041 = vector.broadcast %2039 : vector<8x1xf32> to vector<8x3xf32>
    %2042 = vector.broadcast %2040 : vector<1x3xf32> to vector<8x3xf32>
    %2043 = arith.mulf %2041, %2042 : vector<8x3xf32>
    %2044 = arith.addf %2038, %2043 : vector<8x3xf32>
    %2045 = vector.extract_strided_slice %1999 {offsets = [0, 3], sizes = [8, 1], strides = [1, 1]} : vector<8x8xf32> to vector<8x1xf32>
    %2046 = vector.extract_strided_slice %2025 {offsets = [3, 0], sizes = [1, 3], strides = [1, 1]} : vector<8x3xf32> to vector<1x3xf32>
    %2047 = vector.broadcast %2045 : vector<8x1xf32> to vector<8x3xf32>
    %2048 = vector.broadcast %2046 : vector<1x3xf32> to vector<8x3xf32>
    %2049 = arith.mulf %2047, %2048 : vector<8x3xf32>
    %2050 = arith.addf %2044, %2049 : vector<8x3xf32>
    %2051 = vector.extract_strided_slice %1999 {offsets = [0, 4], sizes = [8, 1], strides = [1, 1]} : vector<8x8xf32> to vector<8x1xf32>
    %2052 = vector.extract_strided_slice %2025 {offsets = [4, 0], sizes = [1, 3], strides = [1, 1]} : vector<8x3xf32> to vector<1x3xf32>
    %2053 = vector.broadcast %2051 : vector<8x1xf32> to vector<8x3xf32>
    %2054 = vector.broadcast %2052 : vector<1x3xf32> to vector<8x3xf32>
    %2055 = arith.mulf %2053, %2054 : vector<8x3xf32>
    %2056 = arith.addf %2050, %2055 : vector<8x3xf32>
    %2057 = vector.extract_strided_slice %1999 {offsets = [0, 5], sizes = [8, 1], strides = [1, 1]} : vector<8x8xf32> to vector<8x1xf32>
    %2058 = vector.extract_strided_slice %2025 {offsets = [5, 0], sizes = [1, 3], strides = [1, 1]} : vector<8x3xf32> to vector<1x3xf32>
    %2059 = vector.broadcast %2057 : vector<8x1xf32> to vector<8x3xf32>
    %2060 = vector.broadcast %2058 : vector<1x3xf32> to vector<8x3xf32>
    %2061 = arith.mulf %2059, %2060 : vector<8x3xf32>
    %2062 = arith.addf %2056, %2061 : vector<8x3xf32>
    %2063 = vector.extract_strided_slice %1999 {offsets = [0, 6], sizes = [8, 1], strides = [1, 1]} : vector<8x8xf32> to vector<8x1xf32>
    %2064 = vector.extract_strided_slice %2025 {offsets = [6, 0], sizes = [1, 3], strides = [1, 1]} : vector<8x3xf32> to vector<1x3xf32>
    %2065 = vector.broadcast %2063 : vector<8x1xf32> to vector<8x3xf32>
    %2066 = vector.broadcast %2064 : vector<1x3xf32> to vector<8x3xf32>
    %2067 = arith.mulf %2065, %2066 : vector<8x3xf32>
    %2068 = arith.addf %2062, %2067 : vector<8x3xf32>
    %2069 = vector.extract_strided_slice %1999 {offsets = [0, 7], sizes = [8, 1], strides = [1, 1]} : vector<8x8xf32> to vector<8x1xf32>
    %2070 = vector.extract_strided_slice %2025 {offsets = [7, 0], sizes = [1, 3], strides = [1, 1]} : vector<8x3xf32> to vector<1x3xf32>
    %2071 = vector.broadcast %2069 : vector<8x1xf32> to vector<8x3xf32>
    %2072 = vector.broadcast %2070 : vector<1x3xf32> to vector<8x3xf32>
    %2073 = arith.mulf %2071, %2072 : vector<8x3xf32>
    %2074 = arith.addf %2068, %2073 : vector<8x3xf32>
    %2075 = vector.broadcast %2027 : vector<8x1xf32> to vector<8x3xf32>
    %2076 = arith.addf %2074, %2075 : vector<8x3xf32>
    %cst_617 = arith.constant 0.000000e+00 : f32
    %2077 = vector.broadcast %cst_617 : f32 to vector<8x3xf32>
    %2078 = arith.maximumf %2076, %2077 : vector<8x3xf32>
    %2079 = arith.addf %1974, %2078 : vector<8x3xf32>
    %c56_618 = arith.constant 56 : index
    %c0_619 = arith.constant 0 : index
    %c0_620 = arith.constant 0 : index
    %2080 = vector.load %arg2[%c56_618, %c0_619, %c0_620] : memref<106x32x32xf32, #tpu.memory_space<vmem>>, vector<1x3x2xf32>
    %2081 = vector.shape_cast %2080 : vector<1x3x2xf32> to vector<3x2xf32>
    %c57_621 = arith.constant 57 : index
    %c0_622 = arith.constant 0 : index
    %c0_623 = arith.constant 0 : index
    %2082 = vector.load %arg2[%c57_621, %c0_622, %c0_623] : memref<106x32x32xf32, #tpu.memory_space<vmem>>, vector<1x1x2xf32>
    %2083 = vector.shape_cast %2082 : vector<1x1x2xf32> to vector<1x2xf32>
    %2084 = vector.extract_strided_slice %2079 {offsets = [0, 0], sizes = [8, 1], strides = [1, 1]} : vector<8x3xf32> to vector<8x1xf32>
    %2085 = vector.extract_strided_slice %2081 {offsets = [0, 0], sizes = [1, 2], strides = [1, 1]} : vector<3x2xf32> to vector<1x2xf32>
    %2086 = vector.broadcast %2084 : vector<8x1xf32> to vector<8x2xf32>
    %2087 = vector.broadcast %2085 : vector<1x2xf32> to vector<8x2xf32>
    %2088 = arith.mulf %2086, %2087 : vector<8x2xf32>
    %2089 = vector.extract_strided_slice %2079 {offsets = [0, 1], sizes = [8, 1], strides = [1, 1]} : vector<8x3xf32> to vector<8x1xf32>
    %2090 = vector.extract_strided_slice %2081 {offsets = [1, 0], sizes = [1, 2], strides = [1, 1]} : vector<3x2xf32> to vector<1x2xf32>
    %2091 = vector.broadcast %2089 : vector<8x1xf32> to vector<8x2xf32>
    %2092 = vector.broadcast %2090 : vector<1x2xf32> to vector<8x2xf32>
    %2093 = arith.mulf %2091, %2092 : vector<8x2xf32>
    %2094 = arith.addf %2088, %2093 : vector<8x2xf32>
    %2095 = vector.extract_strided_slice %2079 {offsets = [0, 2], sizes = [8, 1], strides = [1, 1]} : vector<8x3xf32> to vector<8x1xf32>
    %2096 = vector.extract_strided_slice %2081 {offsets = [2, 0], sizes = [1, 2], strides = [1, 1]} : vector<3x2xf32> to vector<1x2xf32>
    %2097 = vector.broadcast %2095 : vector<8x1xf32> to vector<8x2xf32>
    %2098 = vector.broadcast %2096 : vector<1x2xf32> to vector<8x2xf32>
    %2099 = arith.mulf %2097, %2098 : vector<8x2xf32>
    %2100 = arith.addf %2094, %2099 : vector<8x2xf32>
    %2101 = vector.broadcast %2083 : vector<1x2xf32> to vector<8x2xf32>
    %2102 = arith.addf %2100, %2101 : vector<8x2xf32>
    %cst_624 = arith.constant dense<0.000000e+00> : vector<8xf32>
    %2103 = vector.multi_reduction <add>, %2079, %cst_624 [1] : vector<8x3xf32> to vector<8xf32>
    %2104 = vector.shape_cast %2103 : vector<8xf32> to vector<8x1xf32>
    %cst_625 = arith.constant 3.000000e+00 : f32
    %2105 = vector.broadcast %cst_625 : f32 to vector<8x1xf32>
    %2106 = arith.divf %2104, %2105 : vector<8x1xf32>
    %2107 = vector.broadcast %2106 : vector<8x1xf32> to vector<8x3xf32>
    %2108 = arith.subf %2079, %2107 : vector<8x3xf32>
    %2109 = arith.mulf %2108, %2108 : vector<8x3xf32>
    %cst_626 = arith.constant dense<0.000000e+00> : vector<8xf32>
    %2110 = vector.multi_reduction <add>, %2109, %cst_626 [1] : vector<8x3xf32> to vector<8xf32>
    %2111 = vector.shape_cast %2110 : vector<8xf32> to vector<8x1xf32>
    %cst_627 = arith.constant 3.000000e+00 : f32
    %2112 = vector.broadcast %cst_627 : f32 to vector<8x1xf32>
    %2113 = arith.divf %2111, %2112 : vector<8x1xf32>
    %2114 = vector.broadcast %2106 : vector<8x1xf32> to vector<8x3xf32>
    %2115 = arith.subf %2079, %2114 : vector<8x3xf32>
    %cst_628 = arith.constant 9.99999974E-6 : f32
    %2116 = vector.broadcast %cst_628 : f32 to vector<8x1xf32>
    %2117 = arith.addf %2113, %2116 : vector<8x1xf32>
    %2118 = math.rsqrt %2117 : vector<8x1xf32>
    %2119 = vector.broadcast %2118 : vector<8x1xf32> to vector<8x3xf32>
    %2120 = arith.mulf %2115, %2119 : vector<8x3xf32>
    %c50_629 = arith.constant 50 : index
    %c0_630 = arith.constant 0 : index
    %c0_631 = arith.constant 0 : index
    %2121 = vector.load %arg2[%c50_629, %c0_630, %c0_631] : memref<106x32x32xf32, #tpu.memory_space<vmem>>, vector<1x1x3xf32>
    %2122 = vector.shape_cast %2121 : vector<1x1x3xf32> to vector<1x3xf32>
    %2123 = vector.broadcast %2122 : vector<1x3xf32> to vector<8x3xf32>
    %2124 = arith.mulf %2120, %2123 : vector<8x3xf32>
    %c51_632 = arith.constant 51 : index
    %c0_633 = arith.constant 0 : index
    %c0_634 = arith.constant 0 : index
    %2125 = vector.load %arg2[%c51_632, %c0_633, %c0_634] : memref<106x32x32xf32, #tpu.memory_space<vmem>>, vector<1x1x3xf32>
    %2126 = vector.shape_cast %2125 : vector<1x1x3xf32> to vector<1x3xf32>
    %2127 = vector.broadcast %2126 : vector<1x3xf32> to vector<8x3xf32>
    %2128 = arith.addf %2124, %2127 : vector<8x3xf32>
    %c52_635 = arith.constant 52 : index
    %c0_636 = arith.constant 0 : index
    %c0_637 = arith.constant 0 : index
    %2129 = vector.load %arg2[%c52_635, %c0_636, %c0_637] : memref<106x32x32xf32, #tpu.memory_space<vmem>>, vector<1x3x32xf32>
    %2130 = vector.shape_cast %2129 : vector<1x3x32xf32> to vector<3x32xf32>
    %c53_638 = arith.constant 53 : index
    %c0_639 = arith.constant 0 : index
    %c0_640 = arith.constant 0 : index
    %2131 = vector.load %arg2[%c53_638, %c0_639, %c0_640] : memref<106x32x32xf32, #tpu.memory_space<vmem>>, vector<1x1x32xf32>
    %2132 = vector.shape_cast %2131 : vector<1x1x32xf32> to vector<1x32xf32>
    %2133 = vector.extract_strided_slice %2128 {offsets = [0, 0], sizes = [8, 1], strides = [1, 1]} : vector<8x3xf32> to vector<8x1xf32>
    %2134 = vector.extract_strided_slice %2130 {offsets = [0, 0], sizes = [1, 32], strides = [1, 1]} : vector<3x32xf32> to vector<1x32xf32>
    %2135 = vector.broadcast %2133 : vector<8x1xf32> to vector<8x32xf32>
    %2136 = vector.broadcast %2134 : vector<1x32xf32> to vector<8x32xf32>
    %2137 = arith.mulf %2135, %2136 : vector<8x32xf32>
    %2138 = vector.extract_strided_slice %2128 {offsets = [0, 1], sizes = [8, 1], strides = [1, 1]} : vector<8x3xf32> to vector<8x1xf32>
    %2139 = vector.extract_strided_slice %2130 {offsets = [1, 0], sizes = [1, 32], strides = [1, 1]} : vector<3x32xf32> to vector<1x32xf32>
    %2140 = vector.broadcast %2138 : vector<8x1xf32> to vector<8x32xf32>
    %2141 = vector.broadcast %2139 : vector<1x32xf32> to vector<8x32xf32>
    %2142 = arith.mulf %2140, %2141 : vector<8x32xf32>
    %2143 = arith.addf %2137, %2142 : vector<8x32xf32>
    %2144 = vector.extract_strided_slice %2128 {offsets = [0, 2], sizes = [8, 1], strides = [1, 1]} : vector<8x3xf32> to vector<8x1xf32>
    %2145 = vector.extract_strided_slice %2130 {offsets = [2, 0], sizes = [1, 32], strides = [1, 1]} : vector<3x32xf32> to vector<1x32xf32>
    %2146 = vector.broadcast %2144 : vector<8x1xf32> to vector<8x32xf32>
    %2147 = vector.broadcast %2145 : vector<1x32xf32> to vector<8x32xf32>
    %2148 = arith.mulf %2146, %2147 : vector<8x32xf32>
    %2149 = arith.addf %2143, %2148 : vector<8x32xf32>
    %2150 = vector.broadcast %2132 : vector<1x32xf32> to vector<8x32xf32>
    %2151 = arith.addf %2149, %2150 : vector<8x32xf32>
    %cst_641 = arith.constant 0.000000e+00 : f32
    %2152 = vector.broadcast %cst_641 : f32 to vector<8x32xf32>
    %2153 = arith.maximumf %2151, %2152 : vector<8x32xf32>
    %c54_642 = arith.constant 54 : index
    %c0_643 = arith.constant 0 : index
    %c0_644 = arith.constant 0 : index
    %2154 = vector.load %arg2[%c54_642, %c0_643, %c0_644] : memref<106x32x32xf32, #tpu.memory_space<vmem>>, vector<1x32x2xf32>
    %2155 = vector.shape_cast %2154 : vector<1x32x2xf32> to vector<32x2xf32>
    %c55_645 = arith.constant 55 : index
    %c0_646 = arith.constant 0 : index
    %c0_647 = arith.constant 0 : index
    %2156 = vector.load %arg2[%c55_645, %c0_646, %c0_647] : memref<106x32x32xf32, #tpu.memory_space<vmem>>, vector<1x1x2xf32>
    %2157 = vector.shape_cast %2156 : vector<1x1x2xf32> to vector<1x2xf32>
    %cst_648 = arith.constant dense<0.000000e+00> : vector<8x2xf32>
    %2158 = tpu.matmul %2153, %2155, %cst_648 {dimension_numbers = #tpu.dot_dimension_numbers<[1], [0], [0], [1], [0, 0, 1, 1], [], []>} : vector<8x32xf32>, vector<32x2xf32>, vector<8x2xf32> -> vector<8x2xf32>
    %2159 = vector.broadcast %2157 : vector<1x2xf32> to vector<8x2xf32>
    %2160 = arith.addf %2158, %2159 : vector<8x2xf32>
    %2161 = arith.addf %2102, %2160 : vector<8x2xf32>
    %c60_649 = arith.constant 60 : index
    %c0_650 = arith.constant 0 : index
    %c0_651 = arith.constant 0 : index
    %2162 = vector.load %arg2[%c60_649, %c0_650, %c0_651] : memref<106x32x32xf32, #tpu.memory_space<vmem>>, vector<1x8x8xf32>
    %2163 = vector.shape_cast %2162 : vector<1x8x8xf32> to vector<8x8xf32>
    %cst_652 = arith.constant dense<0.000000e+00> : vector<8xf32>
    %2164 = vector.multi_reduction <add>, %2161, %cst_652 [1] : vector<8x2xf32> to vector<8xf32>
    %2165 = vector.shape_cast %2164 : vector<8xf32> to vector<8x1xf32>
    %cst_653 = arith.constant 2.000000e+00 : f32
    %2166 = vector.broadcast %cst_653 : f32 to vector<8x1xf32>
    %2167 = arith.divf %2165, %2166 : vector<8x1xf32>
    %2168 = vector.broadcast %2167 : vector<8x1xf32> to vector<8x2xf32>
    %2169 = arith.subf %2161, %2168 : vector<8x2xf32>
    %2170 = arith.mulf %2169, %2169 : vector<8x2xf32>
    %cst_654 = arith.constant dense<0.000000e+00> : vector<8xf32>
    %2171 = vector.multi_reduction <add>, %2170, %cst_654 [1] : vector<8x2xf32> to vector<8xf32>
    %2172 = vector.shape_cast %2171 : vector<8xf32> to vector<8x1xf32>
    %cst_655 = arith.constant 2.000000e+00 : f32
    %2173 = vector.broadcast %cst_655 : f32 to vector<8x1xf32>
    %2174 = arith.divf %2172, %2173 : vector<8x1xf32>
    %2175 = vector.broadcast %2167 : vector<8x1xf32> to vector<8x2xf32>
    %2176 = arith.subf %2161, %2175 : vector<8x2xf32>
    %cst_656 = arith.constant 9.99999974E-6 : f32
    %2177 = vector.broadcast %cst_656 : f32 to vector<8x1xf32>
    %2178 = arith.addf %2174, %2177 : vector<8x1xf32>
    %2179 = math.rsqrt %2178 : vector<8x1xf32>
    %2180 = vector.broadcast %2179 : vector<8x1xf32> to vector<8x2xf32>
    %2181 = arith.mulf %2176, %2180 : vector<8x2xf32>
    %c58_657 = arith.constant 58 : index
    %c0_658 = arith.constant 0 : index
    %c0_659 = arith.constant 0 : index
    %2182 = vector.load %arg2[%c58_657, %c0_658, %c0_659] : memref<106x32x32xf32, #tpu.memory_space<vmem>>, vector<1x1x2xf32>
    %2183 = vector.shape_cast %2182 : vector<1x1x2xf32> to vector<1x2xf32>
    %2184 = vector.broadcast %2183 : vector<1x2xf32> to vector<8x2xf32>
    %2185 = arith.mulf %2181, %2184 : vector<8x2xf32>
    %c59_660 = arith.constant 59 : index
    %c0_661 = arith.constant 0 : index
    %c0_662 = arith.constant 0 : index
    %2186 = vector.load %arg2[%c59_660, %c0_661, %c0_662] : memref<106x32x32xf32, #tpu.memory_space<vmem>>, vector<1x1x2xf32>
    %2187 = vector.shape_cast %2186 : vector<1x1x2xf32> to vector<1x2xf32>
    %2188 = vector.broadcast %2187 : vector<1x2xf32> to vector<8x2xf32>
    %2189 = arith.addf %2185, %2188 : vector<8x2xf32>
    %c61_663 = arith.constant 61 : index
    %c0_664 = arith.constant 0 : index
    %c0_665 = arith.constant 0 : index
    %2190 = vector.load %arg2[%c61_663, %c0_664, %c0_665] : memref<106x32x32xf32, #tpu.memory_space<vmem>>, vector<1x8x1xf32>
    %2191 = vector.shape_cast %2190 : vector<1x8x1xf32> to vector<8x1xf32>
    %2192 = vector.extract_strided_slice %2163 {offsets = [0, 0], sizes = [8, 1], strides = [1, 1]} : vector<8x8xf32> to vector<8x1xf32>
    %2193 = vector.extract_strided_slice %2189 {offsets = [0, 0], sizes = [1, 2], strides = [1, 1]} : vector<8x2xf32> to vector<1x2xf32>
    %2194 = vector.broadcast %2192 : vector<8x1xf32> to vector<8x2xf32>
    %2195 = vector.broadcast %2193 : vector<1x2xf32> to vector<8x2xf32>
    %2196 = arith.mulf %2194, %2195 : vector<8x2xf32>
    %2197 = vector.extract_strided_slice %2163 {offsets = [0, 1], sizes = [8, 1], strides = [1, 1]} : vector<8x8xf32> to vector<8x1xf32>
    %2198 = vector.extract_strided_slice %2189 {offsets = [1, 0], sizes = [1, 2], strides = [1, 1]} : vector<8x2xf32> to vector<1x2xf32>
    %2199 = vector.broadcast %2197 : vector<8x1xf32> to vector<8x2xf32>
    %2200 = vector.broadcast %2198 : vector<1x2xf32> to vector<8x2xf32>
    %2201 = arith.mulf %2199, %2200 : vector<8x2xf32>
    %2202 = arith.addf %2196, %2201 : vector<8x2xf32>
    %2203 = vector.extract_strided_slice %2163 {offsets = [0, 2], sizes = [8, 1], strides = [1, 1]} : vector<8x8xf32> to vector<8x1xf32>
    %2204 = vector.extract_strided_slice %2189 {offsets = [2, 0], sizes = [1, 2], strides = [1, 1]} : vector<8x2xf32> to vector<1x2xf32>
    %2205 = vector.broadcast %2203 : vector<8x1xf32> to vector<8x2xf32>
    %2206 = vector.broadcast %2204 : vector<1x2xf32> to vector<8x2xf32>
    %2207 = arith.mulf %2205, %2206 : vector<8x2xf32>
    %2208 = arith.addf %2202, %2207 : vector<8x2xf32>
    %2209 = vector.extract_strided_slice %2163 {offsets = [0, 3], sizes = [8, 1], strides = [1, 1]} : vector<8x8xf32> to vector<8x1xf32>
    %2210 = vector.extract_strided_slice %2189 {offsets = [3, 0], sizes = [1, 2], strides = [1, 1]} : vector<8x2xf32> to vector<1x2xf32>
    %2211 = vector.broadcast %2209 : vector<8x1xf32> to vector<8x2xf32>
    %2212 = vector.broadcast %2210 : vector<1x2xf32> to vector<8x2xf32>
    %2213 = arith.mulf %2211, %2212 : vector<8x2xf32>
    %2214 = arith.addf %2208, %2213 : vector<8x2xf32>
    %2215 = vector.extract_strided_slice %2163 {offsets = [0, 4], sizes = [8, 1], strides = [1, 1]} : vector<8x8xf32> to vector<8x1xf32>
    %2216 = vector.extract_strided_slice %2189 {offsets = [4, 0], sizes = [1, 2], strides = [1, 1]} : vector<8x2xf32> to vector<1x2xf32>
    %2217 = vector.broadcast %2215 : vector<8x1xf32> to vector<8x2xf32>
    %2218 = vector.broadcast %2216 : vector<1x2xf32> to vector<8x2xf32>
    %2219 = arith.mulf %2217, %2218 : vector<8x2xf32>
    %2220 = arith.addf %2214, %2219 : vector<8x2xf32>
    %2221 = vector.extract_strided_slice %2163 {offsets = [0, 5], sizes = [8, 1], strides = [1, 1]} : vector<8x8xf32> to vector<8x1xf32>
    %2222 = vector.extract_strided_slice %2189 {offsets = [5, 0], sizes = [1, 2], strides = [1, 1]} : vector<8x2xf32> to vector<1x2xf32>
    %2223 = vector.broadcast %2221 : vector<8x1xf32> to vector<8x2xf32>
    %2224 = vector.broadcast %2222 : vector<1x2xf32> to vector<8x2xf32>
    %2225 = arith.mulf %2223, %2224 : vector<8x2xf32>
    %2226 = arith.addf %2220, %2225 : vector<8x2xf32>
    %2227 = vector.extract_strided_slice %2163 {offsets = [0, 6], sizes = [8, 1], strides = [1, 1]} : vector<8x8xf32> to vector<8x1xf32>
    %2228 = vector.extract_strided_slice %2189 {offsets = [6, 0], sizes = [1, 2], strides = [1, 1]} : vector<8x2xf32> to vector<1x2xf32>
    %2229 = vector.broadcast %2227 : vector<8x1xf32> to vector<8x2xf32>
    %2230 = vector.broadcast %2228 : vector<1x2xf32> to vector<8x2xf32>
    %2231 = arith.mulf %2229, %2230 : vector<8x2xf32>
    %2232 = arith.addf %2226, %2231 : vector<8x2xf32>
    %2233 = vector.extract_strided_slice %2163 {offsets = [0, 7], sizes = [8, 1], strides = [1, 1]} : vector<8x8xf32> to vector<8x1xf32>
    %2234 = vector.extract_strided_slice %2189 {offsets = [7, 0], sizes = [1, 2], strides = [1, 1]} : vector<8x2xf32> to vector<1x2xf32>
    %2235 = vector.broadcast %2233 : vector<8x1xf32> to vector<8x2xf32>
    %2236 = vector.broadcast %2234 : vector<1x2xf32> to vector<8x2xf32>
    %2237 = arith.mulf %2235, %2236 : vector<8x2xf32>
    %2238 = arith.addf %2232, %2237 : vector<8x2xf32>
    %2239 = vector.broadcast %2191 : vector<8x1xf32> to vector<8x2xf32>
    %2240 = arith.addf %2238, %2239 : vector<8x2xf32>
    %cst_666 = arith.constant 0.000000e+00 : f32
    %2241 = vector.broadcast %cst_666 : f32 to vector<8x2xf32>
    %2242 = arith.maximumf %2240, %2241 : vector<8x2xf32>
    %2243 = arith.addf %2161, %2242 : vector<8x2xf32>
    %cst_667 = arith.constant dense<0.000000e+00> : vector<8xf32>
    %2244 = vector.multi_reduction <add>, %2243, %cst_667 [1] : vector<8x2xf32> to vector<8xf32>
    %2245 = vector.shape_cast %2244 : vector<8xf32> to vector<8x1xf32>
    %cst_668 = arith.constant 2.000000e+00 : f32
    %2246 = vector.broadcast %cst_668 : f32 to vector<8x1xf32>
    %2247 = arith.divf %2245, %2246 : vector<8x1xf32>
    %2248 = vector.broadcast %2247 : vector<8x1xf32> to vector<8x2xf32>
    %2249 = arith.subf %2243, %2248 : vector<8x2xf32>
    %2250 = arith.mulf %2249, %2249 : vector<8x2xf32>
    %cst_669 = arith.constant dense<0.000000e+00> : vector<8xf32>
    %2251 = vector.multi_reduction <add>, %2250, %cst_669 [1] : vector<8x2xf32> to vector<8xf32>
    %2252 = vector.shape_cast %2251 : vector<8xf32> to vector<8x1xf32>
    %cst_670 = arith.constant 2.000000e+00 : f32
    %2253 = vector.broadcast %cst_670 : f32 to vector<8x1xf32>
    %2254 = arith.divf %2252, %2253 : vector<8x1xf32>
    %2255 = vector.broadcast %2247 : vector<8x1xf32> to vector<8x2xf32>
    %2256 = arith.subf %2243, %2255 : vector<8x2xf32>
    %cst_671 = arith.constant 9.99999974E-6 : f32
    %2257 = vector.broadcast %cst_671 : f32 to vector<8x1xf32>
    %2258 = arith.addf %2254, %2257 : vector<8x1xf32>
    %2259 = math.rsqrt %2258 : vector<8x1xf32>
    %2260 = vector.broadcast %2259 : vector<8x1xf32> to vector<8x2xf32>
    %2261 = arith.mulf %2256, %2260 : vector<8x2xf32>
    %c62_672 = arith.constant 62 : index
    %c0_673 = arith.constant 0 : index
    %c0_674 = arith.constant 0 : index
    %2262 = vector.load %arg2[%c62_672, %c0_673, %c0_674] : memref<106x32x32xf32, #tpu.memory_space<vmem>>, vector<1x1x2xf32>
    %2263 = vector.shape_cast %2262 : vector<1x1x2xf32> to vector<1x2xf32>
    %2264 = vector.broadcast %2263 : vector<1x2xf32> to vector<8x2xf32>
    %2265 = arith.mulf %2261, %2264 : vector<8x2xf32>
    %c63_675 = arith.constant 63 : index
    %c0_676 = arith.constant 0 : index
    %c0_677 = arith.constant 0 : index
    %2266 = vector.load %arg2[%c63_675, %c0_676, %c0_677] : memref<106x32x32xf32, #tpu.memory_space<vmem>>, vector<1x1x2xf32>
    %2267 = vector.shape_cast %2266 : vector<1x1x2xf32> to vector<1x2xf32>
    %2268 = vector.broadcast %2267 : vector<1x2xf32> to vector<8x2xf32>
    %2269 = arith.addf %2265, %2268 : vector<8x2xf32>
    %c64_678 = arith.constant 64 : index
    %c0_679 = arith.constant 0 : index
    %c0_680 = arith.constant 0 : index
    %2270 = vector.load %arg2[%c64_678, %c0_679, %c0_680] : memref<106x32x32xf32, #tpu.memory_space<vmem>>, vector<1x2x32xf32>
    %2271 = vector.shape_cast %2270 : vector<1x2x32xf32> to vector<2x32xf32>
    %c65_681 = arith.constant 65 : index
    %c0_682 = arith.constant 0 : index
    %c0_683 = arith.constant 0 : index
    %2272 = vector.load %arg2[%c65_681, %c0_682, %c0_683] : memref<106x32x32xf32, #tpu.memory_space<vmem>>, vector<1x1x32xf32>
    %2273 = vector.shape_cast %2272 : vector<1x1x32xf32> to vector<1x32xf32>
    %2274 = vector.extract_strided_slice %2269 {offsets = [0, 0], sizes = [8, 1], strides = [1, 1]} : vector<8x2xf32> to vector<8x1xf32>
    %2275 = vector.extract_strided_slice %2271 {offsets = [0, 0], sizes = [1, 32], strides = [1, 1]} : vector<2x32xf32> to vector<1x32xf32>
    %2276 = vector.broadcast %2274 : vector<8x1xf32> to vector<8x32xf32>
    %2277 = vector.broadcast %2275 : vector<1x32xf32> to vector<8x32xf32>
    %2278 = arith.mulf %2276, %2277 : vector<8x32xf32>
    %2279 = vector.extract_strided_slice %2269 {offsets = [0, 1], sizes = [8, 1], strides = [1, 1]} : vector<8x2xf32> to vector<8x1xf32>
    %2280 = vector.extract_strided_slice %2271 {offsets = [1, 0], sizes = [1, 32], strides = [1, 1]} : vector<2x32xf32> to vector<1x32xf32>
    %2281 = vector.broadcast %2279 : vector<8x1xf32> to vector<8x32xf32>
    %2282 = vector.broadcast %2280 : vector<1x32xf32> to vector<8x32xf32>
    %2283 = arith.mulf %2281, %2282 : vector<8x32xf32>
    %2284 = arith.addf %2278, %2283 : vector<8x32xf32>
    %2285 = vector.broadcast %2273 : vector<1x32xf32> to vector<8x32xf32>
    %2286 = arith.addf %2284, %2285 : vector<8x32xf32>
    %cst_684 = arith.constant 0.000000e+00 : f32
    %2287 = vector.broadcast %cst_684 : f32 to vector<8x32xf32>
    %2288 = arith.maximumf %2286, %2287 : vector<8x32xf32>
    %c66_685 = arith.constant 66 : index
    %c0_686 = arith.constant 0 : index
    %c0_687 = arith.constant 0 : index
    %2289 = vector.load %arg2[%c66_685, %c0_686, %c0_687] : memref<106x32x32xf32, #tpu.memory_space<vmem>>, vector<1x32x2xf32>
    %2290 = vector.shape_cast %2289 : vector<1x32x2xf32> to vector<32x2xf32>
    %c67_688 = arith.constant 67 : index
    %c0_689 = arith.constant 0 : index
    %c0_690 = arith.constant 0 : index
    %2291 = vector.load %arg2[%c67_688, %c0_689, %c0_690] : memref<106x32x32xf32, #tpu.memory_space<vmem>>, vector<1x1x2xf32>
    %2292 = vector.shape_cast %2291 : vector<1x1x2xf32> to vector<1x2xf32>
    %cst_691 = arith.constant dense<0.000000e+00> : vector<8x2xf32>
    %2293 = tpu.matmul %2288, %2290, %cst_691 {dimension_numbers = #tpu.dot_dimension_numbers<[1], [0], [0], [1], [0, 0, 1, 1], [], []>} : vector<8x32xf32>, vector<32x2xf32>, vector<8x2xf32> -> vector<8x2xf32>
    %2294 = vector.broadcast %2292 : vector<1x2xf32> to vector<8x2xf32>
    %2295 = arith.addf %2293, %2294 : vector<8x2xf32>
    %2296 = arith.addf %2243, %2295 : vector<8x2xf32>
    %c68_692 = arith.constant 68 : index
    %c0_693 = arith.constant 0 : index
    %c0_694 = arith.constant 0 : index
    %2297 = vector.load %arg2[%c68_692, %c0_693, %c0_694] : memref<106x32x32xf32, #tpu.memory_space<vmem>>, vector<1x2x8xf32>
    %2298 = vector.shape_cast %2297 : vector<1x2x8xf32> to vector<2x8xf32>
    %c69_695 = arith.constant 69 : index
    %c0_696 = arith.constant 0 : index
    %c0_697 = arith.constant 0 : index
    %2299 = vector.load %arg2[%c69_695, %c0_696, %c0_697] : memref<106x32x32xf32, #tpu.memory_space<vmem>>, vector<1x1x8xf32>
    %2300 = vector.shape_cast %2299 : vector<1x1x8xf32> to vector<1x8xf32>
    %2301 = vector.extract_strided_slice %2296 {offsets = [0, 0], sizes = [8, 1], strides = [1, 1]} : vector<8x2xf32> to vector<8x1xf32>
    %2302 = vector.extract_strided_slice %2298 {offsets = [0, 0], sizes = [1, 8], strides = [1, 1]} : vector<2x8xf32> to vector<1x8xf32>
    %2303 = vector.broadcast %2301 : vector<8x1xf32> to vector<8x8xf32>
    %2304 = vector.broadcast %2302 : vector<1x8xf32> to vector<8x8xf32>
    %2305 = arith.mulf %2303, %2304 : vector<8x8xf32>
    %2306 = vector.extract_strided_slice %2296 {offsets = [0, 1], sizes = [8, 1], strides = [1, 1]} : vector<8x2xf32> to vector<8x1xf32>
    %2307 = vector.extract_strided_slice %2298 {offsets = [1, 0], sizes = [1, 8], strides = [1, 1]} : vector<2x8xf32> to vector<1x8xf32>
    %2308 = vector.broadcast %2306 : vector<8x1xf32> to vector<8x8xf32>
    %2309 = vector.broadcast %2307 : vector<1x8xf32> to vector<8x8xf32>
    %2310 = arith.mulf %2308, %2309 : vector<8x8xf32>
    %2311 = arith.addf %2305, %2310 : vector<8x8xf32>
    %2312 = vector.broadcast %2300 : vector<1x8xf32> to vector<8x8xf32>
    %2313 = arith.addf %2311, %2312 : vector<8x8xf32>
    %cst_698 = arith.constant 0.000000e+00 : f32
    %2314 = vector.broadcast %cst_698 : f32 to vector<8x8xf32>
    %2315 = arith.cmpf oge, %2313, %2314 : vector<8x8xf32>
    %cst_699 = arith.constant 0.00999999977 : f32
    %2316 = vector.broadcast %cst_699 : f32 to vector<8x8xf32>
    %2317 = arith.mulf %2316, %2313 : vector<8x8xf32>
    %2318 = arith.select %2315, %2313, %2317 : vector<8x8xi1>, vector<8x8xf32>
    %cst_700 = arith.constant dense<0.000000e+00> : vector<8xf32>
    %2319 = vector.multi_reduction <add>, %2318, %cst_700 [1] : vector<8x8xf32> to vector<8xf32>
    %2320 = vector.shape_cast %2319 : vector<8xf32> to vector<8x1xf32>
    %cst_701 = arith.constant 8.000000e+00 : f32
    %2321 = vector.broadcast %cst_701 : f32 to vector<8x1xf32>
    %2322 = arith.divf %2320, %2321 : vector<8x1xf32>
    %2323 = vector.broadcast %2322 : vector<8x1xf32> to vector<8x8xf32>
    %2324 = arith.subf %2318, %2323 : vector<8x8xf32>
    %2325 = arith.mulf %2324, %2324 : vector<8x8xf32>
    %cst_702 = arith.constant dense<0.000000e+00> : vector<8xf32>
    %2326 = vector.multi_reduction <add>, %2325, %cst_702 [1] : vector<8x8xf32> to vector<8xf32>
    %2327 = vector.shape_cast %2326 : vector<8xf32> to vector<8x1xf32>
    %cst_703 = arith.constant 8.000000e+00 : f32
    %2328 = vector.broadcast %cst_703 : f32 to vector<8x1xf32>
    %2329 = arith.divf %2327, %2328 : vector<8x1xf32>
    %2330 = vector.broadcast %2322 : vector<8x1xf32> to vector<8x8xf32>
    %2331 = arith.subf %2318, %2330 : vector<8x8xf32>
    %cst_704 = arith.constant 9.99999974E-6 : f32
    %2332 = vector.broadcast %cst_704 : f32 to vector<8x1xf32>
    %2333 = arith.addf %2329, %2332 : vector<8x1xf32>
    %2334 = math.rsqrt %2333 : vector<8x1xf32>
    %2335 = vector.broadcast %2334 : vector<8x1xf32> to vector<8x8xf32>
    %2336 = arith.mulf %2331, %2335 : vector<8x8xf32>
    %c70_705 = arith.constant 70 : index
    %c0_706 = arith.constant 0 : index
    %c0_707 = arith.constant 0 : index
    %2337 = vector.load %arg2[%c70_705, %c0_706, %c0_707] : memref<106x32x32xf32, #tpu.memory_space<vmem>>, vector<1x1x8xf32>
    %2338 = vector.shape_cast %2337 : vector<1x1x8xf32> to vector<1x8xf32>
    %2339 = vector.broadcast %2338 : vector<1x8xf32> to vector<8x8xf32>
    %2340 = arith.mulf %2336, %2339 : vector<8x8xf32>
    %c71_708 = arith.constant 71 : index
    %c0_709 = arith.constant 0 : index
    %c0_710 = arith.constant 0 : index
    %2341 = vector.load %arg2[%c71_708, %c0_709, %c0_710] : memref<106x32x32xf32, #tpu.memory_space<vmem>>, vector<1x1x8xf32>
    %2342 = vector.shape_cast %2341 : vector<1x1x8xf32> to vector<1x8xf32>
    %2343 = vector.broadcast %2342 : vector<1x8xf32> to vector<8x8xf32>
    %2344 = arith.addf %2340, %2343 : vector<8x8xf32>
    %c72_711 = arith.constant 72 : index
    %c0_712 = arith.constant 0 : index
    %c0_713 = arith.constant 0 : index
    %2345 = vector.load %arg2[%c72_711, %c0_712, %c0_713] : memref<106x32x32xf32, #tpu.memory_space<vmem>>, vector<1x8x1xf32>
    %2346 = vector.shape_cast %2345 : vector<1x8x1xf32> to vector<8x1xf32>
    %c73_714 = arith.constant 73 : index
    %c0_715 = arith.constant 0 : index
    %c0_716 = arith.constant 0 : index
    %2347 = vector.load %arg2[%c73_714, %c0_715, %c0_716] : memref<106x32x32xf32, #tpu.memory_space<vmem>>, vector<1x1x1xf32>
    %2348 = vector.shape_cast %2347 : vector<1x1x1xf32> to vector<1x1xf32>
    %2349 = vector.extract_strided_slice %2344 {offsets = [0, 0], sizes = [8, 1], strides = [1, 1]} : vector<8x8xf32> to vector<8x1xf32>
    %2350 = vector.extract_strided_slice %2346 {offsets = [0, 0], sizes = [1, 1], strides = [1, 1]} : vector<8x1xf32> to vector<1x1xf32>
    %2351 = vector.broadcast %2350 : vector<1x1xf32> to vector<8x1xf32>
    %2352 = arith.mulf %2349, %2351 : vector<8x1xf32>
    %2353 = vector.extract_strided_slice %2344 {offsets = [0, 1], sizes = [8, 1], strides = [1, 1]} : vector<8x8xf32> to vector<8x1xf32>
    %2354 = vector.extract_strided_slice %2346 {offsets = [1, 0], sizes = [1, 1], strides = [1, 1]} : vector<8x1xf32> to vector<1x1xf32>
    %2355 = vector.broadcast %2354 : vector<1x1xf32> to vector<8x1xf32>
    %2356 = arith.mulf %2353, %2355 : vector<8x1xf32>
    %2357 = arith.addf %2352, %2356 : vector<8x1xf32>
    %2358 = vector.extract_strided_slice %2344 {offsets = [0, 2], sizes = [8, 1], strides = [1, 1]} : vector<8x8xf32> to vector<8x1xf32>
    %2359 = vector.extract_strided_slice %2346 {offsets = [2, 0], sizes = [1, 1], strides = [1, 1]} : vector<8x1xf32> to vector<1x1xf32>
    %2360 = vector.broadcast %2359 : vector<1x1xf32> to vector<8x1xf32>
    %2361 = arith.mulf %2358, %2360 : vector<8x1xf32>
    %2362 = arith.addf %2357, %2361 : vector<8x1xf32>
    %2363 = vector.extract_strided_slice %2344 {offsets = [0, 3], sizes = [8, 1], strides = [1, 1]} : vector<8x8xf32> to vector<8x1xf32>
    %2364 = vector.extract_strided_slice %2346 {offsets = [3, 0], sizes = [1, 1], strides = [1, 1]} : vector<8x1xf32> to vector<1x1xf32>
    %2365 = vector.broadcast %2364 : vector<1x1xf32> to vector<8x1xf32>
    %2366 = arith.mulf %2363, %2365 : vector<8x1xf32>
    %2367 = arith.addf %2362, %2366 : vector<8x1xf32>
    %2368 = vector.extract_strided_slice %2344 {offsets = [0, 4], sizes = [8, 1], strides = [1, 1]} : vector<8x8xf32> to vector<8x1xf32>
    %2369 = vector.extract_strided_slice %2346 {offsets = [4, 0], sizes = [1, 1], strides = [1, 1]} : vector<8x1xf32> to vector<1x1xf32>
    %2370 = vector.broadcast %2369 : vector<1x1xf32> to vector<8x1xf32>
    %2371 = arith.mulf %2368, %2370 : vector<8x1xf32>
    %2372 = arith.addf %2367, %2371 : vector<8x1xf32>
    %2373 = vector.extract_strided_slice %2344 {offsets = [0, 5], sizes = [8, 1], strides = [1, 1]} : vector<8x8xf32> to vector<8x1xf32>
    %2374 = vector.extract_strided_slice %2346 {offsets = [5, 0], sizes = [1, 1], strides = [1, 1]} : vector<8x1xf32> to vector<1x1xf32>
    %2375 = vector.broadcast %2374 : vector<1x1xf32> to vector<8x1xf32>
    %2376 = arith.mulf %2373, %2375 : vector<8x1xf32>
    %2377 = arith.addf %2372, %2376 : vector<8x1xf32>
    %2378 = vector.extract_strided_slice %2344 {offsets = [0, 6], sizes = [8, 1], strides = [1, 1]} : vector<8x8xf32> to vector<8x1xf32>
    %2379 = vector.extract_strided_slice %2346 {offsets = [6, 0], sizes = [1, 1], strides = [1, 1]} : vector<8x1xf32> to vector<1x1xf32>
    %2380 = vector.broadcast %2379 : vector<1x1xf32> to vector<8x1xf32>
    %2381 = arith.mulf %2378, %2380 : vector<8x1xf32>
    %2382 = arith.addf %2377, %2381 : vector<8x1xf32>
    %2383 = vector.extract_strided_slice %2344 {offsets = [0, 7], sizes = [8, 1], strides = [1, 1]} : vector<8x8xf32> to vector<8x1xf32>
    %2384 = vector.extract_strided_slice %2346 {offsets = [7, 0], sizes = [1, 1], strides = [1, 1]} : vector<8x1xf32> to vector<1x1xf32>
    %2385 = vector.broadcast %2384 : vector<1x1xf32> to vector<8x1xf32>
    %2386 = arith.mulf %2383, %2385 : vector<8x1xf32>
    %2387 = arith.addf %2382, %2386 : vector<8x1xf32>
    %2388 = vector.broadcast %2348 : vector<1x1xf32> to vector<8x1xf32>
    %2389 = arith.addf %2387, %2388 : vector<8x1xf32>
    %c1_717 = arith.constant 1 : index
    %c0_718 = arith.constant 0 : index
    %c6_719 = arith.constant 6 : index
    %2390 = vector.load %arg3[%c1_717, %c0_718, %c6_719] : memref<2x8x9xf32, #tpu.memory_space<vmem>>, vector<1x8x1xf32>
    %2391 = vector.shape_cast %2390 : vector<1x8x1xf32> to vector<8x1xf32>
    %2392 = vector.shape_cast %2389 : vector<8x1xf32> to vector<1x8x1xf32>
    tpu.vector_store %arg3[%c1_717, %c0_718, %c6_719], %2392 {strides = array<i32>} : memref<2x8x9xf32, #tpu.memory_space<vmem>>, vector<1x8x1xf32>,
    %c74_720 = arith.constant 74 : index
    %c0_721 = arith.constant 0 : index
    %c0_722 = arith.constant 0 : index
    %2393 = vector.load %arg2[%c74_720, %c0_721, %c0_722] : memref<106x32x32xf32, #tpu.memory_space<vmem>>, vector<1x2x2xf32>
    %2394 = vector.shape_cast %2393 : vector<1x2x2xf32> to vector<2x2xf32>
    %2395 = vector.extract_strided_slice %2394 {offsets = [0, 0], sizes = [1, 2], strides = [1, 1]} : vector<2x2xf32> to vector<1x2xf32>
    %2396 = vector.broadcast %2389 : vector<8x1xf32> to vector<8x2xf32>
    %2397 = vector.broadcast %2395 : vector<1x2xf32> to vector<8x2xf32>
    %2398 = arith.mulf %2396, %2397 : vector<8x2xf32>
    %2399 = vector.extract_strided_slice %2394 {offsets = [1, 0], sizes = [1, 2], strides = [1, 1]} : vector<2x2xf32> to vector<1x2xf32>
    %2400 = vector.broadcast %1420 : vector<8x1xf32> to vector<8x2xf32>
    %2401 = vector.broadcast %2399 : vector<1x2xf32> to vector<8x2xf32>
    %2402 = arith.mulf %2400, %2401 : vector<8x2xf32>
    %2403 = arith.addf %2398, %2402 : vector<8x2xf32>
    %c75_723 = arith.constant 75 : index
    %c0_724 = arith.constant 0 : index
    %c0_725 = arith.constant 0 : index
    %2404 = vector.load %arg2[%c75_723, %c0_724, %c0_725] : memref<106x32x32xf32, #tpu.memory_space<vmem>>, vector<1x1x2xf32>
    %2405 = vector.shape_cast %2404 : vector<1x1x2xf32> to vector<1x2xf32>
    %2406 = vector.broadcast %2405 : vector<1x2xf32> to vector<8x2xf32>
    %2407 = arith.addf %2403, %2406 : vector<8x2xf32>
    %cst_726 = arith.constant dense<0.000000e+00> : vector<8xf32>
    %2408 = vector.multi_reduction <add>, %2407, %cst_726 [1] : vector<8x2xf32> to vector<8xf32>
    %2409 = vector.shape_cast %2408 : vector<8xf32> to vector<8x1xf32>
    %cst_727 = arith.constant 2.000000e+00 : f32
    %2410 = vector.broadcast %cst_727 : f32 to vector<8x1xf32>
    %2411 = arith.divf %2409, %2410 : vector<8x1xf32>
    %2412 = vector.broadcast %2411 : vector<8x1xf32> to vector<8x2xf32>
    %2413 = arith.subf %2407, %2412 : vector<8x2xf32>
    %2414 = arith.mulf %2413, %2413 : vector<8x2xf32>
    %cst_728 = arith.constant dense<0.000000e+00> : vector<8xf32>
    %2415 = vector.multi_reduction <add>, %2414, %cst_728 [1] : vector<8x2xf32> to vector<8xf32>
    %2416 = vector.shape_cast %2415 : vector<8xf32> to vector<8x1xf32>
    %cst_729 = arith.constant 2.000000e+00 : f32
    %2417 = vector.broadcast %cst_729 : f32 to vector<8x1xf32>
    %2418 = arith.divf %2416, %2417 : vector<8x1xf32>
    %2419 = vector.broadcast %2411 : vector<8x1xf32> to vector<8x2xf32>
    %2420 = arith.subf %2407, %2419 : vector<8x2xf32>
    %cst_730 = arith.constant 9.99999974E-6 : f32
    %2421 = vector.broadcast %cst_730 : f32 to vector<8x1xf32>
    %2422 = arith.addf %2418, %2421 : vector<8x1xf32>
    %2423 = math.rsqrt %2422 : vector<8x1xf32>
    %2424 = vector.broadcast %2423 : vector<8x1xf32> to vector<8x2xf32>
    %2425 = arith.mulf %2420, %2424 : vector<8x2xf32>
    %c76_731 = arith.constant 76 : index
    %c0_732 = arith.constant 0 : index
    %c0_733 = arith.constant 0 : index
    %2426 = vector.load %arg2[%c76_731, %c0_732, %c0_733] : memref<106x32x32xf32, #tpu.memory_space<vmem>>, vector<1x1x2xf32>
    %2427 = vector.shape_cast %2426 : vector<1x1x2xf32> to vector<1x2xf32>
    %2428 = vector.broadcast %2427 : vector<1x2xf32> to vector<8x2xf32>
    %2429 = arith.mulf %2425, %2428 : vector<8x2xf32>
    %c77_734 = arith.constant 77 : index
    %c0_735 = arith.constant 0 : index
    %c0_736 = arith.constant 0 : index
    %2430 = vector.load %arg2[%c77_734, %c0_735, %c0_736] : memref<106x32x32xf32, #tpu.memory_space<vmem>>, vector<1x1x2xf32>
    %2431 = vector.shape_cast %2430 : vector<1x1x2xf32> to vector<1x2xf32>
    %2432 = vector.broadcast %2431 : vector<1x2xf32> to vector<8x2xf32>
    %2433 = arith.addf %2429, %2432 : vector<8x2xf32>
    %cst_737 = arith.constant 0.000000e+00 : f32
    %2434 = vector.broadcast %cst_737 : f32 to vector<8x2xf32>
    %2435 = arith.maximumf %2433, %2434 : vector<8x2xf32>
    %c78_738 = arith.constant 78 : index
    %c0_739 = arith.constant 0 : index
    %c0_740 = arith.constant 0 : index
    %2436 = vector.load %arg2[%c78_738, %c0_739, %c0_740] : memref<106x32x32xf32, #tpu.memory_space<vmem>>, vector<1x2x1xf32>
    %2437 = vector.shape_cast %2436 : vector<1x2x1xf32> to vector<2x1xf32>
    %c79_741 = arith.constant 79 : index
    %c0_742 = arith.constant 0 : index
    %c0_743 = arith.constant 0 : index
    %2438 = vector.load %arg2[%c79_741, %c0_742, %c0_743] : memref<106x32x32xf32, #tpu.memory_space<vmem>>, vector<1x1x1xf32>
    %2439 = vector.shape_cast %2438 : vector<1x1x1xf32> to vector<1x1xf32>
    %2440 = vector.extract_strided_slice %2435 {offsets = [0, 0], sizes = [8, 1], strides = [1, 1]} : vector<8x2xf32> to vector<8x1xf32>
    %2441 = vector.extract_strided_slice %2437 {offsets = [0, 0], sizes = [1, 1], strides = [1, 1]} : vector<2x1xf32> to vector<1x1xf32>
    %2442 = vector.broadcast %2441 : vector<1x1xf32> to vector<8x1xf32>
    %2443 = arith.mulf %2440, %2442 : vector<8x1xf32>
    %2444 = vector.extract_strided_slice %2435 {offsets = [0, 1], sizes = [8, 1], strides = [1, 1]} : vector<8x2xf32> to vector<8x1xf32>
    %2445 = vector.extract_strided_slice %2437 {offsets = [1, 0], sizes = [1, 1], strides = [1, 1]} : vector<2x1xf32> to vector<1x1xf32>
    %2446 = vector.broadcast %2445 : vector<1x1xf32> to vector<8x1xf32>
    %2447 = arith.mulf %2444, %2446 : vector<8x1xf32>
    %2448 = arith.addf %2443, %2447 : vector<8x1xf32>
    %2449 = vector.broadcast %2439 : vector<1x1xf32> to vector<8x1xf32>
    %2450 = arith.addf %2448, %2449 : vector<8x1xf32>
    %c1_744 = arith.constant 1 : index
    %c0_745 = arith.constant 0 : index
    %c7_746 = arith.constant 7 : index
    %2451 = vector.load %arg3[%c1_744, %c0_745, %c7_746] : memref<2x8x9xf32, #tpu.memory_space<vmem>>, vector<1x8x1xf32>
    %2452 = vector.shape_cast %2451 : vector<1x8x1xf32> to vector<8x1xf32>
    %2453 = vector.shape_cast %2450 : vector<8x1xf32> to vector<1x8x1xf32>
    tpu.vector_store %arg3[%c1_744, %c0_745, %c7_746], %2453 {strides = array<i32>} : memref<2x8x9xf32, #tpu.memory_space<vmem>>, vector<1x8x1xf32>,
    %c1_747 = arith.constant 1 : index
    %c0_748 = arith.constant 0 : index
    %c4_749 = arith.constant 4 : index
    %2454 = vector.load %arg3[%c1_747, %c0_748, %c4_749] : memref<2x8x9xf32, #tpu.memory_space<vmem>>, vector<1x8x1xf32>
    %2455 = vector.shape_cast %2454 : vector<1x8x1xf32> to vector<8x1xf32>
    %2456 = vector.extract_strided_slice %2455 {offsets = [0, 0], sizes = [1, 1], strides = [1, 1]} : vector<8x1xf32> to vector<1x1xf32>
    %2457 = vector.broadcast %2456 : vector<1x1xf32> to vector<8x1xf32>
    %2458 = arith.subf %2455, %2457 : vector<8x1xf32>
    %c1_750 = arith.constant 1 : index
    %c0_751 = arith.constant 0 : index
    %c0_752 = arith.constant 0 : index
    %2459 = vector.load %arg5[%c1_750, %c0_751, %c0_752] : memref<2x8x2xf32, #tpu.memory_space<vmem>>, vector<1x8x1xf32>
    %2460 = vector.shape_cast %2459 : vector<1x8x1xf32> to vector<8x1xf32>
    %2461 = vector.shape_cast %2458 : vector<8x1xf32> to vector<1x8x1xf32>
    tpu.vector_store %arg5[%c1_750, %c0_751, %c0_752], %2461 {strides = array<i32>} : memref<2x8x2xf32, #tpu.memory_space<vmem>>, vector<1x8x1xf32>,
    %2462 = vector.extract_strided_slice %1974 {offsets = [0, 2], sizes = [8, 1], strides = [1, 1]} : vector<8x3xf32> to vector<8x1xf32>
    %c1_753 = arith.constant 1 : index
    %c0_754 = arith.constant 0 : index
    %c1_755 = arith.constant 1 : index
    %2463 = vector.load %arg5[%c1_753, %c0_754, %c1_755] : memref<2x8x2xf32, #tpu.memory_space<vmem>>, vector<1x8x1xf32>
    %2464 = vector.shape_cast %2463 : vector<1x8x1xf32> to vector<8x1xf32>
    %2465 = vector.shape_cast %2462 : vector<8x1xf32> to vector<1x8x1xf32>
    tpu.vector_store %arg5[%c1_753, %c0_754, %c1_755], %2465 {strides = array<i32>} : memref<2x8x2xf32, #tpu.memory_space<vmem>>, vector<1x8x1xf32>,
    %c1_756 = arith.constant 1 : index
    %c0_757 = arith.constant 0 : index
    %c0_758 = arith.constant 0 : index
    %2466 = vector.load %arg5[%c1_756, %c0_757, %c0_758] : memref<2x8x2xf32, #tpu.memory_space<vmem>>, vector<1x8x2xf32>
    %2467 = vector.shape_cast %2466 : vector<1x8x2xf32> to vector<8x2xf32>
    %c82_759 = arith.constant 82 : index
    %c0_760 = arith.constant 0 : index
    %c0_761 = arith.constant 0 : index
    %2468 = vector.load %arg2[%c82_759, %c0_760, %c0_761] : memref<106x32x32xf32, #tpu.memory_space<vmem>>, vector<1x8x8xf32>
    %2469 = vector.shape_cast %2468 : vector<1x8x8xf32> to vector<8x8xf32>
    %cst_762 = arith.constant dense<0.000000e+00> : vector<8xf32>
    %2470 = vector.multi_reduction <add>, %2467, %cst_762 [1] : vector<8x2xf32> to vector<8xf32>
    %2471 = vector.shape_cast %2470 : vector<8xf32> to vector<8x1xf32>
    %cst_763 = arith.constant 2.000000e+00 : f32
    %2472 = vector.broadcast %cst_763 : f32 to vector<8x1xf32>
    %2473 = arith.divf %2471, %2472 : vector<8x1xf32>
    %2474 = vector.broadcast %2473 : vector<8x1xf32> to vector<8x2xf32>
    %2475 = arith.subf %2467, %2474 : vector<8x2xf32>
    %2476 = arith.mulf %2475, %2475 : vector<8x2xf32>
    %cst_764 = arith.constant dense<0.000000e+00> : vector<8xf32>
    %2477 = vector.multi_reduction <add>, %2476, %cst_764 [1] : vector<8x2xf32> to vector<8xf32>
    %2478 = vector.shape_cast %2477 : vector<8xf32> to vector<8x1xf32>
    %cst_765 = arith.constant 2.000000e+00 : f32
    %2479 = vector.broadcast %cst_765 : f32 to vector<8x1xf32>
    %2480 = arith.divf %2478, %2479 : vector<8x1xf32>
    %2481 = vector.broadcast %2473 : vector<8x1xf32> to vector<8x2xf32>
    %2482 = arith.subf %2467, %2481 : vector<8x2xf32>
    %cst_766 = arith.constant 9.99999974E-6 : f32
    %2483 = vector.broadcast %cst_766 : f32 to vector<8x1xf32>
    %2484 = arith.addf %2480, %2483 : vector<8x1xf32>
    %2485 = math.rsqrt %2484 : vector<8x1xf32>
    %2486 = vector.broadcast %2485 : vector<8x1xf32> to vector<8x2xf32>
    %2487 = arith.mulf %2482, %2486 : vector<8x2xf32>
    %c80_767 = arith.constant 80 : index
    %c0_768 = arith.constant 0 : index
    %c0_769 = arith.constant 0 : index
    %2488 = vector.load %arg2[%c80_767, %c0_768, %c0_769] : memref<106x32x32xf32, #tpu.memory_space<vmem>>, vector<1x1x2xf32>
    %2489 = vector.shape_cast %2488 : vector<1x1x2xf32> to vector<1x2xf32>
    %2490 = vector.broadcast %2489 : vector<1x2xf32> to vector<8x2xf32>
    %2491 = arith.mulf %2487, %2490 : vector<8x2xf32>
    %c81_770 = arith.constant 81 : index
    %c0_771 = arith.constant 0 : index
    %c0_772 = arith.constant 0 : index
    %2492 = vector.load %arg2[%c81_770, %c0_771, %c0_772] : memref<106x32x32xf32, #tpu.memory_space<vmem>>, vector<1x1x2xf32>
    %2493 = vector.shape_cast %2492 : vector<1x1x2xf32> to vector<1x2xf32>
    %2494 = vector.broadcast %2493 : vector<1x2xf32> to vector<8x2xf32>
    %2495 = arith.addf %2491, %2494 : vector<8x2xf32>
    %c83_773 = arith.constant 83 : index
    %c0_774 = arith.constant 0 : index
    %c0_775 = arith.constant 0 : index
    %2496 = vector.load %arg2[%c83_773, %c0_774, %c0_775] : memref<106x32x32xf32, #tpu.memory_space<vmem>>, vector<1x8x1xf32>
    %2497 = vector.shape_cast %2496 : vector<1x8x1xf32> to vector<8x1xf32>
    %2498 = vector.extract_strided_slice %2469 {offsets = [0, 0], sizes = [8, 1], strides = [1, 1]} : vector<8x8xf32> to vector<8x1xf32>
    %2499 = vector.extract_strided_slice %2495 {offsets = [0, 0], sizes = [1, 2], strides = [1, 1]} : vector<8x2xf32> to vector<1x2xf32>
    %2500 = vector.broadcast %2498 : vector<8x1xf32> to vector<8x2xf32>
    %2501 = vector.broadcast %2499 : vector<1x2xf32> to vector<8x2xf32>
    %2502 = arith.mulf %2500, %2501 : vector<8x2xf32>
    %2503 = vector.extract_strided_slice %2469 {offsets = [0, 1], sizes = [8, 1], strides = [1, 1]} : vector<8x8xf32> to vector<8x1xf32>
    %2504 = vector.extract_strided_slice %2495 {offsets = [1, 0], sizes = [1, 2], strides = [1, 1]} : vector<8x2xf32> to vector<1x2xf32>
    %2505 = vector.broadcast %2503 : vector<8x1xf32> to vector<8x2xf32>
    %2506 = vector.broadcast %2504 : vector<1x2xf32> to vector<8x2xf32>
    %2507 = arith.mulf %2505, %2506 : vector<8x2xf32>
    %2508 = arith.addf %2502, %2507 : vector<8x2xf32>
    %2509 = vector.extract_strided_slice %2469 {offsets = [0, 2], sizes = [8, 1], strides = [1, 1]} : vector<8x8xf32> to vector<8x1xf32>
    %2510 = vector.extract_strided_slice %2495 {offsets = [2, 0], sizes = [1, 2], strides = [1, 1]} : vector<8x2xf32> to vector<1x2xf32>
    %2511 = vector.broadcast %2509 : vector<8x1xf32> to vector<8x2xf32>
    %2512 = vector.broadcast %2510 : vector<1x2xf32> to vector<8x2xf32>
    %2513 = arith.mulf %2511, %2512 : vector<8x2xf32>
    %2514 = arith.addf %2508, %2513 : vector<8x2xf32>
    %2515 = vector.extract_strided_slice %2469 {offsets = [0, 3], sizes = [8, 1], strides = [1, 1]} : vector<8x8xf32> to vector<8x1xf32>
    %2516 = vector.extract_strided_slice %2495 {offsets = [3, 0], sizes = [1, 2], strides = [1, 1]} : vector<8x2xf32> to vector<1x2xf32>
    %2517 = vector.broadcast %2515 : vector<8x1xf32> to vector<8x2xf32>
    %2518 = vector.broadcast %2516 : vector<1x2xf32> to vector<8x2xf32>
    %2519 = arith.mulf %2517, %2518 : vector<8x2xf32>
    %2520 = arith.addf %2514, %2519 : vector<8x2xf32>
    %2521 = vector.extract_strided_slice %2469 {offsets = [0, 4], sizes = [8, 1], strides = [1, 1]} : vector<8x8xf32> to vector<8x1xf32>
    %2522 = vector.extract_strided_slice %2495 {offsets = [4, 0], sizes = [1, 2], strides = [1, 1]} : vector<8x2xf32> to vector<1x2xf32>
    %2523 = vector.broadcast %2521 : vector<8x1xf32> to vector<8x2xf32>
    %2524 = vector.broadcast %2522 : vector<1x2xf32> to vector<8x2xf32>
    %2525 = arith.mulf %2523, %2524 : vector<8x2xf32>
    %2526 = arith.addf %2520, %2525 : vector<8x2xf32>
    %2527 = vector.extract_strided_slice %2469 {offsets = [0, 5], sizes = [8, 1], strides = [1, 1]} : vector<8x8xf32> to vector<8x1xf32>
    %2528 = vector.extract_strided_slice %2495 {offsets = [5, 0], sizes = [1, 2], strides = [1, 1]} : vector<8x2xf32> to vector<1x2xf32>
    %2529 = vector.broadcast %2527 : vector<8x1xf32> to vector<8x2xf32>
    %2530 = vector.broadcast %2528 : vector<1x2xf32> to vector<8x2xf32>
    %2531 = arith.mulf %2529, %2530 : vector<8x2xf32>
    %2532 = arith.addf %2526, %2531 : vector<8x2xf32>
    %2533 = vector.extract_strided_slice %2469 {offsets = [0, 6], sizes = [8, 1], strides = [1, 1]} : vector<8x8xf32> to vector<8x1xf32>
    %2534 = vector.extract_strided_slice %2495 {offsets = [6, 0], sizes = [1, 2], strides = [1, 1]} : vector<8x2xf32> to vector<1x2xf32>
    %2535 = vector.broadcast %2533 : vector<8x1xf32> to vector<8x2xf32>
    %2536 = vector.broadcast %2534 : vector<1x2xf32> to vector<8x2xf32>
    %2537 = arith.mulf %2535, %2536 : vector<8x2xf32>
    %2538 = arith.addf %2532, %2537 : vector<8x2xf32>
    %2539 = vector.extract_strided_slice %2469 {offsets = [0, 7], sizes = [8, 1], strides = [1, 1]} : vector<8x8xf32> to vector<8x1xf32>
    %2540 = vector.extract_strided_slice %2495 {offsets = [7, 0], sizes = [1, 2], strides = [1, 1]} : vector<8x2xf32> to vector<1x2xf32>
    %2541 = vector.broadcast %2539 : vector<8x1xf32> to vector<8x2xf32>
    %2542 = vector.broadcast %2540 : vector<1x2xf32> to vector<8x2xf32>
    %2543 = arith.mulf %2541, %2542 : vector<8x2xf32>
    %2544 = arith.addf %2538, %2543 : vector<8x2xf32>
    %2545 = vector.broadcast %2497 : vector<8x1xf32> to vector<8x2xf32>
    %2546 = arith.addf %2544, %2545 : vector<8x2xf32>
    %cst_776 = arith.constant 0.000000e+00 : f32
    %2547 = vector.broadcast %cst_776 : f32 to vector<8x2xf32>
    %2548 = arith.maximumf %2546, %2547 : vector<8x2xf32>
    %2549 = arith.addf %2467, %2548 : vector<8x2xf32>
    %cst_777 = arith.constant dense<0.000000e+00> : vector<8xf32>
    %2550 = vector.multi_reduction <add>, %2549, %cst_777 [1] : vector<8x2xf32> to vector<8xf32>
    %2551 = vector.shape_cast %2550 : vector<8xf32> to vector<8x1xf32>
    %cst_778 = arith.constant 2.000000e+00 : f32
    %2552 = vector.broadcast %cst_778 : f32 to vector<8x1xf32>
    %2553 = arith.divf %2551, %2552 : vector<8x1xf32>
    %2554 = vector.broadcast %2553 : vector<8x1xf32> to vector<8x2xf32>
    %2555 = arith.subf %2549, %2554 : vector<8x2xf32>
    %2556 = arith.mulf %2555, %2555 : vector<8x2xf32>
    %cst_779 = arith.constant dense<0.000000e+00> : vector<8xf32>
    %2557 = vector.multi_reduction <add>, %2556, %cst_779 [1] : vector<8x2xf32> to vector<8xf32>
    %2558 = vector.shape_cast %2557 : vector<8xf32> to vector<8x1xf32>
    %cst_780 = arith.constant 2.000000e+00 : f32
    %2559 = vector.broadcast %cst_780 : f32 to vector<8x1xf32>
    %2560 = arith.divf %2558, %2559 : vector<8x1xf32>
    %2561 = vector.broadcast %2553 : vector<8x1xf32> to vector<8x2xf32>
    %2562 = arith.subf %2549, %2561 : vector<8x2xf32>
    %cst_781 = arith.constant 9.99999974E-6 : f32
    %2563 = vector.broadcast %cst_781 : f32 to vector<8x1xf32>
    %2564 = arith.addf %2560, %2563 : vector<8x1xf32>
    %2565 = math.rsqrt %2564 : vector<8x1xf32>
    %2566 = vector.broadcast %2565 : vector<8x1xf32> to vector<8x2xf32>
    %2567 = arith.mulf %2562, %2566 : vector<8x2xf32>
    %c84_782 = arith.constant 84 : index
    %c0_783 = arith.constant 0 : index
    %c0_784 = arith.constant 0 : index
    %2568 = vector.load %arg2[%c84_782, %c0_783, %c0_784] : memref<106x32x32xf32, #tpu.memory_space<vmem>>, vector<1x1x2xf32>
    %2569 = vector.shape_cast %2568 : vector<1x1x2xf32> to vector<1x2xf32>
    %2570 = vector.broadcast %2569 : vector<1x2xf32> to vector<8x2xf32>
    %2571 = arith.mulf %2567, %2570 : vector<8x2xf32>
    %c85_785 = arith.constant 85 : index
    %c0_786 = arith.constant 0 : index
    %c0_787 = arith.constant 0 : index
    %2572 = vector.load %arg2[%c85_785, %c0_786, %c0_787] : memref<106x32x32xf32, #tpu.memory_space<vmem>>, vector<1x1x2xf32>
    %2573 = vector.shape_cast %2572 : vector<1x1x2xf32> to vector<1x2xf32>
    %2574 = vector.broadcast %2573 : vector<1x2xf32> to vector<8x2xf32>
    %2575 = arith.addf %2571, %2574 : vector<8x2xf32>
    %c86_788 = arith.constant 86 : index
    %c0_789 = arith.constant 0 : index
    %c0_790 = arith.constant 0 : index
    %2576 = vector.load %arg2[%c86_788, %c0_789, %c0_790] : memref<106x32x32xf32, #tpu.memory_space<vmem>>, vector<1x2x32xf32>
    %2577 = vector.shape_cast %2576 : vector<1x2x32xf32> to vector<2x32xf32>
    %c87_791 = arith.constant 87 : index
    %c0_792 = arith.constant 0 : index
    %c0_793 = arith.constant 0 : index
    %2578 = vector.load %arg2[%c87_791, %c0_792, %c0_793] : memref<106x32x32xf32, #tpu.memory_space<vmem>>, vector<1x1x32xf32>
    %2579 = vector.shape_cast %2578 : vector<1x1x32xf32> to vector<1x32xf32>
    %2580 = vector.extract_strided_slice %2575 {offsets = [0, 0], sizes = [8, 1], strides = [1, 1]} : vector<8x2xf32> to vector<8x1xf32>
    %2581 = vector.extract_strided_slice %2577 {offsets = [0, 0], sizes = [1, 32], strides = [1, 1]} : vector<2x32xf32> to vector<1x32xf32>
    %2582 = vector.broadcast %2580 : vector<8x1xf32> to vector<8x32xf32>
    %2583 = vector.broadcast %2581 : vector<1x32xf32> to vector<8x32xf32>
    %2584 = arith.mulf %2582, %2583 : vector<8x32xf32>
    %2585 = vector.extract_strided_slice %2575 {offsets = [0, 1], sizes = [8, 1], strides = [1, 1]} : vector<8x2xf32> to vector<8x1xf32>
    %2586 = vector.extract_strided_slice %2577 {offsets = [1, 0], sizes = [1, 32], strides = [1, 1]} : vector<2x32xf32> to vector<1x32xf32>
    %2587 = vector.broadcast %2585 : vector<8x1xf32> to vector<8x32xf32>
    %2588 = vector.broadcast %2586 : vector<1x32xf32> to vector<8x32xf32>
    %2589 = arith.mulf %2587, %2588 : vector<8x32xf32>
    %2590 = arith.addf %2584, %2589 : vector<8x32xf32>
    %2591 = vector.broadcast %2579 : vector<1x32xf32> to vector<8x32xf32>
    %2592 = arith.addf %2590, %2591 : vector<8x32xf32>
    %cst_794 = arith.constant 0.000000e+00 : f32
    %2593 = vector.broadcast %cst_794 : f32 to vector<8x32xf32>
    %2594 = arith.maximumf %2592, %2593 : vector<8x32xf32>
    %c88_795 = arith.constant 88 : index
    %c0_796 = arith.constant 0 : index
    %c0_797 = arith.constant 0 : index
    %2595 = vector.load %arg2[%c88_795, %c0_796, %c0_797] : memref<106x32x32xf32, #tpu.memory_space<vmem>>, vector<1x32x2xf32>
    %2596 = vector.shape_cast %2595 : vector<1x32x2xf32> to vector<32x2xf32>
    %c89_798 = arith.constant 89 : index
    %c0_799 = arith.constant 0 : index
    %c0_800 = arith.constant 0 : index
    %2597 = vector.load %arg2[%c89_798, %c0_799, %c0_800] : memref<106x32x32xf32, #tpu.memory_space<vmem>>, vector<1x1x2xf32>
    %2598 = vector.shape_cast %2597 : vector<1x1x2xf32> to vector<1x2xf32>
    %cst_801 = arith.constant dense<0.000000e+00> : vector<8x2xf32>
    %2599 = tpu.matmul %2594, %2596, %cst_801 {dimension_numbers = #tpu.dot_dimension_numbers<[1], [0], [0], [1], [0, 0, 1, 1], [], []>} : vector<8x32xf32>, vector<32x2xf32>, vector<8x2xf32> -> vector<8x2xf32>
    %2600 = vector.broadcast %2598 : vector<1x2xf32> to vector<8x2xf32>
    %2601 = arith.addf %2599, %2600 : vector<8x2xf32>
    %2602 = arith.addf %2549, %2601 : vector<8x2xf32>
    %c92_802 = arith.constant 92 : index
    %c0_803 = arith.constant 0 : index
    %c0_804 = arith.constant 0 : index
    %2603 = vector.load %arg2[%c92_802, %c0_803, %c0_804] : memref<106x32x32xf32, #tpu.memory_space<vmem>>, vector<1x8x8xf32>
    %2604 = vector.shape_cast %2603 : vector<1x8x8xf32> to vector<8x8xf32>
    %cst_805 = arith.constant dense<0.000000e+00> : vector<8xf32>
    %2605 = vector.multi_reduction <add>, %2602, %cst_805 [1] : vector<8x2xf32> to vector<8xf32>
    %2606 = vector.shape_cast %2605 : vector<8xf32> to vector<8x1xf32>
    %cst_806 = arith.constant 2.000000e+00 : f32
    %2607 = vector.broadcast %cst_806 : f32 to vector<8x1xf32>
    %2608 = arith.divf %2606, %2607 : vector<8x1xf32>
    %2609 = vector.broadcast %2608 : vector<8x1xf32> to vector<8x2xf32>
    %2610 = arith.subf %2602, %2609 : vector<8x2xf32>
    %2611 = arith.mulf %2610, %2610 : vector<8x2xf32>
    %cst_807 = arith.constant dense<0.000000e+00> : vector<8xf32>
    %2612 = vector.multi_reduction <add>, %2611, %cst_807 [1] : vector<8x2xf32> to vector<8xf32>
    %2613 = vector.shape_cast %2612 : vector<8xf32> to vector<8x1xf32>
    %cst_808 = arith.constant 2.000000e+00 : f32
    %2614 = vector.broadcast %cst_808 : f32 to vector<8x1xf32>
    %2615 = arith.divf %2613, %2614 : vector<8x1xf32>
    %2616 = vector.broadcast %2608 : vector<8x1xf32> to vector<8x2xf32>
    %2617 = arith.subf %2602, %2616 : vector<8x2xf32>
    %cst_809 = arith.constant 9.99999974E-6 : f32
    %2618 = vector.broadcast %cst_809 : f32 to vector<8x1xf32>
    %2619 = arith.addf %2615, %2618 : vector<8x1xf32>
    %2620 = math.rsqrt %2619 : vector<8x1xf32>
    %2621 = vector.broadcast %2620 : vector<8x1xf32> to vector<8x2xf32>
    %2622 = arith.mulf %2617, %2621 : vector<8x2xf32>
    %c90_810 = arith.constant 90 : index
    %c0_811 = arith.constant 0 : index
    %c0_812 = arith.constant 0 : index
    %2623 = vector.load %arg2[%c90_810, %c0_811, %c0_812] : memref<106x32x32xf32, #tpu.memory_space<vmem>>, vector<1x1x2xf32>
    %2624 = vector.shape_cast %2623 : vector<1x1x2xf32> to vector<1x2xf32>
    %2625 = vector.broadcast %2624 : vector<1x2xf32> to vector<8x2xf32>
    %2626 = arith.mulf %2622, %2625 : vector<8x2xf32>
    %c91_813 = arith.constant 91 : index
    %c0_814 = arith.constant 0 : index
    %c0_815 = arith.constant 0 : index
    %2627 = vector.load %arg2[%c91_813, %c0_814, %c0_815] : memref<106x32x32xf32, #tpu.memory_space<vmem>>, vector<1x1x2xf32>
    %2628 = vector.shape_cast %2627 : vector<1x1x2xf32> to vector<1x2xf32>
    %2629 = vector.broadcast %2628 : vector<1x2xf32> to vector<8x2xf32>
    %2630 = arith.addf %2626, %2629 : vector<8x2xf32>
    %c93_816 = arith.constant 93 : index
    %c0_817 = arith.constant 0 : index
    %c0_818 = arith.constant 0 : index
    %2631 = vector.load %arg2[%c93_816, %c0_817, %c0_818] : memref<106x32x32xf32, #tpu.memory_space<vmem>>, vector<1x8x1xf32>
    %2632 = vector.shape_cast %2631 : vector<1x8x1xf32> to vector<8x1xf32>
    %2633 = vector.extract_strided_slice %2604 {offsets = [0, 0], sizes = [8, 1], strides = [1, 1]} : vector<8x8xf32> to vector<8x1xf32>
    %2634 = vector.extract_strided_slice %2630 {offsets = [0, 0], sizes = [1, 2], strides = [1, 1]} : vector<8x2xf32> to vector<1x2xf32>
    %2635 = vector.broadcast %2633 : vector<8x1xf32> to vector<8x2xf32>
    %2636 = vector.broadcast %2634 : vector<1x2xf32> to vector<8x2xf32>
    %2637 = arith.mulf %2635, %2636 : vector<8x2xf32>
    %2638 = vector.extract_strided_slice %2604 {offsets = [0, 1], sizes = [8, 1], strides = [1, 1]} : vector<8x8xf32> to vector<8x1xf32>
    %2639 = vector.extract_strided_slice %2630 {offsets = [1, 0], sizes = [1, 2], strides = [1, 1]} : vector<8x2xf32> to vector<1x2xf32>
    %2640 = vector.broadcast %2638 : vector<8x1xf32> to vector<8x2xf32>
    %2641 = vector.broadcast %2639 : vector<1x2xf32> to vector<8x2xf32>
    %2642 = arith.mulf %2640, %2641 : vector<8x2xf32>
    %2643 = arith.addf %2637, %2642 : vector<8x2xf32>
    %2644 = vector.extract_strided_slice %2604 {offsets = [0, 2], sizes = [8, 1], strides = [1, 1]} : vector<8x8xf32> to vector<8x1xf32>
    %2645 = vector.extract_strided_slice %2630 {offsets = [2, 0], sizes = [1, 2], strides = [1, 1]} : vector<8x2xf32> to vector<1x2xf32>
    %2646 = vector.broadcast %2644 : vector<8x1xf32> to vector<8x2xf32>
    %2647 = vector.broadcast %2645 : vector<1x2xf32> to vector<8x2xf32>
    %2648 = arith.mulf %2646, %2647 : vector<8x2xf32>
    %2649 = arith.addf %2643, %2648 : vector<8x2xf32>
    %2650 = vector.extract_strided_slice %2604 {offsets = [0, 3], sizes = [8, 1], strides = [1, 1]} : vector<8x8xf32> to vector<8x1xf32>
    %2651 = vector.extract_strided_slice %2630 {offsets = [3, 0], sizes = [1, 2], strides = [1, 1]} : vector<8x2xf32> to vector<1x2xf32>
    %2652 = vector.broadcast %2650 : vector<8x1xf32> to vector<8x2xf32>
    %2653 = vector.broadcast %2651 : vector<1x2xf32> to vector<8x2xf32>
    %2654 = arith.mulf %2652, %2653 : vector<8x2xf32>
    %2655 = arith.addf %2649, %2654 : vector<8x2xf32>
    %2656 = vector.extract_strided_slice %2604 {offsets = [0, 4], sizes = [8, 1], strides = [1, 1]} : vector<8x8xf32> to vector<8x1xf32>
    %2657 = vector.extract_strided_slice %2630 {offsets = [4, 0], sizes = [1, 2], strides = [1, 1]} : vector<8x2xf32> to vector<1x2xf32>
    %2658 = vector.broadcast %2656 : vector<8x1xf32> to vector<8x2xf32>
    %2659 = vector.broadcast %2657 : vector<1x2xf32> to vector<8x2xf32>
    %2660 = arith.mulf %2658, %2659 : vector<8x2xf32>
    %2661 = arith.addf %2655, %2660 : vector<8x2xf32>
    %2662 = vector.extract_strided_slice %2604 {offsets = [0, 5], sizes = [8, 1], strides = [1, 1]} : vector<8x8xf32> to vector<8x1xf32>
    %2663 = vector.extract_strided_slice %2630 {offsets = [5, 0], sizes = [1, 2], strides = [1, 1]} : vector<8x2xf32> to vector<1x2xf32>
    %2664 = vector.broadcast %2662 : vector<8x1xf32> to vector<8x2xf32>
    %2665 = vector.broadcast %2663 : vector<1x2xf32> to vector<8x2xf32>
    %2666 = arith.mulf %2664, %2665 : vector<8x2xf32>
    %2667 = arith.addf %2661, %2666 : vector<8x2xf32>
    %2668 = vector.extract_strided_slice %2604 {offsets = [0, 6], sizes = [8, 1], strides = [1, 1]} : vector<8x8xf32> to vector<8x1xf32>
    %2669 = vector.extract_strided_slice %2630 {offsets = [6, 0], sizes = [1, 2], strides = [1, 1]} : vector<8x2xf32> to vector<1x2xf32>
    %2670 = vector.broadcast %2668 : vector<8x1xf32> to vector<8x2xf32>
    %2671 = vector.broadcast %2669 : vector<1x2xf32> to vector<8x2xf32>
    %2672 = arith.mulf %2670, %2671 : vector<8x2xf32>
    %2673 = arith.addf %2667, %2672 : vector<8x2xf32>
    %2674 = vector.extract_strided_slice %2604 {offsets = [0, 7], sizes = [8, 1], strides = [1, 1]} : vector<8x8xf32> to vector<8x1xf32>
    %2675 = vector.extract_strided_slice %2630 {offsets = [7, 0], sizes = [1, 2], strides = [1, 1]} : vector<8x2xf32> to vector<1x2xf32>
    %2676 = vector.broadcast %2674 : vector<8x1xf32> to vector<8x2xf32>
    %2677 = vector.broadcast %2675 : vector<1x2xf32> to vector<8x2xf32>
    %2678 = arith.mulf %2676, %2677 : vector<8x2xf32>
    %2679 = arith.addf %2673, %2678 : vector<8x2xf32>
    %2680 = vector.broadcast %2632 : vector<8x1xf32> to vector<8x2xf32>
    %2681 = arith.addf %2679, %2680 : vector<8x2xf32>
    %cst_819 = arith.constant 0.000000e+00 : f32
    %2682 = vector.broadcast %cst_819 : f32 to vector<8x2xf32>
    %2683 = arith.maximumf %2681, %2682 : vector<8x2xf32>
    %2684 = arith.addf %2602, %2683 : vector<8x2xf32>
    %cst_820 = arith.constant dense<0.000000e+00> : vector<8xf32>
    %2685 = vector.multi_reduction <add>, %2684, %cst_820 [1] : vector<8x2xf32> to vector<8xf32>
    %2686 = vector.shape_cast %2685 : vector<8xf32> to vector<8x1xf32>
    %cst_821 = arith.constant 2.000000e+00 : f32
    %2687 = vector.broadcast %cst_821 : f32 to vector<8x1xf32>
    %2688 = arith.divf %2686, %2687 : vector<8x1xf32>
    %2689 = vector.broadcast %2688 : vector<8x1xf32> to vector<8x2xf32>
    %2690 = arith.subf %2684, %2689 : vector<8x2xf32>
    %2691 = arith.mulf %2690, %2690 : vector<8x2xf32>
    %cst_822 = arith.constant dense<0.000000e+00> : vector<8xf32>
    %2692 = vector.multi_reduction <add>, %2691, %cst_822 [1] : vector<8x2xf32> to vector<8xf32>
    %2693 = vector.shape_cast %2692 : vector<8xf32> to vector<8x1xf32>
    %cst_823 = arith.constant 2.000000e+00 : f32
    %2694 = vector.broadcast %cst_823 : f32 to vector<8x1xf32>
    %2695 = arith.divf %2693, %2694 : vector<8x1xf32>
    %2696 = vector.broadcast %2688 : vector<8x1xf32> to vector<8x2xf32>
    %2697 = arith.subf %2684, %2696 : vector<8x2xf32>
    %cst_824 = arith.constant 9.99999974E-6 : f32
    %2698 = vector.broadcast %cst_824 : f32 to vector<8x1xf32>
    %2699 = arith.addf %2695, %2698 : vector<8x1xf32>
    %2700 = math.rsqrt %2699 : vector<8x1xf32>
    %2701 = vector.broadcast %2700 : vector<8x1xf32> to vector<8x2xf32>
    %2702 = arith.mulf %2697, %2701 : vector<8x2xf32>
    %c94_825 = arith.constant 94 : index
    %c0_826 = arith.constant 0 : index
    %c0_827 = arith.constant 0 : index
    %2703 = vector.load %arg2[%c94_825, %c0_826, %c0_827] : memref<106x32x32xf32, #tpu.memory_space<vmem>>, vector<1x1x2xf32>
    %2704 = vector.shape_cast %2703 : vector<1x1x2xf32> to vector<1x2xf32>
    %2705 = vector.broadcast %2704 : vector<1x2xf32> to vector<8x2xf32>
    %2706 = arith.mulf %2702, %2705 : vector<8x2xf32>
    %c95_828 = arith.constant 95 : index
    %c0_829 = arith.constant 0 : index
    %c0_830 = arith.constant 0 : index
    %2707 = vector.load %arg2[%c95_828, %c0_829, %c0_830] : memref<106x32x32xf32, #tpu.memory_space<vmem>>, vector<1x1x2xf32>
    %2708 = vector.shape_cast %2707 : vector<1x1x2xf32> to vector<1x2xf32>
    %2709 = vector.broadcast %2708 : vector<1x2xf32> to vector<8x2xf32>
    %2710 = arith.addf %2706, %2709 : vector<8x2xf32>
    %c96_831 = arith.constant 96 : index
    %c0_832 = arith.constant 0 : index
    %c0_833 = arith.constant 0 : index
    %2711 = vector.load %arg2[%c96_831, %c0_832, %c0_833] : memref<106x32x32xf32, #tpu.memory_space<vmem>>, vector<1x2x32xf32>
    %2712 = vector.shape_cast %2711 : vector<1x2x32xf32> to vector<2x32xf32>
    %c97_834 = arith.constant 97 : index
    %c0_835 = arith.constant 0 : index
    %c0_836 = arith.constant 0 : index
    %2713 = vector.load %arg2[%c97_834, %c0_835, %c0_836] : memref<106x32x32xf32, #tpu.memory_space<vmem>>, vector<1x1x32xf32>
    %2714 = vector.shape_cast %2713 : vector<1x1x32xf32> to vector<1x32xf32>
    %2715 = vector.extract_strided_slice %2710 {offsets = [0, 0], sizes = [8, 1], strides = [1, 1]} : vector<8x2xf32> to vector<8x1xf32>
    %2716 = vector.extract_strided_slice %2712 {offsets = [0, 0], sizes = [1, 32], strides = [1, 1]} : vector<2x32xf32> to vector<1x32xf32>
    %2717 = vector.broadcast %2715 : vector<8x1xf32> to vector<8x32xf32>
    %2718 = vector.broadcast %2716 : vector<1x32xf32> to vector<8x32xf32>
    %2719 = arith.mulf %2717, %2718 : vector<8x32xf32>
    %2720 = vector.extract_strided_slice %2710 {offsets = [0, 1], sizes = [8, 1], strides = [1, 1]} : vector<8x2xf32> to vector<8x1xf32>
    %2721 = vector.extract_strided_slice %2712 {offsets = [1, 0], sizes = [1, 32], strides = [1, 1]} : vector<2x32xf32> to vector<1x32xf32>
    %2722 = vector.broadcast %2720 : vector<8x1xf32> to vector<8x32xf32>
    %2723 = vector.broadcast %2721 : vector<1x32xf32> to vector<8x32xf32>
    %2724 = arith.mulf %2722, %2723 : vector<8x32xf32>
    %2725 = arith.addf %2719, %2724 : vector<8x32xf32>
    %2726 = vector.broadcast %2714 : vector<1x32xf32> to vector<8x32xf32>
    %2727 = arith.addf %2725, %2726 : vector<8x32xf32>
    %cst_837 = arith.constant 0.000000e+00 : f32
    %2728 = vector.broadcast %cst_837 : f32 to vector<8x32xf32>
    %2729 = arith.maximumf %2727, %2728 : vector<8x32xf32>
    %c98_838 = arith.constant 98 : index
    %c0_839 = arith.constant 0 : index
    %c0_840 = arith.constant 0 : index
    %2730 = vector.load %arg2[%c98_838, %c0_839, %c0_840] : memref<106x32x32xf32, #tpu.memory_space<vmem>>, vector<1x32x2xf32>
    %2731 = vector.shape_cast %2730 : vector<1x32x2xf32> to vector<32x2xf32>
    %c99_841 = arith.constant 99 : index
    %c0_842 = arith.constant 0 : index
    %c0_843 = arith.constant 0 : index
    %2732 = vector.load %arg2[%c99_841, %c0_842, %c0_843] : memref<106x32x32xf32, #tpu.memory_space<vmem>>, vector<1x1x2xf32>
    %2733 = vector.shape_cast %2732 : vector<1x1x2xf32> to vector<1x2xf32>
    %cst_844 = arith.constant dense<0.000000e+00> : vector<8x2xf32>
    %2734 = tpu.matmul %2729, %2731, %cst_844 {dimension_numbers = #tpu.dot_dimension_numbers<[1], [0], [0], [1], [0, 0, 1, 1], [], []>} : vector<8x32xf32>, vector<32x2xf32>, vector<8x2xf32> -> vector<8x2xf32>
    %2735 = vector.broadcast %2733 : vector<1x2xf32> to vector<8x2xf32>
    %2736 = arith.addf %2734, %2735 : vector<8x2xf32>
    %2737 = arith.addf %2684, %2736 : vector<8x2xf32>
    %c100_845 = arith.constant 100 : index
    %c0_846 = arith.constant 0 : index
    %c0_847 = arith.constant 0 : index
    %2738 = vector.load %arg2[%c100_845, %c0_846, %c0_847] : memref<106x32x32xf32, #tpu.memory_space<vmem>>, vector<1x2x8xf32>
    %2739 = vector.shape_cast %2738 : vector<1x2x8xf32> to vector<2x8xf32>
    %c101_848 = arith.constant 101 : index
    %c0_849 = arith.constant 0 : index
    %c0_850 = arith.constant 0 : index
    %2740 = vector.load %arg2[%c101_848, %c0_849, %c0_850] : memref<106x32x32xf32, #tpu.memory_space<vmem>>, vector<1x1x8xf32>
    %2741 = vector.shape_cast %2740 : vector<1x1x8xf32> to vector<1x8xf32>
    %2742 = vector.extract_strided_slice %2737 {offsets = [0, 0], sizes = [8, 1], strides = [1, 1]} : vector<8x2xf32> to vector<8x1xf32>
    %2743 = vector.extract_strided_slice %2739 {offsets = [0, 0], sizes = [1, 8], strides = [1, 1]} : vector<2x8xf32> to vector<1x8xf32>
    %2744 = vector.broadcast %2742 : vector<8x1xf32> to vector<8x8xf32>
    %2745 = vector.broadcast %2743 : vector<1x8xf32> to vector<8x8xf32>
    %2746 = arith.mulf %2744, %2745 : vector<8x8xf32>
    %2747 = vector.extract_strided_slice %2737 {offsets = [0, 1], sizes = [8, 1], strides = [1, 1]} : vector<8x2xf32> to vector<8x1xf32>
    %2748 = vector.extract_strided_slice %2739 {offsets = [1, 0], sizes = [1, 8], strides = [1, 1]} : vector<2x8xf32> to vector<1x8xf32>
    %2749 = vector.broadcast %2747 : vector<8x1xf32> to vector<8x8xf32>
    %2750 = vector.broadcast %2748 : vector<1x8xf32> to vector<8x8xf32>
    %2751 = arith.mulf %2749, %2750 : vector<8x8xf32>
    %2752 = arith.addf %2746, %2751 : vector<8x8xf32>
    %2753 = vector.broadcast %2741 : vector<1x8xf32> to vector<8x8xf32>
    %2754 = arith.addf %2752, %2753 : vector<8x8xf32>
    %cst_851 = arith.constant 0.000000e+00 : f32
    %2755 = vector.broadcast %cst_851 : f32 to vector<8x8xf32>
    %2756 = arith.cmpf oge, %2754, %2755 : vector<8x8xf32>
    %cst_852 = arith.constant 0.00999999977 : f32
    %2757 = vector.broadcast %cst_852 : f32 to vector<8x8xf32>
    %2758 = arith.mulf %2757, %2754 : vector<8x8xf32>
    %2759 = arith.select %2756, %2754, %2758 : vector<8x8xi1>, vector<8x8xf32>
    %cst_853 = arith.constant dense<0.000000e+00> : vector<8xf32>
    %2760 = vector.multi_reduction <add>, %2759, %cst_853 [1] : vector<8x8xf32> to vector<8xf32>
    %2761 = vector.shape_cast %2760 : vector<8xf32> to vector<8x1xf32>
    %cst_854 = arith.constant 8.000000e+00 : f32
    %2762 = vector.broadcast %cst_854 : f32 to vector<8x1xf32>
    %2763 = arith.divf %2761, %2762 : vector<8x1xf32>
    %2764 = vector.broadcast %2763 : vector<8x1xf32> to vector<8x8xf32>
    %2765 = arith.subf %2759, %2764 : vector<8x8xf32>
    %2766 = arith.mulf %2765, %2765 : vector<8x8xf32>
    %cst_855 = arith.constant dense<0.000000e+00> : vector<8xf32>
    %2767 = vector.multi_reduction <add>, %2766, %cst_855 [1] : vector<8x8xf32> to vector<8xf32>
    %2768 = vector.shape_cast %2767 : vector<8xf32> to vector<8x1xf32>
    %cst_856 = arith.constant 8.000000e+00 : f32
    %2769 = vector.broadcast %cst_856 : f32 to vector<8x1xf32>
    %2770 = arith.divf %2768, %2769 : vector<8x1xf32>
    %2771 = vector.broadcast %2763 : vector<8x1xf32> to vector<8x8xf32>
    %2772 = arith.subf %2759, %2771 : vector<8x8xf32>
    %cst_857 = arith.constant 9.99999974E-6 : f32
    %2773 = vector.broadcast %cst_857 : f32 to vector<8x1xf32>
    %2774 = arith.addf %2770, %2773 : vector<8x1xf32>
    %2775 = math.rsqrt %2774 : vector<8x1xf32>
    %2776 = vector.broadcast %2775 : vector<8x1xf32> to vector<8x8xf32>
    %2777 = arith.mulf %2772, %2776 : vector<8x8xf32>
    %c102_858 = arith.constant 102 : index
    %c0_859 = arith.constant 0 : index
    %c0_860 = arith.constant 0 : index
    %2778 = vector.load %arg2[%c102_858, %c0_859, %c0_860] : memref<106x32x32xf32, #tpu.memory_space<vmem>>, vector<1x1x8xf32>
    %2779 = vector.shape_cast %2778 : vector<1x1x8xf32> to vector<1x8xf32>
    %2780 = vector.broadcast %2779 : vector<1x8xf32> to vector<8x8xf32>
    %2781 = arith.mulf %2777, %2780 : vector<8x8xf32>
    %c103_861 = arith.constant 103 : index
    %c0_862 = arith.constant 0 : index
    %c0_863 = arith.constant 0 : index
    %2782 = vector.load %arg2[%c103_861, %c0_862, %c0_863] : memref<106x32x32xf32, #tpu.memory_space<vmem>>, vector<1x1x8xf32>
    %2783 = vector.shape_cast %2782 : vector<1x1x8xf32> to vector<1x8xf32>
    %2784 = vector.broadcast %2783 : vector<1x8xf32> to vector<8x8xf32>
    %2785 = arith.addf %2781, %2784 : vector<8x8xf32>
    %c104_864 = arith.constant 104 : index
    %c0_865 = arith.constant 0 : index
    %c0_866 = arith.constant 0 : index
    %2786 = vector.load %arg2[%c104_864, %c0_865, %c0_866] : memref<106x32x32xf32, #tpu.memory_space<vmem>>, vector<1x8x1xf32>
    %2787 = vector.shape_cast %2786 : vector<1x8x1xf32> to vector<8x1xf32>
    %c105_867 = arith.constant 105 : index
    %c0_868 = arith.constant 0 : index
    %c0_869 = arith.constant 0 : index
    %2788 = vector.load %arg2[%c105_867, %c0_868, %c0_869] : memref<106x32x32xf32, #tpu.memory_space<vmem>>, vector<1x1x1xf32>
    %2789 = vector.shape_cast %2788 : vector<1x1x1xf32> to vector<1x1xf32>
    %2790 = vector.extract_strided_slice %2785 {offsets = [0, 0], sizes = [8, 1], strides = [1, 1]} : vector<8x8xf32> to vector<8x1xf32>
    %2791 = vector.extract_strided_slice %2787 {offsets = [0, 0], sizes = [1, 1], strides = [1, 1]} : vector<8x1xf32> to vector<1x1xf32>
    %2792 = vector.broadcast %2791 : vector<1x1xf32> to vector<8x1xf32>
    %2793 = arith.mulf %2790, %2792 : vector<8x1xf32>
    %2794 = vector.extract_strided_slice %2785 {offsets = [0, 1], sizes = [8, 1], strides = [1, 1]} : vector<8x8xf32> to vector<8x1xf32>
    %2795 = vector.extract_strided_slice %2787 {offsets = [1, 0], sizes = [1, 1], strides = [1, 1]} : vector<8x1xf32> to vector<1x1xf32>
    %2796 = vector.broadcast %2795 : vector<1x1xf32> to vector<8x1xf32>
    %2797 = arith.mulf %2794, %2796 : vector<8x1xf32>
    %2798 = arith.addf %2793, %2797 : vector<8x1xf32>
    %2799 = vector.extract_strided_slice %2785 {offsets = [0, 2], sizes = [8, 1], strides = [1, 1]} : vector<8x8xf32> to vector<8x1xf32>
    %2800 = vector.extract_strided_slice %2787 {offsets = [2, 0], sizes = [1, 1], strides = [1, 1]} : vector<8x1xf32> to vector<1x1xf32>
    %2801 = vector.broadcast %2800 : vector<1x1xf32> to vector<8x1xf32>
    %2802 = arith.mulf %2799, %2801 : vector<8x1xf32>
    %2803 = arith.addf %2798, %2802 : vector<8x1xf32>
    %2804 = vector.extract_strided_slice %2785 {offsets = [0, 3], sizes = [8, 1], strides = [1, 1]} : vector<8x8xf32> to vector<8x1xf32>
    %2805 = vector.extract_strided_slice %2787 {offsets = [3, 0], sizes = [1, 1], strides = [1, 1]} : vector<8x1xf32> to vector<1x1xf32>
    %2806 = vector.broadcast %2805 : vector<1x1xf32> to vector<8x1xf32>
    %2807 = arith.mulf %2804, %2806 : vector<8x1xf32>
    %2808 = arith.addf %2803, %2807 : vector<8x1xf32>
    %2809 = vector.extract_strided_slice %2785 {offsets = [0, 4], sizes = [8, 1], strides = [1, 1]} : vector<8x8xf32> to vector<8x1xf32>
    %2810 = vector.extract_strided_slice %2787 {offsets = [4, 0], sizes = [1, 1], strides = [1, 1]} : vector<8x1xf32> to vector<1x1xf32>
    %2811 = vector.broadcast %2810 : vector<1x1xf32> to vector<8x1xf32>
    %2812 = arith.mulf %2809, %2811 : vector<8x1xf32>
    %2813 = arith.addf %2808, %2812 : vector<8x1xf32>
    %2814 = vector.extract_strided_slice %2785 {offsets = [0, 5], sizes = [8, 1], strides = [1, 1]} : vector<8x8xf32> to vector<8x1xf32>
    %2815 = vector.extract_strided_slice %2787 {offsets = [5, 0], sizes = [1, 1], strides = [1, 1]} : vector<8x1xf32> to vector<1x1xf32>
    %2816 = vector.broadcast %2815 : vector<1x1xf32> to vector<8x1xf32>
    %2817 = arith.mulf %2814, %2816 : vector<8x1xf32>
    %2818 = arith.addf %2813, %2817 : vector<8x1xf32>
    %2819 = vector.extract_strided_slice %2785 {offsets = [0, 6], sizes = [8, 1], strides = [1, 1]} : vector<8x8xf32> to vector<8x1xf32>
    %2820 = vector.extract_strided_slice %2787 {offsets = [6, 0], sizes = [1, 1], strides = [1, 1]} : vector<8x1xf32> to vector<1x1xf32>
    %2821 = vector.broadcast %2820 : vector<1x1xf32> to vector<8x1xf32>
    %2822 = arith.mulf %2819, %2821 : vector<8x1xf32>
    %2823 = arith.addf %2818, %2822 : vector<8x1xf32>
    %2824 = vector.extract_strided_slice %2785 {offsets = [0, 7], sizes = [8, 1], strides = [1, 1]} : vector<8x8xf32> to vector<8x1xf32>
    %2825 = vector.extract_strided_slice %2787 {offsets = [7, 0], sizes = [1, 1], strides = [1, 1]} : vector<8x1xf32> to vector<1x1xf32>
    %2826 = vector.broadcast %2825 : vector<1x1xf32> to vector<8x1xf32>
    %2827 = arith.mulf %2824, %2826 : vector<8x1xf32>
    %2828 = arith.addf %2823, %2827 : vector<8x1xf32>
    %2829 = vector.broadcast %2789 : vector<1x1xf32> to vector<8x1xf32>
    %2830 = arith.addf %2828, %2829 : vector<8x1xf32>
    %c1_870 = arith.constant 1 : index
    %c0_871 = arith.constant 0 : index
    %c8_872 = arith.constant 8 : index
    %2831 = vector.load %arg3[%c1_870, %c0_871, %c8_872] : memref<2x8x9xf32, #tpu.memory_space<vmem>>, vector<1x8x1xf32>
    %2832 = vector.shape_cast %2831 : vector<1x8x1xf32> to vector<8x1xf32>
    %2833 = vector.shape_cast %2830 : vector<8x1xf32> to vector<1x8x1xf32>
    tpu.vector_store %arg3[%c1_870, %c0_871, %c8_872], %2833 {strides = array<i32>} : memref<2x8x9xf32, #tpu.memory_space<vmem>>, vector<1x8x1xf32>,
    return
  }
}

</mosaic_0001>

<llo_original>
// kernel: phytsmixer_forward.1
$region0: #{phytsmixer_forward.1}
  #allocation0 [shape = 'u32[]', space=smem, size = 0x4, offset = 0x4, fixed_abs, tag = 'smem constant byte address 0x4 - core index']
  #allocation1 [shape = 'u32[144,128]{1,0:T(1,128)}', space=vmem, size = 0x12000, scoped, tag = 'internal scratch']
  #allocation2 [shape = 'f32[2,8,16]{2,1,0:T(8,128)}', space=vmem, size = 0x2000, scoped, tag = 'scratch operand']
  #allocation3 [shape = 'f32[2,8,2]{2,1,0:T(8,128)}', space=vmem, size = 0x2000, scoped, tag = 'scratch operand']
  %s0 = inlined_call_operand.vmem [shape: f32[2,16,4], index: 0, kind: input, shape index: {}]
  %s1 = inlined_call_operand.vmem [shape: f32[2,8,1], index: 1, kind: input, shape index: {}]
  %s2 = inlined_call_operand.vmem [shape: f32[106,32,32], index: 2, kind: input, shape index: {}]
  %s3 = inlined_call_operand.vmem [shape: f32[2,8,9], index: 3, kind: output, shape index: {}]
  %s4 = sld [smem:[#allocation0]]
  $region22: #{phytsmixer_forward.1} parent=0
    _
  %s6 = ssub.s32 1, %s4
  %s7 = scalar_select 0, %s6, %s4
  // Predicated region
  $region2: #{phytsmixer_forward.1} parent=0 // pred_check
    _
  $region3: #{phytsmixer_forward.1} parent=0 // pred_check_branch
    %9 = sbr.rel (0) target = $region5
  $region4: #{phytsmixer_forward.1} parent=0 // pred_region
    _
  $region5: #{phytsmixer_forward.1} parent=0 // pred_fallthru
    _
  // Predicated region
  $region6: #{phytsmixer_forward.1} parent=0 // pred_check
    _
  $region7: #{phytsmixer_forward.1} parent=0 // pred_check_branch
    %11 = sbr.rel (0) target = $region9
  $region8: #{phytsmixer_forward.1} parent=0 // pred_region
    _
  $region9: #{phytsmixer_forward.1} parent=0 // pred_fallthru
    _
  // Predicated region
  $region10: #{phytsmixer_forward.1} parent=0 // pred_check
    _
  $region11: #{phytsmixer_forward.1} parent=0 // pred_check_branch
    %13 = sbr.rel (0) target = $region13
  $region12: #{phytsmixer_forward.1} parent=0 // pred_region
    _
  $region13: #{phytsmixer_forward.1} parent=0 // pred_fallthru
    _
  %v14 = vld [vmem:[%s0] sm:$0xff]
  %v15 = vld [vmem:[%s0 + $0x8] sm:$0xff]
  %v16 = vld [vmem:[%s1] sm:$0xff]
  %v17 = vld [vmem:[%s2] sm:$0xff]
  %s18 = scalar_lea.vmem %s2, 32
  %v19 = vld [vmem:[%s18] sm:$0xff]
  %21 = vset.pattern.permute.xlu0 0
  %22 = vperm.xlu0 %21, %v19
  %v23 = vpop.permute.xlu0 %22
  %vm25 = vcmask 130048
  %v27 = vsel %vm25, %v17, 0
  %29 = vmatprep.subr.mxu0 0.0
  %30 = vmatpush1.msra.mxu0 0.0
  %31 = vmatprep.subr.mxu0 0.0
  %32 = vmatpush1.msra.mxu0 0.0
  %33 = vmatprep.subr.mxu0 0.0
  %34 = vmatpush1.msra.mxu0 0.0
  %35 = vmatprep.subr.mxu0 0.0
  %36 = vmatpush1.msra.mxu0 0.0
  %37 = vmatprep.subr.mxu0 0.0
  %38 = vmatpush1.msra.mxu0 0.0
  %39 = vmatprep.subr.mxu0 0.0
  %40 = vmatpush1.msra.mxu0 0.0
  %41 = vmatprep.subr.mxu0 0.0
  %42 = vmatpush1.msra.mxu0 0.0
  %43 = vmatprep.subr.mxu0 0.0
  %44 = vmatpush1.msra.mxu0 0.0
  %45 = vmatprep.subr.mxu0 0.0
  %46 = vmatpush1.msra.mxu0 0.0
  %47 = vmatprep.subr.mxu0 0.0
  %48 = vmatpush1.msra.mxu0 0.0
  %49 = vmatprep.subr.mxu0 0.0
  %50 = vmatpush1.msra.mxu0 0.0
  %51 = vmatprep.subr.mxu0 0.0
  %52 = vmatpush1.msra.mxu0 0.0
  %53 = vmatprep.subr.mxu0 0.0
  %54 = vmatpush1.msra.mxu0 0.0
  %55 = vmatprep.subr.mxu0 0.0
  %56 = vmatpush1.msra.mxu0 0.0
  %57 = vmatprep.subr.mxu0 0.0
  %58 = vmatpush1.msra.mxu0 %v15
  %59 = vmatprep.subr.mxu0 0.0
  %60 = vmatpush1.msra.mxu0 %v14
  %61 = vmatprep.subr.mxu0 0.0
  %62 = vmatpush2.msra.mxu0 0.0
  %63 = vmatprep.subr.mxu0 0.0
  %64 = vmatpush2.msra.mxu0 0.0
  %65 = vmatprep.subr.mxu0 0.0
  %66 = vmatpush2.msra.mxu0 0.0
  %67 = vmatprep.subr.mxu0 0.0
  %68 = vmatpush2.msra.mxu0 0.0
  %69 = vmatprep.subr.mxu0 0.0
  %70 = vmatpush2.msra.mxu0 0.0
  %71 = vmatprep.subr.mxu0 0.0
  %72 = vmatpush2.msra.mxu0 0.0
  %73 = vmatprep.subr.mxu0 0.0
  %74 = vmatpush2.msra.mxu0 0.0
  %75 = vmatprep.subr.mxu0 0.0
  %76 = vmatpush2.msra.mxu0 0.0
  %77 = vmatprep.subr.mxu0 0.0
  %78 = vmatpush2.msra.mxu0 0.0
  %79 = vmatprep.subr.mxu0 0.0
  %80 = vmatpush2.msra.mxu0 0.0
  %81 = vmatprep.subr.mxu0 0.0
  %82 = vmatpush2.msra.mxu0 0.0
  %83 = vmatprep.subr.mxu0 0.0
  %84 = vmatpush2.msra.mxu0 0.0
  %85 = vmatprep.subr.mxu0 0.0
  %86 = vmatpush2.msra.mxu0 0.0
  %87 = vmatprep.subr.mxu0 0.0
  %88 = vmatpush2.msra.mxu0 0.0
  %89 = vmatprep.subr.mxu0 0.0
  %90 = vmatpush2.msra.mxu0 0.0
  %91 = vmatprep.subr.mxu0 0.0
  %92 = vmatpush2.msra.mxu0 0.0
  %93 = vmatprep.mubr.f32.mxu0 0.0
  %94 = vmatmul.mubr.f32.gmra.mxu0 %v27
  %v95 = vpop.f32.mrf.mxu0
  %v96 = vadd.f32 %v23, %v95
  %v97 = vpop.f32.mrf.mxu0
  %98 = vdwg.mxu0
  %s99 = scalar_lea.vmem %s2, 256
  %v100 = vld [vmem:[%s99] sm:$0xf]
  %s101 = scalar_lea.vmem %s2, 288
  %v102 = vld [vmem:[%s101] sm:$0x1]
  %104 = vset.pattern.permute.xlu0 0
  %105 = vperm.xlu0 %104, %v96
  %v106 = vpop.permute.xlu0 %105
  %v108 = vlaneseq
  %v109 = vshrl.u32 %v108, 7
  %v110 = vsub.s32 0, %v109
  %v111 = vrot.slane %v100, %v110
  %v112 = vmul.f32 %v106, %v111
  %113 = vset.pattern.permute.xlu0 1
  %114 = vperm.xlu0 %113, %v96
  %v115 = vpop.permute.xlu0 %114
  %v117 = vlaneseq
  %v118 = vshrl.u32 %v117, 7
  %v119 = vsub.s32 1, %v118
  %v120 = vrot.slane %v100, %v119
  %v121 = vmul.f32 %v115, %v120
  %v122 = vadd.f32 %v112, %v121
  %123 = vset.pattern.permute.xlu0 2
  %124 = vperm.xlu0 %123, %v96
  %v125 = vpop.permute.xlu0 %124
  %v127 = vlaneseq
  %v128 = vshrl.u32 %v127, 7
  %v129 = vsub.s32 2, %v128
  %v130 = vrot.slane %v100, %v129
  %v131 = vmul.f32 %v125, %v130
  %v132 = vadd.f32 %v122, %v131
  %133 = vset.pattern.permute.xlu0 3
  %134 = vperm.xlu0 %133, %v96
  %v135 = vpop.permute.xlu0 %134
  %v137 = vlaneseq
  %v138 = vshrl.u32 %v137, 7
  %v139 = vsub.s32 3, %v138
  %v140 = vrot.slane %v100, %v139
  %v141 = vmul.f32 %v135, %v140
  %v142 = vadd.f32 %v132, %v141
  %v143 = vlaneseq
  %v144 = vshrl.u32 %v143, 7
  %v145 = vsub.s32 0, %v144
  %v146 = vrot.slane %v102, %v145
  %v147 = vadd.f32 %v142, %v146
  %vm148 = vcmask 31744
  %v149 = vsel %vm148, %v96, 0.0
  %150 = vadd.xlane.f32.xlu0 %v149
  %v151 = vpop.xlane.xlu0 %150
  %v152 = vrcp.pop 4.0
  %v153 = vmul.f32 %v151, %v152
  %v154 = vsub.f32 %v96, %v153
  %v155 = vmul.f32 %v154, %v154
  %v156 = vsel %vm148, %v155, 0.0
  %157 = vadd.xlane.f32.xlu0 %v156
  %v158 = vpop.xlane.xlu0 %157
  %v159 = vmul.f32 %v158, %v152
  %v160 = vadd.f32 %v159, 1e-05
  %v161 = vrsqrt.pop %v160
  %v162 = vmul.f32 %v154, %v161
  %s163 = scalar_lea.vmem %s2, 64
  %v164 = vld [vmem:[%s163] sm:$0x1]
  %v165 = vlaneseq
  %v166 = vshrl.u32 %v165, 7
  %v167 = vsub.s32 0, %v166
  %v168 = vrot.slane %v164, %v167
  %v169 = vmul.f32 %v162, %v168
  %s170 = scalar_lea.vmem %s2, 96
  %v171 = vld [vmem:[%s170] sm:$0x1]
  %v172 = vlaneseq
  %v173 = vshrl.u32 %v172, 7
  %v174 = vsub.s32 0, %v173
  %v175 = vrot.slane %v171, %v174
  %v176 = vadd.f32 %v169, %v175
  %s177 = scalar_lea.vmem %s2, 128
  %v178 = vld [vmem:[%s177] sm:$0xf]
  %s179 = scalar_lea.vmem %s2, 160
  %v180 = vld [vmem:[%s179] sm:$0x1]
  %182 = vset.pattern.permute.xlu0 0
  %183 = vperm.xlu0 %182, %v176
  %v184 = vpop.permute.xlu0 %183
  %v186 = vlaneseq
  %v187 = vshrl.u32 %v186, 7
  %v188 = vsub.s32 0, %v187
  %v189 = vrot.slane %v178, %v188
  %v190 = vmul.f32 %v184, %v189
  %191 = vset.pattern.permute.xlu0 1
  %192 = vperm.xlu0 %191, %v176
  %v193 = vpop.permute.xlu0 %192
  %v195 = vlaneseq
  %v196 = vshrl.u32 %v195, 7
  %v197 = vsub.s32 1, %v196
  %v198 = vrot.slane %v178, %v197
  %v199 = vmul.f32 %v193, %v198
  %v200 = vadd.f32 %v190, %v199
  %201 = vset.pattern.permute.xlu0 2
  %202 = vperm.xlu0 %201, %v176
  %v203 = vpop.permute.xlu0 %202
  %v205 = vlaneseq
  %v206 = vshrl.u32 %v205, 7
  %v207 = vsub.s32 2, %v206
  %v208 = vrot.slane %v178, %v207
  %v209 = vmul.f32 %v203, %v208
  %v210 = vadd.f32 %v200, %v209
  %211 = vset.pattern.permute.xlu0 3
  %212 = vperm.xlu0 %211, %v176
  %v213 = vpop.permute.xlu0 %212
  %v215 = vlaneseq
  %v216 = vshrl.u32 %v215, 7
  %v217 = vsub.s32 3, %v216
  %v218 = vrot.slane %v178, %v217
  %v219 = vmul.f32 %v213, %v218
  %v220 = vadd.f32 %v210, %v219
  %v221 = vlaneseq
  %v222 = vshrl.u32 %v221, 7
  %v223 = vsub.s32 0, %v222
  %v224 = vrot.slane %v180, %v223
  %v225 = vadd.f32 %v220, %v224
  %v226 = vmax.f32 %v225, 0.0
  %s227 = scalar_lea.vmem %s2, 192
  %v228 = vld [vmem:[%s227] sm:$0xff]
  %v229 = vld [vmem:[%s227 + $0x8] sm:$0xff]
  %v230 = vld [vmem:[%s227 + $0x10] sm:$0xff]
  %v231 = vld [vmem:[%s227 + $0x18] sm:$0xff]
  %s232 = scalar_lea.vmem %s2, 224
  %v233 = vld [vmem:[%s232] sm:$0x1]
  %v234 = vlaneseq
  %v235 = vshrl.u32 %v234, 7
  %v236 = vsub.s32 0, %v235
  %v237 = vrot.slane %v233, %v236
  %vm238 = vcmask 261120
  %v240 = vsel %vm238, %v226, 0
  %242 = vmatprep.subr.mxu0 0.0
  %243 = vmatpush1.msra.mxu0 0.0
  %244 = vmatprep.subr.mxu0 0.0
  %245 = vmatpush1.msra.mxu0 0.0
  %246 = vmatprep.subr.mxu0 0.0
  %247 = vmatpush1.msra.mxu0 0.0
  %248 = vmatprep.subr.mxu0 0.0
  %249 = vmatpush1.msra.mxu0 0.0
  %250 = vmatprep.subr.mxu0 0.0
  %251 = vmatpush1.msra.mxu0 0.0
  %252 = vmatprep.subr.mxu0 0.0
  %253 = vmatpush1.msra.mxu0 0.0
  %254 = vmatprep.subr.mxu0 0.0
  %255 = vmatpush1.msra.mxu0 0.0
  %256 = vmatprep.subr.mxu0 0.0
  %257 = vmatpush1.msra.mxu0 0.0
  %258 = vmatprep.subr.mxu0 0.0
  %259 = vmatpush1.msra.mxu0 0.0
  %260 = vmatprep.subr.mxu0 0.0
  %261 = vmatpush1.msra.mxu0 0.0
  %262 = vmatprep.subr.mxu0 0.0
  %263 = vmatpush1.msra.mxu0 0.0
  %264 = vmatprep.subr.mxu0 0.0
  %265 = vmatpush1.msra.mxu0 0.0
  %266 = vmatprep.subr.mxu0 0.0
  %267 = vmatpush1.msra.mxu0 %v231
  %268 = vmatprep.subr.mxu0 0.0
  %269 = vmatpush1.msra.mxu0 %v230
  %270 = vmatprep.subr.mxu0 0.0
  %271 = vmatpush1.msra.mxu0 %v229
  %272 = vmatprep.subr.mxu0 0.0
  %273 = vmatpush1.msra.mxu0 %v228
  %274 = vmatprep.subr.mxu0 0.0
  %275 = vmatpush2.msra.mxu0 0.0
  %276 = vmatprep.subr.mxu0 0.0
  %277 = vmatpush2.msra.mxu0 0.0
  %278 = vmatprep.subr.mxu0 0.0
  %279 = vmatpush2.msra.mxu0 0.0
  %280 = vmatprep.subr.mxu0 0.0
  %281 = vmatpush2.msra.mxu0 0.0
  %282 = vmatprep.subr.mxu0 0.0
  %283 = vmatpush2.msra.mxu0 0.0
  %284 = vmatprep.subr.mxu0 0.0
  %285 = vmatpush2.msra.mxu0 0.0
  %286 = vmatprep.subr.mxu0 0.0
  %287 = vmatpush2.msra.mxu0 0.0
  %288 = vmatprep.subr.mxu0 0.0
  %289 = vmatpush2.msra.mxu0 0.0
  %290 = vmatprep.subr.mxu0 0.0
  %291 = vmatpush2.msra.mxu0 0.0
  %292 = vmatprep.subr.mxu0 0.0
  %293 = vmatpush2.msra.mxu0 0.0
  %294 = vmatprep.subr.mxu0 0.0
  %295 = vmatpush2.msra.mxu0 0.0
  %296 = vmatprep.subr.mxu0 0.0
  %297 = vmatpush2.msra.mxu0 0.0
  %298 = vmatprep.subr.mxu0 0.0
  %299 = vmatpush2.msra.mxu0 0.0
  %300 = vmatprep.subr.mxu0 0.0
  %301 = vmatpush2.msra.mxu0 0.0
  %302 = vmatprep.subr.mxu0 0.0
  %303 = vmatpush2.msra.mxu0 0.0
  %304 = vmatprep.subr.mxu0 0.0
  %305 = vmatpush2.msra.mxu0 0.0
  %306 = vmatprep.mubr.f32.mxu0 0.0
  %307 = vmatmul.mubr.f32.gmra.mxu0 %v240
  %v308 = vpop.f32.mrf.mxu0
  %v309 = vadd.f32 %v237, %v308
  %v310 = vpop.f32.mrf.mxu0
  %311 = vdwg.mxu0
  %v312 = vadd.f32 %v147, %v309
  %s313 = scalar_lea.vmem %s2, 512
  %v314 = vld [vmem:[%s313] sm:$0x1]
  %s315 = scalar_lea.vmem %s2, 544
  %v316 = vld [vmem:[%s315] sm:$0x1]
  %318 = vset.pattern.permute.xlu0 0
  %319 = vperm.xlu0 %318, %v16
  %v320 = vpop.permute.xlu0 %319
  %v322 = vlaneseq
  %v323 = vshrl.u32 %v322, 7
  %v324 = vsub.s32 0, %v323
  %v325 = vrot.slane %v314, %v324
  %v326 = vmul.f32 %v320, %v325
  %v327 = vlaneseq
  %v328 = vshrl.u32 %v327, 7
  %v329 = vsub.s32 0, %v328
  %v330 = vrot.slane %v316, %v329
  %v331 = vadd.f32 %v326, %v330
  %v332 = vadd.f32 %v16, 0.0
  %v333 = vsub.f32 %v16, %v332
  %v334 = vmul.f32 %v333, %v333
  %v335 = vadd.f32 %v334, 0.0
  %v336 = vadd.f32 %v335, 1e-05
  %v337 = vrsqrt.pop %v336
  %v338 = vmul.f32 %v333, %v337
  %s339 = scalar_lea.vmem %s2, 320
  %v340 = vld [vmem:[%s339] sm:$0x1]
  %v341 = vlaneseq
  %v342 = vshrl.u32 %v341, 7
  %v343 = vsub.s32 0, %v342
  %v344 = vrot.slane %v340, %v343
  %v345 = vmul.f32 %v338, %v344
  %s346 = scalar_lea.vmem %s2, 352
  %v347 = vld [vmem:[%s346] sm:$0x1]
  %v348 = vlaneseq
  %v349 = vshrl.u32 %v348, 7
  %v350 = vsub.s32 0, %v349
  %v351 = vrot.slane %v347, %v350
  %v352 = vadd.f32 %v345, %v351
  %s353 = scalar_lea.vmem %s2, 384
  %v354 = vld [vmem:[%s353] sm:$0x1]
  %s355 = scalar_lea.vmem %s2, 416
  %v356 = vld [vmem:[%s355] sm:$0x1]
  %358 = vset.pattern.permute.xlu0 0
  %359 = vperm.xlu0 %358, %v352
  %v360 = vpop.permute.xlu0 %359
  %v362 = vlaneseq
  %v363 = vshrl.u32 %v362, 7
  %v364 = vsub.s32 0, %v363
  %v365 = vrot.slane %v354, %v364
  %v366 = vmul.f32 %v360, %v365
  %v367 = vlaneseq
  %v368 = vshrl.u32 %v367, 7
  %v369 = vsub.s32 0, %v368
  %v370 = vrot.slane %v356, %v369
  %v371 = vadd.f32 %v366, %v370
  %v372 = vmax.f32 %v371, 0.0
  %s373 = scalar_lea.vmem %s2, 448
  %v374 = vld [vmem:[%s373] sm:$0xff]
  %v375 = vld [vmem:[%s373 + $0x8] sm:$0xff]
  %v376 = vld [vmem:[%s373 + $0x10] sm:$0xff]
  %v377 = vld [vmem:[%s373 + $0x18] sm:$0xff]
  %s378 = scalar_lea.vmem %s2, 480
  %v379 = vld [vmem:[%s378] sm:$0x1]
  %v380 = vlaneseq
  %v381 = vshrl.u32 %v380, 7
  %v382 = vsub.s32 0, %v381
  %v383 = vrot.slane %v379, %v382
  %v385 = vsel %vm238, %v372, 0
  %387 = vmatprep.subr.mxu0 0.0
  %388 = vmatpush1.msra.mxu0 0.0
  %389 = vmatprep.subr.mxu0 0.0
  %390 = vmatpush1.msra.mxu0 0.0
  %391 = vmatprep.subr.mxu0 0.0
  %392 = vmatpush1.msra.mxu0 0.0
  %393 = vmatprep.subr.mxu0 0.0
  %394 = vmatpush1.msra.mxu0 0.0
  %395 = vmatprep.subr.mxu0 0.0
  %396 = vmatpush1.msra.mxu0 0.0
  %397 = vmatprep.subr.mxu0 0.0
  %398 = vmatpush1.msra.mxu0 0.0
  %399 = vmatprep.subr.mxu0 0.0
  %400 = vmatpush1.msra.mxu0 0.0
  %401 = vmatprep.subr.mxu0 0.0
  %402 = vmatpush1.msra.mxu0 0.0
  %403 = vmatprep.subr.mxu0 0.0
  %404 = vmatpush1.msra.mxu0 0.0
  %405 = vmatprep.subr.mxu0 0.0
  %406 = vmatpush1.msra.mxu0 0.0
  %407 = vmatprep.subr.mxu0 0.0
  %408 = vmatpush1.msra.mxu0 0.0
  %409 = vmatprep.subr.mxu0 0.0
  %410 = vmatpush1.msra.mxu0 0.0
  %411 = vmatprep.subr.mxu0 0.0
  %412 = vmatpush1.msra.mxu0 %v377
  %413 = vmatprep.subr.mxu0 0.0
  %414 = vmatpush1.msra.mxu0 %v376
  %415 = vmatprep.subr.mxu0 0.0
  %416 = vmatpush1.msra.mxu0 %v375
  %417 = vmatprep.subr.mxu0 0.0
  %418 = vmatpush1.msra.mxu0 %v374
  %419 = vmatprep.subr.mxu0 0.0
  %420 = vmatpush2.msra.mxu0 0.0
  %421 = vmatprep.subr.mxu0 0.0
  %422 = vmatpush2.msra.mxu0 0.0
  %423 = vmatprep.subr.mxu0 0.0
  %424 = vmatpush2.msra.mxu0 0.0
  %425 = vmatprep.subr.mxu0 0.0
  %426 = vmatpush2.msra.mxu0 0.0
  %427 = vmatprep.subr.mxu0 0.0
  %428 = vmatpush2.msra.mxu0 0.0
  %429 = vmatprep.subr.mxu0 0.0
  %430 = vmatpush2.msra.mxu0 0.0
  %431 = vmatprep.subr.mxu0 0.0
  %432 = vmatpush2.msra.mxu0 0.0
  %433 = vmatprep.subr.mxu0 0.0
  %434 = vmatpush2.msra.mxu0 0.0
  %435 = vmatprep.subr.mxu0 0.0
  %436 = vmatpush2.msra.mxu0 0.0
  %437 = vmatprep.subr.mxu0 0.0
  %438 = vmatpush2.msra.mxu0 0.0
  %439 = vmatprep.subr.mxu0 0.0
  %440 = vmatpush2.msra.mxu0 0.0
  %441 = vmatprep.subr.mxu0 0.0
  %442 = vmatpush2.msra.mxu0 0.0
  %443 = vmatprep.subr.mxu0 0.0
  %444 = vmatpush2.msra.mxu0 0.0
  %445 = vmatprep.subr.mxu0 0.0
  %446 = vmatpush2.msra.mxu0 0.0
  %447 = vmatprep.subr.mxu0 0.0
  %448 = vmatpush2.msra.mxu0 0.0
  %449 = vmatprep.subr.mxu0 0.0
  %450 = vmatpush2.msra.mxu0 0.0
  %451 = vmatprep.mubr.f32.mxu0 0.0
  %452 = vmatmul.mubr.f32.gmra.mxu0 %v385
  %v453 = vpop.f32.mrf.mxu0
  %v454 = vadd.f32 %v383, %v453
  %v455 = vpop.f32.mrf.mxu0
  %456 = vdwg.mxu0
  %v457 = vadd.f32 %v331, %v454
  %vm458 = vcmask 64512
  %459 = vst.msk [vmem:[#allocation2] sm:$0xff] %vm458, %v312
  %461 = vrot.lane.b32.xlu0 %v457, 8
  %v462 = vpop.permute.xlu0 %461
  %vm464 = vcmask 130112
  %465 = vst.msk [vmem:[#allocation2] sm:$0xff] %vm464, %v462
  %v466 = vld [vmem:[#allocation2] sm:$0xff]
  %s467 = scalar_lea.vmem %s2, 640
  %v468 = vld [vmem:[%s467] sm:$0xff]
  %v469 = vsel %vm25, %v466, 0.0
  %470 = vadd.xlane.f32.xlu0 %v469
  %v471 = vpop.xlane.xlu0 %470
  %v472 = vrcp.pop 16.0
  %v473 = vmul.f32 %v471, %v472
  %v474 = vsub.f32 %v466, %v473
  %v475 = vmul.f32 %v474, %v474
  %v476 = vsel %vm25, %v475, 0.0
  %477 = vadd.xlane.f32.xlu0 %v476
  %v478 = vpop.xlane.xlu0 %477
  %v479 = vmul.f32 %v478, %v472
  %v480 = vadd.f32 %v479, 1e-05
  %v481 = vrsqrt.pop %v480
  %v482 = vmul.f32 %v474, %v481
  %s483 = scalar_lea.vmem %s2, 576
  %v484 = vld [vmem:[%s483] sm:$0x1]
  %v485 = vlaneseq
  %v486 = vshrl.u32 %v485, 7
  %v487 = vsub.s32 0, %v486
  %v488 = vrot.slane %v484, %v487
  %v489 = vmul.f32 %v482, %v488
  %s490 = scalar_lea.vmem %s2, 608
  %v491 = vld [vmem:[%s490] sm:$0x1]
  %v492 = vlaneseq
  %v493 = vshrl.u32 %v492, 7
  %v494 = vsub.s32 0, %v493
  %v495 = vrot.slane %v491, %v494
  %v496 = vadd.f32 %v489, %v495
  %s497 = scalar_lea.vmem %s2, 672
  %v498 = vld [vmem:[%s497] sm:$0xff]
  %500 = vset.pattern.permute.xlu0 0
  %501 = vperm.xlu0 %500, %v468
  %v502 = vpop.permute.xlu0 %501
  %v504 = vlaneseq
  %v505 = vshrl.u32 %v504, 7
  %v506 = vsub.s32 0, %v505
  %v507 = vrot.slane %v496, %v506
  %v508 = vmul.f32 %v502, %v507
  %509 = vset.pattern.permute.xlu0 1
  %510 = vperm.xlu0 %509, %v468
  %v511 = vpop.permute.xlu0 %510
  %v513 = vlaneseq
  %v514 = vshrl.u32 %v513, 7
  %v515 = vsub.s32 1, %v514
  %v516 = vrot.slane %v496, %v515
  %v517 = vmul.f32 %v511, %v516
  %v518 = vadd.f32 %v508, %v517
  %519 = vset.pattern.permute.xlu0 2
  %520 = vperm.xlu0 %519, %v468
  %v521 = vpop.permute.xlu0 %520
  %v523 = vlaneseq
  %v524 = vshrl.u32 %v523, 7
  %v525 = vsub.s32 2, %v524
  %v526 = vrot.slane %v496, %v525
  %v527 = vmul.f32 %v521, %v526
  %v528 = vadd.f32 %v518, %v527
  %529 = vset.pattern.permute.xlu0 3
  %530 = vperm.xlu0 %529, %v468
  %v531 = vpop.permute.xlu0 %530
  %v533 = vlaneseq
  %v534 = vshrl.u32 %v533, 7
  %v535 = vsub.s32 3, %v534
  %v536 = vrot.slane %v496, %v535
  %v537 = vmul.f32 %v531, %v536
  %v538 = vadd.f32 %v528, %v537
  %539 = vset.pattern.permute.xlu0 4
  %540 = vperm.xlu0 %539, %v468
  %v541 = vpop.permute.xlu0 %540
  %v543 = vlaneseq
  %v544 = vshrl.u32 %v543, 7
  %v545 = vsub.s32 4, %v544
  %v546 = vrot.slane %v496, %v545
  %v547 = vmul.f32 %v541, %v546
  %v548 = vadd.f32 %v538, %v547
  %549 = vset.pattern.permute.xlu0 5
  %550 = vperm.xlu0 %549, %v468
  %v551 = vpop.permute.xlu0 %550
  %v553 = vlaneseq
  %v554 = vshrl.u32 %v553, 7
  %v555 = vsub.s32 5, %v554
  %v556 = vrot.slane %v496, %v555
  %v557 = vmul.f32 %v551, %v556
  %v558 = vadd.f32 %v548, %v557
  %559 = vset.pattern.permute.xlu0 6
  %560 = vperm.xlu0 %559, %v468
  %v561 = vpop.permute.xlu0 %560
  %v563 = vlaneseq
  %v564 = vshrl.u32 %v563, 7
  %v565 = vsub.s32 6, %v564
  %v566 = vrot.slane %v496, %v565
  %v567 = vmul.f32 %v561, %v566
  %v568 = vadd.f32 %v558, %v567
  %569 = vset.pattern.permute.xlu0 7
  %570 = vperm.xlu0 %569, %v468
  %v571 = vpop.permute.xlu0 %570
  %v573 = vlaneseq
  %v574 = vshrl.u32 %v573, 7
  %v575 = vsub.s32 7, %v574
  %v576 = vrot.slane %v496, %v575
  %v577 = vmul.f32 %v571, %v576
  %v578 = vadd.f32 %v568, %v577
  %580 = vset.pattern.permute.xlu0 0
  %581 = vperm.xlu0 %580, %v498
  %v582 = vpop.permute.xlu0 %581
  %v584 = vadd.f32 %v578, %v582
  %v585 = vmax.f32 %v584, 0.0
  %v586 = vadd.f32 %v466, %v585
  %s587 = scalar_lea.vmem %s2, 896
  %v588 = vld [vmem:[%s587] sm:$0xff]
  %v589 = vld [vmem:[%s587 + $0x8] sm:$0xff]
  %s590 = scalar_lea.vmem %s2, 928
  %v591 = vld [vmem:[%s590] sm:$0x1]
  %v592 = vlaneseq
  %v593 = vshrl.u32 %v592, 7
  %v594 = vsub.s32 0, %v593
  %v595 = vrot.slane %v591, %v594
  %v597 = vsel %vm25, %v586, 0
  %599 = vmatprep.subr.mxu0 0.0
  %600 = vmatpush1.msra.mxu0 0.0
  %601 = vmatprep.subr.mxu0 0.0
  %602 = vmatpush1.msra.mxu0 0.0
  %603 = vmatprep.subr.mxu0 0.0
  %604 = vmatpush1.msra.mxu0 0.0
  %605 = vmatprep.subr.mxu0 0.0
  %606 = vmatpush1.msra.mxu0 0.0
  %607 = vmatprep.subr.mxu0 0.0
  %608 = vmatpush1.msra.mxu0 0.0
  %609 = vmatprep.subr.mxu0 0.0
  %610 = vmatpush1.msra.mxu0 0.0
  %611 = vmatprep.subr.mxu0 0.0
  %612 = vmatpush1.msra.mxu0 0.0
  %613 = vmatprep.subr.mxu0 0.0
  %614 = vmatpush1.msra.mxu0 0.0
  %615 = vmatprep.subr.mxu0 0.0
  %616 = vmatpush1.msra.mxu0 0.0
  %617 = vmatprep.subr.mxu0 0.0
  %618 = vmatpush1.msra.mxu0 0.0
  %619 = vmatprep.subr.mxu0 0.0
  %620 = vmatpush1.msra.mxu0 0.0
  %621 = vmatprep.subr.mxu0 0.0
  %622 = vmatpush1.msra.mxu0 0.0
  %623 = vmatprep.subr.mxu0 0.0
  %624 = vmatpush1.msra.mxu0 0.0
  %625 = vmatprep.subr.mxu0 0.0
  %626 = vmatpush1.msra.mxu0 0.0
  %627 = vmatprep.subr.mxu0 0.0
  %628 = vmatpush1.msra.mxu0 %v589
  %629 = vmatprep.subr.mxu0 0.0
  %630 = vmatpush1.msra.mxu0 %v588
  %631 = vmatprep.subr.mxu0 0.0
  %632 = vmatpush2.msra.mxu0 0.0
  %633 = vmatprep.subr.mxu0 0.0
  %634 = vmatpush2.msra.mxu0 0.0
  %635 = vmatprep.subr.mxu0 0.0
  %636 = vmatpush2.msra.mxu0 0.0
  %637 = vmatprep.subr.mxu0 0.0
  %638 = vmatpush2.msra.mxu0 0.0
  %639 = vmatprep.subr.mxu0 0.0
  %640 = vmatpush2.msra.mxu0 0.0
  %641 = vmatprep.subr.mxu0 0.0
  %642 = vmatpush2.msra.mxu0 0.0
  %643 = vmatprep.subr.mxu0 0.0
  %644 = vmatpush2.msra.mxu0 0.0
  %645 = vmatprep.subr.mxu0 0.0
  %646 = vmatpush2.msra.mxu0 0.0
  %647 = vmatprep.subr.mxu0 0.0
  %648 = vmatpush2.msra.mxu0 0.0
  %649 = vmatprep.subr.mxu0 0.0
  %650 = vmatpush2.msra.mxu0 0.0
  %651 = vmatprep.subr.mxu0 0.0
  %652 = vmatpush2.msra.mxu0 0.0
  %653 = vmatprep.subr.mxu0 0.0
  %654 = vmatpush2.msra.mxu0 0.0
  %655 = vmatprep.subr.mxu0 0.0
  %656 = vmatpush2.msra.mxu0 0.0
  %657 = vmatprep.subr.mxu0 0.0
  %658 = vmatpush2.msra.mxu0 0.0
  %659 = vmatprep.subr.mxu0 0.0
  %660 = vmatpush2.msra.mxu0 0.0
  %661 = vmatprep.subr.mxu0 0.0
  %662 = vmatpush2.msra.mxu0 0.0
  %663 = vmatprep.mubr.f32.mxu0 0.0
  %664 = vmatmul.mubr.f32.gmra.mxu0 %v597
  %v665 = vpop.f32.mrf.mxu0
  %v666 = vadd.f32 %v595, %v665
  %v667 = vpop.f32.mrf.mxu0
  %668 = vdwg.mxu0
  %v669 = vsel %vm25, %v586, 0.0
  %670 = vadd.xlane.f32.xlu0 %v669
  %v671 = vpop.xlane.xlu0 %670
  %v672 = vmul.f32 %v671, %v472
  %v673 = vsub.f32 %v586, %v672
  %v674 = vmul.f32 %v673, %v673
  %v675 = vsel %vm25, %v674, 0.0
  %676 = vadd.xlane.f32.xlu0 %v675
  %v677 = vpop.xlane.xlu0 %676
  %v678 = vmul.f32 %v677, %v472
  %v679 = vadd.f32 %v678, 1e-05
  %v680 = vrsqrt.pop %v679
  %v681 = vmul.f32 %v673, %v680
  %s682 = scalar_lea.vmem %s2, 704
  %v683 = vld [vmem:[%s682] sm:$0x1]
  %v684 = vlaneseq
  %v685 = vshrl.u32 %v684, 7
  %v686 = vsub.s32 0, %v685
  %v687 = vrot.slane %v683, %v686
  %v688 = vmul.f32 %v681, %v687
  %s689 = scalar_lea.vmem %s2, 736
  %v690 = vld [vmem:[%s689] sm:$0x1]
  %v691 = vlaneseq
  %v692 = vshrl.u32 %v691, 7
  %v693 = vsub.s32 0, %v692
  %v694 = vrot.slane %v690, %v693
  %v695 = vadd.f32 %v688, %v694
  %s696 = scalar_lea.vmem %s2, 768
  %v697 = vld [vmem:[%s696] sm:$0xff]
  %v698 = vld [vmem:[%s696 + $0x8] sm:$0xff]
  %s699 = scalar_lea.vmem %s2, 800
  %v700 = vld [vmem:[%s699] sm:$0x1]
  %v701 = vlaneseq
  %v702 = vshrl.u32 %v701, 7
  %v703 = vsub.s32 0, %v702
  %v704 = vrot.slane %v700, %v703
  %v706 = vsel %vm25, %v695, 0
  %708 = vmatprep.subr.mxu0 0.0
  %709 = vmatpush1.msra.mxu0 0.0
  %710 = vmatprep.subr.mxu0 0.0
  %711 = vmatpush1.msra.mxu0 0.0
  %712 = vmatprep.subr.mxu0 0.0
  %713 = vmatpush1.msra.mxu0 0.0
  %714 = vmatprep.subr.mxu0 0.0
  %715 = vmatpush1.msra.mxu0 0.0
  %716 = vmatprep.subr.mxu0 0.0
  %717 = vmatpush1.msra.mxu0 0.0
  %718 = vmatprep.subr.mxu0 0.0
  %719 = vmatpush1.msra.mxu0 0.0
  %720 = vmatprep.subr.mxu0 0.0
  %721 = vmatpush1.msra.mxu0 0.0
  %722 = vmatprep.subr.mxu0 0.0
  %723 = vmatpush1.msra.mxu0 0.0
  %724 = vmatprep.subr.mxu0 0.0
  %725 = vmatpush1.msra.mxu0 0.0
  %726 = vmatprep.subr.mxu0 0.0
  %727 = vmatpush1.msra.mxu0 0.0
  %728 = vmatprep.subr.mxu0 0.0
  %729 = vmatpush1.msra.mxu0 0.0
  %730 = vmatprep.subr.mxu0 0.0
  %731 = vmatpush1.msra.mxu0 0.0
  %732 = vmatprep.subr.mxu0 0.0
  %733 = vmatpush1.msra.mxu0 0.0
  %734 = vmatprep.subr.mxu0 0.0
  %735 = vmatpush1.msra.mxu0 0.0
  %736 = vmatprep.subr.mxu0 0.0
  %737 = vmatpush1.msra.mxu0 %v698
  %738 = vmatprep.subr.mxu0 0.0
  %739 = vmatpush1.msra.mxu0 %v697
  %740 = vmatprep.subr.mxu0 0.0
  %741 = vmatpush2.msra.mxu0 0.0
  %742 = vmatprep.subr.mxu0 0.0
  %743 = vmatpush2.msra.mxu0 0.0
  %744 = vmatprep.subr.mxu0 0.0
  %745 = vmatpush2.msra.mxu0 0.0
  %746 = vmatprep.subr.mxu0 0.0
  %747 = vmatpush2.msra.mxu0 0.0
  %748 = vmatprep.subr.mxu0 0.0
  %749 = vmatpush2.msra.mxu0 0.0
  %750 = vmatprep.subr.mxu0 0.0
  %751 = vmatpush2.msra.mxu0 0.0
  %752 = vmatprep.subr.mxu0 0.0
  %753 = vmatpush2.msra.mxu0 0.0
  %754 = vmatprep.subr.mxu0 0.0
  %755 = vmatpush2.msra.mxu0 0.0
  %756 = vmatprep.subr.mxu0 0.0
  %757 = vmatpush2.msra.mxu0 0.0
  %758 = vmatprep.subr.mxu0 0.0
  %759 = vmatpush2.msra.mxu0 0.0
  %760 = vmatprep.subr.mxu0 0.0
  %761 = vmatpush2.msra.mxu0 0.0
  %762 = vmatprep.subr.mxu0 0.0
  %763 = vmatpush2.msra.mxu0 0.0
  %764 = vmatprep.subr.mxu0 0.0
  %765 = vmatpush2.msra.mxu0 0.0
  %766 = vmatprep.subr.mxu0 0.0
  %767 = vmatpush2.msra.mxu0 0.0
  %768 = vmatprep.subr.mxu0 0.0
  %769 = vmatpush2.msra.mxu0 0.0
  %770 = vmatprep.subr.mxu0 0.0
  %771 = vmatpush2.msra.mxu0 0.0
  %772 = vmatprep.mubr.f32.mxu0 0.0
  %773 = vmatmul.mubr.f32.gmra.mxu0 %v706
  %v774 = vpop.f32.mrf.mxu0
  %v775 = vadd.f32 %v704, %v774
  %v776 = vpop.f32.mrf.mxu0
  %777 = vdwg.mxu0
  %v778 = vmax.f32 %v775, 0.0
  %s779 = scalar_lea.vmem %s2, 832
  %v780 = vld [vmem:[%s779] sm:$0xff]
  %v781 = vld [vmem:[%s779 + $0x8] sm:$0xff]
  %v782 = vld [vmem:[%s779 + $0x10] sm:$0xff]
  %v783 = vld [vmem:[%s779 + $0x18] sm:$0xff]
  %s784 = scalar_lea.vmem %s2, 864
  %v785 = vld [vmem:[%s784] sm:$0x1]
  %v786 = vlaneseq
  %v787 = vshrl.u32 %v786, 7
  %v788 = vsub.s32 0, %v787
  %v789 = vrot.slane %v785, %v788
  %v791 = vsel %vm238, %v778, 0
  %793 = vmatprep.subr.mxu0 0.0
  %794 = vmatpush1.msra.mxu0 0.0
  %795 = vmatprep.subr.mxu0 0.0
  %796 = vmatpush1.msra.mxu0 0.0
  %797 = vmatprep.subr.mxu0 0.0
  %798 = vmatpush1.msra.mxu0 0.0
  %799 = vmatprep.subr.mxu0 0.0
  %800 = vmatpush1.msra.mxu0 0.0
  %801 = vmatprep.subr.mxu0 0.0
  %802 = vmatpush1.msra.mxu0 0.0
  %803 = vmatprep.subr.mxu0 0.0
  %804 = vmatpush1.msra.mxu0 0.0
  %805 = vmatprep.subr.mxu0 0.0
  %806 = vmatpush1.msra.mxu0 0.0
  %807 = vmatprep.subr.mxu0 0.0
  %808 = vmatpush1.msra.mxu0 0.0
  %809 = vmatprep.subr.mxu0 0.0
  %810 = vmatpush1.msra.mxu0 0.0
  %811 = vmatprep.subr.mxu0 0.0
  %812 = vmatpush1.msra.mxu0 0.0
  %813 = vmatprep.subr.mxu0 0.0
  %814 = vmatpush1.msra.mxu0 0.0
  %815 = vmatprep.subr.mxu0 0.0
  %816 = vmatpush1.msra.mxu0 0.0
  %817 = vmatprep.subr.mxu0 0.0
  %818 = vmatpush1.msra.mxu0 %v783
  %819 = vmatprep.subr.mxu0 0.0
  %820 = vmatpush1.msra.mxu0 %v782
  %821 = vmatprep.subr.mxu0 0.0
  %822 = vmatpush1.msra.mxu0 %v781
  %823 = vmatprep.subr.mxu0 0.0
  %824 = vmatpush1.msra.mxu0 %v780
  %825 = vmatprep.subr.mxu0 0.0
  %826 = vmatpush2.msra.mxu0 0.0
  %827 = vmatprep.subr.mxu0 0.0
  %828 = vmatpush2.msra.mxu0 0.0
  %829 = vmatprep.subr.mxu0 0.0
  %830 = vmatpush2.msra.mxu0 0.0
  %831 = vmatprep.subr.mxu0 0.0
  %832 = vmatpush2.msra.mxu0 0.0
  %833 = vmatprep.subr.mxu0 0.0
  %834 = vmatpush2.msra.mxu0 0.0
  %835 = vmatprep.subr.mxu0 0.0
  %836 = vmatpush2.msra.mxu0 0.0
  %837 = vmatprep.subr.mxu0 0.0
  %838 = vmatpush2.msra.mxu0 0.0
  %839 = vmatprep.subr.mxu0 0.0
  %840 = vmatpush2.msra.mxu0 0.0
  %841 = vmatprep.subr.mxu0 0.0
  %842 = vmatpush2.msra.mxu0 0.0
  %843 = vmatprep.subr.mxu0 0.0
  %844 = vmatpush2.msra.mxu0 0.0
  %845 = vmatprep.subr.mxu0 0.0
  %846 = vmatpush2.msra.mxu0 0.0
  %847 = vmatprep.subr.mxu0 0.0
  %848 = vmatpush2.msra.mxu0 0.0
  %849 = vmatprep.subr.mxu0 0.0
  %850 = vmatpush2.msra.mxu0 0.0
  %851 = vmatprep.subr.mxu0 0.0
  %852 = vmatpush2.msra.mxu0 0.0
  %853 = vmatprep.subr.mxu0 0.0
  %854 = vmatpush2.msra.mxu0 0.0
  %855 = vmatprep.subr.mxu0 0.0
  %856 = vmatpush2.msra.mxu0 0.0
  %857 = vmatprep.mubr.f32.mxu0 0.0
  %858 = vmatmul.mubr.f32.gmra.mxu0 %v791
  %v859 = vpop.f32.mrf.mxu0
  %v860 = vadd.f32 %v789, %v859
  %v861 = vpop.f32.mrf.mxu0
  %862 = vdwg.mxu0
  %v863 = vadd.f32 %v666, %v860
  %s864 = scalar_lea.vmem %s2, 1024
  %v865 = vld [vmem:[%s864] sm:$0xff]
  %v866 = vsel %vm458, %v863, 0.0
  %867 = vadd.xlane.f32.xlu0 %v866
  %v868 = vpop.xlane.xlu0 %867
  %v869 = vrcp.pop 8.0
  %v870 = vmul.f32 %v868, %v869
  %v871 = vsub.f32 %v863, %v870
  %v872 = vmul.f32 %v871, %v871
  %v873 = vsel %vm458, %v872, 0.0
  %874 = vadd.xlane.f32.xlu0 %v873
  %v875 = vpop.xlane.xlu0 %874
  %v876 = vmul.f32 %v875, %v869
  %v877 = vadd.f32 %v876, 1e-05
  %v878 = vrsqrt.pop %v877
  %v879 = vmul.f32 %v871, %v878
  %s880 = scalar_lea.vmem %s2, 960
  %v881 = vld [vmem:[%s880] sm:$0x1]
  %v882 = vlaneseq
  %v883 = vshrl.u32 %v882, 7
  %v884 = vsub.s32 0, %v883
  %v885 = vrot.slane %v881, %v884
  %v886 = vmul.f32 %v879, %v885
  %s887 = scalar_lea.vmem %s2, 992
  %v888 = vld [vmem:[%s887] sm:$0x1]
  %v889 = vlaneseq
  %v890 = vshrl.u32 %v889, 7
  %v891 = vsub.s32 0, %v890
  %v892 = vrot.slane %v888, %v891
  %v893 = vadd.f32 %v886, %v892
  %s894 = scalar_lea.vmem %s2, 1056
  %v895 = vld [vmem:[%s894] sm:$0xff]
  %897 = vset.pattern.permute.xlu0 0
  %898 = vperm.xlu0 %897, %v865
  %v899 = vpop.permute.xlu0 %898
  %v901 = vlaneseq
  %v902 = vshrl.u32 %v901, 7
  %v903 = vsub.s32 0, %v902
  %v904 = vrot.slane %v893, %v903
  %v905 = vmul.f32 %v899, %v904
  %906 = vset.pattern.permute.xlu0 1
  %907 = vperm.xlu0 %906, %v865
  %v908 = vpop.permute.xlu0 %907
  %v910 = vlaneseq
  %v911 = vshrl.u32 %v910, 7
  %v912 = vsub.s32 1, %v911
  %v913 = vrot.slane %v893, %v912
  %v914 = vmul.f32 %v908, %v913
  %v915 = vadd.f32 %v905, %v914
  %916 = vset.pattern.permute.xlu0 2
  %917 = vperm.xlu0 %916, %v865
  %v918 = vpop.permute.xlu0 %917
  %v920 = vlaneseq
  %v921 = vshrl.u32 %v920, 7
  %v922 = vsub.s32 2, %v921
  %v923 = vrot.slane %v893, %v922
  %v924 = vmul.f32 %v918, %v923
  %v925 = vadd.f32 %v915, %v924
  %926 = vset.pattern.permute.xlu0 3
  %927 = vperm.xlu0 %926, %v865
  %v928 = vpop.permute.xlu0 %927
  %v930 = vlaneseq
  %v931 = vshrl.u32 %v930, 7
  %v932 = vsub.s32 3, %v931
  %v933 = vrot.slane %v893, %v932
  %v934 = vmul.f32 %v928, %v933
  %v935 = vadd.f32 %v925, %v934
  %936 = vset.pattern.permute.xlu0 4
  %937 = vperm.xlu0 %936, %v865
  %v938 = vpop.permute.xlu0 %937
  %v940 = vlaneseq
  %v941 = vshrl.u32 %v940, 7
  %v942 = vsub.s32 4, %v941
  %v943 = vrot.slane %v893, %v942
  %v944 = vmul.f32 %v938, %v943
  %v945 = vadd.f32 %v935, %v944
  %946 = vset.pattern.permute.xlu0 5
  %947 = vperm.xlu0 %946, %v865
  %v948 = vpop.permute.xlu0 %947
  %v950 = vlaneseq
  %v951 = vshrl.u32 %v950, 7
  %v952 = vsub.s32 5, %v951
  %v953 = vrot.slane %v893, %v952
  %v954 = vmul.f32 %v948, %v953
  %v955 = vadd.f32 %v945, %v954
  %956 = vset.pattern.permute.xlu0 6
  %957 = vperm.xlu0 %956, %v865
  %v958 = vpop.permute.xlu0 %957
  %v960 = vlaneseq
  %v961 = vshrl.u32 %v960, 7
  %v962 = vsub.s32 6, %v961
  %v963 = vrot.slane %v893, %v962
  %v964 = vmul.f32 %v958, %v963
  %v965 = vadd.f32 %v955, %v964
  %966 = vset.pattern.permute.xlu0 7
  %967 = vperm.xlu0 %966, %v865
  %v968 = vpop.permute.xlu0 %967
  %v970 = vlaneseq
  %v971 = vshrl.u32 %v970, 7
  %v972 = vsub.s32 7, %v971
  %v973 = vrot.slane %v893, %v972
  %v974 = vmul.f32 %v968, %v973
  %v975 = vadd.f32 %v965, %v974
  %977 = vset.pattern.permute.xlu0 0
  %978 = vperm.xlu0 %977, %v895
  %v979 = vpop.permute.xlu0 %978
  %v981 = vadd.f32 %v975, %v979
  %v982 = vmax.f32 %v981, 0.0
  %v983 = vadd.f32 %v863, %v982
  %v984 = vsel %vm458, %v983, 0.0
  %985 = vadd.xlane.f32.xlu0 %v984
  %v986 = vpop.xlane.xlu0 %985
  %v987 = vmul.f32 %v986, %v869
  %v988 = vsub.f32 %v983, %v987
  %v989 = vmul.f32 %v988, %v988
  %v990 = vsel %vm458, %v989, 0.0
  %991 = vadd.xlane.f32.xlu0 %v990
  %v992 = vpop.xlane.xlu0 %991
  %v993 = vmul.f32 %v992, %v869
  %v994 = vadd.f32 %v993, 1e-05
  %v995 = vrsqrt.pop %v994
  %v996 = vmul.f32 %v988, %v995
  %s997 = scalar_lea.vmem %s2, 1088
  %v998 = vld [vmem:[%s997] sm:$0x1]
  %v999 = vlaneseq
  %v1000 = vshrl.u32 %v999, 7
  %v1001 = vsub.s32 0, %v1000
  %v1002 = vrot.slane %v998, %v1001
  %v1003 = vmul.f32 %v996, %v1002
  %s1004 = scalar_lea.vmem %s2, 1120
  %v1005 = vld [vmem:[%s1004] sm:$0x1]
  %v1006 = vlaneseq
  %v1007 = vshrl.u32 %v1006, 7
  %v1008 = vsub.s32 0, %v1007
  %v1009 = vrot.slane %v1005, %v1008
  %v1010 = vadd.f32 %v1003, %v1009
  %s1011 = scalar_lea.vmem %s2, 1152
  %v1012 = vld [vmem:[%s1011] sm:$0xff]
  %s1013 = scalar_lea.vmem %s2, 1184
  %v1014 = vld [vmem:[%s1013] sm:$0x1]
  %1016 = vset.pattern.permute.xlu0 0
  %1017 = vperm.xlu0 %1016, %v1010
  %v1018 = vpop.permute.xlu0 %1017
  %v1020 = vlaneseq
  %v1021 = vshrl.u32 %v1020, 7
  %v1022 = vsub.s32 0, %v1021
  %v1023 = vrot.slane %v1012, %v1022
  %v1024 = vmul.f32 %v1018, %v1023
  %1025 = vset.pattern.permute.xlu0 1
  %1026 = vperm.xlu0 %1025, %v1010
  %v1027 = vpop.permute.xlu0 %1026
  %v1029 = vlaneseq
  %v1030 = vshrl.u32 %v1029, 7
  %v1031 = vsub.s32 1, %v1030
  %v1032 = vrot.slane %v1012, %v1031
  %v1033 = vmul.f32 %v1027, %v1032
  %v1034 = vadd.f32 %v1024, %v1033
  %1035 = vset.pattern.permute.xlu0 2
  %1036 = vperm.xlu0 %1035, %v1010
  %v1037 = vpop.permute.xlu0 %1036
  %v1039 = vlaneseq
  %v1040 = vshrl.u32 %v1039, 7
  %v1041 = vsub.s32 2, %v1040
  %v1042 = vrot.slane %v1012, %v1041
  %v1043 = vmul.f32 %v1037, %v1042
  %v1044 = vadd.f32 %v1034, %v1043
  %1045 = vset.pattern.permute.xlu0 3
  %1046 = vperm.xlu0 %1045, %v1010
  %v1047 = vpop.permute.xlu0 %1046
  %v1049 = vlaneseq
  %v1050 = vshrl.u32 %v1049, 7
  %v1051 = vsub.s32 3, %v1050
  %v1052 = vrot.slane %v1012, %v1051
  %v1053 = vmul.f32 %v1047, %v1052
  %v1054 = vadd.f32 %v1044, %v1053
  %1055 = vset.pattern.permute.xlu0 4
  %1056 = vperm.xlu0 %1055, %v1010
  %v1057 = vpop.permute.xlu0 %1056
  %v1059 = vlaneseq
  %v1060 = vshrl.u32 %v1059, 7
  %v1061 = vsub.s32 4, %v1060
  %v1062 = vrot.slane %v1012, %v1061
  %v1063 = vmul.f32 %v1057, %v1062
  %v1064 = vadd.f32 %v1054, %v1063
  %1065 = vset.pattern.permute.xlu0 5
  %1066 = vperm.xlu0 %1065, %v1010
  %v1067 = vpop.permute.xlu0 %1066
  %v1069 = vlaneseq
  %v1070 = vshrl.u32 %v1069, 7
  %v1071 = vsub.s32 5, %v1070
  %v1072 = vrot.slane %v1012, %v1071
  %v1073 = vmul.f32 %v1067, %v1072
  %v1074 = vadd.f32 %v1064, %v1073
  %1075 = vset.pattern.permute.xlu0 6
  %1076 = vperm.xlu0 %1075, %v1010
  %v1077 = vpop.permute.xlu0 %1076
  %v1079 = vlaneseq
  %v1080 = vshrl.u32 %v1079, 7
  %v1081 = vsub.s32 6, %v1080
  %v1082 = vrot.slane %v1012, %v1081
  %v1083 = vmul.f32 %v1077, %v1082
  %v1084 = vadd.f32 %v1074, %v1083
  %1085 = vset.pattern.permute.xlu0 7
  %1086 = vperm.xlu0 %1085, %v1010
  %v1087 = vpop.permute.xlu0 %1086
  %v1089 = vlaneseq
  %v1090 = vshrl.u32 %v1089, 7
  %v1091 = vsub.s32 7, %v1090
  %v1092 = vrot.slane %v1012, %v1091
  %v1093 = vmul.f32 %v1087, %v1092
  %v1094 = vadd.f32 %v1084, %v1093
  %v1095 = vlaneseq
  %v1096 = vshrl.u32 %v1095, 7
  %v1097 = vsub.s32 0, %v1096
  %v1098 = vrot.slane %v1014, %v1097
  %v1099 = vadd.f32 %v1094, %v1098
  %v1100 = vmax.f32 %v1099, 0.0
  %s1101 = scalar_lea.vmem %s2, 1216
  %v1102 = vld [vmem:[%s1101] sm:$0xff]
  %v1103 = vld [vmem:[%s1101 + $0x8] sm:$0xff]
  %v1104 = vld [vmem:[%s1101 + $0x10] sm:$0xff]
  %v1105 = vld [vmem:[%s1101 + $0x18] sm:$0xff]
  %s1106 = scalar_lea.vmem %s2, 1248
  %v1107 = vld [vmem:[%s1106] sm:$0x1]
  %v1108 = vlaneseq
  %v1109 = vshrl.u32 %v1108, 7
  %v1110 = vsub.s32 0, %v1109
  %v1111 = vrot.slane %v1107, %v1110
  %v1113 = vsel %vm238, %v1100, 0
  %1115 = vmatprep.subr.mxu0 0.0
  %1116 = vmatpush1.msra.mxu0 0.0
  %1117 = vmatprep.subr.mxu0 0.0
  %1118 = vmatpush1.msra.mxu0 0.0
  %1119 = vmatprep.subr.mxu0 0.0
  %1120 = vmatpush1.msra.mxu0 0.0
  %1121 = vmatprep.subr.mxu0 0.0
  %1122 = vmatpush1.msra.mxu0 0.0
  %1123 = vmatprep.subr.mxu0 0.0
  %1124 = vmatpush1.msra.mxu0 0.0
  %1125 = vmatprep.subr.mxu0 0.0
  %1126 = vmatpush1.msra.mxu0 0.0
  %1127 = vmatprep.subr.mxu0 0.0
  %1128 = vmatpush1.msra.mxu0 0.0
  %1129 = vmatprep.subr.mxu0 0.0
  %1130 = vmatpush1.msra.mxu0 0.0
  %1131 = vmatprep.subr.mxu0 0.0
  %1132 = vmatpush1.msra.mxu0 0.0
  %1133 = vmatprep.subr.mxu0 0.0
  %1134 = vmatpush1.msra.mxu0 0.0
  %1135 = vmatprep.subr.mxu0 0.0
  %1136 = vmatpush1.msra.mxu0 0.0
  %1137 = vmatprep.subr.mxu0 0.0
  %1138 = vmatpush1.msra.mxu0 0.0
  %1139 = vmatprep.subr.mxu0 0.0
  %1140 = vmatpush1.msra.mxu0 %v1105
  %1141 = vmatprep.subr.mxu0 0.0
  %1142 = vmatpush1.msra.mxu0 %v1104
  %1143 = vmatprep.subr.mxu0 0.0
  %1144 = vmatpush1.msra.mxu0 %v1103
  %1145 = vmatprep.subr.mxu0 0.0
  %1146 = vmatpush1.msra.mxu0 %v1102
  %1147 = vmatprep.subr.mxu0 0.0
  %1148 = vmatpush2.msra.mxu0 0.0
  %1149 = vmatprep.subr.mxu0 0.0
  %1150 = vmatpush2.msra.mxu0 0.0
  %1151 = vmatprep.subr.mxu0 0.0
  %1152 = vmatpush2.msra.mxu0 0.0
  %1153 = vmatprep.subr.mxu0 0.0
  %1154 = vmatpush2.msra.mxu0 0.0
  %1155 = vmatprep.subr.mxu0 0.0
  %1156 = vmatpush2.msra.mxu0 0.0
  %1157 = vmatprep.subr.mxu0 0.0
  %1158 = vmatpush2.msra.mxu0 0.0
  %1159 = vmatprep.subr.mxu0 0.0
  %1160 = vmatpush2.msra.mxu0 0.0
  %1161 = vmatprep.subr.mxu0 0.0
  %1162 = vmatpush2.msra.mxu0 0.0
  %1163 = vmatprep.subr.mxu0 0.0
  %1164 = vmatpush2.msra.mxu0 0.0
  %1165 = vmatprep.subr.mxu0 0.0
  %1166 = vmatpush2.msra.mxu0 0.0
  %1167 = vmatprep.subr.mxu0 0.0
  %1168 = vmatpush2.msra.mxu0 0.0
  %1169 = vmatprep.subr.mxu0 0.0
  %1170 = vmatpush2.msra.mxu0 0.0
  %1171 = vmatprep.subr.mxu0 0.0
  %1172 = vmatpush2.msra.mxu0 0.0
  %1173 = vmatprep.subr.mxu0 0.0
  %1174 = vmatpush2.msra.mxu0 0.0
  %1175 = vmatprep.subr.mxu0 0.0
  %1176 = vmatpush2.msra.mxu0 0.0
  %1177 = vmatprep.subr.mxu0 0.0
  %1178 = vmatpush2.msra.mxu0 0.0
  %1179 = vmatprep.mubr.f32.mxu0 0.0
  %1180 = vmatmul.mubr.f32.gmra.mxu0 %v1113
  %v1181 = vpop.f32.mrf.mxu0
  %v1182 = vadd.f32 %v1111, %v1181
  %v1183 = vpop.f32.mrf.mxu0
  %1184 = vdwg.mxu0
  %v1185 = vadd.f32 %v983, %v1182
  %s1186 = scalar_lea.vmem %s2, 1280
  %v1187 = vld [vmem:[%s1186] sm:$0xff]
  %s1188 = scalar_lea.vmem %s2, 1312
  %v1189 = vld [vmem:[%s1188] sm:$0x1]
  %1191 = vset.pattern.permute.xlu0 0
  %1192 = vperm.xlu0 %1191, %v1185
  %v1193 = vpop.permute.xlu0 %1192
  %v1195 = vlaneseq
  %v1196 = vshrl.u32 %v1195, 7
  %v1197 = vsub.s32 0, %v1196
  %v1198 = vrot.slane %v1187, %v1197
  %v1199 = vmul.f32 %v1193, %v1198
  %1200 = vset.pattern.permute.xlu0 1
  %1201 = vperm.xlu0 %1200, %v1185
  %v1202 = vpop.permute.xlu0 %1201
  %v1204 = vlaneseq
  %v1205 = vshrl.u32 %v1204, 7
  %v1206 = vsub.s32 1, %v1205
  %v1207 = vrot.slane %v1187, %v1206
  %v1208 = vmul.f32 %v1202, %v1207
  %v1209 = vadd.f32 %v1199, %v1208
  %1210 = vset.pattern.permute.xlu0 2
  %1211 = vperm.xlu0 %1210, %v1185
  %v1212 = vpop.permute.xlu0 %1211
  %v1214 = vlaneseq
  %v1215 = vshrl.u32 %v1214, 7
  %v1216 = vsub.s32 2, %v1215
  %v1217 = vrot.slane %v1187, %v1216
  %v1218 = vmul.f32 %v1212, %v1217
  %v1219 = vadd.f32 %v1209, %v1218
  %1220 = vset.pattern.permute.xlu0 3
  %1221 = vperm.xlu0 %1220, %v1185
  %v1222 = vpop.permute.xlu0 %1221
  %v1224 = vlaneseq
  %v1225 = vshrl.u32 %v1224, 7
  %v1226 = vsub.s32 3, %v1225
  %v1227 = vrot.slane %v1187, %v1226
  %v1228 = vmul.f32 %v1222, %v1227
  %v1229 = vadd.f32 %v1219, %v1228
  %1230 = vset.pattern.permute.xlu0 4
  %1231 = vperm.xlu0 %1230, %v1185
  %v1232 = vpop.permute.xlu0 %1231
  %v1234 = vlaneseq
  %v1235 = vshrl.u32 %v1234, 7
  %v1236 = vsub.s32 4, %v1235
  %v1237 = vrot.slane %v1187, %v1236
  %v1238 = vmul.f32 %v1232, %v1237
  %v1239 = vadd.f32 %v1229, %v1238
  %1240 = vset.pattern.permute.xlu0 5
  %1241 = vperm.xlu0 %1240, %v1185
  %v1242 = vpop.permute.xlu0 %1241
  %v1244 = vlaneseq
  %v1245 = vshrl.u32 %v1244, 7
  %v1246 = vsub.s32 5, %v1245
  %v1247 = vrot.slane %v1187, %v1246
  %v1248 = vmul.f32 %v1242, %v1247
  %v1249 = vadd.f32 %v1239, %v1248
  %1250 = vset.pattern.permute.xlu0 6
  %1251 = vperm.xlu0 %1250, %v1185
  %v1252 = vpop.permute.xlu0 %1251
  %v1254 = vlaneseq
  %v1255 = vshrl.u32 %v1254, 7
  %v1256 = vsub.s32 6, %v1255
  %v1257 = vrot.slane %v1187, %v1256
  %v1258 = vmul.f32 %v1252, %v1257
  %v1259 = vadd.f32 %v1249, %v1258
  %1260 = vset.pattern.permute.xlu0 7
  %1261 = vperm.xlu0 %1260, %v1185
  %v1262 = vpop.permute.xlu0 %1261
  %v1264 = vlaneseq
  %v1265 = vshrl.u32 %v1264, 7
  %v1266 = vsub.s32 7, %v1265
  %v1267 = vrot.slane %v1187, %v1266
  %v1268 = vmul.f32 %v1262, %v1267
  %v1269 = vadd.f32 %v1259, %v1268
  %v1270 = vlaneseq
  %v1271 = vshrl.u32 %v1270, 7
  %v1272 = vsub.s32 0, %v1271
  %v1273 = vrot.slane %v1189, %v1272
  %v1274 = vadd.f32 %v1269, %v1273
  %vm1275 = vcmp.ge.f32.partialorder %v1274, 0.0
  %v1276 = vmul.f32 %v1274, 0.01
  %v1277 = vsel %vm1275, %v1274, %v1276
  %v1278 = vsel %vm238, %v1277, 0.0
  %1279 = vadd.xlane.f32.xlu0 %v1278
  %v1280 = vpop.xlane.xlu0 %1279
  %v1281 = vrcp.pop 32.0
  %v1282 = vmul.f32 %v1280, %v1281
  %v1283 = vsub.f32 %v1277, %v1282
  %v1284 = vmul.f32 %v1283, %v1283
  %v1285 = vsel %vm238, %v1284, 0.0
  %1286 = vadd.xlane.f32.xlu0 %v1285
  %v1287 = vpop.xlane.xlu0 %1286
  %v1288 = vmul.f32 %v1287, %v1281
  %v1289 = vadd.f32 %v1288, 1e-05
  %v1290 = vrsqrt.pop %v1289
  %v1291 = vmul.f32 %v1283, %v1290
  %s1292 = scalar_lea.vmem %s2, 1344
  %v1293 = vld [vmem:[%s1292] sm:$0x1]
  %v1294 = vlaneseq
  %v1295 = vshrl.u32 %v1294, 7
  %v1296 = vsub.s32 0, %v1295
  %v1297 = vrot.slane %v1293, %v1296
  %v1298 = vmul.f32 %v1291, %v1297
  %s1299 = scalar_lea.vmem %s2, 1376
  %v1300 = vld [vmem:[%s1299] sm:$0x1]
  %v1301 = vlaneseq
  %v1302 = vshrl.u32 %v1301, 7
  %v1303 = vsub.s32 0, %v1302
  %v1304 = vrot.slane %v1300, %v1303
  %v1305 = vadd.f32 %v1298, %v1304
  %s1306 = scalar_lea.vmem %s2, 1408
  %v1307 = vld [vmem:[%s1306] sm:$0xff]
  %v1308 = vld [vmem:[%s1306 + $0x8] sm:$0xff]
  %v1309 = vld [vmem:[%s1306 + $0x10] sm:$0xff]
  %v1310 = vld [vmem:[%s1306 + $0x18] sm:$0xff]
  %s1311 = scalar_lea.vmem %s2, 1440
  %v1312 = vld [vmem:[%s1311] sm:$0x1]
  %v1313 = vlaneseq
  %v1314 = vshrl.u32 %v1313, 7
  %v1315 = vsub.s32 0, %v1314
  %v1316 = vrot.slane %v1312, %v1315
  %v1318 = vsel %vm238, %v1305, 0
  %1320 = vmatprep.subr.mxu0 0.0
  %1321 = vmatpush1.msra.mxu0 0.0
  %1322 = vmatprep.subr.mxu0 0.0
  %1323 = vmatpush1.msra.mxu0 0.0
  %1324 = vmatprep.subr.mxu0 0.0
  %1325 = vmatpush1.msra.mxu0 0.0
  %1326 = vmatprep.subr.mxu0 0.0
  %1327 = vmatpush1.msra.mxu0 0.0
  %1328 = vmatprep.subr.mxu0 0.0
  %1329 = vmatpush1.msra.mxu0 0.0
  %1330 = vmatprep.subr.mxu0 0.0
  %1331 = vmatpush1.msra.mxu0 0.0
  %1332 = vmatprep.subr.mxu0 0.0
  %1333 = vmatpush1.msra.mxu0 0.0
  %1334 = vmatprep.subr.mxu0 0.0
  %1335 = vmatpush1.msra.mxu0 0.0
  %1336 = vmatprep.subr.mxu0 0.0
  %1337 = vmatpush1.msra.mxu0 0.0
  %1338 = vmatprep.subr.mxu0 0.0
  %1339 = vmatpush1.msra.mxu0 0.0
  %1340 = vmatprep.subr.mxu0 0.0
  %1341 = vmatpush1.msra.mxu0 0.0
  %1342 = vmatprep.subr.mxu0 0.0
  %1343 = vmatpush1.msra.mxu0 0.0
  %1344 = vmatprep.subr.mxu0 0.0
  %1345 = vmatpush1.msra.mxu0 %v1310
  %1346 = vmatprep.subr.mxu0 0.0
  %1347 = vmatpush1.msra.mxu0 %v1309
  %1348 = vmatprep.subr.mxu0 0.0
  %1349 = vmatpush1.msra.mxu0 %v1308
  %1350 = vmatprep.subr.mxu0 0.0
  %1351 = vmatpush1.msra.mxu0 %v1307
  %1352 = vmatprep.subr.mxu0 0.0
  %1353 = vmatpush2.msra.mxu0 0.0
  %1354 = vmatprep.subr.mxu0 0.0
  %1355 = vmatpush2.msra.mxu0 0.0
  %1356 = vmatprep.subr.mxu0 0.0
  %1357 = vmatpush2.msra.mxu0 0.0
  %1358 = vmatprep.subr.mxu0 0.0
  %1359 = vmatpush2.msra.mxu0 0.0
  %1360 = vmatprep.subr.mxu0 0.0
  %1361 = vmatpush2.msra.mxu0 0.0
  %1362 = vmatprep.subr.mxu0 0.0
  %1363 = vmatpush2.msra.mxu0 0.0
  %1364 = vmatprep.subr.mxu0 0.0
  %1365 = vmatpush2.msra.mxu0 0.0
  %1366 = vmatprep.subr.mxu0 0.0
  %1367 = vmatpush2.msra.mxu0 0.0
  %1368 = vmatprep.subr.mxu0 0.0
  %1369 = vmatpush2.msra.mxu0 0.0
  %1370 = vmatprep.subr.mxu0 0.0
  %1371 = vmatpush2.msra.mxu0 0.0
  %1372 = vmatprep.subr.mxu0 0.0
  %1373 = vmatpush2.msra.mxu0 0.0
  %1374 = vmatprep.subr.mxu0 0.0
  %1375 = vmatpush2.msra.mxu0 0.0
  %1376 = vmatprep.subr.mxu0 0.0
  %1377 = vmatpush2.msra.mxu0 0.0
  %1378 = vmatprep.subr.mxu0 0.0
  %1379 = vmatpush2.msra.mxu0 0.0
  %1380 = vmatprep.subr.mxu0 0.0
  %1381 = vmatpush2.msra.mxu0 0.0
  %1382 = vmatprep.subr.mxu0 0.0
  %1383 = vmatpush2.msra.mxu0 0.0
  %1384 = vmatprep.mubr.f32.mxu0 0.0
  %1385 = vmatmul.mubr.f32.gmra.mxu0 %v1318
  %v1386 = vpop.f32.mrf.mxu0
  %v1387 = vadd.f32 %v1316, %v1386
  %v1388 = vpop.f32.mrf.mxu0
  %1389 = vdwg.mxu0
  %vm1390 = vcmask 23552
  %1391 = vst.msk [vmem:[%s3] sm:$0xff] %vm1390, %v1387
  %v1393 = vrot.slane %v1387, 7
  %v1395 = vsub.f32 %v1387, %v1393
  %1397 = vrot.lane.b32.xlu0 %v1395, 3
  %v1398 = vpop.permute.xlu0 %1397
  %vm1400 = vcmask 42009
  %1401 = vst.msk [vmem:[%s3 - $0x1] sm:$0x2] %vm1400, %v1398
  %v1402 = vrot.slane %v1387, 6
  %v1404 = vsub.f32 %v1387, %v1402
  %v1405 = vmul.f32 %v1404, 0.5
  %1407 = vrot.lane.b32.xlu0 %v1405, 3
  %v1408 = vpop.permute.xlu0 %1407
  %vm1410 = vcmask 48154
  %1411 = vst.msk [vmem:[%s3 - $0x1] sm:$0xfc] %vm1410, %v1408
  %vm1412 = vcmask 48159
  %1413 = vst.msk [vmem:[%s3] sm:$0x80] %vm1412, %v1398
  %s1414 = scalar_lea.vmem %s2, 1536
  %v1415 = vld [vmem:[%s1414] sm:$0xff]
  %v1416 = vsel %vm1390, %v1387, 0.0
  %1417 = vadd.xlane.f32.xlu0 %v1416
  %v1418 = vpop.xlane.xlu0 %1417
  %v1419 = vrcp.pop 3.0
  %v1420 = vmul.f32 %v1418, %v1419
  %v1421 = vsub.f32 %v1387, %v1420
  %v1422 = vmul.f32 %v1421, %v1421
  %v1423 = vsel %vm1390, %v1422, 0.0
  %1424 = vadd.xlane.f32.xlu0 %v1423
  %v1425 = vpop.xlane.xlu0 %1424
  %v1426 = vmul.f32 %v1425, %v1419
  %v1427 = vadd.f32 %v1426, 1e-05
  %v1428 = vrsqrt.pop %v1427
  %v1429 = vmul.f32 %v1421, %v1428
  %s1430 = scalar_lea.vmem %s2, 1472
  %v1431 = vld [vmem:[%s1430] sm:$0x1]
  %v1432 = vlaneseq
  %v1433 = vshrl.u32 %v1432, 7
  %v1434 = vsub.s32 0, %v1433
  %v1435 = vrot.slane %v1431, %v1434
  %v1436 = vmul.f32 %v1429, %v1435
  %s1437 = scalar_lea.vmem %s2, 1504
  %v1438 = vld [vmem:[%s1437] sm:$0x1]
  %v1439 = vlaneseq
  %v1440 = vshrl.u32 %v1439, 7
  %v1441 = vsub.s32 0, %v1440
  %v1442 = vrot.slane %v1438, %v1441
  %v1443 = vadd.f32 %v1436, %v1442
  %s1444 = scalar_lea.vmem %s2, 1568
  %v1445 = vld [vmem:[%s1444] sm:$0xff]
  %1447 = vset.pattern.permute.xlu0 0
  %1448 = vperm.xlu0 %1447, %v1415
  %v1449 = vpop.permute.xlu0 %1448
  %v1451 = vlaneseq
  %v1452 = vshrl.u32 %v1451, 7
  %v1453 = vsub.s32 0, %v1452
  %v1454 = vrot.slane %v1443, %v1453
  %v1455 = vmul.f32 %v1449, %v1454
  %1456 = vset.pattern.permute.xlu0 1
  %1457 = vperm.xlu0 %1456, %v1415
  %v1458 = vpop.permute.xlu0 %1457
  %v1460 = vlaneseq
  %v1461 = vshrl.u32 %v1460, 7
  %v1462 = vsub.s32 1, %v1461
  %v1463 = vrot.slane %v1443, %v1462
  %v1464 = vmul.f32 %v1458, %v1463
  %v1465 = vadd.f32 %v1455, %v1464
  %1466 = vset.pattern.permute.xlu0 2
  %1467 = vperm.xlu0 %1466, %v1415
  %v1468 = vpop.permute.xlu0 %1467
  %v1470 = vlaneseq
  %v1471 = vshrl.u32 %v1470, 7
  %v1472 = vsub.s32 2, %v1471
  %v1473 = vrot.slane %v1443, %v1472
  %v1474 = vmul.f32 %v1468, %v1473
  %v1475 = vadd.f32 %v1465, %v1474
  %1476 = vset.pattern.permute.xlu0 3
  %1477 = vperm.xlu0 %1476, %v1415
  %v1478 = vpop.permute.xlu0 %1477
  %v1480 = vlaneseq
  %v1481 = vshrl.u32 %v1480, 7
  %v1482 = vsub.s32 3, %v1481
  %v1483 = vrot.slane %v1443, %v1482
  %v1484 = vmul.f32 %v1478, %v1483
  %v1485 = vadd.f32 %v1475, %v1484
  %1486 = vset.pattern.permute.xlu0 4
  %1487 = vperm.xlu0 %1486, %v1415
  %v1488 = vpop.permute.xlu0 %1487
  %v1490 = vlaneseq
  %v1491 = vshrl.u32 %v1490, 7
  %v1492 = vsub.s32 4, %v1491
  %v1493 = vrot.slane %v1443, %v1492
  %v1494 = vmul.f32 %v1488, %v1493
  %v1495 = vadd.f32 %v1485, %v1494
  %1496 = vset.pattern.permute.xlu0 5
  %1497 = vperm.xlu0 %1496, %v1415
  %v1498 = vpop.permute.xlu0 %1497
  %v1500 = vlaneseq
  %v1501 = vshrl.u32 %v1500, 7
  %v1502 = vsub.s32 5, %v1501
  %v1503 = vrot.slane %v1443, %v1502
  %v1504 = vmul.f32 %v1498, %v1503
  %v1505 = vadd.f32 %v1495, %v1504
  %1506 = vset.pattern.permute.xlu0 6
  %1507 = vperm.xlu0 %1506, %v1415
  %v1508 = vpop.permute.xlu0 %1507
  %v1510 = vlaneseq
  %v1511 = vshrl.u32 %v1510, 7
  %v1512 = vsub.s32 6, %v1511
  %v1513 = vrot.slane %v1443, %v1512
  %v1514 = vmul.f32 %v1508, %v1513
  %v1515 = vadd.f32 %v1505, %v1514
  %1516 = vset.pattern.permute.xlu0 7
  %1517 = vperm.xlu0 %1516, %v1415
  %v1518 = vpop.permute.xlu0 %1517
  %v1520 = vlaneseq
  %v1521 = vshrl.u32 %v1520, 7
  %v1522 = vsub.s32 7, %v1521
  %v1523 = vrot.slane %v1443, %v1522
  %v1524 = vmul.f32 %v1518, %v1523
  %v1525 = vadd.f32 %v1515, %v1524
  %1527 = vset.pattern.permute.xlu0 0
  %1528 = vperm.xlu0 %1527, %v1445
  %v1529 = vpop.permute.xlu0 %1528
  %v1531 = vadd.f32 %v1525, %v1529
  %v1532 = vmax.f32 %v1531, 0.0
  %v1533 = vadd.f32 %v1387, %v1532
  %s1534 = scalar_lea.vmem %s2, 1792
  %v1535 = vld [vmem:[%s1534] sm:$0x7]
  %s1536 = scalar_lea.vmem %s2, 1824
  %v1537 = vld [vmem:[%s1536] sm:$0x1]
  %1539 = vset.pattern.permute.xlu0 0
  %1540 = vperm.xlu0 %1539, %v1533
  %v1541 = vpop.permute.xlu0 %1540
  %v1543 = vlaneseq
  %v1544 = vshrl.u32 %v1543, 7
  %v1545 = vsub.s32 0, %v1544
  %v1546 = vrot.slane %v1535, %v1545
  %v1547 = vmul.f32 %v1541, %v1546
  %1548 = vset.pattern.permute.xlu0 1
  %1549 = vperm.xlu0 %1548, %v1533
  %v1550 = vpop.permute.xlu0 %1549
  %v1552 = vlaneseq
  %v1553 = vshrl.u32 %v1552, 7
  %v1554 = vsub.s32 1, %v1553
  %v1555 = vrot.slane %v1535, %v1554
  %v1556 = vmul.f32 %v1550, %v1555
  %v1557 = vadd.f32 %v1547, %v1556
  %1558 = vset.pattern.permute.xlu0 2
  %1559 = vperm.xlu0 %1558, %v1533
  %v1560 = vpop.permute.xlu0 %1559
  %v1562 = vlaneseq
  %v1563 = vshrl.u32 %v1562, 7
  %v1564 = vsub.s32 2, %v1563
  %v1565 = vrot.slane %v1535, %v1564
  %v1566 = vmul.f32 %v1560, %v1565
  %v1567 = vadd.f32 %v1557, %v1566
  %v1568 = vlaneseq
  %v1569 = vshrl.u32 %v1568, 7
  %v1570 = vsub.s32 0, %v1569
  %v1571 = vrot.slane %v1537, %v1570
  %v1572 = vadd.f32 %v1567, %v1571
  %v1573 = vsel %vm1390, %v1533, 0.0
  %1574 = vadd.xlane.f32.xlu0 %v1573
  %v1575 = vpop.xlane.xlu0 %1574
  %v1576 = vmul.f32 %v1575, %v1419
  %v1577 = vsub.f32 %v1533, %v1576
  %v1578 = vmul.f32 %v1577, %v1577
  %v1579 = vsel %vm1390, %v1578, 0.0
  %1580 = vadd.xlane.f32.xlu0 %v1579
  %v1581 = vpop.xlane.xlu0 %1580
  %v1582 = vmul.f32 %v1581, %v1419
  %v1583 = vadd.f32 %v1582, 1e-05
  %v1584 = vrsqrt.pop %v1583
  %v1585 = vmul.f32 %v1577, %v1584
  %s1586 = scalar_lea.vmem %s2, 1600
  %v1587 = vld [vmem:[%s1586] sm:$0x1]
  %v1588 = vlaneseq
  %v1589 = vshrl.u32 %v1588, 7
  %v1590 = vsub.s32 0, %v1589
  %v1591 = vrot.slane %v1587, %v1590
  %v1592 = vmul.f32 %v1585, %v1591
  %s1593 = scalar_lea.vmem %s2, 1632
  %v1594 = vld [vmem:[%s1593] sm:$0x1]
  %v1595 = vlaneseq
  %v1596 = vshrl.u32 %v1595, 7
  %v1597 = vsub.s32 0, %v1596
  %v1598 = vrot.slane %v1594, %v1597
  %v1599 = vadd.f32 %v1592, %v1598
  %s1600 = scalar_lea.vmem %s2, 1664
  %v1601 = vld [vmem:[%s1600] sm:$0x7]
  %s1602 = scalar_lea.vmem %s2, 1696
  %v1603 = vld [vmem:[%s1602] sm:$0x1]
  %1605 = vset.pattern.permute.xlu0 0
  %1606 = vperm.xlu0 %1605, %v1599
  %v1607 = vpop.permute.xlu0 %1606
  %v1609 = vlaneseq
  %v1610 = vshrl.u32 %v1609, 7
  %v1611 = vsub.s32 0, %v1610
  %v1612 = vrot.slane %v1601, %v1611
  %v1613 = vmul.f32 %v1607, %v1612
  %1614 = vset.pattern.permute.xlu0 1
  %1615 = vperm.xlu0 %1614, %v1599
  %v1616 = vpop.permute.xlu0 %1615
  %v1618 = vlaneseq
  %v1619 = vshrl.u32 %v1618, 7
  %v1620 = vsub.s32 1, %v1619
  %v1621 = vrot.slane %v1601, %v1620
  %v1622 = vmul.f32 %v1616, %v1621
  %v1623 = vadd.f32 %v1613, %v1622
  %1624 = vset.pattern.permute.xlu0 2
  %1625 = vperm.xlu0 %1624, %v1599
  %v1626 = vpop.permute.xlu0 %1625
  %v1628 = vlaneseq
  %v1629 = vshrl.u32 %v1628, 7
  %v1630 = vsub.s32 2, %v1629
  %v1631 = vrot.slane %v1601, %v1630
  %v1632 = vmul.f32 %v1626, %v1631
  %v1633 = vadd.f32 %v1623, %v1632
  %v1634 = vlaneseq
  %v1635 = vshrl.u32 %v1634, 7
  %v1636 = vsub.s32 0, %v1635
  %v1637 = vrot.slane %v1603, %v1636
  %v1638 = vadd.f32 %v1633, %v1637
  %v1639 = vmax.f32 %v1638, 0.0
  %s1640 = scalar_lea.vmem %s2, 1728
  %v1641 = vld [vmem:[%s1640] sm:$0xff]
  %v1642 = vld [vmem:[%s1640 + $0x8] sm:$0xff]
  %v1643 = vld [vmem:[%s1640 + $0x10] sm:$0xff]
  %v1644 = vld [vmem:[%s1640 + $0x18] sm:$0xff]
  %s1645 = scalar_lea.vmem %s2, 1760
  %v1646 = vld [vmem:[%s1645] sm:$0x1]
  %v1647 = vlaneseq
  %v1648 = vshrl.u32 %v1647, 7
  %v1649 = vsub.s32 0, %v1648
  %v1650 = vrot.slane %v1646, %v1649
  %v1652 = vsel %vm238, %v1639, 0
  %1654 = vmatprep.subr.mxu0 0.0
  %1655 = vmatpush1.msra.mxu0 0.0
  %1656 = vmatprep.subr.mxu0 0.0
  %1657 = vmatpush1.msra.mxu0 0.0
  %1658 = vmatprep.subr.mxu0 0.0
  %1659 = vmatpush1.msra.mxu0 0.0
  %1660 = vmatprep.subr.mxu0 0.0
  %1661 = vmatpush1.msra.mxu0 0.0
  %1662 = vmatprep.subr.mxu0 0.0
  %1663 = vmatpush1.msra.mxu0 0.0
  %1664 = vmatprep.subr.mxu0 0.0
  %1665 = vmatpush1.msra.mxu0 0.0
  %1666 = vmatprep.subr.mxu0 0.0
  %1667 = vmatpush1.msra.mxu0 0.0
  %1668 = vmatprep.subr.mxu0 0.0
  %1669 = vmatpush1.msra.mxu0 0.0
  %1670 = vmatprep.subr.mxu0 0.0
  %1671 = vmatpush1.msra.mxu0 0.0
  %1672 = vmatprep.subr.mxu0 0.0
  %1673 = vmatpush1.msra.mxu0 0.0
  %1674 = vmatprep.subr.mxu0 0.0
  %1675 = vmatpush1.msra.mxu0 0.0
  %1676 = vmatprep.subr.mxu0 0.0
  %1677 = vmatpush1.msra.mxu0 0.0
  %1678 = vmatprep.subr.mxu0 0.0
  %1679 = vmatpush1.msra.mxu0 %v1644
  %1680 = vmatprep.subr.mxu0 0.0
  %1681 = vmatpush1.msra.mxu0 %v1643
  %1682 = vmatprep.subr.mxu0 0.0
  %1683 = vmatpush1.msra.mxu0 %v1642
  %1684 = vmatprep.subr.mxu0 0.0
  %1685 = vmatpush1.msra.mxu0 %v1641
  %1686 = vmatprep.subr.mxu0 0.0
  %1687 = vmatpush2.msra.mxu0 0.0
  %1688 = vmatprep.subr.mxu0 0.0
  %1689 = vmatpush2.msra.mxu0 0.0
  %1690 = vmatprep.subr.mxu0 0.0
  %1691 = vmatpush2.msra.mxu0 0.0
  %1692 = vmatprep.subr.mxu0 0.0
  %1693 = vmatpush2.msra.mxu0 0.0
  %1694 = vmatprep.subr.mxu0 0.0
  %1695 = vmatpush2.msra.mxu0 0.0
  %1696 = vmatprep.subr.mxu0 0.0
  %1697 = vmatpush2.msra.mxu0 0.0
  %1698 = vmatprep.subr.mxu0 0.0
  %1699 = vmatpush2.msra.mxu0 0.0
  %1700 = vmatprep.subr.mxu0 0.0
  %1701 = vmatpush2.msra.mxu0 0.0
  %1702 = vmatprep.subr.mxu0 0.0
  %1703 = vmatpush2.msra.mxu0 0.0
  %1704 = vmatprep.subr.mxu0 0.0
  %1705 = vmatpush2.msra.mxu0 0.0
  %1706 = vmatprep.subr.mxu0 0.0
  %1707 = vmatpush2.msra.mxu0 0.0
  %1708 = vmatprep.subr.mxu0 0.0
  %1709 = vmatpush2.msra.mxu0 0.0
  %1710 = vmatprep.subr.mxu0 0.0
  %1711 = vmatpush2.msra.mxu0 0.0
  %1712 = vmatprep.subr.mxu0 0.0
  %1713 = vmatpush2.msra.mxu0 0.0
  %1714 = vmatprep.subr.mxu0 0.0
  %1715 = vmatpush2.msra.mxu0 0.0
  %1716 = vmatprep.subr.mxu0 0.0
  %1717 = vmatpush2.msra.mxu0 0.0
  %1718 = vmatprep.mubr.f32.mxu0 0.0
  %1719 = vmatmul.mubr.f32.gmra.mxu0 %v1652
  %v1720 = vpop.f32.mrf.mxu0
  %v1721 = vadd.f32 %v1650, %v1720
  %v1722 = vpop.f32.mrf.mxu0
  %1723 = vdwg.mxu0
  %v1724 = vadd.f32 %v1572, %v1721
  %s1725 = scalar_lea.vmem %s2, 1920
  %v1726 = vld [vmem:[%s1725] sm:$0xff]
  %vm1727 = vcmask 15360
  %v1728 = vsel %vm1727, %v1724, 0.0
  %1729 = vadd.xlane.f32.xlu0 %v1728
  %v1730 = vpop.xlane.xlu0 %1729
  %v1731 = vrcp.pop 2.0
  %v1732 = vmul.f32 %v1730, %v1731
  %v1733 = vsub.f32 %v1724, %v1732
  %v1734 = vmul.f32 %v1733, %v1733
  %v1735 = vsel %vm1727, %v1734, 0.0
  %1736 = vadd.xlane.f32.xlu0 %v1735
  %v1737 = vpop.xlane.xlu0 %1736
  %v1738 = vmul.f32 %v1737, %v1731
  %v1739 = vadd.f32 %v1738, 1e-05
  %v1740 = vrsqrt.pop %v1739
  %v1741 = vmul.f32 %v1733, %v1740
  %s1742 = scalar_lea.vmem %s2, 1856
  %v1743 = vld [vmem:[%s1742] sm:$0x1]
  %v1744 = vlaneseq
  %v1745 = vshrl.u32 %v1744, 7
  %v1746 = vsub.s32 0, %v1745
  %v1747 = vrot.slane %v1743, %v1746
  %v1748 = vmul.f32 %v1741, %v1747
  %s1749 = scalar_lea.vmem %s2, 1888
  %v1750 = vld [vmem:[%s1749] sm:$0x1]
  %v1751 = vlaneseq
  %v1752 = vshrl.u32 %v1751, 7
  %v1753 = vsub.s32 0, %v1752
  %v1754 = vrot.slane %v1750, %v1753
  %v1755 = vadd.f32 %v1748, %v1754
  %s1756 = scalar_lea.vmem %s2, 1952
  %v1757 = vld [vmem:[%s1756] sm:$0xff]
  %1759 = vset.pattern.permute.xlu0 0
  %1760 = vperm.xlu0 %1759, %v1726
  %v1761 = vpop.permute.xlu0 %1760
  %v1763 = vlaneseq
  %v1764 = vshrl.u32 %v1763, 7
  %v1765 = vsub.s32 0, %v1764
  %v1766 = vrot.slane %v1755, %v1765
  %v1767 = vmul.f32 %v1761, %v1766
  %1768 = vset.pattern.permute.xlu0 1
  %1769 = vperm.xlu0 %1768, %v1726
  %v1770 = vpop.permute.xlu0 %1769
  %v1772 = vlaneseq
  %v1773 = vshrl.u32 %v1772, 7
  %v1774 = vsub.s32 1, %v1773
  %v1775 = vrot.slane %v1755, %v1774
  %v1776 = vmul.f32 %v1770, %v1775
  %v1777 = vadd.f32 %v1767, %v1776
  %1778 = vset.pattern.permute.xlu0 2
  %1779 = vperm.xlu0 %1778, %v1726
  %v1780 = vpop.permute.xlu0 %1779
  %v1782 = vlaneseq
  %v1783 = vshrl.u32 %v1782, 7
  %v1784 = vsub.s32 2, %v1783
  %v1785 = vrot.slane %v1755, %v1784
  %v1786 = vmul.f32 %v1780, %v1785
  %v1787 = vadd.f32 %v1777, %v1786
  %1788 = vset.pattern.permute.xlu0 3
  %1789 = vperm.xlu0 %1788, %v1726
  %v1790 = vpop.permute.xlu0 %1789
  %v1792 = vlaneseq
  %v1793 = vshrl.u32 %v1792, 7
  %v1794 = vsub.s32 3, %v1793
  %v1795 = vrot.slane %v1755, %v1794
  %v1796 = vmul.f32 %v1790, %v1795
  %v1797 = vadd.f32 %v1787, %v1796
  %1798 = vset.pattern.permute.xlu0 4
  %1799 = vperm.xlu0 %1798, %v1726
  %v1800 = vpop.permute.xlu0 %1799
  %v1802 = vlaneseq
  %v1803 = vshrl.u32 %v1802, 7
  %v1804 = vsub.s32 4, %v1803
  %v1805 = vrot.slane %v1755, %v1804
  %v1806 = vmul.f32 %v1800, %v1805
  %v1807 = vadd.f32 %v1797, %v1806
  %1808 = vset.pattern.permute.xlu0 5
  %1809 = vperm.xlu0 %1808, %v1726
  %v1810 = vpop.permute.xlu0 %1809
  %v1812 = vlaneseq
  %v1813 = vshrl.u32 %v1812, 7
  %v1814 = vsub.s32 5, %v1813
  %v1815 = vrot.slane %v1755, %v1814
  %v1816 = vmul.f32 %v1810, %v1815
  %v1817 = vadd.f32 %v1807, %v1816
  %1818 = vset.pattern.permute.xlu0 6
  %1819 = vperm.xlu0 %1818, %v1726
  %v1820 = vpop.permute.xlu0 %1819
  %v1822 = vlaneseq
  %v1823 = vshrl.u32 %v1822, 7
  %v1824 = vsub.s32 6, %v1823
  %v1825 = vrot.slane %v1755, %v1824
  %v1826 = vmul.f32 %v1820, %v1825
  %v1827 = vadd.f32 %v1817, %v1826
  %1828 = vset.pattern.permute.xlu0 7
  %1829 = vperm.xlu0 %1828, %v1726
  %v1830 = vpop.permute.xlu0 %1829
  %v1832 = vlaneseq
  %v1833 = vshrl.u32 %v1832, 7
  %v1834 = vsub.s32 7, %v1833
  %v1835 = vrot.slane %v1755, %v1834
  %v1836 = vmul.f32 %v1830, %v1835
  %v1837 = vadd.f32 %v1827, %v1836
  %1839 = vset.pattern.permute.xlu0 0
  %1840 = vperm.xlu0 %1839, %v1757
  %v1841 = vpop.permute.xlu0 %1840
  %v1843 = vadd.f32 %v1837, %v1841
  %v1844 = vmax.f32 %v1843, 0.0
  %v1845 = vadd.f32 %v1724, %v1844
  %v1846 = vsel %vm1727, %v1845, 0.0
  %1847 = vadd.xlane.f32.xlu0 %v1846
  %v1848 = vpop.xlane.xlu0 %1847
  %v1849 = vmul.f32 %v1848, %v1731
  %v1850 = vsub.f32 %v1845, %v1849
  %v1851 = vmul.f32 %v1850, %v1850
  %v1852 = vsel %vm1727, %v1851, 0.0
  %1853 = vadd.xlane.f32.xlu0 %v1852
  %v1854 = vpop.xlane.xlu0 %1853
  %v1855 = vmul.f32 %v1854, %v1731
  %v1856 = vadd.f32 %v1855, 1e-05
  %v1857 = vrsqrt.pop %v1856
  %v1858 = vmul.f32 %v1850, %v1857
  %s1859 = scalar_lea.vmem %s2, 1984
  %v1860 = vld [vmem:[%s1859] sm:$0x1]
  %v1861 = vlaneseq
  %v1862 = vshrl.u32 %v1861, 7
  %v1863 = vsub.s32 0, %v1862
  %v1864 = vrot.slane %v1860, %v1863
  %v1865 = vmul.f32 %v1858, %v1864
  %s1866 = scalar_lea.vmem %s2, 2016
  %v1867 = vld [vmem:[%s1866] sm:$0x1]
  %v1868 = vlaneseq
  %v1869 = vshrl.u32 %v1868, 7
  %v1870 = vsub.s32 0, %v1869
  %v1871 = vrot.slane %v1867, %v1870
  %v1872 = vadd.f32 %v1865, %v1871
  %s1873 = scalar_lea.vmem %s2, 2048
  %v1874 = vld [vmem:[%s1873] sm:$0x3]
  %s1875 = scalar_lea.vmem %s2, 2080
  %v1876 = vld [vmem:[%s1875] sm:$0x1]
  %1878 = vset.pattern.permute.xlu0 0
  %1879 = vperm.xlu0 %1878, %v1872
  %v1880 = vpop.permute.xlu0 %1879
  %v1882 = vlaneseq
  %v1883 = vshrl.u32 %v1882, 7
  %v1884 = vsub.s32 0, %v1883
  %v1885 = vrot.slane %v1874, %v1884
  %v1886 = vmul.f32 %v1880, %v1885
  %1887 = vset.pattern.permute.xlu0 1
  %1888 = vperm.xlu0 %1887, %v1872
  %v1889 = vpop.permute.xlu0 %1888
  %v1891 = vlaneseq
  %v1892 = vshrl.u32 %v1891, 7
  %v1893 = vsub.s32 1, %v1892
  %v1894 = vrot.slane %v1874, %v1893
  %v1895 = vmul.f32 %v1889, %v1894
  %v1896 = vadd.f32 %v1886, %v1895
  %v1897 = vlaneseq
  %v1898 = vshrl.u32 %v1897, 7
  %v1899 = vsub.s32 0, %v1898
  %v1900 = vrot.slane %v1876, %v1899
  %v1901 = vadd.f32 %v1896, %v1900
  %v1902 = vmax.f32 %v1901, 0.0
  %s1903 = scalar_lea.vmem %s2, 2112
  %v1904 = vld [vmem:[%s1903] sm:$0xff]
  %v1905 = vld [vmem:[%s1903 + $0x8] sm:$0xff]
  %v1906 = vld [vmem:[%s1903 + $0x10] sm:$0xff]
  %v1907 = vld [vmem:[%s1903 + $0x18] sm:$0xff]
  %s1908 = scalar_lea.vmem %s2, 2144
  %v1909 = vld [vmem:[%s1908] sm:$0x1]
  %v1910 = vlaneseq
  %v1911 = vshrl.u32 %v1910, 7
  %v1912 = vsub.s32 0, %v1911
  %v1913 = vrot.slane %v1909, %v1912
  %v1915 = vsel %vm238, %v1902, 0
  %1917 = vmatprep.subr.mxu0 0.0
  %1918 = vmatpush1.msra.mxu0 0.0
  %1919 = vmatprep.subr.mxu0 0.0
  %1920 = vmatpush1.msra.mxu0 0.0
  %1921 = vmatprep.subr.mxu0 0.0
  %1922 = vmatpush1.msra.mxu0 0.0
  %1923 = vmatprep.subr.mxu0 0.0
  %1924 = vmatpush1.msra.mxu0 0.0
  %1925 = vmatprep.subr.mxu0 0.0
  %1926 = vmatpush1.msra.mxu0 0.0
  %1927 = vmatprep.subr.mxu0 0.0
  %1928 = vmatpush1.msra.mxu0 0.0
  %1929 = vmatprep.subr.mxu0 0.0
  %1930 = vmatpush1.msra.mxu0 0.0
  %1931 = vmatprep.subr.mxu0 0.0
  %1932 = vmatpush1.msra.mxu0 0.0
  %1933 = vmatprep.subr.mxu0 0.0
  %1934 = vmatpush1.msra.mxu0 0.0
  %1935 = vmatprep.subr.mxu0 0.0
  %1936 = vmatpush1.msra.mxu0 0.0
  %1937 = vmatprep.subr.mxu0 0.0
  %1938 = vmatpush1.msra.mxu0 0.0
  %1939 = vmatprep.subr.mxu0 0.0
  %1940 = vmatpush1.msra.mxu0 0.0
  %1941 = vmatprep.subr.mxu0 0.0
  %1942 = vmatpush1.msra.mxu0 %v1907
  %1943 = vmatprep.subr.mxu0 0.0
  %1944 = vmatpush1.msra.mxu0 %v1906
  %1945 = vmatprep.subr.mxu0 0.0
  %1946 = vmatpush1.msra.mxu0 %v1905
  %1947 = vmatprep.subr.mxu0 0.0
  %1948 = vmatpush1.msra.mxu0 %v1904
  %1949 = vmatprep.subr.mxu0 0.0
  %1950 = vmatpush2.msra.mxu0 0.0
  %1951 = vmatprep.subr.mxu0 0.0
  %1952 = vmatpush2.msra.mxu0 0.0
  %1953 = vmatprep.subr.mxu0 0.0
  %1954 = vmatpush2.msra.mxu0 0.0
  %1955 = vmatprep.subr.mxu0 0.0
  %1956 = vmatpush2.msra.mxu0 0.0
  %1957 = vmatprep.subr.mxu0 0.0
  %1958 = vmatpush2.msra.mxu0 0.0
  %1959 = vmatprep.subr.mxu0 0.0
  %1960 = vmatpush2.msra.mxu0 0.0
  %1961 = vmatprep.subr.mxu0 0.0
  %1962 = vmatpush2.msra.mxu0 0.0
  %1963 = vmatprep.subr.mxu0 0.0
  %1964 = vmatpush2.msra.mxu0 0.0
  %1965 = vmatprep.subr.mxu0 0.0
  %1966 = vmatpush2.msra.mxu0 0.0
  %1967 = vmatprep.subr.mxu0 0.0
  %1968 = vmatpush2.msra.mxu0 0.0
  %1969 = vmatprep.subr.mxu0 0.0
  %1970 = vmatpush2.msra.mxu0 0.0
  %1971 = vmatprep.subr.mxu0 0.0
  %1972 = vmatpush2.msra.mxu0 0.0
  %1973 = vmatprep.subr.mxu0 0.0
  %1974 = vmatpush2.msra.mxu0 0.0
  %1975 = vmatprep.subr.mxu0 0.0
  %1976 = vmatpush2.msra.mxu0 0.0
  %1977 = vmatprep.subr.mxu0 0.0
  %1978 = vmatpush2.msra.mxu0 0.0
  %1979 = vmatprep.subr.mxu0 0.0
  %1980 = vmatpush2.msra.mxu0 0.0
  %1981 = vmatprep.mubr.f32.mxu0 0.0
  %1982 = vmatmul.mubr.f32.gmra.mxu0 %v1915
  %v1983 = vpop.f32.mrf.mxu0
  %v1984 = vadd.f32 %v1913, %v1983
  %v1985 = vpop.f32.mrf.mxu0
  %1986 = vdwg.mxu0
  %v1987 = vadd.f32 %v1845, %v1984
  %s1988 = scalar_lea.vmem %s2, 2176
  %v1989 = vld [vmem:[%s1988] sm:$0x3]
  %s1990 = scalar_lea.vmem %s2, 2208
  %v1991 = vld [vmem:[%s1990] sm:$0x1]
  %1993 = vset.pattern.permute.xlu0 0
  %1994 = vperm.xlu0 %1993, %v1987
  %v1995 = vpop.permute.xlu0 %1994
  %v1997 = vlaneseq
  %v1998 = vshrl.u32 %v1997, 7
  %v1999 = vsub.s32 0, %v1998
  %v2000 = vrot.slane %v1989, %v1999
  %v2001 = vmul.f32 %v1995, %v2000
  %2002 = vset.pattern.permute.xlu0 1
  %2003 = vperm.xlu0 %2002, %v1987
  %v2004 = vpop.permute.xlu0 %2003
  %v2006 = vlaneseq
  %v2007 = vshrl.u32 %v2006, 7
  %v2008 = vsub.s32 1, %v2007
  %v2009 = vrot.slane %v1989, %v2008
  %v2010 = vmul.f32 %v2004, %v2009
  %v2011 = vadd.f32 %v2001, %v2010
  %v2012 = vlaneseq
  %v2013 = vshrl.u32 %v2012, 7
  %v2014 = vsub.s32 0, %v2013
  %v2015 = vrot.slane %v1991, %v2014
  %v2016 = vadd.f32 %v2011, %v2015
  %vm2017 = vcmp.ge.f32.partialorder %v2016, 0.0
  %v2018 = vmul.f32 %v2016, 0.01
  %v2019 = vsel %vm2017, %v2016, %v2018
  %v2020 = vsel %vm458, %v2019, 0.0
  %2021 = vadd.xlane.f32.xlu0 %v2020
  %v2022 = vpop.xlane.xlu0 %2021
  %v2023 = vmul.f32 %v2022, %v869
  %v2024 = vsub.f32 %v2019, %v2023
  %v2025 = vmul.f32 %v2024, %v2024
  %v2026 = vsel %vm458, %v2025, 0.0
  %2027 = vadd.xlane.f32.xlu0 %v2026
  %v2028 = vpop.xlane.xlu0 %2027
  %v2029 = vmul.f32 %v2028, %v869
  %v2030 = vadd.f32 %v2029, 1e-05
  %v2031 = vrsqrt.pop %v2030
  %v2032 = vmul.f32 %v2024, %v2031
  %s2033 = scalar_lea.vmem %s2, 2240
  %v2034 = vld [vmem:[%s2033] sm:$0x1]
  %v2035 = vlaneseq
  %v2036 = vshrl.u32 %v2035, 7
  %v2037 = vsub.s32 0, %v2036
  %v2038 = vrot.slane %v2034, %v2037
  %v2039 = vmul.f32 %v2032, %v2038
  %s2040 = scalar_lea.vmem %s2, 2272
  %v2041 = vld [vmem:[%s2040] sm:$0x1]
  %v2042 = vlaneseq
  %v2043 = vshrl.u32 %v2042, 7
  %v2044 = vsub.s32 0, %v2043
  %v2045 = vrot.slane %v2041, %v2044
  %v2046 = vadd.f32 %v2039, %v2045
  %s2047 = scalar_lea.vmem %s2, 2304
  %v2048 = vld [vmem:[%s2047] sm:$0xff]
  %s2049 = scalar_lea.vmem %s2, 2336
  %v2050 = vld [vmem:[%s2049] sm:$0x1]
  %v2051 = vlaneseq
  %v2052 = vshrl.u32 %v2051, 7
  %v2053 = vsub.s32 0, %v2052
  %v2054 = vrot.slane %v2048, %v2053
  %v2055 = vmul.f32 %v2046, %v2054
  %v2056 = vlaneseq
  %v2057 = vshrl.u32 %v2056, 7
  %v2058 = vsub.s32 1, %v2057
  %v2059 = vrot.slane %v2048, %v2058
  %2061 = vrot.lane.b32.xlu0 %v2059, 1
  %v2062 = vpop.permute.xlu0 %2061
  %v2064 = vmul.f32 %v2046, %v2062
  %2066 = vrot.lane.b32.xlu0 %v2064, 127
  %v2067 = vpop.permute.xlu0 %2066
  %v2069 = vadd.f32 %v2055, %v2067
  %v2070 = vlaneseq
  %v2071 = vshrl.u32 %v2070, 7
  %v2072 = vsub.s32 2, %v2071
  %v2073 = vrot.slane %v2048, %v2072
  %2075 = vrot.lane.b32.xlu0 %v2073, 2
  %v2076 = vpop.permute.xlu0 %2075
  %v2078 = vmul.f32 %v2046, %v2076
  %2080 = vrot.lane.b32.xlu0 %v2078, 126
  %v2081 = vpop.permute.xlu0 %2080
  %v2083 = vadd.f32 %v2069, %v2081
  %v2084 = vlaneseq
  %v2085 = vshrl.u32 %v2084, 7
  %v2086 = vsub.s32 3, %v2085
  %v2087 = vrot.slane %v2048, %v2086
  %2089 = vrot.lane.b32.xlu0 %v2087, 3
  %v2090 = vpop.permute.xlu0 %2089
  %v2092 = vmul.f32 %v2046, %v2090
  %2094 = vrot.lane.b32.xlu0 %v2092, 125
  %v2095 = vpop.permute.xlu0 %2094
  %v2097 = vadd.f32 %v2083, %v2095
  %v2098 = vlaneseq
  %v2099 = vshrl.u32 %v2098, 7
  %v2100 = vsub.s32 4, %v2099
  %v2101 = vrot.slane %v2048, %v2100
  %2103 = vrot.lane.b32.xlu0 %v2101, 4
  %v2104 = vpop.permute.xlu0 %2103
  %v2106 = vmul.f32 %v2046, %v2104
  %2108 = vrot.lane.b32.xlu0 %v2106, 124
  %v2109 = vpop.permute.xlu0 %2108
  %v2111 = vadd.f32 %v2097, %v2109
  %v2112 = vlaneseq
  %v2113 = vshrl.u32 %v2112, 7
  %v2114 = vsub.s32 5, %v2113
  %v2115 = vrot.slane %v2048, %v2114
  %2117 = vrot.lane.b32.xlu0 %v2115, 5
  %v2118 = vpop.permute.xlu0 %2117
  %v2120 = vmul.f32 %v2046, %v2118
  %2122 = vrot.lane.b32.xlu0 %v2120, 123
  %v2123 = vpop.permute.xlu0 %2122
  %v2125 = vadd.f32 %v2111, %v2123
  %v2126 = vlaneseq
  %v2127 = vshrl.u32 %v2126, 7
  %v2128 = vsub.s32 6, %v2127
  %v2129 = vrot.slane %v2048, %v2128
  %2131 = vrot.lane.b32.xlu0 %v2129, 6
  %v2132 = vpop.permute.xlu0 %2131
  %v2134 = vmul.f32 %v2046, %v2132
  %2136 = vrot.lane.b32.xlu0 %v2134, 122
  %v2137 = vpop.permute.xlu0 %2136
  %v2139 = vadd.f32 %v2125, %v2137
  %v2140 = vlaneseq
  %v2141 = vshrl.u32 %v2140, 7
  %v2142 = vsub.s32 7, %v2141
  %v2143 = vrot.slane %v2048, %v2142
  %2145 = vrot.lane.b32.xlu0 %v2143, 7
  %v2146 = vpop.permute.xlu0 %2145
  %v2148 = vmul.f32 %v2046, %v2146
  %2150 = vrot.lane.b32.xlu0 %v2148, 121
  %v2151 = vpop.permute.xlu0 %2150
  %v2153 = vadd.f32 %v2139, %v2151
  %v2154 = vlaneseq
  %v2155 = vshrl.u32 %v2154, 7
  %v2156 = vsub.s32 0, %v2155
  %v2157 = vrot.slane %v2050, %v2156
  %v2158 = vadd.f32 %v2153, %v2157
  %2160 = vrot.lane.b32.xlu0 %v2158, 6
  %v2161 = vpop.permute.xlu0 %2160
  %vm2163 = vcmask 56368
  %2164 = vst.msk [vmem:[%s3] sm:$0xff] %vm2163, %v2161
  %s2165 = scalar_lea.vmem %s2, 2368
  %v2166 = vld [vmem:[%s2165] sm:$0x3]
  %2167 = vset.pattern.permute.xlu0 0
  %2168 = vperm.xlu0 %2167, %v2158
  %v2169 = vpop.permute.xlu0 %2168
  %v2171 = vlaneseq
  %v2172 = vshrl.u32 %v2171, 7
  %v2173 = vsub.s32 0, %v2172
  %v2174 = vrot.slane %v2166, %v2173
  %v2175 = vmul.f32 %v2169, %v2174
  %v2176 = vlaneseq
  %v2177 = vshrl.u32 %v2176, 7
  %v2178 = vsub.s32 1, %v2177
  %v2179 = vrot.slane %v2166, %v2178
  %v2180 = vmul.f32 %v320, %v2179
  %v2181 = vadd.f32 %v2175, %v2180
  %s2182 = scalar_lea.vmem %s2, 2400
  %v2183 = vld [vmem:[%s2182] sm:$0x1]
  %v2184 = vlaneseq
  %v2185 = vshrl.u32 %v2184, 7
  %v2186 = vsub.s32 0, %v2185
  %v2187 = vrot.slane %v2183, %v2186
  %v2188 = vadd.f32 %v2181, %v2187
  %v2189 = vsel %vm1727, %v2188, 0.0
  %2190 = vadd.xlane.f32.xlu0 %v2189
  %v2191 = vpop.xlane.xlu0 %2190
  %v2192 = vmul.f32 %v2191, %v1731
  %v2193 = vsub.f32 %v2188, %v2192
  %v2194 = vmul.f32 %v2193, %v2193
  %v2195 = vsel %vm1727, %v2194, 0.0
  %2196 = vadd.xlane.f32.xlu0 %v2195
  %v2197 = vpop.xlane.xlu0 %2196
  %v2198 = vmul.f32 %v2197, %v1731
  %v2199 = vadd.f32 %v2198, 1e-05
  %v2200 = vrsqrt.pop %v2199
  %v2201 = vmul.f32 %v2193, %v2200
  %s2202 = scalar_lea.vmem %s2, 2432
  %v2203 = vld [vmem:[%s2202] sm:$0x1]
  %v2204 = vlaneseq
  %v2205 = vshrl.u32 %v2204, 7
  %v2206 = vsub.s32 0, %v2205
  %v2207 = vrot.slane %v2203, %v2206
  %v2208 = vmul.f32 %v2201, %v2207
  %s2209 = scalar_lea.vmem %s2, 2464
  %v2210 = vld [vmem:[%s2209] sm:$0x1]
  %v2211 = vlaneseq
  %v2212 = vshrl.u32 %v2211, 7
  %v2213 = vsub.s32 0, %v2212
  %v2214 = vrot.slane %v2210, %v2213
  %v2215 = vadd.f32 %v2208, %v2214
  %v2216 = vmax.f32 %v2215, 0.0
  %s2217 = scalar_lea.vmem %s2, 2496
  %v2218 = vld [vmem:[%s2217] sm:$0x3]
  %s2219 = scalar_lea.vmem %s2, 2528
  %v2220 = vld [vmem:[%s2219] sm:$0x1]
  %v2221 = vlaneseq
  %v2222 = vshrl.u32 %v2221, 7
  %v2223 = vsub.s32 0, %v2222
  %v2224 = vrot.slane %v2218, %v2223
  %v2225 = vmul.f32 %v2216, %v2224
  %v2226 = vlaneseq
  %v2227 = vshrl.u32 %v2226, 7
  %v2228 = vsub.s32 1, %v2227
  %v2229 = vrot.slane %v2218, %v2228
  %2231 = vrot.lane.b32.xlu0 %v2229, 1
  %v2232 = vpop.permute.xlu0 %2231
  %v2234 = vmul.f32 %v2216, %v2232
  %2236 = vrot.lane.b32.xlu0 %v2234, 127
  %v2237 = vpop.permute.xlu0 %2236
  %v2239 = vadd.f32 %v2225, %v2237
  %v2240 = vlaneseq
  %v2241 = vshrl.u32 %v2240, 7
  %v2242 = vsub.s32 0, %v2241
  %v2243 = vrot.slane %v2220, %v2242
  %v2244 = vadd.f32 %v2239, %v2243
  %2246 = vrot.lane.b32.xlu0 %v2244, 7
  %v2247 = vpop.permute.xlu0 %2246
  %vm2249 = vcmask 64568
  %2250 = vst.msk [vmem:[%s3] sm:$0xff] %vm2249, %v2247
  %v2251 = vld [vmem:[%s3] sm:$0xff]
  %v2252 = vlaneseq
  %v2253 = vshrl.u32 %v2252, 7
  %v2254 = vsub.s32 0, %v2253
  %v2255 = vrot.slane %v2251, %v2254
  %v2256 = vsub.f32 %v2251, %v2255
  %2258 = vrot.lane.b32.xlu0 %v2256, 124
  %v2259 = vpop.permute.xlu0 %2258
  %vm2261 = vcmask 7168
  %2262 = vst.msk [vmem:[#allocation3] sm:$0xff] %vm2261, %v2259
  %2263 = vrot.lane.b32.xlu0 %v1387, 127
  %v2264 = vpop.permute.xlu0 %2263
  %vm2266 = vcmask 15368
  %2267 = vst.msk [vmem:[#allocation3] sm:$0xff] %vm2266, %v2264
  %v2268 = vld [vmem:[#allocation3] sm:$0xff]
  %s2269 = scalar_lea.vmem %s2, 2624
  %v2270 = vld [vmem:[%s2269] sm:$0xff]
  %v2271 = vsel %vm1727, %v2268, 0.0
  %2272 = vadd.xlane.f32.xlu0 %v2271
  %v2273 = vpop.xlane.xlu0 %2272
  %v2274 = vmul.f32 %v2273, %v1731
  %v2275 = vsub.f32 %v2268, %v2274
  %v2276 = vmul.f32 %v2275, %v2275
  %v2277 = vsel %vm1727, %v2276, 0.0
  %2278 = vadd.xlane.f32.xlu0 %v2277
  %v2279 = vpop.xlane.xlu0 %2278
  %v2280 = vmul.f32 %v2279, %v1731
  %v2281 = vadd.f32 %v2280, 1e-05
  %v2282 = vrsqrt.pop %v2281
  %v2283 = vmul.f32 %v2275, %v2282
  %s2284 = scalar_lea.vmem %s2, 2560
  %v2285 = vld [vmem:[%s2284] sm:$0x1]
  %v2286 = vlaneseq
  %v2287 = vshrl.u32 %v2286, 7
  %v2288 = vsub.s32 0, %v2287
  %v2289 = vrot.slane %v2285, %v2288
  %v2290 = vmul.f32 %v2283, %v2289
  %s2291 = scalar_lea.vmem %s2, 2592
  %v2292 = vld [vmem:[%s2291] sm:$0x1]
  %v2293 = vlaneseq
  %v2294 = vshrl.u32 %v2293, 7
  %v2295 = vsub.s32 0, %v2294
  %v2296 = vrot.slane %v2292, %v2295
  %v2297 = vadd.f32 %v2290, %v2296
  %s2298 = scalar_lea.vmem %s2, 2656
  %v2299 = vld [vmem:[%s2298] sm:$0xff]
  %2301 = vset.pattern.permute.xlu0 0
  %2302 = vperm.xlu0 %2301, %v2270
  %v2303 = vpop.permute.xlu0 %2302
  %v2305 = vlaneseq
  %v2306 = vshrl.u32 %v2305, 7
  %v2307 = vsub.s32 0, %v2306
  %v2308 = vrot.slane %v2297, %v2307
  %v2309 = vmul.f32 %v2303, %v2308
  %2310 = vset.pattern.permute.xlu0 1
  %2311 = vperm.xlu0 %2310, %v2270
  %v2312 = vpop.permute.xlu0 %2311
  %v2314 = vlaneseq
  %v2315 = vshrl.u32 %v2314, 7
  %v2316 = vsub.s32 1, %v2315
  %v2317 = vrot.slane %v2297, %v2316
  %v2318 = vmul.f32 %v2312, %v2317
  %v2319 = vadd.f32 %v2309, %v2318
  %2320 = vset.pattern.permute.xlu0 2
  %2321 = vperm.xlu0 %2320, %v2270
  %v2322 = vpop.permute.xlu0 %2321
  %v2324 = vlaneseq
  %v2325 = vshrl.u32 %v2324, 7
  %v2326 = vsub.s32 2, %v2325
  %v2327 = vrot.slane %v2297, %v2326
  %v2328 = vmul.f32 %v2322, %v2327
  %v2329 = vadd.f32 %v2319, %v2328
  %2330 = vset.pattern.permute.xlu0 3
  %2331 = vperm.xlu0 %2330, %v2270
  %v2332 = vpop.permute.xlu0 %2331
  %v2334 = vlaneseq
  %v2335 = vshrl.u32 %v2334, 7
  %v2336 = vsub.s32 3, %v2335
  %v2337 = vrot.slane %v2297, %v2336
  %v2338 = vmul.f32 %v2332, %v2337
  %v2339 = vadd.f32 %v2329, %v2338
  %2340 = vset.pattern.permute.xlu0 4
  %2341 = vperm.xlu0 %2340, %v2270
  %v2342 = vpop.permute.xlu0 %2341
  %v2344 = vlaneseq
  %v2345 = vshrl.u32 %v2344, 7
  %v2346 = vsub.s32 4, %v2345
  %v2347 = vrot.slane %v2297, %v2346
  %v2348 = vmul.f32 %v2342, %v2347
  %v2349 = vadd.f32 %v2339, %v2348
  %2350 = vset.pattern.permute.xlu0 5
  %2351 = vperm.xlu0 %2350, %v2270
  %v2352 = vpop.permute.xlu0 %2351
  %v2354 = vlaneseq
  %v2355 = vshrl.u32 %v2354, 7
  %v2356 = vsub.s32 5, %v2355
  %v2357 = vrot.slane %v2297, %v2356
  %v2358 = vmul.f32 %v2352, %v2357
  %v2359 = vadd.f32 %v2349, %v2358
  %2360 = vset.pattern.permute.xlu0 6
  %2361 = vperm.xlu0 %2360, %v2270
  %v2362 = vpop.permute.xlu0 %2361
  %v2364 = vlaneseq
  %v2365 = vshrl.u32 %v2364, 7
  %v2366 = vsub.s32 6, %v2365
  %v2367 = vrot.slane %v2297, %v2366
  %v2368 = vmul.f32 %v2362, %v2367
  %v2369 = vadd.f32 %v2359, %v2368
  %2370 = vset.pattern.permute.xlu0 7
  %2371 = vperm.xlu0 %2370, %v2270
  %v2372 = vpop.permute.xlu0 %2371
  %v2374 = vlaneseq
  %v2375 = vshrl.u32 %v2374, 7
  %v2376 = vsub.s32 7, %v2375
  %v2377 = vrot.slane %v2297, %v2376
  %v2378 = vmul.f32 %v2372, %v2377
  %v2379 = vadd.f32 %v2369, %v2378
  %2381 = vset.pattern.permute.xlu0 0
  %2382 = vperm.xlu0 %2381, %v2299
  %v2383 = vpop.permute.xlu0 %2382
  %v2385 = vadd.f32 %v2379, %v2383
  %v2386 = vmax.f32 %v2385, 0.0
  %v2387 = vadd.f32 %v2268, %v2386
  %v2388 = vsel %vm1727, %v2387, 0.0
  %2389 = vadd.xlane.f32.xlu0 %v2388
  %v2390 = vpop.xlane.xlu0 %2389
  %v2391 = vmul.f32 %v2390, %v1731
  %v2392 = vsub.f32 %v2387, %v2391
  %v2393 = vmul.f32 %v2392, %v2392
  %v2394 = vsel %vm1727, %v2393, 0.0
  %2395 = vadd.xlane.f32.xlu0 %v2394
  %v2396 = vpop.xlane.xlu0 %2395
  %v2397 = vmul.f32 %v2396, %v1731
  %v2398 = vadd.f32 %v2397, 1e-05
  %v2399 = vrsqrt.pop %v2398
  %v2400 = vmul.f32 %v2392, %v2399
  %s2401 = scalar_lea.vmem %s2, 2688
  %v2402 = vld [vmem:[%s2401] sm:$0x1]
  %v2403 = vlaneseq
  %v2404 = vshrl.u32 %v2403, 7
  %v2405 = vsub.s32 0, %v2404
  %v2406 = vrot.slane %v2402, %v2405
  %v2407 = vmul.f32 %v2400, %v2406
  %s2408 = scalar_lea.vmem %s2, 2720
  %v2409 = vld [vmem:[%s2408] sm:$0x1]
  %v2410 = vlaneseq
  %v2411 = vshrl.u32 %v2410, 7
  %v2412 = vsub.s32 0, %v2411
  %v2413 = vrot.slane %v2409, %v2412
  %v2414 = vadd.f32 %v2407, %v2413
  %s2415 = scalar_lea.vmem %s2, 2752
  %v2416 = vld [vmem:[%s2415] sm:$0x3]
  %s2417 = scalar_lea.vmem %s2, 2784
  %v2418 = vld [vmem:[%s2417] sm:$0x1]
  %2420 = vset.pattern.permute.xlu0 0
  %2421 = vperm.xlu0 %2420, %v2414
  %v2422 = vpop.permute.xlu0 %2421
  %v2424 = vlaneseq
  %v2425 = vshrl.u32 %v2424, 7
  %v2426 = vsub.s32 0, %v2425
  %v2427 = vrot.slane %v2416, %v2426
  %v2428 = vmul.f32 %v2422, %v2427
  %2429 = vset.pattern.permute.xlu0 1
  %2430 = vperm.xlu0 %2429, %v2414
  %v2431 = vpop.permute.xlu0 %2430
  %v2433 = vlaneseq
  %v2434 = vshrl.u32 %v2433, 7
  %v2435 = vsub.s32 1, %v2434
  %v2436 = vrot.slane %v2416, %v2435
  %v2437 = vmul.f32 %v2431, %v2436
  %v2438 = vadd.f32 %v2428, %v2437
  %v2439 = vlaneseq
  %v2440 = vshrl.u32 %v2439, 7
  %v2441 = vsub.s32 0, %v2440
  %v2442 = vrot.slane %v2418, %v2441
  %v2443 = vadd.f32 %v2438, %v2442
  %v2444 = vmax.f32 %v2443, 0.0
  %s2445 = scalar_lea.vmem %s2, 2816
  %v2446 = vld [vmem:[%s2445] sm:$0xff]
  %v2447 = vld [vmem:[%s2445 + $0x8] sm:$0xff]
  %v2448 = vld [vmem:[%s2445 + $0x10] sm:$0xff]
  %v2449 = vld [vmem:[%s2445 + $0x18] sm:$0xff]
  %s2450 = scalar_lea.vmem %s2, 2848
  %v2451 = vld [vmem:[%s2450] sm:$0x1]
  %v2452 = vlaneseq
  %v2453 = vshrl.u32 %v2452, 7
  %v2454 = vsub.s32 0, %v2453
  %v2455 = vrot.slane %v2451, %v2454
  %v2457 = vsel %vm238, %v2444, 0
  %2459 = vmatprep.subr.mxu0 0.0
  %2460 = vmatpush1.msra.mxu0 0.0
  %2461 = vmatprep.subr.mxu0 0.0
  %2462 = vmatpush1.msra.mxu0 0.0
  %2463 = vmatprep.subr.mxu0 0.0
  %2464 = vmatpush1.msra.mxu0 0.0
  %2465 = vmatprep.subr.mxu0 0.0
  %2466 = vmatpush1.msra.mxu0 0.0
  %2467 = vmatprep.subr.mxu0 0.0
  %2468 = vmatpush1.msra.mxu0 0.0
  %2469 = vmatprep.subr.mxu0 0.0
  %2470 = vmatpush1.msra.mxu0 0.0
  %2471 = vmatprep.subr.mxu0 0.0
  %2472 = vmatpush1.msra.mxu0 0.0
  %2473 = vmatprep.subr.mxu0 0.0
  %2474 = vmatpush1.msra.mxu0 0.0
  %2475 = vmatprep.subr.mxu0 0.0
  %2476 = vmatpush1.msra.mxu0 0.0
  %2477 = vmatprep.subr.mxu0 0.0
  %2478 = vmatpush1.msra.mxu0 0.0
  %2479 = vmatprep.subr.mxu0 0.0
  %2480 = vmatpush1.msra.mxu0 0.0
  %2481 = vmatprep.subr.mxu0 0.0
  %2482 = vmatpush1.msra.mxu0 0.0
  %2483 = vmatprep.subr.mxu0 0.0
  %2484 = vmatpush1.msra.mxu0 %v2449
  %2485 = vmatprep.subr.mxu0 0.0
  %2486 = vmatpush1.msra.mxu0 %v2448
  %2487 = vmatprep.subr.mxu0 0.0
  %2488 = vmatpush1.msra.mxu0 %v2447
  %2489 = vmatprep.subr.mxu0 0.0
  %2490 = vmatpush1.msra.mxu0 %v2446
  %2491 = vmatprep.subr.mxu0 0.0
  %2492 = vmatpush2.msra.mxu0 0.0
  %2493 = vmatprep.subr.mxu0 0.0
  %2494 = vmatpush2.msra.mxu0 0.0
  %2495 = vmatprep.subr.mxu0 0.0
  %2496 = vmatpush2.msra.mxu0 0.0
  %2497 = vmatprep.subr.mxu0 0.0
  %2498 = vmatpush2.msra.mxu0 0.0
  %2499 = vmatprep.subr.mxu0 0.0
  %2500 = vmatpush2.msra.mxu0 0.0
  %2501 = vmatprep.subr.mxu0 0.0
  %2502 = vmatpush2.msra.mxu0 0.0
  %2503 = vmatprep.subr.mxu0 0.0
  %2504 = vmatpush2.msra.mxu0 0.0
  %2505 = vmatprep.subr.mxu0 0.0
  %2506 = vmatpush2.msra.mxu0 0.0
  %2507 = vmatprep.subr.mxu0 0.0
  %2508 = vmatpush2.msra.mxu0 0.0
  %2509 = vmatprep.subr.mxu0 0.0
  %2510 = vmatpush2.msra.mxu0 0.0
  %2511 = vmatprep.subr.mxu0 0.0
  %2512 = vmatpush2.msra.mxu0 0.0
  %2513 = vmatprep.subr.mxu0 0.0
  %2514 = vmatpush2.msra.mxu0 0.0
  %2515 = vmatprep.subr.mxu0 0.0
  %2516 = vmatpush2.msra.mxu0 0.0
  %2517 = vmatprep.subr.mxu0 0.0
  %2518 = vmatpush2.msra.mxu0 0.0
  %2519 = vmatprep.subr.mxu0 0.0
  %2520 = vmatpush2.msra.mxu0 0.0
  %2521 = vmatprep.subr.mxu0 0.0
  %2522 = vmatpush2.msra.mxu0 0.0
  %2523 = vmatprep.mubr.f32.mxu0 0.0
  %2524 = vmatmul.mubr.f32.gmra.mxu0 %v2457
  %v2525 = vpop.f32.mrf.mxu0
  %v2526 = vadd.f32 %v2455, %v2525
  %v2527 = vpop.f32.mrf.mxu0
  %2528 = vdwg.mxu0
  %v2529 = vadd.f32 %v2387, %v2526
  %s2530 = scalar_lea.vmem %s2, 2944
  %v2531 = vld [vmem:[%s2530] sm:$0xff]
  %v2532 = vsel %vm1727, %v2529, 0.0
  %2533 = vadd.xlane.f32.xlu0 %v2532
  %v2534 = vpop.xlane.xlu0 %2533
  %v2535 = vmul.f32 %v2534, %v1731
  %v2536 = vsub.f32 %v2529, %v2535
  %v2537 = vmul.f32 %v2536, %v2536
  %v2538 = vsel %vm1727, %v2537, 0.0
  %2539 = vadd.xlane.f32.xlu0 %v2538
  %v2540 = vpop.xlane.xlu0 %2539
  %v2541 = vmul.f32 %v2540, %v1731
  %v2542 = vadd.f32 %v2541, 1e-05
  %v2543 = vrsqrt.pop %v2542
  %v2544 = vmul.f32 %v2536, %v2543
  %s2545 = scalar_lea.vmem %s2, 2880
  %v2546 = vld [vmem:[%s2545] sm:$0x1]
  %v2547 = vlaneseq
  %v2548 = vshrl.u32 %v2547, 7
  %v2549 = vsub.s32 0, %v2548
  %v2550 = vrot.slane %v2546, %v2549
  %v2551 = vmul.f32 %v2544, %v2550
  %s2552 = scalar_lea.vmem %s2, 2912
  %v2553 = vld [vmem:[%s2552] sm:$0x1]
  %v2554 = vlaneseq
  %v2555 = vshrl.u32 %v2554, 7
  %v2556 = vsub.s32 0, %v2555
  %v2557 = vrot.slane %v2553, %v2556
  %v2558 = vadd.f32 %v2551, %v2557
  %s2559 = scalar_lea.vmem %s2, 2976
  %v2560 = vld [vmem:[%s2559] sm:$0xff]
  %2562 = vset.pattern.permute.xlu0 0
  %2563 = vperm.xlu0 %2562, %v2531
  %v2564 = vpop.permute.xlu0 %2563
  %v2566 = vlaneseq
  %v2567 = vshrl.u32 %v2566, 7
  %v2568 = vsub.s32 0, %v2567
  %v2569 = vrot.slane %v2558, %v2568
  %v2570 = vmul.f32 %v2564, %v2569
  %2571 = vset.pattern.permute.xlu0 1
  %2572 = vperm.xlu0 %2571, %v2531
  %v2573 = vpop.permute.xlu0 %2572
  %v2575 = vlaneseq
  %v2576 = vshrl.u32 %v2575, 7
  %v2577 = vsub.s32 1, %v2576
  %v2578 = vrot.slane %v2558, %v2577
  %v2579 = vmul.f32 %v2573, %v2578
  %v2580 = vadd.f32 %v2570, %v2579
  %2581 = vset.pattern.permute.xlu0 2
  %2582 = vperm.xlu0 %2581, %v2531
  %v2583 = vpop.permute.xlu0 %2582
  %v2585 = vlaneseq
  %v2586 = vshrl.u32 %v2585, 7
  %v2587 = vsub.s32 2, %v2586
  %v2588 = vrot.slane %v2558, %v2587
  %v2589 = vmul.f32 %v2583, %v2588
  %v2590 = vadd.f32 %v2580, %v2589
  %2591 = vset.pattern.permute.xlu0 3
  %2592 = vperm.xlu0 %2591, %v2531
  %v2593 = vpop.permute.xlu0 %2592
  %v2595 = vlaneseq
  %v2596 = vshrl.u32 %v2595, 7
  %v2597 = vsub.s32 3, %v2596
  %v2598 = vrot.slane %v2558, %v2597
  %v2599 = vmul.f32 %v2593, %v2598
  %v2600 = vadd.f32 %v2590, %v2599
  %2601 = vset.pattern.permute.xlu0 4
  %2602 = vperm.xlu0 %2601, %v2531
  %v2603 = vpop.permute.xlu0 %2602
  %v2605 = vlaneseq
  %v2606 = vshrl.u32 %v2605, 7
  %v2607 = vsub.s32 4, %v2606
  %v2608 = vrot.slane %v2558, %v2607
  %v2609 = vmul.f32 %v2603, %v2608
  %v2610 = vadd.f32 %v2600, %v2609
  %2611 = vset.pattern.permute.xlu0 5
  %2612 = vperm.xlu0 %2611, %v2531
  %v2613 = vpop.permute.xlu0 %2612
  %v2615 = vlaneseq
  %v2616 = vshrl.u32 %v2615, 7
  %v2617 = vsub.s32 5, %v2616
  %v2618 = vrot.slane %v2558, %v2617
  %v2619 = vmul.f32 %v2613, %v2618
  %v2620 = vadd.f32 %v2610, %v2619
  %2621 = vset.pattern.permute.xlu0 6
  %2622 = vperm.xlu0 %2621, %v2531
  %v2623 = vpop.permute.xlu0 %2622
  %v2625 = vlaneseq
  %v2626 = vshrl.u32 %v2625, 7
  %v2627 = vsub.s32 6, %v2626
  %v2628 = vrot.slane %v2558, %v2627
  %v2629 = vmul.f32 %v2623, %v2628
  %v2630 = vadd.f32 %v2620, %v2629
  %2631 = vset.pattern.permute.xlu0 7
  %2632 = vperm.xlu0 %2631, %v2531
  %v2633 = vpop.permute.xlu0 %2632
  %v2635 = vlaneseq
  %v2636 = vshrl.u32 %v2635, 7
  %v2637 = vsub.s32 7, %v2636
  %v2638 = vrot.slane %v2558, %v2637
  %v2639 = vmul.f32 %v2633, %v2638
  %v2640 = vadd.f32 %v2630, %v2639
  %2642 = vset.pattern.permute.xlu0 0
  %2643 = vperm.xlu0 %2642, %v2560
  %v2644 = vpop.permute.xlu0 %2643
  %v2646 = vadd.f32 %v2640, %v2644
  %v2647 = vmax.f32 %v2646, 0.0
  %v2648 = vadd.f32 %v2529, %v2647
  %v2649 = vsel %vm1727, %v2648, 0.0
  %2650 = vadd.xlane.f32.xlu0 %v2649
  %v2651 = vpop.xlane.xlu0 %2650
  %v2652 = vmul.f32 %v2651, %v1731
  %v2653 = vsub.f32 %v2648, %v2652
  %v2654 = vmul.f32 %v2653, %v2653
  %v2655 = vsel %vm1727, %v2654, 0.0
  %2656 = vadd.xlane.f32.xlu0 %v2655
  %v2657 = vpop.xlane.xlu0 %2656
  %v2658 = vmul.f32 %v2657, %v1731
  %v2659 = vadd.f32 %v2658, 1e-05
  %v2660 = vrsqrt.pop %v2659
  %v2661 = vmul.f32 %v2653, %v2660
  %s2662 = scalar_lea.vmem %s2, 3008
  %v2663 = vld [vmem:[%s2662] sm:$0x1]
  %v2664 = vlaneseq
  %v2665 = vshrl.u32 %v2664, 7
  %v2666 = vsub.s32 0, %v2665
  %v2667 = vrot.slane %v2663, %v2666
  %v2668 = vmul.f32 %v2661, %v2667
  %s2669 = scalar_lea.vmem %s2, 3040
  %v2670 = vld [vmem:[%s2669] sm:$0x1]
  %v2671 = vlaneseq
  %v2672 = vshrl.u32 %v2671, 7
  %v2673 = vsub.s32 0, %v2672
  %v2674 = vrot.slane %v2670, %v2673
  %v2675 = vadd.f32 %v2668, %v2674
  %s2676 = scalar_lea.vmem %s2, 3072
  %v2677 = vld [vmem:[%s2676] sm:$0x3]
  %s2678 = scalar_lea.vmem %s2, 3104
  %v2679 = vld [vmem:[%s2678] sm:$0x1]
  %2681 = vset.pattern.permute.xlu0 0
  %2682 = vperm.xlu0 %2681, %v2675
  %v2683 = vpop.permute.xlu0 %2682
  %v2685 = vlaneseq
  %v2686 = vshrl.u32 %v2685, 7
  %v2687 = vsub.s32 0, %v2686
  %v2688 = vrot.slane %v2677, %v2687
  %v2689 = vmul.f32 %v2683, %v2688
  %2690 = vset.pattern.permute.xlu0 1
  %2691 = vperm.xlu0 %2690, %v2675
  %v2692 = vpop.permute.xlu0 %2691
  %v2694 = vlaneseq
  %v2695 = vshrl.u32 %v2694, 7
  %v2696 = vsub.s32 1, %v2695
  %v2697 = vrot.slane %v2677, %v2696
  %v2698 = vmul.f32 %v2692, %v2697
  %v2699 = vadd.f32 %v2689, %v2698
  %v2700 = vlaneseq
  %v2701 = vshrl.u32 %v2700, 7
  %v2702 = vsub.s32 0, %v2701
  %v2703 = vrot.slane %v2679, %v2702
  %v2704 = vadd.f32 %v2699, %v2703
  %v2705 = vmax.f32 %v2704, 0.0
  %s2706 = scalar_lea.vmem %s2, 3136
  %v2707 = vld [vmem:[%s2706] sm:$0xff]
  %v2708 = vld [vmem:[%s2706 + $0x8] sm:$0xff]
  %v2709 = vld [vmem:[%s2706 + $0x10] sm:$0xff]
  %v2710 = vld [vmem:[%s2706 + $0x18] sm:$0xff]
  %s2711 = scalar_lea.vmem %s2, 3168
  %v2712 = vld [vmem:[%s2711] sm:$0x1]
  %v2713 = vlaneseq
  %v2714 = vshrl.u32 %v2713, 7
  %v2715 = vsub.s32 0, %v2714
  %v2716 = vrot.slane %v2712, %v2715
  %v2718 = vsel %vm238, %v2705, 0
  %2720 = vmatprep.subr.mxu0 0.0
  %2721 = vmatpush1.msra.mxu0 0.0
  %2722 = vmatprep.subr.mxu0 0.0
  %2723 = vmatpush1.msra.mxu0 0.0
  %2724 = vmatprep.subr.mxu0 0.0
  %2725 = vmatpush1.msra.mxu0 0.0
  %2726 = vmatprep.subr.mxu0 0.0
  %2727 = vmatpush1.msra.mxu0 0.0
  %2728 = vmatprep.subr.mxu0 0.0
  %2729 = vmatpush1.msra.mxu0 0.0
  %2730 = vmatprep.subr.mxu0 0.0
  %2731 = vmatpush1.msra.mxu0 0.0
  %2732 = vmatprep.subr.mxu0 0.0
  %2733 = vmatpush1.msra.mxu0 0.0
  %2734 = vmatprep.subr.mxu0 0.0
  %2735 = vmatpush1.msra.mxu0 0.0
  %2736 = vmatprep.subr.mxu0 0.0
  %2737 = vmatpush1.msra.mxu0 0.0
  %2738 = vmatprep.subr.mxu0 0.0
  %2739 = vmatpush1.msra.mxu0 0.0
  %2740 = vmatprep.subr.mxu0 0.0
  %2741 = vmatpush1.msra.mxu0 0.0
  %2742 = vmatprep.subr.mxu0 0.0
  %2743 = vmatpush1.msra.mxu0 0.0
  %2744 = vmatprep.subr.mxu0 0.0
  %2745 = vmatpush1.msra.mxu0 %v2710
  %2746 = vmatprep.subr.mxu0 0.0
  %2747 = vmatpush1.msra.mxu0 %v2709
  %2748 = vmatprep.subr.mxu0 0.0
  %2749 = vmatpush1.msra.mxu0 %v2708
  %2750 = vmatprep.subr.mxu0 0.0
  %2751 = vmatpush1.msra.mxu0 %v2707
  %2752 = vmatprep.subr.mxu0 0.0
  %2753 = vmatpush2.msra.mxu0 0.0
  %2754 = vmatprep.subr.mxu0 0.0
  %2755 = vmatpush2.msra.mxu0 0.0
  %2756 = vmatprep.subr.mxu0 0.0
  %2757 = vmatpush2.msra.mxu0 0.0
  %2758 = vmatprep.subr.mxu0 0.0
  %2759 = vmatpush2.msra.mxu0 0.0
  %2760 = vmatprep.subr.mxu0 0.0
  %2761 = vmatpush2.msra.mxu0 0.0
  %2762 = vmatprep.subr.mxu0 0.0
  %2763 = vmatpush2.msra.mxu0 0.0
  %2764 = vmatprep.subr.mxu0 0.0
  %2765 = vmatpush2.msra.mxu0 0.0
  %2766 = vmatprep.subr.mxu0 0.0
  %2767 = vmatpush2.msra.mxu0 0.0
  %2768 = vmatprep.subr.mxu0 0.0
  %2769 = vmatpush2.msra.mxu0 0.0
  %2770 = vmatprep.subr.mxu0 0.0
  %2771 = vmatpush2.msra.mxu0 0.0
  %2772 = vmatprep.subr.mxu0 0.0
  %2773 = vmatpush2.msra.mxu0 0.0
  %2774 = vmatprep.subr.mxu0 0.0
  %2775 = vmatpush2.msra.mxu0 0.0
  %2776 = vmatprep.subr.mxu0 0.0
  %2777 = vmatpush2.msra.mxu0 0.0
  %2778 = vmatprep.subr.mxu0 0.0
  %2779 = vmatpush2.msra.mxu0 0.0
  %2780 = vmatprep.subr.mxu0 0.0
  %2781 = vmatpush2.msra.mxu0 0.0
  %2782 = vmatprep.subr.mxu0 0.0
  %2783 = vmatpush2.msra.mxu0 0.0
  %2784 = vmatprep.mubr.f32.mxu0 0.0
  %2785 = vmatmul.mubr.f32.gmra.mxu0 %v2718
  %v2786 = vpop.f32.mrf.mxu0
  %v2787 = vadd.f32 %v2716, %v2786
  %v2788 = vpop.f32.mrf.mxu0
  %2789 = vdwg.mxu0
  %v2790 = vadd.f32 %v2648, %v2787
  %s2791 = scalar_lea.vmem %s2, 3200
  %v2792 = vld [vmem:[%s2791] sm:$0x3]
  %s2793 = scalar_lea.vmem %s2, 3232
  %v2794 = vld [vmem:[%s2793] sm:$0x1]
  %2796 = vset.pattern.permute.xlu0 0
  %2797 = vperm.xlu0 %2796, %v2790
  %v2798 = vpop.permute.xlu0 %2797
  %v2800 = vlaneseq
  %v2801 = vshrl.u32 %v2800, 7
  %v2802 = vsub.s32 0, %v2801
  %v2803 = vrot.slane %v2792, %v2802
  %v2804 = vmul.f32 %v2798, %v2803
  %2805 = vset.pattern.permute.xlu0 1
  %2806 = vperm.xlu0 %2805, %v2790
  %v2807 = vpop.permute.xlu0 %2806
  %v2809 = vlaneseq
  %v2810 = vshrl.u32 %v2809, 7
  %v2811 = vsub.s32 1, %v2810
  %v2812 = vrot.slane %v2792, %v2811
  %v2813 = vmul.f32 %v2807, %v2812
  %v2814 = vadd.f32 %v2804, %v2813
  %v2815 = vlaneseq
  %v2816 = vshrl.u32 %v2815, 7
  %v2817 = vsub.s32 0, %v2816
  %v2818 = vrot.slane %v2794, %v2817
  %v2819 = vadd.f32 %v2814, %v2818
  %vm2820 = vcmp.ge.f32.partialorder %v2819, 0.0
  %v2821 = vmul.f32 %v2819, 0.01
  %v2822 = vsel %vm2820, %v2819, %v2821
  %v2823 = vsel %vm458, %v2822, 0.0
  %2824 = vadd.xlane.f32.xlu0 %v2823
  %v2825 = vpop.xlane.xlu0 %2824
  %v2826 = vmul.f32 %v2825, %v869
  %v2827 = vsub.f32 %v2822, %v2826
  %v2828 = vmul.f32 %v2827, %v2827
  %v2829 = vsel %vm458, %v2828, 0.0
  %2830 = vadd.xlane.f32.xlu0 %v2829
  %v2831 = vpop.xlane.xlu0 %2830
  %v2832 = vmul.f32 %v2831, %v869
  %v2833 = vadd.f32 %v2832, 1e-05
  %v2834 = vrsqrt.pop %v2833
  %v2835 = vmul.f32 %v2827, %v2834
  %s2836 = scalar_lea.vmem %s2, 3264
  %v2837 = vld [vmem:[%s2836] sm:$0x1]
  %v2838 = vlaneseq
  %v2839 = vshrl.u32 %v2838, 7
  %v2840 = vsub.s32 0, %v2839
  %v2841 = vrot.slane %v2837, %v2840
  %v2842 = vmul.f32 %v2835, %v2841
  %s2843 = scalar_lea.vmem %s2, 3296
  %v2844 = vld [vmem:[%s2843] sm:$0x1]
  %v2845 = vlaneseq
  %v2846 = vshrl.u32 %v2845, 7
  %v2847 = vsub.s32 0, %v2846
  %v2848 = vrot.slane %v2844, %v2847
  %v2849 = vadd.f32 %v2842, %v2848
  %s2850 = scalar_lea.vmem %s2, 3328
  %v2851 = vld [vmem:[%s2850] sm:$0xff]
  %s2852 = scalar_lea.vmem %s2, 3360
  %v2853 = vld [vmem:[%s2852] sm:$0x1]
  %v2854 = vlaneseq
  %v2855 = vshrl.u32 %v2854, 7
  %v2856 = vsub.s32 0, %v2855
  %v2857 = vrot.slane %v2851, %v2856
  %v2858 = vmul.f32 %v2849, %v2857
  %v2859 = vlaneseq
  %v2860 = vshrl.u32 %v2859, 7
  %v2861 = vsub.s32 1, %v2860
  %v2862 = vrot.slane %v2851, %v2861
  %2864 = vrot.lane.b32.xlu0 %v2862, 1
  %v2865 = vpop.permute.xlu0 %2864
  %v2867 = vmul.f32 %v2849, %v2865
  %2869 = vrot.lane.b32.xlu0 %v2867, 127
  %v2870 = vpop.permute.xlu0 %2869
  %v2872 = vadd.f32 %v2858, %v2870
  %v2873 = vlaneseq
  %v2874 = vshrl.u32 %v2873, 7
  %v2875 = vsub.s32 2, %v2874
  %v2876 = vrot.slane %v2851, %v2875
  %2878 = vrot.lane.b32.xlu0 %v2876, 2
  %v2879 = vpop.permute.xlu0 %2878
  %v2881 = vmul.f32 %v2849, %v2879
  %2883 = vrot.lane.b32.xlu0 %v2881, 126
  %v2884 = vpop.permute.xlu0 %2883
  %v2886 = vadd.f32 %v2872, %v2884
  %v2887 = vlaneseq
  %v2888 = vshrl.u32 %v2887, 7
  %v2889 = vsub.s32 3, %v2888
  %v2890 = vrot.slane %v2851, %v2889
  %2892 = vrot.lane.b32.xlu0 %v2890, 3
  %v2893 = vpop.permute.xlu0 %2892
  %v2895 = vmul.f32 %v2849, %v2893
  %2897 = vrot.lane.b32.xlu0 %v2895, 125
  %v2898 = vpop.permute.xlu0 %2897
  %v2900 = vadd.f32 %v2886, %v2898
  %v2901 = vlaneseq
  %v2902 = vshrl.u32 %v2901, 7
  %v2903 = vsub.s32 4, %v2902
  %v2904 = vrot.slane %v2851, %v2903
  %2906 = vrot.lane.b32.xlu0 %v2904, 4
  %v2907 = vpop.permute.xlu0 %2906
  %v2909 = vmul.f32 %v2849, %v2907
  %2911 = vrot.lane.b32.xlu0 %v2909, 124
  %v2912 = vpop.permute.xlu0 %2911
  %v2914 = vadd.f32 %v2900, %v2912
  %v2915 = vlaneseq
  %v2916 = vshrl.u32 %v2915, 7
  %v2917 = vsub.s32 5, %v2916
  %v2918 = vrot.slane %v2851, %v2917
  %2920 = vrot.lane.b32.xlu0 %v2918, 5
  %v2921 = vpop.permute.xlu0 %2920
  %v2923 = vmul.f32 %v2849, %v2921
  %2925 = vrot.lane.b32.xlu0 %v2923, 123
  %v2926 = vpop.permute.xlu0 %2925
  %v2928 = vadd.f32 %v2914, %v2926
  %v2929 = vlaneseq
  %v2930 = vshrl.u32 %v2929, 7
  %v2931 = vsub.s32 6, %v2930
  %v2932 = vrot.slane %v2851, %v2931
  %2934 = vrot.lane.b32.xlu0 %v2932, 6
  %v2935 = vpop.permute.xlu0 %2934
  %v2937 = vmul.f32 %v2849, %v2935
  %2939 = vrot.lane.b32.xlu0 %v2937, 122
  %v2940 = vpop.permute.xlu0 %2939
  %v2942 = vadd.f32 %v2928, %v2940
  %v2943 = vlaneseq
  %v2944 = vshrl.u32 %v2943, 7
  %v2945 = vsub.s32 7, %v2944
  %v2946 = vrot.slane %v2851, %v2945
  %2948 = vrot.lane.b32.xlu0 %v2946, 7
  %v2949 = vpop.permute.xlu0 %2948
  %v2951 = vmul.f32 %v2849, %v2949
  %2953 = vrot.lane.b32.xlu0 %v2951, 121
  %v2954 = vpop.permute.xlu0 %2953
  %v2956 = vadd.f32 %v2942, %v2954
  %v2957 = vlaneseq
  %v2958 = vshrl.u32 %v2957, 7
  %v2959 = vsub.s32 0, %v2958
  %v2960 = vrot.slane %v2853, %v2959
  %v2961 = vadd.f32 %v2956, %v2960
  %2963 = vrot.lane.b32.xlu0 %v2961, 8
  %v2964 = vpop.permute.xlu0 %2963
  %vm2966 = vcmask 72768
  %2967 = vst.msk [vmem:[%s3] sm:$0xff] %vm2966, %v2964
  %s2968 = scalar_lea.vmem %s0, 16
  %v2969 = vld [vmem:[%s2968] sm:$0xff]
  %v2970 = vld [vmem:[%s2968 + $0x8] sm:$0xff]
  %s2971 = scalar_lea.vmem %s1, 8
  %v2972 = vld [vmem:[%s2971] sm:$0xff]
  %v2973 = vld [vmem:[%s2] sm:$0xff]
  %v2974 = vld [vmem:[%s18] sm:$0xff]
  %2976 = vset.pattern.permute.xlu0 0
  %2977 = vperm.xlu0 %2976, %v2974
  %v2978 = vpop.permute.xlu0 %2977
  %v2981 = vsel %vm25, %v2973, 0
  %2983 = vmatprep.subr.mxu0 0.0
  %2984 = vmatpush1.msra.mxu0 0.0
  %2985 = vmatprep.subr.mxu0 0.0
  %2986 = vmatpush1.msra.mxu0 0.0
  %2987 = vmatprep.subr.mxu0 0.0
  %2988 = vmatpush1.msra.mxu0 0.0
  %2989 = vmatprep.subr.mxu0 0.0
  %2990 = vmatpush1.msra.mxu0 0.0
  %2991 = vmatprep.subr.mxu0 0.0
  %2992 = vmatpush1.msra.mxu0 0.0
  %2993 = vmatprep.subr.mxu0 0.0
  %2994 = vmatpush1.msra.mxu0 0.0
  %2995 = vmatprep.subr.mxu0 0.0
  %2996 = vmatpush1.msra.mxu0 0.0
  %2997 = vmatprep.subr.mxu0 0.0
  %2998 = vmatpush1.msra.mxu0 0.0
  %2999 = vmatprep.subr.mxu0 0.0
  %3000 = vmatpush1.msra.mxu0 0.0
  %3001 = vmatprep.subr.mxu0 0.0
  %3002 = vmatpush1.msra.mxu0 0.0
  %3003 = vmatprep.subr.mxu0 0.0
  %3004 = vmatpush1.msra.mxu0 0.0
  %3005 = vmatprep.subr.mxu0 0.0
  %3006 = vmatpush1.msra.mxu0 0.0
  %3007 = vmatprep.subr.mxu0 0.0
  %3008 = vmatpush1.msra.mxu0 0.0
  %3009 = vmatprep.subr.mxu0 0.0
  %3010 = vmatpush1.msra.mxu0 0.0
  %3011 = vmatprep.subr.mxu0 0.0
  %3012 = vmatpush1.msra.mxu0 %v2970
  %3013 = vmatprep.subr.mxu0 0.0
  %3014 = vmatpush1.msra.mxu0 %v2969
  %3015 = vmatprep.subr.mxu0 0.0
  %3016 = vmatpush2.msra.mxu0 0.0
  %3017 = vmatprep.subr.mxu0 0.0
  %3018 = vmatpush2.msra.mxu0 0.0
  %3019 = vmatprep.subr.mxu0 0.0
  %3020 = vmatpush2.msra.mxu0 0.0
  %3021 = vmatprep.subr.mxu0 0.0
  %3022 = vmatpush2.msra.mxu0 0.0
  %3023 = vmatprep.subr.mxu0 0.0
  %3024 = vmatpush2.msra.mxu0 0.0
  %3025 = vmatprep.subr.mxu0 0.0
  %3026 = vmatpush2.msra.mxu0 0.0
  %3027 = vmatprep.subr.mxu0 0.0
  %3028 = vmatpush2.msra.mxu0 0.0
  %3029 = vmatprep.subr.mxu0 0.0
  %3030 = vmatpush2.msra.mxu0 0.0
  %3031 = vmatprep.subr.mxu0 0.0
  %3032 = vmatpush2.msra.mxu0 0.0
  %3033 = vmatprep.subr.mxu0 0.0
  %3034 = vmatpush2.msra.mxu0 0.0
  %3035 = vmatprep.subr.mxu0 0.0
  %3036 = vmatpush2.msra.mxu0 0.0
  %3037 = vmatprep.subr.mxu0 0.0
  %3038 = vmatpush2.msra.mxu0 0.0
  %3039 = vmatprep.subr.mxu0 0.0
  %3040 = vmatpush2.msra.mxu0 0.0
  %3041 = vmatprep.subr.mxu0 0.0
  %3042 = vmatpush2.msra.mxu0 0.0
  %3043 = vmatprep.subr.mxu0 0.0
  %3044 = vmatpush2.msra.mxu0 0.0
  %3045 = vmatprep.subr.mxu0 0.0
  %3046 = vmatpush2.msra.mxu0 0.0
  %3047 = vmatprep.mubr.f32.mxu0 0.0
  %3048 = vmatmul.mubr.f32.gmra.mxu0 %v2981
  %v3049 = vpop.f32.mrf.mxu0
  %v3050 = vadd.f32 %v2978, %v3049
  %v3051 = vpop.f32.mrf.mxu0
  %3052 = vdwg.mxu0
  %v3053 = vld [vmem:[%s99] sm:$0xf]
  %v3054 = vld [vmem:[%s101] sm:$0x1]
  %3056 = vset.pattern.permute.xlu0 0
  %3057 = vperm.xlu0 %3056, %v3050
  %v3058 = vpop.permute.xlu0 %3057
  %v3060 = vlaneseq
  %v3061 = vshrl.u32 %v3060, 7
  %v3062 = vsub.s32 0, %v3061
  %v3063 = vrot.slane %v3053, %v3062
  %v3064 = vmul.f32 %v3058, %v3063
  %3065 = vset.pattern.permute.xlu0 1
  %3066 = vperm.xlu0 %3065, %v3050
  %v3067 = vpop.permute.xlu0 %3066
  %v3069 = vlaneseq
  %v3070 = vshrl.u32 %v3069, 7
  %v3071 = vsub.s32 1, %v3070
  %v3072 = vrot.slane %v3053, %v3071
  %v3073 = vmul.f32 %v3067, %v3072
  %v3074 = vadd.f32 %v3064, %v3073
  %3075 = vset.pattern.permute.xlu0 2
  %3076 = vperm.xlu0 %3075, %v3050
  %v3077 = vpop.permute.xlu0 %3076
  %v3079 = vlaneseq
  %v3080 = vshrl.u32 %v3079, 7
  %v3081 = vsub.s32 2, %v3080
  %v3082 = vrot.slane %v3053, %v3081
  %v3083 = vmul.f32 %v3077, %v3082
  %v3084 = vadd.f32 %v3074, %v3083
  %3085 = vset.pattern.permute.xlu0 3
  %3086 = vperm.xlu0 %3085, %v3050
  %v3087 = vpop.permute.xlu0 %3086
  %v3089 = vlaneseq
  %v3090 = vshrl.u32 %v3089, 7
  %v3091 = vsub.s32 3, %v3090
  %v3092 = vrot.slane %v3053, %v3091
  %v3093 = vmul.f32 %v3087, %v3092
  %v3094 = vadd.f32 %v3084, %v3093
  %v3095 = vlaneseq
  %v3096 = vshrl.u32 %v3095, 7
  %v3097 = vsub.s32 0, %v3096
  %v3098 = vrot.slane %v3054, %v3097
  %v3099 = vadd.f32 %v3094, %v3098
  %v3100 = vsel %vm148, %v3050, 0.0
  %3101 = vadd.xlane.f32.xlu0 %v3100
  %v3102 = vpop.xlane.xlu0 %3101
  %v3103 = vmul.f32 %v3102, %v152
  %v3104 = vsub.f32 %v3050, %v3103
  %v3105 = vmul.f32 %v3104, %v3104
  %v3106 = vsel %vm148, %v3105, 0.0
  %3107 = vadd.xlane.f32.xlu0 %v3106
  %v3108 = vpop.xlane.xlu0 %3107
  %v3109 = vmul.f32 %v3108, %v152
  %v3110 = vadd.f32 %v3109, 1e-05
  %v3111 = vrsqrt.pop %v3110
  %v3112 = vmul.f32 %v3104, %v3111
  %v3113 = vld [vmem:[%s163] sm:$0x1]
  %v3114 = vlaneseq
  %v3115 = vshrl.u32 %v3114, 7
  %v3116 = vsub.s32 0, %v3115
  %v3117 = vrot.slane %v3113, %v3116
  %v3118 = vmul.f32 %v3112, %v3117
  %v3119 = vld [vmem:[%s170] sm:$0x1]
  %v3120 = vlaneseq
  %v3121 = vshrl.u32 %v3120, 7
  %v3122 = vsub.s32 0, %v3121
  %v3123 = vrot.slane %v3119, %v3122
  %v3124 = vadd.f32 %v3118, %v3123
  %v3125 = vld [vmem:[%s177] sm:$0xf]
  %v3126 = vld [vmem:[%s179] sm:$0x1]
  %3128 = vset.pattern.permute.xlu0 0
  %3129 = vperm.xlu0 %3128, %v3124
  %v3130 = vpop.permute.xlu0 %3129
  %v3132 = vlaneseq
  %v3133 = vshrl.u32 %v3132, 7
  %v3134 = vsub.s32 0, %v3133
  %v3135 = vrot.slane %v3125, %v3134
  %v3136 = vmul.f32 %v3130, %v3135
  %3137 = vset.pattern.permute.xlu0 1
  %3138 = vperm.xlu0 %3137, %v3124
  %v3139 = vpop.permute.xlu0 %3138
  %v3141 = vlaneseq
  %v3142 = vshrl.u32 %v3141, 7
  %v3143 = vsub.s32 1, %v3142
  %v3144 = vrot.slane %v3125, %v3143
  %v3145 = vmul.f32 %v3139, %v3144
  %v3146 = vadd.f32 %v3136, %v3145
  %3147 = vset.pattern.permute.xlu0 2
  %3148 = vperm.xlu0 %3147, %v3124
  %v3149 = vpop.permute.xlu0 %3148
  %v3151 = vlaneseq
  %v3152 = vshrl.u32 %v3151, 7
  %v3153 = vsub.s32 2, %v3152
  %v3154 = vrot.slane %v3125, %v3153
  %v3155 = vmul.f32 %v3149, %v3154
  %v3156 = vadd.f32 %v3146, %v3155
  %3157 = vset.pattern.permute.xlu0 3
  %3158 = vperm.xlu0 %3157, %v3124
  %v3159 = vpop.permute.xlu0 %3158
  %v3161 = vlaneseq
  %v3162 = vshrl.u32 %v3161, 7
  %v3163 = vsub.s32 3, %v3162
  %v3164 = vrot.slane %v3125, %v3163
  %v3165 = vmul.f32 %v3159, %v3164
  %v3166 = vadd.f32 %v3156, %v3165
  %v3167 = vlaneseq
  %v3168 = vshrl.u32 %v3167, 7
  %v3169 = vsub.s32 0, %v3168
  %v3170 = vrot.slane %v3126, %v3169
  %v3171 = vadd.f32 %v3166, %v3170
  %v3172 = vmax.f32 %v3171, 0.0
  %v3173 = vld [vmem:[%s227] sm:$0xff]
  %v3174 = vld [vmem:[%s227 + $0x8] sm:$0xff]
  %v3175 = vld [vmem:[%s227 + $0x10] sm:$0xff]
  %v3176 = vld [vmem:[%s227 + $0x18] sm:$0xff]
  %v3177 = vld [vmem:[%s232] sm:$0x1]
  %v3178 = vlaneseq
  %v3179 = vshrl.u32 %v3178, 7
  %v3180 = vsub.s32 0, %v3179
  %v3181 = vrot.slane %v3177, %v3180
  %v3183 = vsel %vm238, %v3172, 0
  %3185 = vmatprep.subr.mxu0 0.0
  %3186 = vmatpush1.msra.mxu0 0.0
  %3187 = vmatprep.subr.mxu0 0.0
  %3188 = vmatpush1.msra.mxu0 0.0
  %3189 = vmatprep.subr.mxu0 0.0
  %3190 = vmatpush1.msra.mxu0 0.0
  %3191 = vmatprep.subr.mxu0 0.0
  %3192 = vmatpush1.msra.mxu0 0.0
  %3193 = vmatprep.subr.mxu0 0.0
  %3194 = vmatpush1.msra.mxu0 0.0
  %3195 = vmatprep.subr.mxu0 0.0
  %3196 = vmatpush1.msra.mxu0 0.0
  %3197 = vmatprep.subr.mxu0 0.0
  %3198 = vmatpush1.msra.mxu0 0.0
  %3199 = vmatprep.subr.mxu0 0.0
  %3200 = vmatpush1.msra.mxu0 0.0
  %3201 = vmatprep.subr.mxu0 0.0
  %3202 = vmatpush1.msra.mxu0 0.0
  %3203 = vmatprep.subr.mxu0 0.0
  %3204 = vmatpush1.msra.mxu0 0.0
  %3205 = vmatprep.subr.mxu0 0.0
  %3206 = vmatpush1.msra.mxu0 0.0
  %3207 = vmatprep.subr.mxu0 0.0
  %3208 = vmatpush1.msra.mxu0 0.0
  %3209 = vmatprep.subr.mxu0 0.0
  %3210 = vmatpush1.msra.mxu0 %v3176
  %3211 = vmatprep.subr.mxu0 0.0
  %3212 = vmatpush1.msra.mxu0 %v3175
  %3213 = vmatprep.subr.mxu0 0.0
  %3214 = vmatpush1.msra.mxu0 %v3174
  %3215 = vmatprep.subr.mxu0 0.0
  %3216 = vmatpush1.msra.mxu0 %v3173
  %3217 = vmatprep.subr.mxu0 0.0
  %3218 = vmatpush2.msra.mxu0 0.0
  %3219 = vmatprep.subr.mxu0 0.0
  %3220 = vmatpush2.msra.mxu0 0.0
  %3221 = vmatprep.subr.mxu0 0.0
  %3222 = vmatpush2.msra.mxu0 0.0
  %3223 = vmatprep.subr.mxu0 0.0
  %3224 = vmatpush2.msra.mxu0 0.0
  %3225 = vmatprep.subr.mxu0 0.0
  %3226 = vmatpush2.msra.mxu0 0.0
  %3227 = vmatprep.subr.mxu0 0.0
  %3228 = vmatpush2.msra.mxu0 0.0
  %3229 = vmatprep.subr.mxu0 0.0
  %3230 = vmatpush2.msra.mxu0 0.0
  %3231 = vmatprep.subr.mxu0 0.0
  %3232 = vmatpush2.msra.mxu0 0.0
  %3233 = vmatprep.subr.mxu0 0.0
  %3234 = vmatpush2.msra.mxu0 0.0
  %3235 = vmatprep.subr.mxu0 0.0
  %3236 = vmatpush2.msra.mxu0 0.0
  %3237 = vmatprep.subr.mxu0 0.0
  %3238 = vmatpush2.msra.mxu0 0.0
  %3239 = vmatprep.subr.mxu0 0.0
  %3240 = vmatpush2.msra.mxu0 0.0
  %3241 = vmatprep.subr.mxu0 0.0
  %3242 = vmatpush2.msra.mxu0 0.0
  %3243 = vmatprep.subr.mxu0 0.0
  %3244 = vmatpush2.msra.mxu0 0.0
  %3245 = vmatprep.subr.mxu0 0.0
  %3246 = vmatpush2.msra.mxu0 0.0
  %3247 = vmatprep.subr.mxu0 0.0
  %3248 = vmatpush2.msra.mxu0 0.0
  %3249 = vmatprep.mubr.f32.mxu0 0.0
  %3250 = vmatmul.mubr.f32.gmra.mxu0 %v3183
  %v3251 = vpop.f32.mrf.mxu0
  %v3252 = vadd.f32 %v3181, %v3251
  %v3253 = vpop.f32.mrf.mxu0
  %3254 = vdwg.mxu0
  %v3255 = vadd.f32 %v3099, %v3252
  %v3256 = vld [vmem:[%s313] sm:$0x1]
  %v3257 = vld [vmem:[%s315] sm:$0x1]
  %3259 = vset.pattern.permute.xlu0 0
  %3260 = vperm.xlu0 %3259, %v2972
  %v3261 = vpop.permute.xlu0 %3260
  %v3263 = vlaneseq
  %v3264 = vshrl.u32 %v3263, 7
  %v3265 = vsub.s32 0, %v3264
  %v3266 = vrot.slane %v3256, %v3265
  %v3267 = vmul.f32 %v3261, %v3266
  %v3268 = vlaneseq
  %v3269 = vshrl.u32 %v3268, 7
  %v3270 = vsub.s32 0, %v3269
  %v3271 = vrot.slane %v3257, %v3270
  %v3272 = vadd.f32 %v3267, %v3271
  %v3273 = vadd.f32 %v2972, 0.0
  %v3274 = vsub.f32 %v2972, %v3273
  %v3275 = vmul.f32 %v3274, %v3274
  %v3276 = vadd.f32 %v3275, 0.0
  %v3277 = vadd.f32 %v3276, 1e-05
  %v3278 = vrsqrt.pop %v3277
  %v3279 = vmul.f32 %v3274, %v3278
  %v3280 = vld [vmem:[%s339] sm:$0x1]
  %v3281 = vlaneseq
  %v3282 = vshrl.u32 %v3281, 7
  %v3283 = vsub.s32 0, %v3282
  %v3284 = vrot.slane %v3280, %v3283
  %v3285 = vmul.f32 %v3279, %v3284
  %v3286 = vld [vmem:[%s346] sm:$0x1]
  %v3287 = vlaneseq
  %v3288 = vshrl.u32 %v3287, 7
  %v3289 = vsub.s32 0, %v3288
  %v3290 = vrot.slane %v3286, %v3289
  %v3291 = vadd.f32 %v3285, %v3290
  %v3292 = vld [vmem:[%s353] sm:$0x1]
  %v3293 = vld [vmem:[%s355] sm:$0x1]
  %3295 = vset.pattern.permute.xlu0 0
  %3296 = vperm.xlu0 %3295, %v3291
  %v3297 = vpop.permute.xlu0 %3296
  %v3299 = vlaneseq
  %v3300 = vshrl.u32 %v3299, 7
  %v3301 = vsub.s32 0, %v3300
  %v3302 = vrot.slane %v3292, %v3301
  %v3303 = vmul.f32 %v3297, %v3302
  %v3304 = vlaneseq
  %v3305 = vshrl.u32 %v3304, 7
  %v3306 = vsub.s32 0, %v3305
  %v3307 = vrot.slane %v3293, %v3306
  %v3308 = vadd.f32 %v3303, %v3307
  %v3309 = vmax.f32 %v3308, 0.0
  %v3310 = vld [vmem:[%s373] sm:$0xff]
  %v3311 = vld [vmem:[%s373 + $0x8] sm:$0xff]
  %v3312 = vld [vmem:[%s373 + $0x10] sm:$0xff]
  %v3313 = vld [vmem:[%s373 + $0x18] sm:$0xff]
  %v3314 = vld [vmem:[%s378] sm:$0x1]
  %v3315 = vlaneseq
  %v3316 = vshrl.u32 %v3315, 7
  %v3317 = vsub.s32 0, %v3316
  %v3318 = vrot.slane %v3314, %v3317
  %v3320 = vsel %vm238, %v3309, 0
  %3322 = vmatprep.subr.mxu0 0.0
  %3323 = vmatpush1.msra.mxu0 0.0
  %3324 = vmatprep.subr.mxu0 0.0
  %3325 = vmatpush1.msra.mxu0 0.0
  %3326 = vmatprep.subr.mxu0 0.0
  %3327 = vmatpush1.msra.mxu0 0.0
  %3328 = vmatprep.subr.mxu0 0.0
  %3329 = vmatpush1.msra.mxu0 0.0
  %3330 = vmatprep.subr.mxu0 0.0
  %3331 = vmatpush1.msra.mxu0 0.0
  %3332 = vmatprep.subr.mxu0 0.0
  %3333 = vmatpush1.msra.mxu0 0.0
  %3334 = vmatprep.subr.mxu0 0.0
  %3335 = vmatpush1.msra.mxu0 0.0
  %3336 = vmatprep.subr.mxu0 0.0
  %3337 = vmatpush1.msra.mxu0 0.0
  %3338 = vmatprep.subr.mxu0 0.0
  %3339 = vmatpush1.msra.mxu0 0.0
  %3340 = vmatprep.subr.mxu0 0.0
  %3341 = vmatpush1.msra.mxu0 0.0
  %3342 = vmatprep.subr.mxu0 0.0
  %3343 = vmatpush1.msra.mxu0 0.0
  %3344 = vmatprep.subr.mxu0 0.0
  %3345 = vmatpush1.msra.mxu0 0.0
  %3346 = vmatprep.subr.mxu0 0.0
  %3347 = vmatpush1.msra.mxu0 %v3313
  %3348 = vmatprep.subr.mxu0 0.0
  %3349 = vmatpush1.msra.mxu0 %v3312
  %3350 = vmatprep.subr.mxu0 0.0
  %3351 = vmatpush1.msra.mxu0 %v3311
  %3352 = vmatprep.subr.mxu0 0.0
  %3353 = vmatpush1.msra.mxu0 %v3310
  %3354 = vmatprep.subr.mxu0 0.0
  %3355 = vmatpush2.msra.mxu0 0.0
  %3356 = vmatprep.subr.mxu0 0.0
  %3357 = vmatpush2.msra.mxu0 0.0
  %3358 = vmatprep.subr.mxu0 0.0
  %3359 = vmatpush2.msra.mxu0 0.0
  %3360 = vmatprep.subr.mxu0 0.0
  %3361 = vmatpush2.msra.mxu0 0.0
  %3362 = vmatprep.subr.mxu0 0.0
  %3363 = vmatpush2.msra.mxu0 0.0
  %3364 = vmatprep.subr.mxu0 0.0
  %3365 = vmatpush2.msra.mxu0 0.0
  %3366 = vmatprep.subr.mxu0 0.0
  %3367 = vmatpush2.msra.mxu0 0.0
  %3368 = vmatprep.subr.mxu0 0.0
  %3369 = vmatpush2.msra.mxu0 0.0
  %3370 = vmatprep.subr.mxu0 0.0
  %3371 = vmatpush2.msra.mxu0 0.0
  %3372 = vmatprep.subr.mxu0 0.0
  %3373 = vmatpush2.msra.mxu0 0.0
  %3374 = vmatprep.subr.mxu0 0.0
  %3375 = vmatpush2.msra.mxu0 0.0
  %3376 = vmatprep.subr.mxu0 0.0
  %3377 = vmatpush2.msra.mxu0 0.0
  %3378 = vmatprep.subr.mxu0 0.0
  %3379 = vmatpush2.msra.mxu0 0.0
  %3380 = vmatprep.subr.mxu0 0.0
  %3381 = vmatpush2.msra.mxu0 0.0
  %3382 = vmatprep.subr.mxu0 0.0
  %3383 = vmatpush2.msra.mxu0 0.0
  %3384 = vmatprep.subr.mxu0 0.0
  %3385 = vmatpush2.msra.mxu0 0.0
  %3386 = vmatprep.mubr.f32.mxu0 0.0
  %3387 = vmatmul.mubr.f32.gmra.mxu0 %v3320
  %v3388 = vpop.f32.mrf.mxu0
  %v3389 = vadd.f32 %v3318, %v3388
  %v3390 = vpop.f32.mrf.mxu0
  %3391 = vdwg.mxu0
  %v3392 = vadd.f32 %v3272, %v3389
  %s3393 = scalar_lea.vmem [#allocation2], 8
  %3394 = vst.msk [vmem:[%s3393] sm:$0xff] %vm458, %v3255
  %3396 = vrot.lane.b32.xlu0 %v3392, 8
  %v3397 = vpop.permute.xlu0 %3396
  %3399 = vst.msk [vmem:[%s3393] sm:$0xff] %vm464, %v3397
  %v3400 = vld [vmem:[%s3393] sm:$0xff]
  %v3401 = vld [vmem:[%s467] sm:$0xff]
  %v3402 = vsel %vm25, %v3400, 0.0
  %3403 = vadd.xlane.f32.xlu0 %v3402
  %v3404 = vpop.xlane.xlu0 %3403
  %v3405 = vmul.f32 %v3404, %v472
  %v3406 = vsub.f32 %v3400, %v3405
  %v3407 = vmul.f32 %v3406, %v3406
  %v3408 = vsel %vm25, %v3407, 0.0
  %3409 = vadd.xlane.f32.xlu0 %v3408
  %v3410 = vpop.xlane.xlu0 %3409
  %v3411 = vmul.f32 %v3410, %v472
  %v3412 = vadd.f32 %v3411, 1e-05
  %v3413 = vrsqrt.pop %v3412
  %v3414 = vmul.f32 %v3406, %v3413
  %v3415 = vld [vmem:[%s483] sm:$0x1]
  %v3416 = vlaneseq
  %v3417 = vshrl.u32 %v3416, 7
  %v3418 = vsub.s32 0, %v3417
  %v3419 = vrot.slane %v3415, %v3418
  %v3420 = vmul.f32 %v3414, %v3419
  %v3421 = vld [vmem:[%s490] sm:$0x1]
  %v3422 = vlaneseq
  %v3423 = vshrl.u32 %v3422, 7
  %v3424 = vsub.s32 0, %v3423
  %v3425 = vrot.slane %v3421, %v3424
  %v3426 = vadd.f32 %v3420, %v3425
  %v3427 = vld [vmem:[%s497] sm:$0xff]
  %3429 = vset.pattern.permute.xlu0 0
  %3430 = vperm.xlu0 %3429, %v3401
  %v3431 = vpop.permute.xlu0 %3430
  %v3433 = vlaneseq
  %v3434 = vshrl.u32 %v3433, 7
  %v3435 = vsub.s32 0, %v3434
  %v3436 = vrot.slane %v3426, %v3435
  %v3437 = vmul.f32 %v3431, %v3436
  %3438 = vset.pattern.permute.xlu0 1
  %3439 = vperm.xlu0 %3438, %v3401
  %v3440 = vpop.permute.xlu0 %3439
  %v3442 = vlaneseq
  %v3443 = vshrl.u32 %v3442, 7
  %v3444 = vsub.s32 1, %v3443
  %v3445 = vrot.slane %v3426, %v3444
  %v3446 = vmul.f32 %v3440, %v3445
  %v3447 = vadd.f32 %v3437, %v3446
  %3448 = vset.pattern.permute.xlu0 2
  %3449 = vperm.xlu0 %3448, %v3401
  %v3450 = vpop.permute.xlu0 %3449
  %v3452 = vlaneseq
  %v3453 = vshrl.u32 %v3452, 7
  %v3454 = vsub.s32 2, %v3453
  %v3455 = vrot.slane %v3426, %v3454
  %v3456 = vmul.f32 %v3450, %v3455
  %v3457 = vadd.f32 %v3447, %v3456
  %3458 = vset.pattern.permute.xlu0 3
  %3459 = vperm.xlu0 %3458, %v3401
  %v3460 = vpop.permute.xlu0 %3459
  %v3462 = vlaneseq
  %v3463 = vshrl.u32 %v3462, 7
  %v3464 = vsub.s32 3, %v3463
  %v3465 = vrot.slane %v3426, %v3464
  %v3466 = vmul.f32 %v3460, %v3465
  %v3467 = vadd.f32 %v3457, %v3466
  %3468 = vset.pattern.permute.xlu0 4
  %3469 = vperm.xlu0 %3468, %v3401
  %v3470 = vpop.permute.xlu0 %3469
  %v3472 = vlaneseq
  %v3473 = vshrl.u32 %v3472, 7
  %v3474 = vsub.s32 4, %v3473
  %v3475 = vrot.slane %v3426, %v3474
  %v3476 = vmul.f32 %v3470, %v3475
  %v3477 = vadd.f32 %v3467, %v3476
  %3478 = vset.pattern.permute.xlu0 5
  %3479 = vperm.xlu0 %3478, %v3401
  %v3480 = vpop.permute.xlu0 %3479
  %v3482 = vlaneseq
  %v3483 = vshrl.u32 %v3482, 7
  %v3484 = vsub.s32 5, %v3483
  %v3485 = vrot.slane %v3426, %v3484
  %v3486 = vmul.f32 %v3480, %v3485
  %v3487 = vadd.f32 %v3477, %v3486
  %3488 = vset.pattern.permute.xlu0 6
  %3489 = vperm.xlu0 %3488, %v3401
  %v3490 = vpop.permute.xlu0 %3489
  %v3492 = vlaneseq
  %v3493 = vshrl.u32 %v3492, 7
  %v3494 = vsub.s32 6, %v3493
  %v3495 = vrot.slane %v3426, %v3494
  %v3496 = vmul.f32 %v3490, %v3495
  %v3497 = vadd.f32 %v3487, %v3496
  %3498 = vset.pattern.permute.xlu0 7
  %3499 = vperm.xlu0 %3498, %v3401
  %v3500 = vpop.permute.xlu0 %3499
  %v3502 = vlaneseq
  %v3503 = vshrl.u32 %v3502, 7
  %v3504 = vsub.s32 7, %v3503
  %v3505 = vrot.slane %v3426, %v3504
  %v3506 = vmul.f32 %v3500, %v3505
  %v3507 = vadd.f32 %v3497, %v3506
  %3509 = vset.pattern.permute.xlu0 0
  %3510 = vperm.xlu0 %3509, %v3427
  %v3511 = vpop.permute.xlu0 %3510
  %v3513 = vadd.f32 %v3507, %v3511
  %v3514 = vmax.f32 %v3513, 0.0
  %v3515 = vadd.f32 %v3400, %v3514
  %v3516 = vld [vmem:[%s587] sm:$0xff]
  %v3517 = vld [vmem:[%s587 + $0x8] sm:$0xff]
  %v3518 = vld [vmem:[%s590] sm:$0x1]
  %v3519 = vlaneseq
  %v3520 = vshrl.u32 %v3519, 7
  %v3521 = vsub.s32 0, %v3520
  %v3522 = vrot.slane %v3518, %v3521
  %v3524 = vsel %vm25, %v3515, 0
  %3526 = vmatprep.subr.mxu0 0.0
  %3527 = vmatpush1.msra.mxu0 0.0
  %3528 = vmatprep.subr.mxu0 0.0
  %3529 = vmatpush1.msra.mxu0 0.0
  %3530 = vmatprep.subr.mxu0 0.0
  %3531 = vmatpush1.msra.mxu0 0.0
  %3532 = vmatprep.subr.mxu0 0.0
  %3533 = vmatpush1.msra.mxu0 0.0
  %3534 = vmatprep.subr.mxu0 0.0
  %3535 = vmatpush1.msra.mxu0 0.0
  %3536 = vmatprep.subr.mxu0 0.0
  %3537 = vmatpush1.msra.mxu0 0.0
  %3538 = vmatprep.subr.mxu0 0.0
  %3539 = vmatpush1.msra.mxu0 0.0
  %3540 = vmatprep.subr.mxu0 0.0
  %3541 = vmatpush1.msra.mxu0 0.0
  %3542 = vmatprep.subr.mxu0 0.0
  %3543 = vmatpush1.msra.mxu0 0.0
  %3544 = vmatprep.subr.mxu0 0.0
  %3545 = vmatpush1.msra.mxu0 0.0
  %3546 = vmatprep.subr.mxu0 0.0
  %3547 = vmatpush1.msra.mxu0 0.0
  %3548 = vmatprep.subr.mxu0 0.0
  %3549 = vmatpush1.msra.mxu0 0.0
  %3550 = vmatprep.subr.mxu0 0.0
  %3551 = vmatpush1.msra.mxu0 0.0
  %3552 = vmatprep.subr.mxu0 0.0
  %3553 = vmatpush1.msra.mxu0 0.0
  %3554 = vmatprep.subr.mxu0 0.0
  %3555 = vmatpush1.msra.mxu0 %v3517
  %3556 = vmatprep.subr.mxu0 0.0
  %3557 = vmatpush1.msra.mxu0 %v3516
  %3558 = vmatprep.subr.mxu0 0.0
  %3559 = vmatpush2.msra.mxu0 0.0
  %3560 = vmatprep.subr.mxu0 0.0
  %3561 = vmatpush2.msra.mxu0 0.0
  %3562 = vmatprep.subr.mxu0 0.0
  %3563 = vmatpush2.msra.mxu0 0.0
  %3564 = vmatprep.subr.mxu0 0.0
  %3565 = vmatpush2.msra.mxu0 0.0
  %3566 = vmatprep.subr.mxu0 0.0
  %3567 = vmatpush2.msra.mxu0 0.0
  %3568 = vmatprep.subr.mxu0 0.0
  %3569 = vmatpush2.msra.mxu0 0.0
  %3570 = vmatprep.subr.mxu0 0.0
  %3571 = vmatpush2.msra.mxu0 0.0
  %3572 = vmatprep.subr.mxu0 0.0
  %3573 = vmatpush2.msra.mxu0 0.0
  %3574 = vmatprep.subr.mxu0 0.0
  %3575 = vmatpush2.msra.mxu0 0.0
  %3576 = vmatprep.subr.mxu0 0.0
  %3577 = vmatpush2.msra.mxu0 0.0
  %3578 = vmatprep.subr.mxu0 0.0
  %3579 = vmatpush2.msra.mxu0 0.0
  %3580 = vmatprep.subr.mxu0 0.0
  %3581 = vmatpush2.msra.mxu0 0.0
  %3582 = vmatprep.subr.mxu0 0.0
  %3583 = vmatpush2.msra.mxu0 0.0
  %3584 = vmatprep.subr.mxu0 0.0
  %3585 = vmatpush2.msra.mxu0 0.0
  %3586 = vmatprep.subr.mxu0 0.0
  %3587 = vmatpush2.msra.mxu0 0.0
  %3588 = vmatprep.subr.mxu0 0.0
  %3589 = vmatpush2.msra.mxu0 0.0
  %3590 = vmatprep.mubr.f32.mxu0 0.0
  %3591 = vmatmul.mubr.f32.gmra.mxu0 %v3524
  %v3592 = vpop.f32.mrf.mxu0
  %v3593 = vadd.f32 %v3522, %v3592
  %v3594 = vpop.f32.mrf.mxu0
  %3595 = vdwg.mxu0
  %v3596 = vsel %vm25, %v3515, 0.0
  %3597 = vadd.xlane.f32.xlu0 %v3596
  %v3598 = vpop.xlane.xlu0 %3597
  %v3599 = vmul.f32 %v3598, %v472
  %v3600 = vsub.f32 %v3515, %v3599
  %v3601 = vmul.f32 %v3600, %v3600
  %v3602 = vsel %vm25, %v3601, 0.0
  %3603 = vadd.xlane.f32.xlu0 %v3602
  %v3604 = vpop.xlane.xlu0 %3603
  %v3605 = vmul.f32 %v3604, %v472
  %v3606 = vadd.f32 %v3605, 1e-05
  %v3607 = vrsqrt.pop %v3606
  %v3608 = vmul.f32 %v3600, %v3607
  %v3609 = vld [vmem:[%s682] sm:$0x1]
  %v3610 = vlaneseq
  %v3611 = vshrl.u32 %v3610, 7
  %v3612 = vsub.s32 0, %v3611
  %v3613 = vrot.slane %v3609, %v3612
  %v3614 = vmul.f32 %v3608, %v3613
  %v3615 = vld [vmem:[%s689] sm:$0x1]
  %v3616 = vlaneseq
  %v3617 = vshrl.u32 %v3616, 7
  %v3618 = vsub.s32 0, %v3617
  %v3619 = vrot.slane %v3615, %v3618
  %v3620 = vadd.f32 %v3614, %v3619
  %v3621 = vld [vmem:[%s696] sm:$0xff]
  %v3622 = vld [vmem:[%s696 + $0x8] sm:$0xff]
  %v3623 = vld [vmem:[%s699] sm:$0x1]
  %v3624 = vlaneseq
  %v3625 = vshrl.u32 %v3624, 7
  %v3626 = vsub.s32 0, %v3625
  %v3627 = vrot.slane %v3623, %v3626
  %v3629 = vsel %vm25, %v3620, 0
  %3631 = vmatprep.subr.mxu0 0.0
  %3632 = vmatpush1.msra.mxu0 0.0
  %3633 = vmatprep.subr.mxu0 0.0
  %3634 = vmatpush1.msra.mxu0 0.0
  %3635 = vmatprep.subr.mxu0 0.0
  %3636 = vmatpush1.msra.mxu0 0.0
  %3637 = vmatprep.subr.mxu0 0.0
  %3638 = vmatpush1.msra.mxu0 0.0
  %3639 = vmatprep.subr.mxu0 0.0
  %3640 = vmatpush1.msra.mxu0 0.0
  %3641 = vmatprep.subr.mxu0 0.0
  %3642 = vmatpush1.msra.mxu0 0.0
  %3643 = vmatprep.subr.mxu0 0.0
  %3644 = vmatpush1.msra.mxu0 0.0
  %3645 = vmatprep.subr.mxu0 0.0
  %3646 = vmatpush1.msra.mxu0 0.0
  %3647 = vmatprep.subr.mxu0 0.0
  %3648 = vmatpush1.msra.mxu0 0.0
  %3649 = vmatprep.subr.mxu0 0.0
  %3650 = vmatpush1.msra.mxu0 0.0
  %3651 = vmatprep.subr.mxu0 0.0
  %3652 = vmatpush1.msra.mxu0 0.0
  %3653 = vmatprep.subr.mxu0 0.0
  %3654 = vmatpush1.msra.mxu0 0.0
  %3655 = vmatprep.subr.mxu0 0.0
  %3656 = vmatpush1.msra.mxu0 0.0
  %3657 = vmatprep.subr.mxu0 0.0
  %3658 = vmatpush1.msra.mxu0 0.0
  %3659 = vmatprep.subr.mxu0 0.0
  %3660 = vmatpush1.msra.mxu0 %v3622
  %3661 = vmatprep.subr.mxu0 0.0
  %3662 = vmatpush1.msra.mxu0 %v3621
  %3663 = vmatprep.subr.mxu0 0.0
  %3664 = vmatpush2.msra.mxu0 0.0
  %3665 = vmatprep.subr.mxu0 0.0
  %3666 = vmatpush2.msra.mxu0 0.0
  %3667 = vmatprep.subr.mxu0 0.0
  %3668 = vmatpush2.msra.mxu0 0.0
  %3669 = vmatprep.subr.mxu0 0.0
  %3670 = vmatpush2.msra.mxu0 0.0
  %3671 = vmatprep.subr.mxu0 0.0
  %3672 = vmatpush2.msra.mxu0 0.0
  %3673 = vmatprep.subr.mxu0 0.0
  %3674 = vmatpush2.msra.mxu0 0.0
  %3675 = vmatprep.subr.mxu0 0.0
  %3676 = vmatpush2.msra.mxu0 0.0
  %3677 = vmatprep.subr.mxu0 0.0
  %3678 = vmatpush2.msra.mxu0 0.0
  %3679 = vmatprep.subr.mxu0 0.0
  %3680 = vmatpush2.msra.mxu0 0.0
  %3681 = vmatprep.subr.mxu0 0.0
  %3682 = vmatpush2.msra.mxu0 0.0
  %3683 = vmatprep.subr.mxu0 0.0
  %3684 = vmatpush2.msra.mxu0 0.0
  %3685 = vmatprep.subr.mxu0 0.0
  %3686 = vmatpush2.msra.mxu0 0.0
  %3687 = vmatprep.subr.mxu0 0.0
  %3688 = vmatpush2.msra.mxu0 0.0
  %3689 = vmatprep.subr.mxu0 0.0
  %3690 = vmatpush2.msra.mxu0 0.0
  %3691 = vmatprep.subr.mxu0 0.0
  %3692 = vmatpush2.msra.mxu0 0.0
  %3693 = vmatprep.subr.mxu0 0.0
  %3694 = vmatpush2.msra.mxu0 0.0
  %3695 = vmatprep.mubr.f32.mxu0 0.0
  %3696 = vmatmul.mubr.f32.gmra.mxu0 %v3629
  %v3697 = vpop.f32.mrf.mxu0
  %v3698 = vadd.f32 %v3627, %v3697
  %v3699 = vpop.f32.mrf.mxu0
  %3700 = vdwg.mxu0
  %v3701 = vmax.f32 %v3698, 0.0
  %v3702 = vld [vmem:[%s779] sm:$0xff]
  %v3703 = vld [vmem:[%s779 + $0x8] sm:$0xff]
  %v3704 = vld [vmem:[%s779 + $0x10] sm:$0xff]
  %v3705 = vld [vmem:[%s779 + $0x18] sm:$0xff]
  %v3706 = vld [vmem:[%s784] sm:$0x1]
  %v3707 = vlaneseq
  %v3708 = vshrl.u32 %v3707, 7
  %v3709 = vsub.s32 0, %v3708
  %v3710 = vrot.slane %v3706, %v3709
  %v3712 = vsel %vm238, %v3701, 0
  %3714 = vmatprep.subr.mxu0 0.0
  %3715 = vmatpush1.msra.mxu0 0.0
  %3716 = vmatprep.subr.mxu0 0.0
  %3717 = vmatpush1.msra.mxu0 0.0
  %3718 = vmatprep.subr.mxu0 0.0
  %3719 = vmatpush1.msra.mxu0 0.0
  %3720 = vmatprep.subr.mxu0 0.0
  %3721 = vmatpush1.msra.mxu0 0.0
  %3722 = vmatprep.subr.mxu0 0.0
  %3723 = vmatpush1.msra.mxu0 0.0
  %3724 = vmatprep.subr.mxu0 0.0
  %3725 = vmatpush1.msra.mxu0 0.0
  %3726 = vmatprep.subr.mxu0 0.0
  %3727 = vmatpush1.msra.mxu0 0.0
  %3728 = vmatprep.subr.mxu0 0.0
  %3729 = vmatpush1.msra.mxu0 0.0
  %3730 = vmatprep.subr.mxu0 0.0
  %3731 = vmatpush1.msra.mxu0 0.0
  %3732 = vmatprep.subr.mxu0 0.0
  %3733 = vmatpush1.msra.mxu0 0.0
  %3734 = vmatprep.subr.mxu0 0.0
  %3735 = vmatpush1.msra.mxu0 0.0
  %3736 = vmatprep.subr.mxu0 0.0
  %3737 = vmatpush1.msra.mxu0 0.0
  %3738 = vmatprep.subr.mxu0 0.0
  %3739 = vmatpush1.msra.mxu0 %v3705
  %3740 = vmatprep.subr.mxu0 0.0
  %3741 = vmatpush1.msra.mxu0 %v3704
  %3742 = vmatprep.subr.mxu0 0.0
  %3743 = vmatpush1.msra.mxu0 %v3703
  %3744 = vmatprep.subr.mxu0 0.0
  %3745 = vmatpush1.msra.mxu0 %v3702
  %3746 = vmatprep.subr.mxu0 0.0
  %3747 = vmatpush2.msra.mxu0 0.0
  %3748 = vmatprep.subr.mxu0 0.0
  %3749 = vmatpush2.msra.mxu0 0.0
  %3750 = vmatprep.subr.mxu0 0.0
  %3751 = vmatpush2.msra.mxu0 0.0
  %3752 = vmatprep.subr.mxu0 0.0
  %3753 = vmatpush2.msra.mxu0 0.0
  %3754 = vmatprep.subr.mxu0 0.0
  %3755 = vmatpush2.msra.mxu0 0.0
  %3756 = vmatprep.subr.mxu0 0.0
  %3757 = vmatpush2.msra.mxu0 0.0
  %3758 = vmatprep.subr.mxu0 0.0
  %3759 = vmatpush2.msra.mxu0 0.0
  %3760 = vmatprep.subr.mxu0 0.0
  %3761 = vmatpush2.msra.mxu0 0.0
  %3762 = vmatprep.subr.mxu0 0.0
  %3763 = vmatpush2.msra.mxu0 0.0
  %3764 = vmatprep.subr.mxu0 0.0
  %3765 = vmatpush2.msra.mxu0 0.0
  %3766 = vmatprep.subr.mxu0 0.0
  %3767 = vmatpush2.msra.mxu0 0.0
  %3768 = vmatprep.subr.mxu0 0.0
  %3769 = vmatpush2.msra.mxu0 0.0
  %3770 = vmatprep.subr.mxu0 0.0
  %3771 = vmatpush2.msra.mxu0 0.0
  %3772 = vmatprep.subr.mxu0 0.0
  %3773 = vmatpush2.msra.mxu0 0.0
  %3774 = vmatprep.subr.mxu0 0.0
  %3775 = vmatpush2.msra.mxu0 0.0
  %3776 = vmatprep.subr.mxu0 0.0
  %3777 = vmatpush2.msra.mxu0 0.0
  %3778 = vmatprep.mubr.f32.mxu0 0.0
  %3779 = vmatmul.mubr.f32.gmra.mxu0 %v3712
  %v3780 = vpop.f32.mrf.mxu0
  %v3781 = vadd.f32 %v3710, %v3780
  %v3782 = vpop.f32.mrf.mxu0
  %3783 = vdwg.mxu0
  %v3784 = vadd.f32 %v3593, %v3781
  %v3785 = vld [vmem:[%s864] sm:$0xff]
  %v3786 = vsel %vm458, %v3784, 0.0
  %3787 = vadd.xlane.f32.xlu0 %v3786
  %v3788 = vpop.xlane.xlu0 %3787
  %v3789 = vmul.f32 %v3788, %v869
  %v3790 = vsub.f32 %v3784, %v3789
  %v3791 = vmul.f32 %v3790, %v3790
  %v3792 = vsel %vm458, %v3791, 0.0
  %3793 = vadd.xlane.f32.xlu0 %v3792
  %v3794 = vpop.xlane.xlu0 %3793
  %v3795 = vmul.f32 %v3794, %v869
  %v3796 = vadd.f32 %v3795, 1e-05
  %v3797 = vrsqrt.pop %v3796
  %v3798 = vmul.f32 %v3790, %v3797
  %v3799 = vld [vmem:[%s880] sm:$0x1]
  %v3800 = vlaneseq
  %v3801 = vshrl.u32 %v3800, 7
  %v3802 = vsub.s32 0, %v3801
  %v3803 = vrot.slane %v3799, %v3802
  %v3804 = vmul.f32 %v3798, %v3803
  %v3805 = vld [vmem:[%s887] sm:$0x1]
  %v3806 = vlaneseq
  %v3807 = vshrl.u32 %v3806, 7
  %v3808 = vsub.s32 0, %v3807
  %v3809 = vrot.slane %v3805, %v3808
  %v3810 = vadd.f32 %v3804, %v3809
  %v3811 = vld [vmem:[%s894] sm:$0xff]
  %3813 = vset.pattern.permute.xlu0 0
  %3814 = vperm.xlu0 %3813, %v3785
  %v3815 = vpop.permute.xlu0 %3814
  %v3817 = vlaneseq
  %v3818 = vshrl.u32 %v3817, 7
  %v3819 = vsub.s32 0, %v3818
  %v3820 = vrot.slane %v3810, %v3819
  %v3821 = vmul.f32 %v3815, %v3820
  %3822 = vset.pattern.permute.xlu0 1
  %3823 = vperm.xlu0 %3822, %v3785
  %v3824 = vpop.permute.xlu0 %3823
  %v3826 = vlaneseq
  %v3827 = vshrl.u32 %v3826, 7
  %v3828 = vsub.s32 1, %v3827
  %v3829 = vrot.slane %v3810, %v3828
  %v3830 = vmul.f32 %v3824, %v3829
  %v3831 = vadd.f32 %v3821, %v3830
  %3832 = vset.pattern.permute.xlu0 2
  %3833 = vperm.xlu0 %3832, %v3785
  %v3834 = vpop.permute.xlu0 %3833
  %v3836 = vlaneseq
  %v3837 = vshrl.u32 %v3836, 7
  %v3838 = vsub.s32 2, %v3837
  %v3839 = vrot.slane %v3810, %v3838
  %v3840 = vmul.f32 %v3834, %v3839
  %v3841 = vadd.f32 %v3831, %v3840
  %3842 = vset.pattern.permute.xlu0 3
  %3843 = vperm.xlu0 %3842, %v3785
  %v3844 = vpop.permute.xlu0 %3843
  %v3846 = vlaneseq
  %v3847 = vshrl.u32 %v3846, 7
  %v3848 = vsub.s32 3, %v3847
  %v3849 = vrot.slane %v3810, %v3848
  %v3850 = vmul.f32 %v3844, %v3849
  %v3851 = vadd.f32 %v3841, %v3850
  %3852 = vset.pattern.permute.xlu0 4
  %3853 = vperm.xlu0 %3852, %v3785
  %v3854 = vpop.permute.xlu0 %3853
  %v3856 = vlaneseq
  %v3857 = vshrl.u32 %v3856, 7
  %v3858 = vsub.s32 4, %v3857
  %v3859 = vrot.slane %v3810, %v3858
  %v3860 = vmul.f32 %v3854, %v3859
  %v3861 = vadd.f32 %v3851, %v3860
  %3862 = vset.pattern.permute.xlu0 5
  %3863 = vperm.xlu0 %3862, %v3785
  %v3864 = vpop.permute.xlu0 %3863
  %v3866 = vlaneseq
  %v3867 = vshrl.u32 %v3866, 7
  %v3868 = vsub.s32 5, %v3867
  %v3869 = vrot.slane %v3810, %v3868
  %v3870 = vmul.f32 %v3864, %v3869
  %v3871 = vadd.f32 %v3861, %v3870
  %3872 = vset.pattern.permute.xlu0 6
  %3873 = vperm.xlu0 %3872, %v3785
  %v3874 = vpop.permute.xlu0 %3873
  %v3876 = vlaneseq
  %v3877 = vshrl.u32 %v3876, 7
  %v3878 = vsub.s32 6, %v3877
  %v3879 = vrot.slane %v3810, %v3878
  %v3880 = vmul.f32 %v3874, %v3879
  %v3881 = vadd.f32 %v3871, %v3880
  %3882 = vset.pattern.permute.xlu0 7
  %3883 = vperm.xlu0 %3882, %v3785
  %v3884 = vpop.permute.xlu0 %3883
  %v3886 = vlaneseq
  %v3887 = vshrl.u32 %v3886, 7
  %v3888 = vsub.s32 7, %v3887
  %v3889 = vrot.slane %v3810, %v3888
  %v3890 = vmul.f32 %v3884, %v3889
  %v3891 = vadd.f32 %v3881, %v3890
  %3893 = vset.pattern.permute.xlu0 0
  %3894 = vperm.xlu0 %3893, %v3811
  %v3895 = vpop.permute.xlu0 %3894
  %v3897 = vadd.f32 %v3891, %v3895
  %v3898 = vmax.f32 %v3897, 0.0
  %v3899 = vadd.f32 %v3784, %v3898
  %v3900 = vsel %vm458, %v3899, 0.0
  %3901 = vadd.xlane.f32.xlu0 %v3900
  %v3902 = vpop.xlane.xlu0 %3901
  %v3903 = vmul.f32 %v3902, %v869
  %v3904 = vsub.f32 %v3899, %v3903
  %v3905 = vmul.f32 %v3904, %v3904
  %v3906 = vsel %vm458, %v3905, 0.0
  %3907 = vadd.xlane.f32.xlu0 %v3906
  %v3908 = vpop.xlane.xlu0 %3907
  %v3909 = vmul.f32 %v3908, %v869
  %v3910 = vadd.f32 %v3909, 1e-05
  %v3911 = vrsqrt.pop %v3910
  %v3912 = vmul.f32 %v3904, %v3911
  %v3913 = vld [vmem:[%s997] sm:$0x1]
  %v3914 = vlaneseq
  %v3915 = vshrl.u32 %v3914, 7
  %v3916 = vsub.s32 0, %v3915
  %v3917 = vrot.slane %v3913, %v3916
  %v3918 = vmul.f32 %v3912, %v3917
  %v3919 = vld [vmem:[%s1004] sm:$0x1]
  %v3920 = vlaneseq
  %v3921 = vshrl.u32 %v3920, 7
  %v3922 = vsub.s32 0, %v3921
  %v3923 = vrot.slane %v3919, %v3922
  %v3924 = vadd.f32 %v3918, %v3923
  %v3925 = vld [vmem:[%s1011] sm:$0xff]
  %v3926 = vld [vmem:[%s1013] sm:$0x1]
  %3928 = vset.pattern.permute.xlu0 0
  %3929 = vperm.xlu0 %3928, %v3924
  %v3930 = vpop.permute.xlu0 %3929
  %v3932 = vlaneseq
  %v3933 = vshrl.u32 %v3932, 7
  %v3934 = vsub.s32 0, %v3933
  %v3935 = vrot.slane %v3925, %v3934
  %v3936 = vmul.f32 %v3930, %v3935
  %3937 = vset.pattern.permute.xlu0 1
  %3938 = vperm.xlu0 %3937, %v3924
  %v3939 = vpop.permute.xlu0 %3938
  %v3941 = vlaneseq
  %v3942 = vshrl.u32 %v3941, 7
  %v3943 = vsub.s32 1, %v3942
  %v3944 = vrot.slane %v3925, %v3943
  %v3945 = vmul.f32 %v3939, %v3944
  %v3946 = vadd.f32 %v3936, %v3945
  %3947 = vset.pattern.permute.xlu0 2
  %3948 = vperm.xlu0 %3947, %v3924
  %v3949 = vpop.permute.xlu0 %3948
  %v3951 = vlaneseq
  %v3952 = vshrl.u32 %v3951, 7
  %v3953 = vsub.s32 2, %v3952
  %v3954 = vrot.slane %v3925, %v3953
  %v3955 = vmul.f32 %v3949, %v3954
  %v3956 = vadd.f32 %v3946, %v3955
  %3957 = vset.pattern.permute.xlu0 3
  %3958 = vperm.xlu0 %3957, %v3924
  %v3959 = vpop.permute.xlu0 %3958
  %v3961 = vlaneseq
  %v3962 = vshrl.u32 %v3961, 7
  %v3963 = vsub.s32 3, %v3962
  %v3964 = vrot.slane %v3925, %v3963
  %v3965 = vmul.f32 %v3959, %v3964
  %v3966 = vadd.f32 %v3956, %v3965
  %3967 = vset.pattern.permute.xlu0 4
  %3968 = vperm.xlu0 %3967, %v3924
  %v3969 = vpop.permute.xlu0 %3968
  %v3971 = vlaneseq
  %v3972 = vshrl.u32 %v3971, 7
  %v3973 = vsub.s32 4, %v3972
  %v3974 = vrot.slane %v3925, %v3973
  %v3975 = vmul.f32 %v3969, %v3974
  %v3976 = vadd.f32 %v3966, %v3975
  %3977 = vset.pattern.permute.xlu0 5
  %3978 = vperm.xlu0 %3977, %v3924
  %v3979 = vpop.permute.xlu0 %3978
  %v3981 = vlaneseq
  %v3982 = vshrl.u32 %v3981, 7
  %v3983 = vsub.s32 5, %v3982
  %v3984 = vrot.slane %v3925, %v3983
  %v3985 = vmul.f32 %v3979, %v3984
  %v3986 = vadd.f32 %v3976, %v3985
  %3987 = vset.pattern.permute.xlu0 6
  %3988 = vperm.xlu0 %3987, %v3924
  %v3989 = vpop.permute.xlu0 %3988
  %v3991 = vlaneseq
  %v3992 = vshrl.u32 %v3991, 7
  %v3993 = vsub.s32 6, %v3992
  %v3994 = vrot.slane %v3925, %v3993
  %v3995 = vmul.f32 %v3989, %v3994
  %v3996 = vadd.f32 %v3986, %v3995
  %3997 = vset.pattern.permute.xlu0 7
  %3998 = vperm.xlu0 %3997, %v3924
  %v3999 = vpop.permute.xlu0 %3998
  %v4001 = vlaneseq
  %v4002 = vshrl.u32 %v4001, 7
  %v4003 = vsub.s32 7, %v4002
  %v4004 = vrot.slane %v3925, %v4003
  %v4005 = vmul.f32 %v3999, %v4004
  %v4006 = vadd.f32 %v3996, %v4005
  %v4007 = vlaneseq
  %v4008 = vshrl.u32 %v4007, 7
  %v4009 = vsub.s32 0, %v4008
  %v4010 = vrot.slane %v3926, %v4009
  %v4011 = vadd.f32 %v4006, %v4010
  %v4012 = vmax.f32 %v4011, 0.0
  %v4013 = vld [vmem:[%s1101] sm:$0xff]
  %v4014 = vld [vmem:[%s1101 + $0x8] sm:$0xff]
  %v4015 = vld [vmem:[%s1101 + $0x10] sm:$0xff]
  %v4016 = vld [vmem:[%s1101 + $0x18] sm:$0xff]
  %v4017 = vld [vmem:[%s1106] sm:$0x1]
  %v4018 = vlaneseq
  %v4019 = vshrl.u32 %v4018, 7
  %v4020 = vsub.s32 0, %v4019
  %v4021 = vrot.slane %v4017, %v4020
  %v4023 = vsel %vm238, %v4012, 0
  %4025 = vmatprep.subr.mxu0 0.0
  %4026 = vmatpush1.msra.mxu0 0.0
  %4027 = vmatprep.subr.mxu0 0.0
  %4028 = vmatpush1.msra.mxu0 0.0
  %4029 = vmatprep.subr.mxu0 0.0
  %4030 = vmatpush1.msra.mxu0 0.0
  %4031 = vmatprep.subr.mxu0 0.0
  %4032 = vmatpush1.msra.mxu0 0.0
  %4033 = vmatprep.subr.mxu0 0.0
  %4034 = vmatpush1.msra.mxu0 0.0
  %4035 = vmatprep.subr.mxu0 0.0
  %4036 = vmatpush1.msra.mxu0 0.0
  %4037 = vmatprep.subr.mxu0 0.0
  %4038 = vmatpush1.msra.mxu0 0.0
  %4039 = vmatprep.subr.mxu0 0.0
  %4040 = vmatpush1.msra.mxu0 0.0
  %4041 = vmatprep.subr.mxu0 0.0
  %4042 = vmatpush1.msra.mxu0 0.0
  %4043 = vmatprep.subr.mxu0 0.0
  %4044 = vmatpush1.msra.mxu0 0.0
  %4045 = vmatprep.subr.mxu0 0.0
  %4046 = vmatpush1.msra.mxu0 0.0
  %4047 = vmatprep.subr.mxu0 0.0
  %4048 = vmatpush1.msra.mxu0 0.0
  %4049 = vmatprep.subr.mxu0 0.0
  %4050 = vmatpush1.msra.mxu0 %v4016
  %4051 = vmatprep.subr.mxu0 0.0
  %4052 = vmatpush1.msra.mxu0 %v4015
  %4053 = vmatprep.subr.mxu0 0.0
  %4054 = vmatpush1.msra.mxu0 %v4014
  %4055 = vmatprep.subr.mxu0 0.0
  %4056 = vmatpush1.msra.mxu0 %v4013
  %4057 = vmatprep.subr.mxu0 0.0
  %4058 = vmatpush2.msra.mxu0 0.0
  %4059 = vmatprep.subr.mxu0 0.0
  %4060 = vmatpush2.msra.mxu0 0.0
  %4061 = vmatprep.subr.mxu0 0.0
  %4062 = vmatpush2.msra.mxu0 0.0
  %4063 = vmatprep.subr.mxu0 0.0
  %4064 = vmatpush2.msra.mxu0 0.0
  %4065 = vmatprep.subr.mxu0 0.0
  %4066 = vmatpush2.msra.mxu0 0.0
  %4067 = vmatprep.subr.mxu0 0.0
  %4068 = vmatpush2.msra.mxu0 0.0
  %4069 = vmatprep.subr.mxu0 0.0
  %4070 = vmatpush2.msra.mxu0 0.0
  %4071 = vmatprep.subr.mxu0 0.0
  %4072 = vmatpush2.msra.mxu0 0.0
  %4073 = vmatprep.subr.mxu0 0.0
  %4074 = vmatpush2.msra.mxu0 0.0
  %4075 = vmatprep.subr.mxu0 0.0
  %4076 = vmatpush2.msra.mxu0 0.0
  %4077 = vmatprep.subr.mxu0 0.0
  %4078 = vmatpush2.msra.mxu0 0.0
  %4079 = vmatprep.subr.mxu0 0.0
  %4080 = vmatpush2.msra.mxu0 0.0
  %4081 = vmatprep.subr.mxu0 0.0
  %4082 = vmatpush2.msra.mxu0 0.0
  %4083 = vmatprep.subr.mxu0 0.0
  %4084 = vmatpush2.msra.mxu0 0.0
  %4085 = vmatprep.subr.mxu0 0.0
  %4086 = vmatpush2.msra.mxu0 0.0
  %4087 = vmatprep.subr.mxu0 0.0
  %4088 = vmatpush2.msra.mxu0 0.0
  %4089 = vmatprep.mubr.f32.mxu0 0.0
  %4090 = vmatmul.mubr.f32.gmra.mxu0 %v4023
  %v4091 = vpop.f32.mrf.mxu0
  %v4092 = vadd.f32 %v4021, %v4091
  %v4093 = vpop.f32.mrf.mxu0
  %4094 = vdwg.mxu0
  %v4095 = vadd.f32 %v3899, %v4092
  %v4096 = vld [vmem:[%s1186] sm:$0xff]
  %v4097 = vld [vmem:[%s1188] sm:$0x1]
  %4099 = vset.pattern.permute.xlu0 0
  %4100 = vperm.xlu0 %4099, %v4095
  %v4101 = vpop.permute.xlu0 %4100
  %v4103 = vlaneseq
  %v4104 = vshrl.u32 %v4103, 7
  %v4105 = vsub.s32 0, %v4104
  %v4106 = vrot.slane %v4096, %v4105
  %v4107 = vmul.f32 %v4101, %v4106
  %4108 = vset.pattern.permute.xlu0 1
  %4109 = vperm.xlu0 %4108, %v4095
  %v4110 = vpop.permute.xlu0 %4109
  %v4112 = vlaneseq
  %v4113 = vshrl.u32 %v4112, 7
  %v4114 = vsub.s32 1, %v4113
  %v4115 = vrot.slane %v4096, %v4114
  %v4116 = vmul.f32 %v4110, %v4115
  %v4117 = vadd.f32 %v4107, %v4116
  %4118 = vset.pattern.permute.xlu0 2
  %4119 = vperm.xlu0 %4118, %v4095
  %v4120 = vpop.permute.xlu0 %4119
  %v4122 = vlaneseq
  %v4123 = vshrl.u32 %v4122, 7
  %v4124 = vsub.s32 2, %v4123
  %v4125 = vrot.slane %v4096, %v4124
  %v4126 = vmul.f32 %v4120, %v4125
  %v4127 = vadd.f32 %v4117, %v4126
  %4128 = vset.pattern.permute.xlu0 3
  %4129 = vperm.xlu0 %4128, %v4095
  %v4130 = vpop.permute.xlu0 %4129
  %v4132 = vlaneseq
  %v4133 = vshrl.u32 %v4132, 7
  %v4134 = vsub.s32 3, %v4133
  %v4135 = vrot.slane %v4096, %v4134
  %v4136 = vmul.f32 %v4130, %v4135
  %v4137 = vadd.f32 %v4127, %v4136
  %4138 = vset.pattern.permute.xlu0 4
  %4139 = vperm.xlu0 %4138, %v4095
  %v4140 = vpop.permute.xlu0 %4139
  %v4142 = vlaneseq
  %v4143 = vshrl.u32 %v4142, 7
  %v4144 = vsub.s32 4, %v4143
  %v4145 = vrot.slane %v4096, %v4144
  %v4146 = vmul.f32 %v4140, %v4145
  %v4147 = vadd.f32 %v4137, %v4146
  %4148 = vset.pattern.permute.xlu0 5
  %4149 = vperm.xlu0 %4148, %v4095
  %v4150 = vpop.permute.xlu0 %4149
  %v4152 = vlaneseq
  %v4153 = vshrl.u32 %v4152, 7
  %v4154 = vsub.s32 5, %v4153
  %v4155 = vrot.slane %v4096, %v4154
  %v4156 = vmul.f32 %v4150, %v4155
  %v4157 = vadd.f32 %v4147, %v4156
  %4158 = vset.pattern.permute.xlu0 6
  %4159 = vperm.xlu0 %4158, %v4095
  %v4160 = vpop.permute.xlu0 %4159
  %v4162 = vlaneseq
  %v4163 = vshrl.u32 %v4162, 7
  %v4164 = vsub.s32 6, %v4163
  %v4165 = vrot.slane %v4096, %v4164
  %v4166 = vmul.f32 %v4160, %v4165
  %v4167 = vadd.f32 %v4157, %v4166
  %4168 = vset.pattern.permute.xlu0 7
  %4169 = vperm.xlu0 %4168, %v4095
  %v4170 = vpop.permute.xlu0 %4169
  %v4172 = vlaneseq
  %v4173 = vshrl.u32 %v4172, 7
  %v4174 = vsub.s32 7, %v4173
  %v4175 = vrot.slane %v4096, %v4174
  %v4176 = vmul.f32 %v4170, %v4175
  %v4177 = vadd.f32 %v4167, %v4176
  %v4178 = vlaneseq
  %v4179 = vshrl.u32 %v4178, 7
  %v4180 = vsub.s32 0, %v4179
  %v4181 = vrot.slane %v4097, %v4180
  %v4182 = vadd.f32 %v4177, %v4181
  %vm4183 = vcmp.ge.f32.partialorder %v4182, 0.0
  %v4184 = vmul.f32 %v4182, 0.01
  %v4185 = vsel %vm4183, %v4182, %v4184
  %v4186 = vsel %vm238, %v4185, 0.0
  %4187 = vadd.xlane.f32.xlu0 %v4186
  %v4188 = vpop.xlane.xlu0 %4187
  %v4189 = vmul.f32 %v4188, %v1281
  %v4190 = vsub.f32 %v4185, %v4189
  %v4191 = vmul.f32 %v4190, %v4190
  %v4192 = vsel %vm238, %v4191, 0.0
  %4193 = vadd.xlane.f32.xlu0 %v4192
  %v4194 = vpop.xlane.xlu0 %4193
  %v4195 = vmul.f32 %v4194, %v1281
  %v4196 = vadd.f32 %v4195, 1e-05
  %v4197 = vrsqrt.pop %v4196
  %v4198 = vmul.f32 %v4190, %v4197
  %v4199 = vld [vmem:[%s1292] sm:$0x1]
  %v4200 = vlaneseq
  %v4201 = vshrl.u32 %v4200, 7
  %v4202 = vsub.s32 0, %v4201
  %v4203 = vrot.slane %v4199, %v4202
  %v4204 = vmul.f32 %v4198, %v4203
  %v4205 = vld [vmem:[%s1299] sm:$0x1]
  %v4206 = vlaneseq
  %v4207 = vshrl.u32 %v4206, 7
  %v4208 = vsub.s32 0, %v4207
  %v4209 = vrot.slane %v4205, %v4208
  %v4210 = vadd.f32 %v4204, %v4209
  %v4211 = vld [vmem:[%s1306] sm:$0xff]
  %v4212 = vld [vmem:[%s1306 + $0x8] sm:$0xff]
  %v4213 = vld [vmem:[%s1306 + $0x10] sm:$0xff]
  %v4214 = vld [vmem:[%s1306 + $0x18] sm:$0xff]
  %v4215 = vld [vmem:[%s1311] sm:$0x1]
  %v4216 = vlaneseq
  %v4217 = vshrl.u32 %v4216, 7
  %v4218 = vsub.s32 0, %v4217
  %v4219 = vrot.slane %v4215, %v4218
  %v4221 = vsel %vm238, %v4210, 0
  %4223 = vmatprep.subr.mxu0 0.0
  %4224 = vmatpush1.msra.mxu0 0.0
  %4225 = vmatprep.subr.mxu0 0.0
  %4226 = vmatpush1.msra.mxu0 0.0
  %4227 = vmatprep.subr.mxu0 0.0
  %4228 = vmatpush1.msra.mxu0 0.0
  %4229 = vmatprep.subr.mxu0 0.0
  %4230 = vmatpush1.msra.mxu0 0.0
  %4231 = vmatprep.subr.mxu0 0.0
  %4232 = vmatpush1.msra.mxu0 0.0
  %4233 = vmatprep.subr.mxu0 0.0
  %4234 = vmatpush1.msra.mxu0 0.0
  %4235 = vmatprep.subr.mxu0 0.0
  %4236 = vmatpush1.msra.mxu0 0.0
  %4237 = vmatprep.subr.mxu0 0.0
  %4238 = vmatpush1.msra.mxu0 0.0
  %4239 = vmatprep.subr.mxu0 0.0
  %4240 = vmatpush1.msra.mxu0 0.0
  %4241 = vmatprep.subr.mxu0 0.0
  %4242 = vmatpush1.msra.mxu0 0.0
  %4243 = vmatprep.subr.mxu0 0.0
  %4244 = vmatpush1.msra.mxu0 0.0
  %4245 = vmatprep.subr.mxu0 0.0
  %4246 = vmatpush1.msra.mxu0 0.0
  %4247 = vmatprep.subr.mxu0 0.0
  %4248 = vmatpush1.msra.mxu0 %v4214
  %4249 = vmatprep.subr.mxu0 0.0
  %4250 = vmatpush1.msra.mxu0 %v4213
  %4251 = vmatprep.subr.mxu0 0.0
  %4252 = vmatpush1.msra.mxu0 %v4212
  %4253 = vmatprep.subr.mxu0 0.0
  %4254 = vmatpush1.msra.mxu0 %v4211
  %4255 = vmatprep.subr.mxu0 0.0
  %4256 = vmatpush2.msra.mxu0 0.0
  %4257 = vmatprep.subr.mxu0 0.0
  %4258 = vmatpush2.msra.mxu0 0.0
  %4259 = vmatprep.subr.mxu0 0.0
  %4260 = vmatpush2.msra.mxu0 0.0
  %4261 = vmatprep.subr.mxu0 0.0
  %4262 = vmatpush2.msra.mxu0 0.0
  %4263 = vmatprep.subr.mxu0 0.0
  %4264 = vmatpush2.msra.mxu0 0.0
  %4265 = vmatprep.subr.mxu0 0.0
  %4266 = vmatpush2.msra.mxu0 0.0
  %4267 = vmatprep.subr.mxu0 0.0
  %4268 = vmatpush2.msra.mxu0 0.0
  %4269 = vmatprep.subr.mxu0 0.0
  %4270 = vmatpush2.msra.mxu0 0.0
  %4271 = vmatprep.subr.mxu0 0.0
  %4272 = vmatpush2.msra.mxu0 0.0
  %4273 = vmatprep.subr.mxu0 0.0
  %4274 = vmatpush2.msra.mxu0 0.0
  %4275 = vmatprep.subr.mxu0 0.0
  %4276 = vmatpush2.msra.mxu0 0.0
  %4277 = vmatprep.subr.mxu0 0.0
  %4278 = vmatpush2.msra.mxu0 0.0
  %4279 = vmatprep.subr.mxu0 0.0
  %4280 = vmatpush2.msra.mxu0 0.0
  %4281 = vmatprep.subr.mxu0 0.0
  %4282 = vmatpush2.msra.mxu0 0.0
  %4283 = vmatprep.subr.mxu0 0.0
  %4284 = vmatpush2.msra.mxu0 0.0
  %4285 = vmatprep.subr.mxu0 0.0
  %4286 = vmatpush2.msra.mxu0 0.0
  %4287 = vmatprep.mubr.f32.mxu0 0.0
  %4288 = vmatmul.mubr.f32.gmra.mxu0 %v4221
  %v4289 = vpop.f32.mrf.mxu0
  %v4290 = vadd.f32 %v4219, %v4289
  %v4291 = vpop.f32.mrf.mxu0
  %4292 = vdwg.mxu0
  %s4293 = scalar_lea.vmem %s3, 8
  %4294 = vst.msk [vmem:[%s4293] sm:$0xff] %vm1390, %v4290
  %v4296 = vrot.slane %v4290, 7
  %v4298 = vsub.f32 %v4290, %v4296
  %4300 = vrot.lane.b32.xlu0 %v4298, 3
  %v4301 = vpop.permute.xlu0 %4300
  %4303 = vst.msk [vmem:[%s4293 - $0x1] sm:$0x2] %vm1400, %v4301
  %v4304 = vrot.slane %v4290, 6
  %v4306 = vsub.f32 %v4290, %v4304
  %v4307 = vmul.f32 %v4306, 0.5
  %4309 = vrot.lane.b32.xlu0 %v4307, 3
  %v4310 = vpop.permute.xlu0 %4309
  %4312 = vst.msk [vmem:[%s4293 - $0x1] sm:$0xfc] %vm1410, %v4310
  %4313 = vst.msk [vmem:[%s4293] sm:$0x80] %vm1412, %v4301
  %v4314 = vld [vmem:[%s1414] sm:$0xff]
  %v4315 = vsel %vm1390, %v4290, 0.0
  %4316 = vadd.xlane.f32.xlu0 %v4315
  %v4317 = vpop.xlane.xlu0 %4316
  %v4318 = vmul.f32 %v4317, %v1419
  %v4319 = vsub.f32 %v4290, %v4318
  %v4320 = vmul.f32 %v4319, %v4319
  %v4321 = vsel %vm1390, %v4320, 0.0
  %4322 = vadd.xlane.f32.xlu0 %v4321
  %v4323 = vpop.xlane.xlu0 %4322
  %v4324 = vmul.f32 %v4323, %v1419
  %v4325 = vadd.f32 %v4324, 1e-05
  %v4326 = vrsqrt.pop %v4325
  %v4327 = vmul.f32 %v4319, %v4326
  %v4328 = vld [vmem:[%s1430] sm:$0x1]
  %v4329 = vlaneseq
  %v4330 = vshrl.u32 %v4329, 7
  %v4331 = vsub.s32 0, %v4330
  %v4332 = vrot.slane %v4328, %v4331
  %v4333 = vmul.f32 %v4327, %v4332
  %v4334 = vld [vmem:[%s1437] sm:$0x1]
  %v4335 = vlaneseq
  %v4336 = vshrl.u32 %v4335, 7
  %v4337 = vsub.s32 0, %v4336
  %v4338 = vrot.slane %v4334, %v4337
  %v4339 = vadd.f32 %v4333, %v4338
  %v4340 = vld [vmem:[%s1444] sm:$0xff]
  %4342 = vset.pattern.permute.xlu0 0
  %4343 = vperm.xlu0 %4342, %v4314
  %v4344 = vpop.permute.xlu0 %4343
  %v4346 = vlaneseq
  %v4347 = vshrl.u32 %v4346, 7
  %v4348 = vsub.s32 0, %v4347
  %v4349 = vrot.slane %v4339, %v4348
  %v4350 = vmul.f32 %v4344, %v4349
  %4351 = vset.pattern.permute.xlu0 1
  %4352 = vperm.xlu0 %4351, %v4314
  %v4353 = vpop.permute.xlu0 %4352
  %v4355 = vlaneseq
  %v4356 = vshrl.u32 %v4355, 7
  %v4357 = vsub.s32 1, %v4356
  %v4358 = vrot.slane %v4339, %v4357
  %v4359 = vmul.f32 %v4353, %v4358
  %v4360 = vadd.f32 %v4350, %v4359
  %4361 = vset.pattern.permute.xlu0 2
  %4362 = vperm.xlu0 %4361, %v4314
  %v4363 = vpop.permute.xlu0 %4362
  %v4365 = vlaneseq
  %v4366 = vshrl.u32 %v4365, 7
  %v4367 = vsub.s32 2, %v4366
  %v4368 = vrot.slane %v4339, %v4367
  %v4369 = vmul.f32 %v4363, %v4368
  %v4370 = vadd.f32 %v4360, %v4369
  %4371 = vset.pattern.permute.xlu0 3
  %4372 = vperm.xlu0 %4371, %v4314
  %v4373 = vpop.permute.xlu0 %4372
  %v4375 = vlaneseq
  %v4376 = vshrl.u32 %v4375, 7
  %v4377 = vsub.s32 3, %v4376
  %v4378 = vrot.slane %v4339, %v4377
  %v4379 = vmul.f32 %v4373, %v4378
  %v4380 = vadd.f32 %v4370, %v4379
  %4381 = vset.pattern.permute.xlu0 4
  %4382 = vperm.xlu0 %4381, %v4314
  %v4383 = vpop.permute.xlu0 %4382
  %v4385 = vlaneseq
  %v4386 = vshrl.u32 %v4385, 7
  %v4387 = vsub.s32 4, %v4386
  %v4388 = vrot.slane %v4339, %v4387
  %v4389 = vmul.f32 %v4383, %v4388
  %v4390 = vadd.f32 %v4380, %v4389
  %4391 = vset.pattern.permute.xlu0 5
  %4392 = vperm.xlu0 %4391, %v4314
  %v4393 = vpop.permute.xlu0 %4392
  %v4395 = vlaneseq
  %v4396 = vshrl.u32 %v4395, 7
  %v4397 = vsub.s32 5, %v4396
  %v4398 = vrot.slane %v4339, %v4397
  %v4399 = vmul.f32 %v4393, %v4398
  %v4400 = vadd.f32 %v4390, %v4399
  %4401 = vset.pattern.permute.xlu0 6
  %4402 = vperm.xlu0 %4401, %v4314
  %v4403 = vpop.permute.xlu0 %4402
  %v4405 = vlaneseq
  %v4406 = vshrl.u32 %v4405, 7
  %v4407 = vsub.s32 6, %v4406
  %v4408 = vrot.slane %v4339, %v4407
  %v4409 = vmul.f32 %v4403, %v4408
  %v4410 = vadd.f32 %v4400, %v4409
  %4411 = vset.pattern.permute.xlu0 7
  %4412 = vperm.xlu0 %4411, %v4314
  %v4413 = vpop.permute.xlu0 %4412
  %v4415 = vlaneseq
  %v4416 = vshrl.u32 %v4415, 7
  %v4417 = vsub.s32 7, %v4416
  %v4418 = vrot.slane %v4339, %v4417
  %v4419 = vmul.f32 %v4413, %v4418
  %v4420 = vadd.f32 %v4410, %v4419
  %4422 = vset.pattern.permute.xlu0 0
  %4423 = vperm.xlu0 %4422, %v4340
  %v4424 = vpop.permute.xlu0 %4423
  %v4426 = vadd.f32 %v4420, %v4424
  %v4427 = vmax.f32 %v4426, 0.0
  %v4428 = vadd.f32 %v4290, %v4427
  %v4429 = vld [vmem:[%s1534] sm:$0x7]
  %v4430 = vld [vmem:[%s1536] sm:$0x1]
  %4432 = vset.pattern.permute.xlu0 0
  %4433 = vperm.xlu0 %4432, %v4428
  %v4434 = vpop.permute.xlu0 %4433
  %v4436 = vlaneseq
  %v4437 = vshrl.u32 %v4436, 7
  %v4438 = vsub.s32 0, %v4437
  %v4439 = vrot.slane %v4429, %v4438
  %v4440 = vmul.f32 %v4434, %v4439
  %4441 = vset.pattern.permute.xlu0 1
  %4442 = vperm.xlu0 %4441, %v4428
  %v4443 = vpop.permute.xlu0 %4442
  %v4445 = vlaneseq
  %v4446 = vshrl.u32 %v4445, 7
  %v4447 = vsub.s32 1, %v4446
  %v4448 = vrot.slane %v4429, %v4447
  %v4449 = vmul.f32 %v4443, %v4448
  %v4450 = vadd.f32 %v4440, %v4449
  %4451 = vset.pattern.permute.xlu0 2
  %4452 = vperm.xlu0 %4451, %v4428
  %v4453 = vpop.permute.xlu0 %4452
  %v4455 = vlaneseq
  %v4456 = vshrl.u32 %v4455, 7
  %v4457 = vsub.s32 2, %v4456
  %v4458 = vrot.slane %v4429, %v4457
  %v4459 = vmul.f32 %v4453, %v4458
  %v4460 = vadd.f32 %v4450, %v4459
  %v4461 = vlaneseq
  %v4462 = vshrl.u32 %v4461, 7
  %v4463 = vsub.s32 0, %v4462
  %v4464 = vrot.slane %v4430, %v4463
  %v4465 = vadd.f32 %v4460, %v4464
  %v4466 = vsel %vm1390, %v4428, 0.0
  %4467 = vadd.xlane.f32.xlu0 %v4466
  %v4468 = vpop.xlane.xlu0 %4467
  %v4469 = vmul.f32 %v4468, %v1419
  %v4470 = vsub.f32 %v4428, %v4469
  %v4471 = vmul.f32 %v4470, %v4470
  %v4472 = vsel %vm1390, %v4471, 0.0
  %4473 = vadd.xlane.f32.xlu0 %v4472
  %v4474 = vpop.xlane.xlu0 %4473
  %v4475 = vmul.f32 %v4474, %v1419
  %v4476 = vadd.f32 %v4475, 1e-05
  %v4477 = vrsqrt.pop %v4476
  %v4478 = vmul.f32 %v4470, %v4477
  %v4479 = vld [vmem:[%s1586] sm:$0x1]
  %v4480 = vlaneseq
  %v4481 = vshrl.u32 %v4480, 7
  %v4482 = vsub.s32 0, %v4481
  %v4483 = vrot.slane %v4479, %v4482
  %v4484 = vmul.f32 %v4478, %v4483
  %v4485 = vld [vmem:[%s1593] sm:$0x1]
  %v4486 = vlaneseq
  %v4487 = vshrl.u32 %v4486, 7
  %v4488 = vsub.s32 0, %v4487
  %v4489 = vrot.slane %v4485, %v4488
  %v4490 = vadd.f32 %v4484, %v4489
  %v4491 = vld [vmem:[%s1600] sm:$0x7]
  %v4492 = vld [vmem:[%s1602] sm:$0x1]
  %4494 = vset.pattern.permute.xlu0 0
  %4495 = vperm.xlu0 %4494, %v4490
  %v4496 = vpop.permute.xlu0 %4495
  %v4498 = vlaneseq
  %v4499 = vshrl.u32 %v4498, 7
  %v4500 = vsub.s32 0, %v4499
  %v4501 = vrot.slane %v4491, %v4500
  %v4502 = vmul.f32 %v4496, %v4501
  %4503 = vset.pattern.permute.xlu0 1
  %4504 = vperm.xlu0 %4503, %v4490
  %v4505 = vpop.permute.xlu0 %4504
  %v4507 = vlaneseq
  %v4508 = vshrl.u32 %v4507, 7
  %v4509 = vsub.s32 1, %v4508
  %v4510 = vrot.slane %v4491, %v4509
  %v4511 = vmul.f32 %v4505, %v4510
  %v4512 = vadd.f32 %v4502, %v4511
  %4513 = vset.pattern.permute.xlu0 2
  %4514 = vperm.xlu0 %4513, %v4490
  %v4515 = vpop.permute.xlu0 %4514
  %v4517 = vlaneseq
  %v4518 = vshrl.u32 %v4517, 7
  %v4519 = vsub.s32 2, %v4518
  %v4520 = vrot.slane %v4491, %v4519
  %v4521 = vmul.f32 %v4515, %v4520
  %v4522 = vadd.f32 %v4512, %v4521
  %v4523 = vlaneseq
  %v4524 = vshrl.u32 %v4523, 7
  %v4525 = vsub.s32 0, %v4524
  %v4526 = vrot.slane %v4492, %v4525
  %v4527 = vadd.f32 %v4522, %v4526
  %v4528 = vmax.f32 %v4527, 0.0
  %v4529 = vld [vmem:[%s1640] sm:$0xff]
  %v4530 = vld [vmem:[%s1640 + $0x8] sm:$0xff]
  %v4531 = vld [vmem:[%s1640 + $0x10] sm:$0xff]
  %v4532 = vld [vmem:[%s1640 + $0x18] sm:$0xff]
  %v4533 = vld [vmem:[%s1645] sm:$0x1]
  %v4534 = vlaneseq
  %v4535 = vshrl.u32 %v4534, 7
  %v4536 = vsub.s32 0, %v4535
  %v4537 = vrot.slane %v4533, %v4536
  %v4539 = vsel %vm238, %v4528, 0
  %4541 = vmatprep.subr.mxu0 0.0
  %4542 = vmatpush1.msra.mxu0 0.0
  %4543 = vmatprep.subr.mxu0 0.0
  %4544 = vmatpush1.msra.mxu0 0.0
  %4545 = vmatprep.subr.mxu0 0.0
  %4546 = vmatpush1.msra.mxu0 0.0
  %4547 = vmatprep.subr.mxu0 0.0
  %4548 = vmatpush1.msra.mxu0 0.0
  %4549 = vmatprep.subr.mxu0 0.0
  %4550 = vmatpush1.msra.mxu0 0.0
  %4551 = vmatprep.subr.mxu0 0.0
  %4552 = vmatpush1.msra.mxu0 0.0
  %4553 = vmatprep.subr.mxu0 0.0
  %4554 = vmatpush1.msra.mxu0 0.0
  %4555 = vmatprep.subr.mxu0 0.0
  %4556 = vmatpush1.msra.mxu0 0.0
  %4557 = vmatprep.subr.mxu0 0.0
  %4558 = vmatpush1.msra.mxu0 0.0
  %4559 = vmatprep.subr.mxu0 0.0
  %4560 = vmatpush1.msra.mxu0 0.0
  %4561 = vmatprep.subr.mxu0 0.0
  %4562 = vmatpush1.msra.mxu0 0.0
  %4563 = vmatprep.subr.mxu0 0.0
  %4564 = vmatpush1.msra.mxu0 0.0
  %4565 = vmatprep.subr.mxu0 0.0
  %4566 = vmatpush1.msra.mxu0 %v4532
  %4567 = vmatprep.subr.mxu0 0.0
  %4568 = vmatpush1.msra.mxu0 %v4531
  %4569 = vmatprep.subr.mxu0 0.0
  %4570 = vmatpush1.msra.mxu0 %v4530
  %4571 = vmatprep.subr.mxu0 0.0
  %4572 = vmatpush1.msra.mxu0 %v4529
  %4573 = vmatprep.subr.mxu0 0.0
  %4574 = vmatpush2.msra.mxu0 0.0
  %4575 = vmatprep.subr.mxu0 0.0
  %4576 = vmatpush2.msra.mxu0 0.0
  %4577 = vmatprep.subr.mxu0 0.0
  %4578 = vmatpush2.msra.mxu0 0.0
  %4579 = vmatprep.subr.mxu0 0.0
  %4580 = vmatpush2.msra.mxu0 0.0
  %4581 = vmatprep.subr.mxu0 0.0
  %4582 = vmatpush2.msra.mxu0 0.0
  %4583 = vmatprep.subr.mxu0 0.0
  %4584 = vmatpush2.msra.mxu0 0.0
  %4585 = vmatprep.subr.mxu0 0.0
  %4586 = vmatpush2.msra.mxu0 0.0
  %4587 = vmatprep.subr.mxu0 0.0
  %4588 = vmatpush2.msra.mxu0 0.0
  %4589 = vmatprep.subr.mxu0 0.0
  %4590 = vmatpush2.msra.mxu0 0.0
  %4591 = vmatprep.subr.mxu0 0.0
  %4592 = vmatpush2.msra.mxu0 0.0
  %4593 = vmatprep.subr.mxu0 0.0
  %4594 = vmatpush2.msra.mxu0 0.0
  %4595 = vmatprep.subr.mxu0 0.0
  %4596 = vmatpush2.msra.mxu0 0.0
  %4597 = vmatprep.subr.mxu0 0.0
  %4598 = vmatpush2.msra.mxu0 0.0
  %4599 = vmatprep.subr.mxu0 0.0
  %4600 = vmatpush2.msra.mxu0 0.0
  %4601 = vmatprep.subr.mxu0 0.0
  %4602 = vmatpush2.msra.mxu0 0.0
  %4603 = vmatprep.subr.mxu0 0.0
  %4604 = vmatpush2.msra.mxu0 0.0
  %4605 = vmatprep.mubr.f32.mxu0 0.0
  %4606 = vmatmul.mubr.f32.gmra.mxu0 %v4539
  %v4607 = vpop.f32.mrf.mxu0
  %v4608 = vadd.f32 %v4537, %v4607
  %v4609 = vpop.f32.mrf.mxu0
  %4610 = vdwg.mxu0
  %v4611 = vadd.f32 %v4465, %v4608
  %v4612 = vld [vmem:[%s1725] sm:$0xff]
  %v4613 = vsel %vm1727, %v4611, 0.0
  %4614 = vadd.xlane.f32.xlu0 %v4613
  %v4615 = vpop.xlane.xlu0 %4614
  %v4616 = vmul.f32 %v4615, %v1731
  %v4617 = vsub.f32 %v4611, %v4616
  %v4618 = vmul.f32 %v4617, %v4617
  %v4619 = vsel %vm1727, %v4618, 0.0
  %4620 = vadd.xlane.f32.xlu0 %v4619
  %v4621 = vpop.xlane.xlu0 %4620
  %v4622 = vmul.f32 %v4621, %v1731
  %v4623 = vadd.f32 %v4622, 1e-05
  %v4624 = vrsqrt.pop %v4623
  %v4625 = vmul.f32 %v4617, %v4624
  %v4626 = vld [vmem:[%s1742] sm:$0x1]
  %v4627 = vlaneseq
  %v4628 = vshrl.u32 %v4627, 7
  %v4629 = vsub.s32 0, %v4628
  %v4630 = vrot.slane %v4626, %v4629
  %v4631 = vmul.f32 %v4625, %v4630
  %v4632 = vld [vmem:[%s1749] sm:$0x1]
  %v4633 = vlaneseq
  %v4634 = vshrl.u32 %v4633, 7
  %v4635 = vsub.s32 0, %v4634
  %v4636 = vrot.slane %v4632, %v4635
  %v4637 = vadd.f32 %v4631, %v4636
  %v4638 = vld [vmem:[%s1756] sm:$0xff]
  %4640 = vset.pattern.permute.xlu0 0
  %4641 = vperm.xlu0 %4640, %v4612
  %v4642 = vpop.permute.xlu0 %4641
  %v4644 = vlaneseq
  %v4645 = vshrl.u32 %v4644, 7
  %v4646 = vsub.s32 0, %v4645
  %v4647 = vrot.slane %v4637, %v4646
  %v4648 = vmul.f32 %v4642, %v4647
  %4649 = vset.pattern.permute.xlu0 1
  %4650 = vperm.xlu0 %4649, %v4612
  %v4651 = vpop.permute.xlu0 %4650
  %v4653 = vlaneseq
  %v4654 = vshrl.u32 %v4653, 7
  %v4655 = vsub.s32 1, %v4654
  %v4656 = vrot.slane %v4637, %v4655
  %v4657 = vmul.f32 %v4651, %v4656
  %v4658 = vadd.f32 %v4648, %v4657
  %4659 = vset.pattern.permute.xlu0 2
  %4660 = vperm.xlu0 %4659, %v4612
  %v4661 = vpop.permute.xlu0 %4660
  %v4663 = vlaneseq
  %v4664 = vshrl.u32 %v4663, 7
  %v4665 = vsub.s32 2, %v4664
  %v4666 = vrot.slane %v4637, %v4665
  %v4667 = vmul.f32 %v4661, %v4666
  %v4668 = vadd.f32 %v4658, %v4667
  %4669 = vset.pattern.permute.xlu0 3
  %4670 = vperm.xlu0 %4669, %v4612
  %v4671 = vpop.permute.xlu0 %4670
  %v4673 = vlaneseq
  %v4674 = vshrl.u32 %v4673, 7
  %v4675 = vsub.s32 3, %v4674
  %v4676 = vrot.slane %v4637, %v4675
  %v4677 = vmul.f32 %v4671, %v4676
  %v4678 = vadd.f32 %v4668, %v4677
  %4679 = vset.pattern.permute.xlu0 4
  %4680 = vperm.xlu0 %4679, %v4612
  %v4681 = vpop.permute.xlu0 %4680
  %v4683 = vlaneseq
  %v4684 = vshrl.u32 %v4683, 7
  %v4685 = vsub.s32 4, %v4684
  %v4686 = vrot.slane %v4637, %v4685
  %v4687 = vmul.f32 %v4681, %v4686
  %v4688 = vadd.f32 %v4678, %v4687
  %4689 = vset.pattern.permute.xlu0 5
  %4690 = vperm.xlu0 %4689, %v4612
  %v4691 = vpop.permute.xlu0 %4690
  %v4693 = vlaneseq
  %v4694 = vshrl.u32 %v4693, 7
  %v4695 = vsub.s32 5, %v4694
  %v4696 = vrot.slane %v4637, %v4695
  %v4697 = vmul.f32 %v4691, %v4696
  %v4698 = vadd.f32 %v4688, %v4697
  %4699 = vset.pattern.permute.xlu0 6
  %4700 = vperm.xlu0 %4699, %v4612
  %v4701 = vpop.permute.xlu0 %4700
  %v4703 = vlaneseq
  %v4704 = vshrl.u32 %v4703, 7
  %v4705 = vsub.s32 6, %v4704
  %v4706 = vrot.slane %v4637, %v4705
  %v4707 = vmul.f32 %v4701, %v4706
  %v4708 = vadd.f32 %v4698, %v4707
  %4709 = vset.pattern.permute.xlu0 7
  %4710 = vperm.xlu0 %4709, %v4612
  %v4711 = vpop.permute.xlu0 %4710
  %v4713 = vlaneseq
  %v4714 = vshrl.u32 %v4713, 7
  %v4715 = vsub.s32 7, %v4714
  %v4716 = vrot.slane %v4637, %v4715
  %v4717 = vmul.f32 %v4711, %v4716
  %v4718 = vadd.f32 %v4708, %v4717
  %4720 = vset.pattern.permute.xlu0 0
  %4721 = vperm.xlu0 %4720, %v4638
  %v4722 = vpop.permute.xlu0 %4721
  %v4724 = vadd.f32 %v4718, %v4722
  %v4725 = vmax.f32 %v4724, 0.0
  %v4726 = vadd.f32 %v4611, %v4725
  %v4727 = vsel %vm1727, %v4726, 0.0
  %4728 = vadd.xlane.f32.xlu0 %v4727
  %v4729 = vpop.xlane.xlu0 %4728
  %v4730 = vmul.f32 %v4729, %v1731
  %v4731 = vsub.f32 %v4726, %v4730
  %v4732 = vmul.f32 %v4731, %v4731
  %v4733 = vsel %vm1727, %v4732, 0.0
  %4734 = vadd.xlane.f32.xlu0 %v4733
  %v4735 = vpop.xlane.xlu0 %4734
  %v4736 = vmul.f32 %v4735, %v1731
  %v4737 = vadd.f32 %v4736, 1e-05
  %v4738 = vrsqrt.pop %v4737
  %v4739 = vmul.f32 %v4731, %v4738
  %v4740 = vld [vmem:[%s1859] sm:$0x1]
  %v4741 = vlaneseq
  %v4742 = vshrl.u32 %v4741, 7
  %v4743 = vsub.s32 0, %v4742
  %v4744 = vrot.slane %v4740, %v4743
  %v4745 = vmul.f32 %v4739, %v4744
  %v4746 = vld [vmem:[%s1866] sm:$0x1]
  %v4747 = vlaneseq
  %v4748 = vshrl.u32 %v4747, 7
  %v4749 = vsub.s32 0, %v4748
  %v4750 = vrot.slane %v4746, %v4749
  %v4751 = vadd.f32 %v4745, %v4750
  %v4752 = vld [vmem:[%s1873] sm:$0x3]
  %v4753 = vld [vmem:[%s1875] sm:$0x1]
  %4755 = vset.pattern.permute.xlu0 0
  %4756 = vperm.xlu0 %4755, %v4751
  %v4757 = vpop.permute.xlu0 %4756
  %v4759 = vlaneseq
  %v4760 = vshrl.u32 %v4759, 7
  %v4761 = vsub.s32 0, %v4760
  %v4762 = vrot.slane %v4752, %v4761
  %v4763 = vmul.f32 %v4757, %v4762
  %4764 = vset.pattern.permute.xlu0 1
  %4765 = vperm.xlu0 %4764, %v4751
  %v4766 = vpop.permute.xlu0 %4765
  %v4768 = vlaneseq
  %v4769 = vshrl.u32 %v4768, 7
  %v4770 = vsub.s32 1, %v4769
  %v4771 = vrot.slane %v4752, %v4770
  %v4772 = vmul.f32 %v4766, %v4771
  %v4773 = vadd.f32 %v4763, %v4772
  %v4774 = vlaneseq
  %v4775 = vshrl.u32 %v4774, 7
  %v4776 = vsub.s32 0, %v4775
  %v4777 = vrot.slane %v4753, %v4776
  %v4778 = vadd.f32 %v4773, %v4777
  %v4779 = vmax.f32 %v4778, 0.0
  %v4780 = vld [vmem:[%s1903] sm:$0xff]
  %v4781 = vld [vmem:[%s1903 + $0x8] sm:$0xff]
  %v4782 = vld [vmem:[%s1903 + $0x10] sm:$0xff]
  %v4783 = vld [vmem:[%s1903 + $0x18] sm:$0xff]
  %v4784 = vld [vmem:[%s1908] sm:$0x1]
  %v4785 = vlaneseq
  %v4786 = vshrl.u32 %v4785, 7
  %v4787 = vsub.s32 0, %v4786
  %v4788 = vrot.slane %v4784, %v4787
  %v4790 = vsel %vm238, %v4779, 0
  %4792 = vmatprep.subr.mxu0 0.0
  %4793 = vmatpush1.msra.mxu0 0.0
  %4794 = vmatprep.subr.mxu0 0.0
  %4795 = vmatpush1.msra.mxu0 0.0
  %4796 = vmatprep.subr.mxu0 0.0
  %4797 = vmatpush1.msra.mxu0 0.0
  %4798 = vmatprep.subr.mxu0 0.0
  %4799 = vmatpush1.msra.mxu0 0.0
  %4800 = vmatprep.subr.mxu0 0.0
  %4801 = vmatpush1.msra.mxu0 0.0
  %4802 = vmatprep.subr.mxu0 0.0
  %4803 = vmatpush1.msra.mxu0 0.0
  %4804 = vmatprep.subr.mxu0 0.0
  %4805 = vmatpush1.msra.mxu0 0.0
  %4806 = vmatprep.subr.mxu0 0.0
  %4807 = vmatpush1.msra.mxu0 0.0
  %4808 = vmatprep.subr.mxu0 0.0
  %4809 = vmatpush1.msra.mxu0 0.0
  %4810 = vmatprep.subr.mxu0 0.0
  %4811 = vmatpush1.msra.mxu0 0.0
  %4812 = vmatprep.subr.mxu0 0.0
  %4813 = vmatpush1.msra.mxu0 0.0
  %4814 = vmatprep.subr.mxu0 0.0
  %4815 = vmatpush1.msra.mxu0 0.0
  %4816 = vmatprep.subr.mxu0 0.0
  %4817 = vmatpush1.msra.mxu0 %v4783
  %4818 = vmatprep.subr.mxu0 0.0
  %4819 = vmatpush1.msra.mxu0 %v4782
  %4820 = vmatprep.subr.mxu0 0.0
  %4821 = vmatpush1.msra.mxu0 %v4781
  %4822 = vmatprep.subr.mxu0 0.0
  %4823 = vmatpush1.msra.mxu0 %v4780
  %4824 = vmatprep.subr.mxu0 0.0
  %4825 = vmatpush2.msra.mxu0 0.0
  %4826 = vmatprep.subr.mxu0 0.0
  %4827 = vmatpush2.msra.mxu0 0.0
  %4828 = vmatprep.subr.mxu0 0.0
  %4829 = vmatpush2.msra.mxu0 0.0
  %4830 = vmatprep.subr.mxu0 0.0
  %4831 = vmatpush2.msra.mxu0 0.0
  %4832 = vmatprep.subr.mxu0 0.0
  %4833 = vmatpush2.msra.mxu0 0.0
  %4834 = vmatprep.subr.mxu0 0.0
  %4835 = vmatpush2.msra.mxu0 0.0
  %4836 = vmatprep.subr.mxu0 0.0
  %4837 = vmatpush2.msra.mxu0 0.0
  %4838 = vmatprep.subr.mxu0 0.0
  %4839 = vmatpush2.msra.mxu0 0.0
  %4840 = vmatprep.subr.mxu0 0.0
  %4841 = vmatpush2.msra.mxu0 0.0
  %4842 = vmatprep.subr.mxu0 0.0
  %4843 = vmatpush2.msra.mxu0 0.0
  %4844 = vmatprep.subr.mxu0 0.0
  %4845 = vmatpush2.msra.mxu0 0.0
  %4846 = vmatprep.subr.mxu0 0.0
  %4847 = vmatpush2.msra.mxu0 0.0
  %4848 = vmatprep.subr.mxu0 0.0
  %4849 = vmatpush2.msra.mxu0 0.0
  %4850 = vmatprep.subr.mxu0 0.0
  %4851 = vmatpush2.msra.mxu0 0.0
  %4852 = vmatprep.subr.mxu0 0.0
  %4853 = vmatpush2.msra.mxu0 0.0
  %4854 = vmatprep.subr.mxu0 0.0
  %4855 = vmatpush2.msra.mxu0 0.0
  %4856 = vmatprep.mubr.f32.mxu0 0.0
  %4857 = vmatmul.mubr.f32.gmra.mxu0 %v4790
  %v4858 = vpop.f32.mrf.mxu0
  %v4859 = vadd.f32 %v4788, %v4858
  %v4860 = vpop.f32.mrf.mxu0
  %4861 = vdwg.mxu0
  %v4862 = vadd.f32 %v4726, %v4859
  %v4863 = vld [vmem:[%s1988] sm:$0x3]
  %v4864 = vld [vmem:[%s1990] sm:$0x1]
  %4866 = vset.pattern.permute.xlu0 0
  %4867 = vperm.xlu0 %4866, %v4862
  %v4868 = vpop.permute.xlu0 %4867
  %v4870 = vlaneseq
  %v4871 = vshrl.u32 %v4870, 7
  %v4872 = vsub.s32 0, %v4871
  %v4873 = vrot.slane %v4863, %v4872
  %v4874 = vmul.f32 %v4868, %v4873
  %4875 = vset.pattern.permute.xlu0 1
  %4876 = vperm.xlu0 %4875, %v4862
  %v4877 = vpop.permute.xlu0 %4876
  %v4879 = vlaneseq
  %v4880 = vshrl.u32 %v4879, 7
  %v4881 = vsub.s32 1, %v4880
  %v4882 = vrot.slane %v4863, %v4881
  %v4883 = vmul.f32 %v4877, %v4882
  %v4884 = vadd.f32 %v4874, %v4883
  %v4885 = vlaneseq
  %v4886 = vshrl.u32 %v4885, 7
  %v4887 = vsub.s32 0, %v4886
  %v4888 = vrot.slane %v4864, %v4887
  %v4889 = vadd.f32 %v4884, %v4888
  %vm4890 = vcmp.ge.f32.partialorder %v4889, 0.0
  %v4891 = vmul.f32 %v4889, 0.01
  %v4892 = vsel %vm4890, %v4889, %v4891
  %v4893 = vsel %vm458, %v4892, 0.0
  %4894 = vadd.xlane.f32.xlu0 %v4893
  %v4895 = vpop.xlane.xlu0 %4894
  %v4896 = vmul.f32 %v4895, %v869
  %v4897 = vsub.f32 %v4892, %v4896
  %v4898 = vmul.f32 %v4897, %v4897
  %v4899 = vsel %vm458, %v4898, 0.0
  %4900 = vadd.xlane.f32.xlu0 %v4899
  %v4901 = vpop.xlane.xlu0 %4900
  %v4902 = vmul.f32 %v4901, %v869
  %v4903 = vadd.f32 %v4902, 1e-05
  %v4904 = vrsqrt.pop %v4903
  %v4905 = vmul.f32 %v4897, %v4904
  %v4906 = vld [vmem:[%s2033] sm:$0x1]
  %v4907 = vlaneseq
  %v4908 = vshrl.u32 %v4907, 7
  %v4909 = vsub.s32 0, %v4908
  %v4910 = vrot.slane %v4906, %v4909
  %v4911 = vmul.f32 %v4905, %v4910
  %v4912 = vld [vmem:[%s2040] sm:$0x1]
  %v4913 = vlaneseq
  %v4914 = vshrl.u32 %v4913, 7
  %v4915 = vsub.s32 0, %v4914
  %v4916 = vrot.slane %v4912, %v4915
  %v4917 = vadd.f32 %v4911, %v4916
  %v4918 = vld [vmem:[%s2047] sm:$0xff]
  %v4919 = vld [vmem:[%s2049] sm:$0x1]
  %v4920 = vlaneseq
  %v4921 = vshrl.u32 %v4920, 7
  %v4922 = vsub.s32 0, %v4921
  %v4923 = vrot.slane %v4918, %v4922
  %v4924 = vmul.f32 %v4917, %v4923
  %v4925 = vlaneseq
  %v4926 = vshrl.u32 %v4925, 7
  %v4927 = vsub.s32 1, %v4926
  %v4928 = vrot.slane %v4918, %v4927
  %4930 = vrot.lane.b32.xlu0 %v4928, 1
  %v4931 = vpop.permute.xlu0 %4930
  %v4933 = vmul.f32 %v4917, %v4931
  %4935 = vrot.lane.b32.xlu0 %v4933, 127
  %v4936 = vpop.permute.xlu0 %4935
  %v4938 = vadd.f32 %v4924, %v4936
  %v4939 = vlaneseq
  %v4940 = vshrl.u32 %v4939, 7
  %v4941 = vsub.s32 2, %v4940
  %v4942 = vrot.slane %v4918, %v4941
  %4944 = vrot.lane.b32.xlu0 %v4942, 2
  %v4945 = vpop.permute.xlu0 %4944
  %v4947 = vmul.f32 %v4917, %v4945
  %4949 = vrot.lane.b32.xlu0 %v4947, 126
  %v4950 = vpop.permute.xlu0 %4949
  %v4952 = vadd.f32 %v4938, %v4950
  %v4953 = vlaneseq
  %v4954 = vshrl.u32 %v4953, 7
  %v4955 = vsub.s32 3, %v4954
  %v4956 = vrot.slane %v4918, %v4955
  %4958 = vrot.lane.b32.xlu0 %v4956, 3
  %v4959 = vpop.permute.xlu0 %4958
  %v4961 = vmul.f32 %v4917, %v4959
  %4963 = vrot.lane.b32.xlu0 %v4961, 125
  %v4964 = vpop.permute.xlu0 %4963
  %v4966 = vadd.f32 %v4952, %v4964
  %v4967 = vlaneseq
  %v4968 = vshrl.u32 %v4967, 7
  %v4969 = vsub.s32 4, %v4968
  %v4970 = vrot.slane %v4918, %v4969
  %4972 = vrot.lane.b32.xlu0 %v4970, 4
  %v4973 = vpop.permute.xlu0 %4972
  %v4975 = vmul.f32 %v4917, %v4973
  %4977 = vrot.lane.b32.xlu0 %v4975, 124
  %v4978 = vpop.permute.xlu0 %4977
  %v4980 = vadd.f32 %v4966, %v4978
  %v4981 = vlaneseq
  %v4982 = vshrl.u32 %v4981, 7
  %v4983 = vsub.s32 5, %v4982
  %v4984 = vrot.slane %v4918, %v4983
  %4986 = vrot.lane.b32.xlu0 %v4984, 5
  %v4987 = vpop.permute.xlu0 %4986
  %v4989 = vmul.f32 %v4917, %v4987
  %4991 = vrot.lane.b32.xlu0 %v4989, 123
  %v4992 = vpop.permute.xlu0 %4991
  %v4994 = vadd.f32 %v4980, %v4992
  %v4995 = vlaneseq
  %v4996 = vshrl.u32 %v4995, 7
  %v4997 = vsub.s32 6, %v4996
  %v4998 = vrot.slane %v4918, %v4997
  %5000 = vrot.lane.b32.xlu0 %v4998, 6
  %v5001 = vpop.permute.xlu0 %5000
  %v5003 = vmul.f32 %v4917, %v5001
  %5005 = vrot.lane.b32.xlu0 %v5003, 122
  %v5006 = vpop.permute.xlu0 %5005
  %v5008 = vadd.f32 %v4994, %v5006
  %v5009 = vlaneseq
  %v5010 = vshrl.u32 %v5009, 7
  %v5011 = vsub.s32 7, %v5010
  %v5012 = vrot.slane %v4918, %v5011
  %5014 = vrot.lane.b32.xlu0 %v5012, 7
  %v5015 = vpop.permute.xlu0 %5014
  %v5017 = vmul.f32 %v4917, %v5015
  %5019 = vrot.lane.b32.xlu0 %v5017, 121
  %v5020 = vpop.permute.xlu0 %5019
  %v5022 = vadd.f32 %v5008, %v5020
  %v5023 = vlaneseq
  %v5024 = vshrl.u32 %v5023, 7
  %v5025 = vsub.s32 0, %v5024
  %v5026 = vrot.slane %v4919, %v5025
  %v5027 = vadd.f32 %v5022, %v5026
  %5029 = vrot.lane.b32.xlu0 %v5027, 6
  %v5030 = vpop.permute.xlu0 %5029
  %5032 = vst.msk [vmem:[%s4293] sm:$0xff] %vm2163, %v5030
  %v5033 = vld [vmem:[%s2165] sm:$0x3]
  %5034 = vset.pattern.permute.xlu0 0
  %5035 = vperm.xlu0 %5034, %v5027
  %v5036 = vpop.permute.xlu0 %5035
  %v5038 = vlaneseq
  %v5039 = vshrl.u32 %v5038, 7
  %v5040 = vsub.s32 0, %v5039
  %v5041 = vrot.slane %v5033, %v5040
  %v5042 = vmul.f32 %v5036, %v5041
  %v5043 = vlaneseq
  %v5044 = vshrl.u32 %v5043, 7
  %v5045 = vsub.s32 1, %v5044
  %v5046 = vrot.slane %v5033, %v5045
  %v5047 = vmul.f32 %v3261, %v5046
  %v5048 = vadd.f32 %v5042, %v5047
  %v5049 = vld [vmem:[%s2182] sm:$0x1]
  %v5050 = vlaneseq
  %v5051 = vshrl.u32 %v5050, 7
  %v5052 = vsub.s32 0, %v5051
  %v5053 = vrot.slane %v5049, %v5052
  %v5054 = vadd.f32 %v5048, %v5053
  %v5055 = vsel %vm1727, %v5054, 0.0
  %5056 = vadd.xlane.f32.xlu0 %v5055
  %v5057 = vpop.xlane.xlu0 %5056
  %v5058 = vmul.f32 %v5057, %v1731
  %v5059 = vsub.f32 %v5054, %v5058
  %v5060 = vmul.f32 %v5059, %v5059
  %v5061 = vsel %vm1727, %v5060, 0.0
  %5062 = vadd.xlane.f32.xlu0 %v5061
  %v5063 = vpop.xlane.xlu0 %5062
  %v5064 = vmul.f32 %v5063, %v1731
  %v5065 = vadd.f32 %v5064, 1e-05
  %v5066 = vrsqrt.pop %v5065
  %v5067 = vmul.f32 %v5059, %v5066
  %v5068 = vld [vmem:[%s2202] sm:$0x1]
  %v5069 = vlaneseq
  %v5070 = vshrl.u32 %v5069, 7
  %v5071 = vsub.s32 0, %v5070
  %v5072 = vrot.slane %v5068, %v5071
  %v5073 = vmul.f32 %v5067, %v5072
  %v5074 = vld [vmem:[%s2209] sm:$0x1]
  %v5075 = vlaneseq
  %v5076 = vshrl.u32 %v5075, 7
  %v5077 = vsub.s32 0, %v5076
  %v5078 = vrot.slane %v5074, %v5077
  %v5079 = vadd.f32 %v5073, %v5078
  %v5080 = vmax.f32 %v5079, 0.0
  %v5081 = vld [vmem:[%s2217] sm:$0x3]
  %v5082 = vld [vmem:[%s2219] sm:$0x1]
  %v5083 = vlaneseq
  %v5084 = vshrl.u32 %v5083, 7
  %v5085 = vsub.s32 0, %v5084
  %v5086 = vrot.slane %v5081, %v5085
  %v5087 = vmul.f32 %v5080, %v5086
  %v5088 = vlaneseq
  %v5089 = vshrl.u32 %v5088, 7
  %v5090 = vsub.s32 1, %v5089
  %v5091 = vrot.slane %v5081, %v5090
  %5093 = vrot.lane.b32.xlu0 %v5091, 1
  %v5094 = vpop.permute.xlu0 %5093
  %v5096 = vmul.f32 %v5080, %v5094
  %5098 = vrot.lane.b32.xlu0 %v5096, 127
  %v5099 = vpop.permute.xlu0 %5098
  %v5101 = vadd.f32 %v5087, %v5099
  %v5102 = vlaneseq
  %v5103 = vshrl.u32 %v5102, 7
  %v5104 = vsub.s32 0, %v5103
  %v5105 = vrot.slane %v5082, %v5104
  %v5106 = vadd.f32 %v5101, %v5105
  %5108 = vrot.lane.b32.xlu0 %v5106, 7
  %v5109 = vpop.permute.xlu0 %5108
  %5111 = vst.msk [vmem:[%s4293] sm:$0xff] %vm2249, %v5109
  %v5112 = vld [vmem:[%s4293] sm:$0xff]
  %v5113 = vlaneseq
  %v5114 = vshrl.u32 %v5113, 7
  %v5115 = vsub.s32 0, %v5114
  %v5116 = vrot.slane %v5112, %v5115
  %v5117 = vsub.f32 %v5112, %v5116
  %5119 = vrot.lane.b32.xlu0 %v5117, 124
  %v5120 = vpop.permute.xlu0 %5119
  %s5122 = scalar_lea.vmem [#allocation3], 8
  %5123 = vst.msk [vmem:[%s5122] sm:$0xff] %vm2261, %v5120
  %5124 = vrot.lane.b32.xlu0 %v4290, 127
  %v5125 = vpop.permute.xlu0 %5124
  %5127 = vst.msk [vmem:[%s5122] sm:$0xff] %vm2266, %v5125
  %v5128 = vld [vmem:[%s5122] sm:$0xff]
  %v5129 = vld [vmem:[%s2269] sm:$0xff]
  %v5130 = vsel %vm1727, %v5128, 0.0
  %5131 = vadd.xlane.f32.xlu0 %v5130
  %v5132 = vpop.xlane.xlu0 %5131
  %v5133 = vmul.f32 %v5132, %v1731
  %v5134 = vsub.f32 %v5128, %v5133
  %v5135 = vmul.f32 %v5134, %v5134
  %v5136 = vsel %vm1727, %v5135, 0.0
  %5137 = vadd.xlane.f32.xlu0 %v5136
  %v5138 = vpop.xlane.xlu0 %5137
  %v5139 = vmul.f32 %v5138, %v1731
  %v5140 = vadd.f32 %v5139, 1e-05
  %v5141 = vrsqrt.pop %v5140
  %v5142 = vmul.f32 %v5134, %v5141
  %v5143 = vld [vmem:[%s2284] sm:$0x1]
  %v5144 = vlaneseq
  %v5145 = vshrl.u32 %v5144, 7
  %v5146 = vsub.s32 0, %v5145
  %v5147 = vrot.slane %v5143, %v5146
  %v5148 = vmul.f32 %v5142, %v5147
  %v5149 = vld [vmem:[%s2291] sm:$0x1]
  %v5150 = vlaneseq
  %v5151 = vshrl.u32 %v5150, 7
  %v5152 = vsub.s32 0, %v5151
  %v5153 = vrot.slane %v5149, %v5152
  %v5154 = vadd.f32 %v5148, %v5153
  %v5155 = vld [vmem:[%s2298] sm:$0xff]
  %5157 = vset.pattern.permute.xlu0 0
  %5158 = vperm.xlu0 %5157, %v5129
  %v5159 = vpop.permute.xlu0 %5158
  %v5161 = vlaneseq
  %v5162 = vshrl.u32 %v5161, 7
  %v5163 = vsub.s32 0, %v5162
  %v5164 = vrot.slane %v5154, %v5163
  %v5165 = vmul.f32 %v5159, %v5164
  %5166 = vset.pattern.permute.xlu0 1
  %5167 = vperm.xlu0 %5166, %v5129
  %v5168 = vpop.permute.xlu0 %5167
  %v5170 = vlaneseq
  %v5171 = vshrl.u32 %v5170, 7
  %v5172 = vsub.s32 1, %v5171
  %v5173 = vrot.slane %v5154, %v5172
  %v5174 = vmul.f32 %v5168, %v5173
  %v5175 = vadd.f32 %v5165, %v5174
  %5176 = vset.pattern.permute.xlu0 2
  %5177 = vperm.xlu0 %5176, %v5129
  %v5178 = vpop.permute.xlu0 %5177
  %v5180 = vlaneseq
  %v5181 = vshrl.u32 %v5180, 7
  %v5182 = vsub.s32 2, %v5181
  %v5183 = vrot.slane %v5154, %v5182
  %v5184 = vmul.f32 %v5178, %v5183
  %v5185 = vadd.f32 %v5175, %v5184
  %5186 = vset.pattern.permute.xlu0 3
  %5187 = vperm.xlu0 %5186, %v5129
  %v5188 = vpop.permute.xlu0 %5187
  %v5190 = vlaneseq
  %v5191 = vshrl.u32 %v5190, 7
  %v5192 = vsub.s32 3, %v5191
  %v5193 = vrot.slane %v5154, %v5192
  %v5194 = vmul.f32 %v5188, %v5193
  %v5195 = vadd.f32 %v5185, %v5194
  %5196 = vset.pattern.permute.xlu0 4
  %5197 = vperm.xlu0 %5196, %v5129
  %v5198 = vpop.permute.xlu0 %5197
  %v5200 = vlaneseq
  %v5201 = vshrl.u32 %v5200, 7
  %v5202 = vsub.s32 4, %v5201
  %v5203 = vrot.slane %v5154, %v5202
  %v5204 = vmul.f32 %v5198, %v5203
  %v5205 = vadd.f32 %v5195, %v5204
  %5206 = vset.pattern.permute.xlu0 5
  %5207 = vperm.xlu0 %5206, %v5129
  %v5208 = vpop.permute.xlu0 %5207
  %v5210 = vlaneseq
  %v5211 = vshrl.u32 %v5210, 7
  %v5212 = vsub.s32 5, %v5211
  %v5213 = vrot.slane %v5154, %v5212
  %v5214 = vmul.f32 %v5208, %v5213
  %v5215 = vadd.f32 %v5205, %v5214
  %5216 = vset.pattern.permute.xlu0 6
  %5217 = vperm.xlu0 %5216, %v5129
  %v5218 = vpop.permute.xlu0 %5217
  %v5220 = vlaneseq
  %v5221 = vshrl.u32 %v5220, 7
  %v5222 = vsub.s32 6, %v5221
  %v5223 = vrot.slane %v5154, %v5222
  %v5224 = vmul.f32 %v5218, %v5223
  %v5225 = vadd.f32 %v5215, %v5224
  %5226 = vset.pattern.permute.xlu0 7
  %5227 = vperm.xlu0 %5226, %v5129
  %v5228 = vpop.permute.xlu0 %5227
  %v5230 = vlaneseq
  %v5231 = vshrl.u32 %v5230, 7
  %v5232 = vsub.s32 7, %v5231
  %v5233 = vrot.slane %v5154, %v5232
  %v5234 = vmul.f32 %v5228, %v5233
  %v5235 = vadd.f32 %v5225, %v5234
  %5237 = vset.pattern.permute.xlu0 0
  %5238 = vperm.xlu0 %5237, %v5155
  %v5239 = vpop.permute.xlu0 %5238
  %v5241 = vadd.f32 %v5235, %v5239
  %v5242 = vmax.f32 %v5241, 0.0
  %v5243 = vadd.f32 %v5128, %v5242
  %v5244 = vsel %vm1727, %v5243, 0.0
  %5245 = vadd.xlane.f32.xlu0 %v5244
  %v5246 = vpop.xlane.xlu0 %5245
  %v5247 = vmul.f32 %v5246, %v1731
  %v5248 = vsub.f32 %v5243, %v5247
  %v5249 = vmul.f32 %v5248, %v5248
  %v5250 = vsel %vm1727, %v5249, 0.0
  %5251 = vadd.xlane.f32.xlu0 %v5250
  %v5252 = vpop.xlane.xlu0 %5251
  %v5253 = vmul.f32 %v5252, %v1731
  %v5254 = vadd.f32 %v5253, 1e-05
  %v5255 = vrsqrt.pop %v5254
  %v5256 = vmul.f32 %v5248, %v5255
  %v5257 = vld [vmem:[%s2401] sm:$0x1]
  %v5258 = vlaneseq
  %v5259 = vshrl.u32 %v5258, 7
  %v5260 = vsub.s32 0, %v5259
  %v5261 = vrot.slane %v5257, %v5260
  %v5262 = vmul.f32 %v5256, %v5261
  %v5263 = vld [vmem:[%s2408] sm:$0x1]
  %v5264 = vlaneseq
  %v5265 = vshrl.u32 %v5264, 7
  %v5266 = vsub.s32 0, %v5265
  %v5267 = vrot.slane %v5263, %v5266
  %v5268 = vadd.f32 %v5262, %v5267
  %v5269 = vld [vmem:[%s2415] sm:$0x3]
  %v5270 = vld [vmem:[%s2417] sm:$0x1]
  %5272 = vset.pattern.permute.xlu0 0
  %5273 = vperm.xlu0 %5272, %v5268
  %v5274 = vpop.permute.xlu0 %5273
  %v5276 = vlaneseq
  %v5277 = vshrl.u32 %v5276, 7
  %v5278 = vsub.s32 0, %v5277
  %v5279 = vrot.slane %v5269, %v5278
  %v5280 = vmul.f32 %v5274, %v5279
  %5281 = vset.pattern.permute.xlu0 1
  %5282 = vperm.xlu0 %5281, %v5268
  %v5283 = vpop.permute.xlu0 %5282
  %v5285 = vlaneseq
  %v5286 = vshrl.u32 %v5285, 7
  %v5287 = vsub.s32 1, %v5286
  %v5288 = vrot.slane %v5269, %v5287
  %v5289 = vmul.f32 %v5283, %v5288
  %v5290 = vadd.f32 %v5280, %v5289
  %v5291 = vlaneseq
  %v5292 = vshrl.u32 %v5291, 7
  %v5293 = vsub.s32 0, %v5292
  %v5294 = vrot.slane %v5270, %v5293
  %v5295 = vadd.f32 %v5290, %v5294
  %v5296 = vmax.f32 %v5295, 0.0
  %v5297 = vld [vmem:[%s2445] sm:$0xff]
  %v5298 = vld [vmem:[%s2445 + $0x8] sm:$0xff]
  %v5299 = vld [vmem:[%s2445 + $0x10] sm:$0xff]
  %v5300 = vld [vmem:[%s2445 + $0x18] sm:$0xff]
  %v5301 = vld [vmem:[%s2450] sm:$0x1]
  %v5302 = vlaneseq
  %v5303 = vshrl.u32 %v5302, 7
  %v5304 = vsub.s32 0, %v5303
  %v5305 = vrot.slane %v5301, %v5304
  %v5307 = vsel %vm238, %v5296, 0
  %5309 = vmatprep.subr.mxu0 0.0
  %5310 = vmatpush1.msra.mxu0 0.0
  %5311 = vmatprep.subr.mxu0 0.0
  %5312 = vmatpush1.msra.mxu0 0.0
  %5313 = vmatprep.subr.mxu0 0.0
  %5314 = vmatpush1.msra.mxu0 0.0
  %5315 = vmatprep.subr.mxu0 0.0
  %5316 = vmatpush1.msra.mxu0 0.0
  %5317 = vmatprep.subr.mxu0 0.0
  %5318 = vmatpush1.msra.mxu0 0.0
  %5319 = vmatprep.subr.mxu0 0.0
  %5320 = vmatpush1.msra.mxu0 0.0
  %5321 = vmatprep.subr.mxu0 0.0
  %5322 = vmatpush1.msra.mxu0 0.0
  %5323 = vmatprep.subr.mxu0 0.0
  %5324 = vmatpush1.msra.mxu0 0.0
  %5325 = vmatprep.subr.mxu0 0.0
  %5326 = vmatpush1.msra.mxu0 0.0
  %5327 = vmatprep.subr.mxu0 0.0
  %5328 = vmatpush1.msra.mxu0 0.0
  %5329 = vmatprep.subr.mxu0 0.0
  %5330 = vmatpush1.msra.mxu0 0.0
  %5331 = vmatprep.subr.mxu0 0.0
  %5332 = vmatpush1.msra.mxu0 0.0
  %5333 = vmatprep.subr.mxu0 0.0
  %5334 = vmatpush1.msra.mxu0 %v5300
  %5335 = vmatprep.subr.mxu0 0.0
  %5336 = vmatpush1.msra.mxu0 %v5299
  %5337 = vmatprep.subr.mxu0 0.0
  %5338 = vmatpush1.msra.mxu0 %v5298
  %5339 = vmatprep.subr.mxu0 0.0
  %5340 = vmatpush1.msra.mxu0 %v5297
  %5341 = vmatprep.subr.mxu0 0.0
  %5342 = vmatpush2.msra.mxu0 0.0
  %5343 = vmatprep.subr.mxu0 0.0
  %5344 = vmatpush2.msra.mxu0 0.0
  %5345 = vmatprep.subr.mxu0 0.0
  %5346 = vmatpush2.msra.mxu0 0.0
  %5347 = vmatprep.subr.mxu0 0.0
  %5348 = vmatpush2.msra.mxu0 0.0
  %5349 = vmatprep.subr.mxu0 0.0
  %5350 = vmatpush2.msra.mxu0 0.0
  %5351 = vmatprep.subr.mxu0 0.0
  %5352 = vmatpush2.msra.mxu0 0.0
  %5353 = vmatprep.subr.mxu0 0.0
  %5354 = vmatpush2.msra.mxu0 0.0
  %5355 = vmatprep.subr.mxu0 0.0
  %5356 = vmatpush2.msra.mxu0 0.0
  %5357 = vmatprep.subr.mxu0 0.0
  %5358 = vmatpush2.msra.mxu0 0.0
  %5359 = vmatprep.subr.mxu0 0.0
  %5360 = vmatpush2.msra.mxu0 0.0
  %5361 = vmatprep.subr.mxu0 0.0
  %5362 = vmatpush2.msra.mxu0 0.0
  %5363 = vmatprep.subr.mxu0 0.0
  %5364 = vmatpush2.msra.mxu0 0.0
  %5365 = vmatprep.subr.mxu0 0.0
  %5366 = vmatpush2.msra.mxu0 0.0
  %5367 = vmatprep.subr.mxu0 0.0
  %5368 = vmatpush2.msra.mxu0 0.0
  %5369 = vmatprep.subr.mxu0 0.0
  %5370 = vmatpush2.msra.mxu0 0.0
  %5371 = vmatprep.subr.mxu0 0.0
  %5372 = vmatpush2.msra.mxu0 0.0
  %5373 = vmatprep.mubr.f32.mxu0 0.0
  %5374 = vmatmul.mubr.f32.gmra.mxu0 %v5307
  %v5375 = vpop.f32.mrf.mxu0
  %v5376 = vadd.f32 %v5305, %v5375
  %v5377 = vpop.f32.mrf.mxu0
  %5378 = vdwg.mxu0
  %v5379 = vadd.f32 %v5243, %v5376
  %v5380 = vld [vmem:[%s2530] sm:$0xff]
  %v5381 = vsel %vm1727, %v5379, 0.0
  %5382 = vadd.xlane.f32.xlu0 %v5381
  %v5383 = vpop.xlane.xlu0 %5382
  %v5384 = vmul.f32 %v5383, %v1731
  %v5385 = vsub.f32 %v5379, %v5384
  %v5386 = vmul.f32 %v5385, %v5385
  %v5387 = vsel %vm1727, %v5386, 0.0
  %5388 = vadd.xlane.f32.xlu0 %v5387
  %v5389 = vpop.xlane.xlu0 %5388
  %v5390 = vmul.f32 %v5389, %v1731
  %v5391 = vadd.f32 %v5390, 1e-05
  %v5392 = vrsqrt.pop %v5391
  %v5393 = vmul.f32 %v5385, %v5392
  %v5394 = vld [vmem:[%s2545] sm:$0x1]
  %v5395 = vlaneseq
  %v5396 = vshrl.u32 %v5395, 7
  %v5397 = vsub.s32 0, %v5396
  %v5398 = vrot.slane %v5394, %v5397
  %v5399 = vmul.f32 %v5393, %v5398
  %v5400 = vld [vmem:[%s2552] sm:$0x1]
  %v5401 = vlaneseq
  %v5402 = vshrl.u32 %v5401, 7
  %v5403 = vsub.s32 0, %v5402
  %v5404 = vrot.slane %v5400, %v5403
  %v5405 = vadd.f32 %v5399, %v5404
  %v5406 = vld [vmem:[%s2559] sm:$0xff]
  %5408 = vset.pattern.permute.xlu0 0
  %5409 = vperm.xlu0 %5408, %v5380
  %v5410 = vpop.permute.xlu0 %5409
  %v5412 = vlaneseq
  %v5413 = vshrl.u32 %v5412, 7
  %v5414 = vsub.s32 0, %v5413
  %v5415 = vrot.slane %v5405, %v5414
  %v5416 = vmul.f32 %v5410, %v5415
  %5417 = vset.pattern.permute.xlu0 1
  %5418 = vperm.xlu0 %5417, %v5380
  %v5419 = vpop.permute.xlu0 %5418
  %v5421 = vlaneseq
  %v5422 = vshrl.u32 %v5421, 7
  %v5423 = vsub.s32 1, %v5422
  %v5424 = vrot.slane %v5405, %v5423
  %v5425 = vmul.f32 %v5419, %v5424
  %v5426 = vadd.f32 %v5416, %v5425
  %5427 = vset.pattern.permute.xlu0 2
  %5428 = vperm.xlu0 %5427, %v5380
  %v5429 = vpop.permute.xlu0 %5428
  %v5431 = vlaneseq
  %v5432 = vshrl.u32 %v5431, 7
  %v5433 = vsub.s32 2, %v5432
  %v5434 = vrot.slane %v5405, %v5433
  %v5435 = vmul.f32 %v5429, %v5434
  %v5436 = vadd.f32 %v5426, %v5435
  %5437 = vset.pattern.permute.xlu0 3
  %5438 = vperm.xlu0 %5437, %v5380
  %v5439 = vpop.permute.xlu0 %5438
  %v5441 = vlaneseq
  %v5442 = vshrl.u32 %v5441, 7
  %v5443 = vsub.s32 3, %v5442
  %v5444 = vrot.slane %v5405, %v5443
  %v5445 = vmul.f32 %v5439, %v5444
  %v5446 = vadd.f32 %v5436, %v5445
  %5447 = vset.pattern.permute.xlu0 4
  %5448 = vperm.xlu0 %5447, %v5380
  %v5449 = vpop.permute.xlu0 %5448
  %v5451 = vlaneseq
  %v5452 = vshrl.u32 %v5451, 7
  %v5453 = vsub.s32 4, %v5452
  %v5454 = vrot.slane %v5405, %v5453
  %v5455 = vmul.f32 %v5449, %v5454
  %v5456 = vadd.f32 %v5446, %v5455
  %5457 = vset.pattern.permute.xlu0 5
  %5458 = vperm.xlu0 %5457, %v5380
  %v5459 = vpop.permute.xlu0 %5458
  %v5461 = vlaneseq
  %v5462 = vshrl.u32 %v5461, 7
  %v5463 = vsub.s32 5, %v5462
  %v5464 = vrot.slane %v5405, %v5463
  %v5465 = vmul.f32 %v5459, %v5464
  %v5466 = vadd.f32 %v5456, %v5465
  %5467 = vset.pattern.permute.xlu0 6
  %5468 = vperm.xlu0 %5467, %v5380
  %v5469 = vpop.permute.xlu0 %5468
  %v5471 = vlaneseq
  %v5472 = vshrl.u32 %v5471, 7
  %v5473 = vsub.s32 6, %v5472
  %v5474 = vrot.slane %v5405, %v5473
  %v5475 = vmul.f32 %v5469, %v5474
  %v5476 = vadd.f32 %v5466, %v5475
  %5477 = vset.pattern.permute.xlu0 7
  %5478 = vperm.xlu0 %5477, %v5380
  %v5479 = vpop.permute.xlu0 %5478
  %v5481 = vlaneseq
  %v5482 = vshrl.u32 %v5481, 7
  %v5483 = vsub.s32 7, %v5482
  %v5484 = vrot.slane %v5405, %v5483
  %v5485 = vmul.f32 %v5479, %v5484
  %v5486 = vadd.f32 %v5476, %v5485
  %5488 = vset.pattern.permute.xlu0 0
  %5489 = vperm.xlu0 %5488, %v5406
  %v5490 = vpop.permute.xlu0 %5489
  %v5492 = vadd.f32 %v5486, %v5490
  %v5493 = vmax.f32 %v5492, 0.0
  %v5494 = vadd.f32 %v5379, %v5493
  %v5495 = vsel %vm1727, %v5494, 0.0
  %5496 = vadd.xlane.f32.xlu0 %v5495
  %v5497 = vpop.xlane.xlu0 %5496
  %v5498 = vmul.f32 %v5497, %v1731
  %v5499 = vsub.f32 %v5494, %v5498
  %v5500 = vmul.f32 %v5499, %v5499
  %v5501 = vsel %vm1727, %v5500, 0.0
  %5502 = vadd.xlane.f32.xlu0 %v5501
  %v5503 = vpop.xlane.xlu0 %5502
  %v5504 = vmul.f32 %v5503, %v1731
  %v5505 = vadd.f32 %v5504, 1e-05
  %v5506 = vrsqrt.pop %v5505
  %v5507 = vmul.f32 %v5499, %v5506
  %v5508 = vld [vmem:[%s2662] sm:$0x1]
  %v5509 = vlaneseq
  %v5510 = vshrl.u32 %v5509, 7
  %v5511 = vsub.s32 0, %v5510
  %v5512 = vrot.slane %v5508, %v5511
  %v5513 = vmul.f32 %v5507, %v5512
  %v5514 = vld [vmem:[%s2669] sm:$0x1]
  %v5515 = vlaneseq
  %v5516 = vshrl.u32 %v5515, 7
  %v5517 = vsub.s32 0, %v5516
  %v5518 = vrot.slane %v5514, %v5517
  %v5519 = vadd.f32 %v5513, %v5518
  %v5520 = vld [vmem:[%s2676] sm:$0x3]
  %v5521 = vld [vmem:[%s2678] sm:$0x1]
  %5523 = vset.pattern.permute.xlu0 0
  %5524 = vperm.xlu0 %5523, %v5519
  %v5525 = vpop.permute.xlu0 %5524
  %v5527 = vlaneseq
  %v5528 = vshrl.u32 %v5527, 7
  %v5529 = vsub.s32 0, %v5528
  %v5530 = vrot.slane %v5520, %v5529
  %v5531 = vmul.f32 %v5525, %v5530
  %5532 = vset.pattern.permute.xlu0 1
  %5533 = vperm.xlu0 %5532, %v5519
  %v5534 = vpop.permute.xlu0 %5533
  %v5536 = vlaneseq
  %v5537 = vshrl.u32 %v5536, 7
  %v5538 = vsub.s32 1, %v5537
  %v5539 = vrot.slane %v5520, %v5538
  %v5540 = vmul.f32 %v5534, %v5539
  %v5541 = vadd.f32 %v5531, %v5540
  %v5542 = vlaneseq
  %v5543 = vshrl.u32 %v5542, 7
  %v5544 = vsub.s32 0, %v5543
  %v5545 = vrot.slane %v5521, %v5544
  %v5546 = vadd.f32 %v5541, %v5545
  %v5547 = vmax.f32 %v5546, 0.0
  %v5548 = vld [vmem:[%s2706] sm:$0xff]
  %v5549 = vld [vmem:[%s2706 + $0x8] sm:$0xff]
  %v5550 = vld [vmem:[%s2706 + $0x10] sm:$0xff]
  %v5551 = vld [vmem:[%s2706 + $0x18] sm:$0xff]
  %v5552 = vld [vmem:[%s2711] sm:$0x1]
  %v5553 = vlaneseq
  %v5554 = vshrl.u32 %v5553, 7
  %v5555 = vsub.s32 0, %v5554
  %v5556 = vrot.slane %v5552, %v5555
  %v5558 = vsel %vm238, %v5547, 0
  %5560 = vmatprep.subr.mxu0 0.0
  %5561 = vmatpush1.msra.mxu0 0.0
  %5562 = vmatprep.subr.mxu0 0.0
  %5563 = vmatpush1.msra.mxu0 0.0
  %5564 = vmatprep.subr.mxu0 0.0
  %5565 = vmatpush1.msra.mxu0 0.0
  %5566 = vmatprep.subr.mxu0 0.0
  %5567 = vmatpush1.msra.mxu0 0.0
  %5568 = vmatprep.subr.mxu0 0.0
  %5569 = vmatpush1.msra.mxu0 0.0
  %5570 = vmatprep.subr.mxu0 0.0
  %5571 = vmatpush1.msra.mxu0 0.0
  %5572 = vmatprep.subr.mxu0 0.0
  %5573 = vmatpush1.msra.mxu0 0.0
  %5574 = vmatprep.subr.mxu0 0.0
  %5575 = vmatpush1.msra.mxu0 0.0
  %5576 = vmatprep.subr.mxu0 0.0
  %5577 = vmatpush1.msra.mxu0 0.0
  %5578 = vmatprep.subr.mxu0 0.0
  %5579 = vmatpush1.msra.mxu0 0.0
  %5580 = vmatprep.subr.mxu0 0.0
  %5581 = vmatpush1.msra.mxu0 0.0
  %5582 = vmatprep.subr.mxu0 0.0
  %5583 = vmatpush1.msra.mxu0 0.0
  %5584 = vmatprep.subr.mxu0 0.0
  %5585 = vmatpush1.msra.mxu0 %v5551
  %5586 = vmatprep.subr.mxu0 0.0
  %5587 = vmatpush1.msra.mxu0 %v5550
  %5588 = vmatprep.subr.mxu0 0.0
  %5589 = vmatpush1.msra.mxu0 %v5549
  %5590 = vmatprep.subr.mxu0 0.0
  %5591 = vmatpush1.msra.mxu0 %v5548
  %5592 = vmatprep.subr.mxu0 0.0
  %5593 = vmatpush2.msra.mxu0 0.0
  %5594 = vmatprep.subr.mxu0 0.0
  %5595 = vmatpush2.msra.mxu0 0.0
  %5596 = vmatprep.subr.mxu0 0.0
  %5597 = vmatpush2.msra.mxu0 0.0
  %5598 = vmatprep.subr.mxu0 0.0
  %5599 = vmatpush2.msra.mxu0 0.0
  %5600 = vmatprep.subr.mxu0 0.0
  %5601 = vmatpush2.msra.mxu0 0.0
  %5602 = vmatprep.subr.mxu0 0.0
  %5603 = vmatpush2.msra.mxu0 0.0
  %5604 = vmatprep.subr.mxu0 0.0
  %5605 = vmatpush2.msra.mxu0 0.0
  %5606 = vmatprep.subr.mxu0 0.0
  %5607 = vmatpush2.msra.mxu0 0.0
  %5608 = vmatprep.subr.mxu0 0.0
  %5609 = vmatpush2.msra.mxu0 0.0
  %5610 = vmatprep.subr.mxu0 0.0
  %5611 = vmatpush2.msra.mxu0 0.0
  %5612 = vmatprep.subr.mxu0 0.0
  %5613 = vmatpush2.msra.mxu0 0.0
  %5614 = vmatprep.subr.mxu0 0.0
  %5615 = vmatpush2.msra.mxu0 0.0
  %5616 = vmatprep.subr.mxu0 0.0
  %5617 = vmatpush2.msra.mxu0 0.0
  %5618 = vmatprep.subr.mxu0 0.0
  %5619 = vmatpush2.msra.mxu0 0.0
  %5620 = vmatprep.subr.mxu0 0.0
  %5621 = vmatpush2.msra.mxu0 0.0
  %5622 = vmatprep.subr.mxu0 0.0
  %5623 = vmatpush2.msra.mxu0 0.0
  %5624 = vmatprep.mubr.f32.mxu0 0.0
  %5625 = vmatmul.mubr.f32.gmra.mxu0 %v5558
  %v5626 = vpop.f32.mrf.mxu0
  %v5627 = vadd.f32 %v5556, %v5626
  %v5628 = vpop.f32.mrf.mxu0
  %5629 = vdwg.mxu0
  %v5630 = vadd.f32 %v5494, %v5627
  %v5631 = vld [vmem:[%s2791] sm:$0x3]
  %v5632 = vld [vmem:[%s2793] sm:$0x1]
  %5634 = vset.pattern.permute.xlu0 0
  %5635 = vperm.xlu0 %5634, %v5630
  %v5636 = vpop.permute.xlu0 %5635
  %v5638 = vlaneseq
  %v5639 = vshrl.u32 %v5638, 7
  %v5640 = vsub.s32 0, %v5639
  %v5641 = vrot.slane %v5631, %v5640
  %v5642 = vmul.f32 %v5636, %v5641
  %5643 = vset.pattern.permute.xlu0 1
  %5644 = vperm.xlu0 %5643, %v5630
  %v5645 = vpop.permute.xlu0 %5644
  %v5647 = vlaneseq
  %v5648 = vshrl.u32 %v5647, 7
  %v5649 = vsub.s32 1, %v5648
  %v5650 = vrot.slane %v5631, %v5649
  %v5651 = vmul.f32 %v5645, %v5650
  %v5652 = vadd.f32 %v5642, %v5651
  %v5653 = vlaneseq
  %v5654 = vshrl.u32 %v5653, 7
  %v5655 = vsub.s32 0, %v5654
  %v5656 = vrot.slane %v5632, %v5655
  %v5657 = vadd.f32 %v5652, %v5656
  %vm5658 = vcmp.ge.f32.partialorder %v5657, 0.0
  %v5659 = vmul.f32 %v5657, 0.01
  %v5660 = vsel %vm5658, %v5657, %v5659
  %v5661 = vsel %vm458, %v5660, 0.0
  %5662 = vadd.xlane.f32.xlu0 %v5661
  %v5663 = vpop.xlane.xlu0 %5662
  %v5664 = vmul.f32 %v5663, %v869
  %v5665 = vsub.f32 %v5660, %v5664
  %v5666 = vmul.f32 %v5665, %v5665
  %v5667 = vsel %vm458, %v5666, 0.0
  %5668 = vadd.xlane.f32.xlu0 %v5667
  %v5669 = vpop.xlane.xlu0 %5668
  %v5670 = vmul.f32 %v5669, %v869
  %v5671 = vadd.f32 %v5670, 1e-05
  %v5672 = vrsqrt.pop %v5671
  %v5673 = vmul.f32 %v5665, %v5672
  %v5674 = vld [vmem:[%s2836] sm:$0x1]
  %v5675 = vlaneseq
  %v5676 = vshrl.u32 %v5675, 7
  %v5677 = vsub.s32 0, %v5676
  %v5678 = vrot.slane %v5674, %v5677
  %v5679 = vmul.f32 %v5673, %v5678
  %v5680 = vld [vmem:[%s2843] sm:$0x1]
  %v5681 = vlaneseq
  %v5682 = vshrl.u32 %v5681, 7
  %v5683 = vsub.s32 0, %v5682
  %v5684 = vrot.slane %v5680, %v5683
  %v5685 = vadd.f32 %v5679, %v5684
  %v5686 = vld [vmem:[%s2850] sm:$0xff]
  %v5687 = vld [vmem:[%s2852] sm:$0x1]
  %v5688 = vlaneseq
  %v5689 = vshrl.u32 %v5688, 7
  %v5690 = vsub.s32 0, %v5689
  %v5691 = vrot.slane %v5686, %v5690
  %v5692 = vmul.f32 %v5685, %v5691
  %v5693 = vlaneseq
  %v5694 = vshrl.u32 %v5693, 7
  %v5695 = vsub.s32 1, %v5694
  %v5696 = vrot.slane %v5686, %v5695
  %5698 = vrot.lane.b32.xlu0 %v5696, 1
  %v5699 = vpop.permute.xlu0 %5698
  %v5701 = vmul.f32 %v5685, %v5699
  %5703 = vrot.lane.b32.xlu0 %v5701, 127
  %v5704 = vpop.permute.xlu0 %5703
  %v5706 = vadd.f32 %v5692, %v5704
  %v5707 = vlaneseq
  %v5708 = vshrl.u32 %v5707, 7
  %v5709 = vsub.s32 2, %v5708
  %v5710 = vrot.slane %v5686, %v5709
  %5712 = vrot.lane.b32.xlu0 %v5710, 2
  %v5713 = vpop.permute.xlu0 %5712
  %v5715 = vmul.f32 %v5685, %v5713
  %5717 = vrot.lane.b32.xlu0 %v5715, 126
  %v5718 = vpop.permute.xlu0 %5717
  %v5720 = vadd.f32 %v5706, %v5718
  %v5721 = vlaneseq
  %v5722 = vshrl.u32 %v5721, 7
  %v5723 = vsub.s32 3, %v5722
  %v5724 = vrot.slane %v5686, %v5723
  %5726 = vrot.lane.b32.xlu0 %v5724, 3
  %v5727 = vpop.permute.xlu0 %5726
  %v5729 = vmul.f32 %v5685, %v5727
  %5731 = vrot.lane.b32.xlu0 %v5729, 125
  %v5732 = vpop.permute.xlu0 %5731
  %v5734 = vadd.f32 %v5720, %v5732
  %v5735 = vlaneseq
  %v5736 = vshrl.u32 %v5735, 7
  %v5737 = vsub.s32 4, %v5736
  %v5738 = vrot.slane %v5686, %v5737
  %5740 = vrot.lane.b32.xlu0 %v5738, 4
  %v5741 = vpop.permute.xlu0 %5740
  %v5743 = vmul.f32 %v5685, %v5741
  %5745 = vrot.lane.b32.xlu0 %v5743, 124
  %v5746 = vpop.permute.xlu0 %5745
  %v5748 = vadd.f32 %v5734, %v5746
  %v5749 = vlaneseq
  %v5750 = vshrl.u32 %v5749, 7
  %v5751 = vsub.s32 5, %v5750
  %v5752 = vrot.slane %v5686, %v5751
  %5754 = vrot.lane.b32.xlu0 %v5752, 5
  %v5755 = vpop.permute.xlu0 %5754
  %v5757 = vmul.f32 %v5685, %v5755
  %5759 = vrot.lane.b32.xlu0 %v5757, 123
  %v5760 = vpop.permute.xlu0 %5759
  %v5762 = vadd.f32 %v5748, %v5760
  %v5763 = vlaneseq
  %v5764 = vshrl.u32 %v5763, 7
  %v5765 = vsub.s32 6, %v5764
  %v5766 = vrot.slane %v5686, %v5765
  %5768 = vrot.lane.b32.xlu0 %v5766, 6
  %v5769 = vpop.permute.xlu0 %5768
  %v5771 = vmul.f32 %v5685, %v5769
  %5773 = vrot.lane.b32.xlu0 %v5771, 122
  %v5774 = vpop.permute.xlu0 %5773
  %v5776 = vadd.f32 %v5762, %v5774
  %v5777 = vlaneseq
  %v5778 = vshrl.u32 %v5777, 7
  %v5779 = vsub.s32 7, %v5778
  %v5780 = vrot.slane %v5686, %v5779
  %5782 = vrot.lane.b32.xlu0 %v5780, 7
  %v5783 = vpop.permute.xlu0 %5782
  %v5785 = vmul.f32 %v5685, %v5783
  %5787 = vrot.lane.b32.xlu0 %v5785, 121
  %v5788 = vpop.permute.xlu0 %5787
  %v5790 = vadd.f32 %v5776, %v5788
  %v5791 = vlaneseq
  %v5792 = vshrl.u32 %v5791, 7
  %v5793 = vsub.s32 0, %v5792
  %v5794 = vrot.slane %v5687, %v5793
  %v5795 = vadd.f32 %v5790, %v5794
  %5797 = vrot.lane.b32.xlu0 %v5795, 8
  %v5798 = vpop.permute.xlu0 %5797
  %5800 = vst.msk [vmem:[%s4293] sm:$0xff] %vm2966, %v5798
  // Predicated region
  $region14: #{phytsmixer_forward.1} parent=0 // pred_check
    _
  $region15: #{phytsmixer_forward.1} parent=0 // pred_check_branch
    %5802 = sbr.rel (0) target = $region17
  $region16: #{phytsmixer_forward.1} parent=0 // pred_region
    _
  $region17: #{phytsmixer_forward.1} parent=0 // pred_fallthru
    _
  // Predicated region
  $region18: #{phytsmixer_forward.1} parent=0 // pred_check
    _
  $region19: #{phytsmixer_forward.1} parent=0 // pred_check_branch
    %5804 = sbr.rel (0) target = $region21
  $region20: #{phytsmixer_forward.1} parent=0 // pred_region
    _
  $region21: #{phytsmixer_forward.1} parent=0 // pred_fallthru
    _

</llo_original>
